<compile_context>
chip_gen: v5e
topology: v5e:2x2
jax: 0.10.0
libtpu: 0.0.40
codegen_flags: <defaults>
</compile_context>

<pallas_src>
import functools

import jax
import jax.numpy as jnp
from jax.experimental import pallas as pl
from jax.experimental.pallas import tpu as pltpu

BN_EPS = 1e-5
LANE = 128


def _round_up(x, m):
    return ((x + m - 1) // m) * m


def _unet_block_kernel(lhs_ref, wup_ref, w1_ref, b1_ref, w2_ref, b2_ref,
                       o_ref, pad_ref, *, H, W, Cp, Cq):
    """One batch element per grid step.

    lhs_ref: (S, Kup)    bf16  im2col of the dilated/padded input for the
                               ConvTranspose (16 taps * cin + bias ones column).
    wup_ref: (Kup, Cp)   bf16  flipped ConvTranspose taps stacked along K,
                               plus a bias row matching the ones column.
    w1_ref : (9, Cp, Cp) bf16  conv1 3x3 taps as (ci, co) mats, BN1 scale folded.
    b1_ref : (1, Cp)     f32   BN1 shift.
    w2_ref : (9, Cp, Cq) bf16  conv2 3x3 taps, BN2 scale folded.
    b2_ref : (1, Cq)     f32   BN2 shift.
    o_ref  : (OH, OW, Cq) f32  lane-dense output tile.
    pad_ref: VMEM scratch (OH+2, OW+16, Cp) f32, zero-bordered image for the
             two 3x3 convs (interior at rows 1..OH, cols 8..8+OW).
    """
    OH, OW = 2 * H, 2 * W
    S = OH * OW
    OWP = OW + 16
    dot = functools.partial(jnp.dot, preferred_element_type=jnp.float32)

    # ---- ConvTranspose2d(cin, cin, k=4, s=2, p=1): one K-packed MXU matmul
    #      (bias rides along via the ones column / bias row). ----
    u = dot(lhs_ref[...], wup_ref[...])                       # (S, Cp) f32

    # ---- zero only the scratch border: 2 pad rows + two 8-wide aligned column
    #      bands. The interior is fully overwritten each stage, so no full
    #      memset; re-zeroed every step so it is correct on every core under
    #      dimension_semantics=("parallel",). ----
    pad_ref[0:1, :, :] = jnp.zeros((1, OWP, Cp), jnp.float32)
    pad_ref[OH + 1:OH + 2, :, :] = jnp.zeros((1, OWP, Cp), jnp.float32)
    pad_ref[1:OH + 1, 0:8, :] = jnp.zeros((OH, 8, Cp), jnp.float32)
    pad_ref[1:OH + 1, OW + 8:OWP, :] = jnp.zeros((OH, 8, Cp), jnp.float32)

    # interior starts at sublane offset 8 -> aligned store
    pad_ref[1:OH + 1, 8:8 + OW, :] = u.reshape(OH, OW, Cp)

    def conv3x3(w_ref):
        # 9 shifted-window matmuls; accumulator initialized from tap 0
        # (no zeros + add), windows cast to bf16 for the MXU.
        acc = None
        for kh in range(3):
            for kw in range(3):
                win = pad_ref[kh:kh + OH, 7 + kw:7 + kw + OW, :]
                win = win.astype(jnp.bfloat16).reshape(S, Cp)
                d = dot(win, w_ref[kh * 3 + kw])
                acc = d if acc is None else acc + d
        return acc

    # ---- Conv2d(cin, cin, 3, p=1, bias=False) + BN1 + ReLU6 ----
    a1 = jnp.clip(conv3x3(w1_ref) + b1_ref[...], 0.0, 6.0)    # f32 epilogue
    # reuse the scratch: interior overwritten, zero border preserved
    pad_ref[1:OH + 1, 8:8 + OW, :] = a1.reshape(OH, OW, Cp)

    # ---- Conv2d(cin, cout, 3, p=1, bias=False) + BN2 ----
    out = conv3x3(w2_ref) + b2_ref[...]
    o_ref[...] = out.reshape(OH, OW, Cq).astype(o_ref.dtype)


def unet_block_forward(x, p):
    """x: (N, cin, H, W) NCHW f32 -> (N, cout, 2H, 2W) NCHW f32."""
    N, cin, H, W = x.shape
    cout = p["c2_w"].shape[0]
    OH, OW = 2 * H, 2 * W
    S = OH * OW
    Cp = _round_up(cin, LANE)              # lane-dense channel padding
    Cq = _round_up(cout, LANE)
    Kup = _round_up(16 * cin + 1, LANE)    # 16 taps * cin + bias column

    # ---------- wrapper-side layout plumbing (no FLOPs moved out) ------------
    # im2col of the zero-dilated / padded input for the transposed conv; this
    # lane-dense bf16 slab replaces the old channel-padded dilated f32 canvas
    # in HBM and turns the ConvT into a single in-kernel MXU matmul.
    x_nhwc = jnp.transpose(x, (0, 2, 3, 1)).astype(jnp.float32)
    xpad = jnp.zeros((N, OH + 3, OW + 3, cin), jnp.float32)
    xpad = xpad.at[:, 2:2 * H + 1:2, 2:2 * W + 1:2, :].set(x_nhwc)
    cols = [xpad[:, kh:kh + OH, kw:kw + OW, :]
            for kh in range(4) for kw in range(4)]
    lhs = jnp.concatenate(cols, axis=-1).reshape(N, S, 16 * cin)
    lhs = jnp.concatenate([lhs, jnp.ones((N, S, 1), jnp.float32)], axis=-1)
    lhs = jnp.pad(lhs, ((0, 0), (0, 0), (0, Kup - 16 * cin - 1)))
    lhs = lhs.astype(jnp.bfloat16)

    # ConvTranspose weight (in, out, kh, kw): flipped taps stacked along K.
    wt = p["up_w"].astype(jnp.float32)
    wup = jnp.zeros((Kup, Cp), jnp.float32)
    for kh in range(4):
        for kw in range(4):
            t = kh * 4 + kw
            wup = wup.at[t * cin:(t + 1) * cin, :cin].set(
                wt[:, :, 3 - kh, 3 - kw])
    wup = wup.at[16 * cin, :cin].set(p["up_b"].astype(jnp.float32))  # bias row
    wup = wup.astype(jnp.bfloat16)

    # 3x3 conv taps as (ci, co) matrices with eval-mode BN scale folded into
    # the output channels; shifts stay f32 for the in-kernel epilogue.
    def bn_scale_shift(g, b, m, v):
        s = g / jnp.sqrt(v + BN_EPS)
        return s, b - m * s

    def conv_taps(w, s, ci, co, Ci, Co):
        wf = w.astype(jnp.float32) * s[:, None, None, None]   # (co, ci, 3, 3)
        m = jnp.zeros((9, Ci, Co), jnp.float32)
        for kh in range(3):
            for kw in range(3):
                m = m.at[kh * 3 + kw, :ci, :co].set(
                    jnp.transpose(wf[:, :, kh, kw]))
        return m.astype(jnp.bfloat16)

    s1, sh1 = bn_scale_shift(p["bn1_g"], p["bn1_b"], p["bn1_m"], p["bn1_v"])
    s2, sh2 = bn_scale_shift(p["bn2_g"], p["bn2_b"], p["bn2_m"], p["bn2_v"])
    w1 = conv_taps(p["c1_w"], s1, cin, cin, Cp, Cp)
    w2 = conv_taps(p["c2_w"], s2, cin, cout, Cp, Cq)
    b1 = jnp.zeros((1, Cp), jnp.float32).at[0, :cin].set(sh1)
    b2 = jnp.zeros((1, Cq), jnp.float32).at[0, :cout].set(sh2)

    kernel = functools.partial(_unet_block_kernel, H=H, W=W, Cp=Cp, Cq=Cq)

    out_nhwc = pl.pallas_call(
        kernel,
        out_shape=jax.ShapeDtypeStruct((N, OH, OW, Cq), jnp.float32),
        grid=(N,),
        in_specs=[
            pl.BlockSpec((None, S, Kup), lambda n: (n, 0, 0)),
            pl.BlockSpec((Kup, Cp), lambda n: (0, 0)),      # weights: constant
            pl.BlockSpec((9, Cp, Cp), lambda n: (0, 0, 0)),  # index maps ->
            pl.BlockSpec((1, Cp), lambda n: (0, 0)),         # VMEM-resident
            pl.BlockSpec((9, Cp, Cq), lambda n: (0, 0, 0)),
            pl.BlockSpec((1, Cq), lambda n: (0, 0)),
        ],
        out_specs=pl.BlockSpec((None, OH, OW, Cq), lambda n: (n, 0, 0, 0)),
        scratch_shapes=[pltpu.VMEM((OH + 2, OW + 16, Cp), jnp.float32)],
        compiler_params=pltpu.CompilerParams(
            dimension_semantics=("parallel",),
            vmem_limit_bytes=32 * 1024 * 1024),
    )(lhs, wup, w1, b1, w2, b2)

    return jnp.transpose(out_nhwc[:, :, :, :cout], (0, 3, 1, 2))


def init_params(key, cin, cout):
    ks = jax.random.split(key, 12)
    return {
        "up_w": 0.2 * jax.random.normal(ks[0], (cin, cin, 4, 4), jnp.float32),
        "up_b": 0.1 * jax.random.normal(ks[1], (cin,), jnp.float32),
        "c1_w": 0.2 * jax.random.normal(ks[2], (cin, cin, 3, 3), jnp.float32),
        "c2_w": 0.2 * jax.random.normal(ks[3], (cout, cin, 3, 3), jnp.float32),
        "bn1_g": 1.0 + 0.1 * jax.random.normal(ks[4], (cin,), jnp.float32),
        "bn1_b": 0.1 * jax.random.normal(ks[5], (cin,), jnp.float32),
        "bn1_m": 0.1 * jax.random.normal(ks[6], (cin,), jnp.float32),
        "bn1_v": 0.5 + jax.random.uniform(ks[7], (cin,), jnp.float32),
        "bn2_g": 1.0 + 0.1 * jax.random.normal(ks[8], (cout,), jnp.float32),
        "bn2_b": 0.1 * jax.random.normal(ks[9], (cout,), jnp.float32),
        "bn2_m": 0.1 * jax.random.normal(ks[10], (cout,), jnp.float32),
        "bn2_v": 0.5 + jax.random.uniform(ks[11], (cout,), jnp.float32),
    }


def unet_block_ref(x, p):
    """Pure-JAX reference with PyTorch (eval-mode) semantics, NCHW, f32."""
    w_t = jnp.transpose(jnp.flip(p["up_w"], (2, 3)), (1, 0, 2, 3))   # OIHW
    y = jax.lax.conv_general_dilated(
        x, w_t, window_strides=(1, 1), padding=((2, 2), (2, 2)),
        lhs_dilation=(2, 2), rhs_dilation=(1, 1),
        dimension_numbers=("NCHW", "OIHW", "NCHW"),
        precision=jax.lax.Precision.HIGHEST)
    y = y + p["up_b"][None, :, None, None]

    def conv3(z, w):
        return jax.lax.conv_general_dilated(
            z, w, window_strides=(1, 1), padding=((1, 1), (1, 1)),
            dimension_numbers=("NCHW", "OIHW", "NCHW"),
            precision=jax.lax.Precision.HIGHEST)

    def bn(z, g, b, m, v):
        s = g / jnp.sqrt(v + BN_EPS)
        return z * s[None, :, None, None] + (b - m * s)[None, :, None, None]

    y = bn(conv3(y, p["c1_w"]), p["bn1_g"], p["bn1_b"], p["bn1_m"], p["bn1_v"])
    y = jnp.clip(y, 0.0, 6.0)
    y = bn(conv3(y, p["c2_w"]), p["bn2_g"], p["bn2_b"], p["bn2_m"], p["bn2_v"])
    return y


if __name__ == "__main__":
    key = jax.random.PRNGKey(0)
    kx, kp = jax.random.split(key)

    # Small shapes: batch=2, cin=4, cout=8, 8x8 spatial -> 16x16 output.
    N, CIN, COUT, H, W = 2, 4, 8, 8, 8
    x = jax.random.normal(kx, (N, CIN, H, W), dtype=jnp.float32)
    params = init_params(kp, CIN, COUT)

    out = jax.block_until_ready(unet_block_forward(x, params))
    ref = unet_block_ref(x, params)

    assert out.shape == (N, COUT, 2 * H, 2 * W), out.shape
    max_err = float(jnp.max(jnp.abs(out - ref)))
    # bf16 MXU operands (per perf review) across three chained convs -> allow
    # ~1e-2-scale absolute error vs. the f32 HIGHEST-precision reference.
    assert jnp.allclose(out, ref, atol=5e-2, rtol=5e-2), max_err
    print("KERNEL_OK")
</pallas_src>

<mosaic_0001>
module attributes {stable_mosaic.version = 11 : i64} {
  func.func @_unet_block_kernel(%arg0: i32, %arg1: memref<1x256x128xbf16, #tpu.memory_space<vmem>>, %arg2: memref<128x128xbf16, #tpu.memory_space<vmem>>, %arg3: memref<9x128x128xbf16, #tpu.memory_space<vmem>>, %arg4: memref<1x128xf32, #tpu.memory_space<vmem>>, %arg5: memref<9x128x128xbf16, #tpu.memory_space<vmem>>, %arg6: memref<1x128xf32, #tpu.memory_space<vmem>>, %arg7: memref<1x16x16x128xf32, #tpu.memory_space<vmem>>, %arg8: memref<18x32x128xf32, #tpu.memory_space<vmem>>) attributes {dimension_semantics = [#tpu.dimension_semantics<parallel>], iteration_bounds = array<i64: 2>, scalar_prefetch = 0 : i64, scratch_operands = 1 : i64, tpu.core_type = #tpu.core_type<tc>, window_params = [{transform_indices = @transform_0, window_bounds = array<i64: 1, 256, 128>}, {pipeline_mode = #tpu.pipeline_mode<synchronous>, transform_indices = @transform_1, window_bounds = array<i64: 128, 128>}, {pipeline_mode = #tpu.pipeline_mode<synchronous>, transform_indices = @transform_2, window_bounds = array<i64: 9, 128, 128>}, {pipeline_mode = #tpu.pipeline_mode<synchronous>, transform_indices = @transform_3, window_bounds = array<i64: 1, 128>}, {pipeline_mode = #tpu.pipeline_mode<synchronous>, transform_indices = @transform_4, window_bounds = array<i64: 9, 128, 128>}, {pipeline_mode = #tpu.pipeline_mode<synchronous>, transform_indices = @transform_5, window_bounds = array<i64: 1, 128>}, {transform_indices = @transform_6, window_bounds = array<i64: 1, 16, 16, 128>}]} {
    %c0 = arith.constant 0 : index
    %c0_0 = arith.constant 0 : index
    %c0_1 = arith.constant 0 : index
    %0 = vector.load %arg1[%c0, %c0_0, %c0_1] : memref<1x256x128xbf16, #tpu.memory_space<vmem>>, vector<1x256x128xbf16>
    %1 = vector.shape_cast %0 : vector<1x256x128xbf16> to vector<256x128xbf16>
    %c0_2 = arith.constant 0 : index
    %c0_3 = arith.constant 0 : index
    %2 = vector.load %arg2[%c0_2, %c0_3] : memref<128x128xbf16, #tpu.memory_space<vmem>>, vector<128x128xbf16>
    %cst = arith.constant dense<0.000000e+00> : vector<256x128xf32>
    %3 = tpu.matmul %1, %2, %cst {dimension_numbers = #tpu.dot_dimension_numbers<[1], [0], [0], [1], [0, 0, 1, 1], [], []>} : vector<256x128xbf16>, vector<128x128xbf16>, vector<256x128xf32> -> vector<256x128xf32>
    %cst_4 = arith.constant 0.000000e+00 : f32
    %4 = vector.broadcast %cst_4 : f32 to vector<1x32x128xf32>
    %c0_5 = arith.constant 0 : index
    %c0_6 = arith.constant 0 : index
    %c0_7 = arith.constant 0 : index
    %5 = vector.load %arg8[%c0_5, %c0_6, %c0_7] : memref<18x32x128xf32, #tpu.memory_space<vmem>>, vector<1x32x128xf32>
    tpu.vector_store %arg8[%c0_5, %c0_6, %c0_7], %4 {strides = array<i32>} : memref<18x32x128xf32, #tpu.memory_space<vmem>>, vector<1x32x128xf32>,
    %cst_8 = arith.constant 0.000000e+00 : f32
    %6 = vector.broadcast %cst_8 : f32 to vector<1x32x128xf32>
    %c17 = arith.constant 17 : index
    %c0_9 = arith.constant 0 : index
    %c0_10 = arith.constant 0 : index
    %7 = vector.load %arg8[%c17, %c0_9, %c0_10] : memref<18x32x128xf32, #tpu.memory_space<vmem>>, vector<1x32x128xf32>
    tpu.vector_store %arg8[%c17, %c0_9, %c0_10], %6 {strides = array<i32>} : memref<18x32x128xf32, #tpu.memory_space<vmem>>, vector<1x32x128xf32>,
    %cst_11 = arith.constant 0.000000e+00 : f32
    %8 = vector.broadcast %cst_11 : f32 to vector<16x8x128xf32>
    %c1 = arith.constant 1 : index
    %c0_12 = arith.constant 0 : index
    %c0_13 = arith.constant 0 : index
    %9 = vector.load %arg8[%c1, %c0_12, %c0_13] : memref<18x32x128xf32, #tpu.memory_space<vmem>>, vector<16x8x128xf32>
    tpu.vector_store %arg8[%c1, %c0_12, %c0_13], %8 {strides = array<i32>} : memref<18x32x128xf32, #tpu.memory_space<vmem>>, vector<16x8x128xf32>,
    %cst_14 = arith.constant 0.000000e+00 : f32
    %10 = vector.broadcast %cst_14 : f32 to vector<16x8x128xf32>
    %c1_15 = arith.constant 1 : index
    %c24 = arith.constant 24 : index
    %c0_16 = arith.constant 0 : index
    %11 = vector.load %arg8[%c1_15, %c24, %c0_16] : memref<18x32x128xf32, #tpu.memory_space<vmem>>, vector<16x8x128xf32>
    tpu.vector_store %arg8[%c1_15, %c24, %c0_16], %10 {strides = array<i32>} : memref<18x32x128xf32, #tpu.memory_space<vmem>>, vector<16x8x128xf32>,
    %12 = vector.shape_cast %3 : vector<256x128xf32> to vector<16x16x128xf32>
    %c1_17 = arith.constant 1 : index
    %c8 = arith.constant 8 : index
    %c0_18 = arith.constant 0 : index
    %13 = vector.load %arg8[%c1_17, %c8, %c0_18] : memref<18x32x128xf32, #tpu.memory_space<vmem>>, vector<16x16x128xf32>
    tpu.vector_store %arg8[%c1_17, %c8, %c0_18], %12 {strides = array<i32>} : memref<18x32x128xf32, #tpu.memory_space<vmem>>, vector<16x16x128xf32>,
    %c0_19 = arith.constant 0 : index
    %c7 = arith.constant 7 : index
    %c0_20 = arith.constant 0 : index
    %14 = vector.load %arg8[%c0_19, %c7, %c0_20] : memref<18x32x128xf32, #tpu.memory_space<vmem>>, vector<16x16x128xf32>
    %15 = arith.truncf %14 : vector<16x16x128xf32> to vector<16x16x128xbf16>
    %16 = vector.shape_cast %15 : vector<16x16x128xbf16> to vector<256x128xbf16>
    %c0_21 = arith.constant 0 : index
    %c0_22 = arith.constant 0 : index
    %c0_23 = arith.constant 0 : index
    %17 = vector.load %arg3[%c0_21, %c0_22, %c0_23] : memref<9x128x128xbf16, #tpu.memory_space<vmem>>, vector<1x128x128xbf16>
    %18 = vector.shape_cast %17 : vector<1x128x128xbf16> to vector<128x128xbf16>
    %cst_24 = arith.constant dense<0.000000e+00> : vector<256x128xf32>
    %19 = tpu.matmul %16, %18, %cst_24 {dimension_numbers = #tpu.dot_dimension_numbers<[1], [0], [0], [1], [0, 0, 1, 1], [], []>} : vector<256x128xbf16>, vector<128x128xbf16>, vector<256x128xf32> -> vector<256x128xf32>
    %c0_25 = arith.constant 0 : index
    %c8_26 = arith.constant 8 : index
    %c0_27 = arith.constant 0 : index
    %20 = vector.load %arg8[%c0_25, %c8_26, %c0_27] : memref<18x32x128xf32, #tpu.memory_space<vmem>>, vector<16x16x128xf32>
    %21 = arith.truncf %20 : vector<16x16x128xf32> to vector<16x16x128xbf16>
    %22 = vector.shape_cast %21 : vector<16x16x128xbf16> to vector<256x128xbf16>
    %c1_28 = arith.constant 1 : index
    %c0_29 = arith.constant 0 : index
    %c0_30 = arith.constant 0 : index
    %23 = vector.load %arg3[%c1_28, %c0_29, %c0_30] : memref<9x128x128xbf16, #tpu.memory_space<vmem>>, vector<1x128x128xbf16>
    %24 = vector.shape_cast %23 : vector<1x128x128xbf16> to vector<128x128xbf16>
    %cst_31 = arith.constant dense<0.000000e+00> : vector<256x128xf32>
    %25 = tpu.matmul %22, %24, %cst_31 {dimension_numbers = #tpu.dot_dimension_numbers<[1], [0], [0], [1], [0, 0, 1, 1], [], []>} : vector<256x128xbf16>, vector<128x128xbf16>, vector<256x128xf32> -> vector<256x128xf32>
    %26 = arith.addf %19, %25 : vector<256x128xf32>
    %c0_32 = arith.constant 0 : index
    %c9 = arith.constant 9 : index
    %c0_33 = arith.constant 0 : index
    %27 = vector.load %arg8[%c0_32, %c9, %c0_33] : memref<18x32x128xf32, #tpu.memory_space<vmem>>, vector<16x16x128xf32>
    %28 = arith.truncf %27 : vector<16x16x128xf32> to vector<16x16x128xbf16>
    %29 = vector.shape_cast %28 : vector<16x16x128xbf16> to vector<256x128xbf16>
    %c2 = arith.constant 2 : index
    %c0_34 = arith.constant 0 : index
    %c0_35 = arith.constant 0 : index
    %30 = vector.load %arg3[%c2, %c0_34, %c0_35] : memref<9x128x128xbf16, #tpu.memory_space<vmem>>, vector<1x128x128xbf16>
    %31 = vector.shape_cast %30 : vector<1x128x128xbf16> to vector<128x128xbf16>
    %cst_36 = arith.constant dense<0.000000e+00> : vector<256x128xf32>
    %32 = tpu.matmul %29, %31, %cst_36 {dimension_numbers = #tpu.dot_dimension_numbers<[1], [0], [0], [1], [0, 0, 1, 1], [], []>} : vector<256x128xbf16>, vector<128x128xbf16>, vector<256x128xf32> -> vector<256x128xf32>
    %33 = arith.addf %26, %32 : vector<256x128xf32>
    %c1_37 = arith.constant 1 : index
    %c7_38 = arith.constant 7 : index
    %c0_39 = arith.constant 0 : index
    %34 = vector.load %arg8[%c1_37, %c7_38, %c0_39] : memref<18x32x128xf32, #tpu.memory_space<vmem>>, vector<16x16x128xf32>
    %35 = arith.truncf %34 : vector<16x16x128xf32> to vector<16x16x128xbf16>
    %36 = vector.shape_cast %35 : vector<16x16x128xbf16> to vector<256x128xbf16>
    %c3 = arith.constant 3 : index
    %c0_40 = arith.constant 0 : index
    %c0_41 = arith.constant 0 : index
    %37 = vector.load %arg3[%c3, %c0_40, %c0_41] : memref<9x128x128xbf16, #tpu.memory_space<vmem>>, vector<1x128x128xbf16>
    %38 = vector.shape_cast %37 : vector<1x128x128xbf16> to vector<128x128xbf16>
    %cst_42 = arith.constant dense<0.000000e+00> : vector<256x128xf32>
    %39 = tpu.matmul %36, %38, %cst_42 {dimension_numbers = #tpu.dot_dimension_numbers<[1], [0], [0], [1], [0, 0, 1, 1], [], []>} : vector<256x128xbf16>, vector<128x128xbf16>, vector<256x128xf32> -> vector<256x128xf32>
    %40 = arith.addf %33, %39 : vector<256x128xf32>
    %c1_43 = arith.constant 1 : index
    %c8_44 = arith.constant 8 : index
    %c0_45 = arith.constant 0 : index
    %41 = vector.load %arg8[%c1_43, %c8_44, %c0_45] : memref<18x32x128xf32, #tpu.memory_space<vmem>>, vector<16x16x128xf32>
    %42 = arith.truncf %41 : vector<16x16x128xf32> to vector<16x16x128xbf16>
    %43 = vector.shape_cast %42 : vector<16x16x128xbf16> to vector<256x128xbf16>
    %c4 = arith.constant 4 : index
    %c0_46 = arith.constant 0 : index
    %c0_47 = arith.constant 0 : index
    %44 = vector.load %arg3[%c4, %c0_46, %c0_47] : memref<9x128x128xbf16, #tpu.memory_space<vmem>>, vector<1x128x128xbf16>
    %45 = vector.shape_cast %44 : vector<1x128x128xbf16> to vector<128x128xbf16>
    %cst_48 = arith.constant dense<0.000000e+00> : vector<256x128xf32>
    %46 = tpu.matmul %43, %45, %cst_48 {dimension_numbers = #tpu.dot_dimension_numbers<[1], [0], [0], [1], [0, 0, 1, 1], [], []>} : vector<256x128xbf16>, vector<128x128xbf16>, vector<256x128xf32> -> vector<256x128xf32>
    %47 = arith.addf %40, %46 : vector<256x128xf32>
    %c1_49 = arith.constant 1 : index
    %c9_50 = arith.constant 9 : index
    %c0_51 = arith.constant 0 : index
    %48 = vector.load %arg8[%c1_49, %c9_50, %c0_51] : memref<18x32x128xf32, #tpu.memory_space<vmem>>, vector<16x16x128xf32>
    %49 = arith.truncf %48 : vector<16x16x128xf32> to vector<16x16x128xbf16>
    %50 = vector.shape_cast %49 : vector<16x16x128xbf16> to vector<256x128xbf16>
    %c5 = arith.constant 5 : index
    %c0_52 = arith.constant 0 : index
    %c0_53 = arith.constant 0 : index
    %51 = vector.load %arg3[%c5, %c0_52, %c0_53] : memref<9x128x128xbf16, #tpu.memory_space<vmem>>, vector<1x128x128xbf16>
    %52 = vector.shape_cast %51 : vector<1x128x128xbf16> to vector<128x128xbf16>
    %cst_54 = arith.constant dense<0.000000e+00> : vector<256x128xf32>
    %53 = tpu.matmul %50, %52, %cst_54 {dimension_numbers = #tpu.dot_dimension_numbers<[1], [0], [0], [1], [0, 0, 1, 1], [], []>} : vector<256x128xbf16>, vector<128x128xbf16>, vector<256x128xf32> -> vector<256x128xf32>
    %54 = arith.addf %47, %53 : vector<256x128xf32>
    %c2_55 = arith.constant 2 : index
    %c7_56 = arith.constant 7 : index
    %c0_57 = arith.constant 0 : index
    %55 = vector.load %arg8[%c2_55, %c7_56, %c0_57] : memref<18x32x128xf32, #tpu.memory_space<vmem>>, vector<16x16x128xf32>
    %56 = arith.truncf %55 : vector<16x16x128xf32> to vector<16x16x128xbf16>
    %57 = vector.shape_cast %56 : vector<16x16x128xbf16> to vector<256x128xbf16>
    %c6 = arith.constant 6 : index
    %c0_58 = arith.constant 0 : index
    %c0_59 = arith.constant 0 : index
    %58 = vector.load %arg3[%c6, %c0_58, %c0_59] : memref<9x128x128xbf16, #tpu.memory_space<vmem>>, vector<1x128x128xbf16>
    %59 = vector.shape_cast %58 : vector<1x128x128xbf16> to vector<128x128xbf16>
    %cst_60 = arith.constant dense<0.000000e+00> : vector<256x128xf32>
    %60 = tpu.matmul %57, %59, %cst_60 {dimension_numbers = #tpu.dot_dimension_numbers<[1], [0], [0], [1], [0, 0, 1, 1], [], []>} : vector<256x128xbf16>, vector<128x128xbf16>, vector<256x128xf32> -> vector<256x128xf32>
    %61 = arith.addf %54, %60 : vector<256x128xf32>
    %c2_61 = arith.constant 2 : index
    %c8_62 = arith.constant 8 : index
    %c0_63 = arith.constant 0 : index
    %62 = vector.load %arg8[%c2_61, %c8_62, %c0_63] : memref<18x32x128xf32, #tpu.memory_space<vmem>>, vector<16x16x128xf32>
    %63 = arith.truncf %62 : vector<16x16x128xf32> to vector<16x16x128xbf16>
    %64 = vector.shape_cast %63 : vector<16x16x128xbf16> to vector<256x128xbf16>
    %c7_64 = arith.constant 7 : index
    %c0_65 = arith.constant 0 : index
    %c0_66 = arith.constant 0 : index
    %65 = vector.load %arg3[%c7_64, %c0_65, %c0_66] : memref<9x128x128xbf16, #tpu.memory_space<vmem>>, vector<1x128x128xbf16>
    %66 = vector.shape_cast %65 : vector<1x128x128xbf16> to vector<128x128xbf16>
    %cst_67 = arith.constant dense<0.000000e+00> : vector<256x128xf32>
    %67 = tpu.matmul %64, %66, %cst_67 {dimension_numbers = #tpu.dot_dimension_numbers<[1], [0], [0], [1], [0, 0, 1, 1], [], []>} : vector<256x128xbf16>, vector<128x128xbf16>, vector<256x128xf32> -> vector<256x128xf32>
    %68 = arith.addf %61, %67 : vector<256x128xf32>
    %c2_68 = arith.constant 2 : index
    %c9_69 = arith.constant 9 : index
    %c0_70 = arith.constant 0 : index
    %69 = vector.load %arg8[%c2_68, %c9_69, %c0_70] : memref<18x32x128xf32, #tpu.memory_space<vmem>>, vector<16x16x128xf32>
    %70 = arith.truncf %69 : vector<16x16x128xf32> to vector<16x16x128xbf16>
    %71 = vector.shape_cast %70 : vector<16x16x128xbf16> to vector<256x128xbf16>
    %c8_71 = arith.constant 8 : index
    %c0_72 = arith.constant 0 : index
    %c0_73 = arith.constant 0 : index
    %72 = vector.load %arg3[%c8_71, %c0_72, %c0_73] : memref<9x128x128xbf16, #tpu.memory_space<vmem>>, vector<1x128x128xbf16>
    %73 = vector.shape_cast %72 : vector<1x128x128xbf16> to vector<128x128xbf16>
    %cst_74 = arith.constant dense<0.000000e+00> : vector<256x128xf32>
    %74 = tpu.matmul %71, %73, %cst_74 {dimension_numbers = #tpu.dot_dimension_numbers<[1], [0], [0], [1], [0, 0, 1, 1], [], []>} : vector<256x128xbf16>, vector<128x128xbf16>, vector<256x128xf32> -> vector<256x128xf32>
    %75 = arith.addf %68, %74 : vector<256x128xf32>
    %c0_75 = arith.constant 0 : index
    %c0_76 = arith.constant 0 : index
    %76 = vector.load %arg4[%c0_75, %c0_76] : memref<1x128xf32, #tpu.memory_space<vmem>>, vector<1x128xf32>
    %77 = vector.broadcast %76 : vector<1x128xf32> to vector<256x128xf32>
    %78 = arith.addf %75, %77 : vector<256x128xf32>
    %cst_77 = arith.constant 0.000000e+00 : f32
    %cst_78 = arith.constant 6.000000e+00 : f32
    %79 = vector.broadcast %cst_77 : f32 to vector<256x128xf32>
    %80 = arith.maximumf %79, %78 : vector<256x128xf32>
    %81 = vector.broadcast %cst_78 : f32 to vector<256x128xf32>
    %82 = arith.minimumf %81, %80 : vector<256x128xf32>
    %83 = vector.shape_cast %82 : vector<256x128xf32> to vector<16x16x128xf32>
    %c1_79 = arith.constant 1 : index
    %c8_80 = arith.constant 8 : index
    %c0_81 = arith.constant 0 : index
    %84 = vector.load %arg8[%c1_79, %c8_80, %c0_81] : memref<18x32x128xf32, #tpu.memory_space<vmem>>, vector<16x16x128xf32>
    tpu.vector_store %arg8[%c1_79, %c8_80, %c0_81], %83 {strides = array<i32>} : memref<18x32x128xf32, #tpu.memory_space<vmem>>, vector<16x16x128xf32>,
    %c0_82 = arith.constant 0 : index
    %c7_83 = arith.constant 7 : index
    %c0_84 = arith.constant 0 : index
    %85 = vector.load %arg8[%c0_82, %c7_83, %c0_84] : memref<18x32x128xf32, #tpu.memory_space<vmem>>, vector<16x16x128xf32>
    %86 = arith.truncf %85 : vector<16x16x128xf32> to vector<16x16x128xbf16>
    %87 = vector.shape_cast %86 : vector<16x16x128xbf16> to vector<256x128xbf16>
    %c0_85 = arith.constant 0 : index
    %c0_86 = arith.constant 0 : index
    %c0_87 = arith.constant 0 : index
    %88 = vector.load %arg5[%c0_85, %c0_86, %c0_87] : memref<9x128x128xbf16, #tpu.memory_space<vmem>>, vector<1x128x128xbf16>
    %89 = vector.shape_cast %88 : vector<1x128x128xbf16> to vector<128x128xbf16>
    %cst_88 = arith.constant dense<0.000000e+00> : vector<256x128xf32>
    %90 = tpu.matmul %87, %89, %cst_88 {dimension_numbers = #tpu.dot_dimension_numbers<[1], [0], [0], [1], [0, 0, 1, 1], [], []>} : vector<256x128xbf16>, vector<128x128xbf16>, vector<256x128xf32> -> vector<256x128xf32>
    %c0_89 = arith.constant 0 : index
    %c8_90 = arith.constant 8 : index
    %c0_91 = arith.constant 0 : index
    %91 = vector.load %arg8[%c0_89, %c8_90, %c0_91] : memref<18x32x128xf32, #tpu.memory_space<vmem>>, vector<16x16x128xf32>
    %92 = arith.truncf %91 : vector<16x16x128xf32> to vector<16x16x128xbf16>
    %93 = vector.shape_cast %92 : vector<16x16x128xbf16> to vector<256x128xbf16>
    %c1_92 = arith.constant 1 : index
    %c0_93 = arith.constant 0 : index
    %c0_94 = arith.constant 0 : index
    %94 = vector.load %arg5[%c1_92, %c0_93, %c0_94] : memref<9x128x128xbf16, #tpu.memory_space<vmem>>, vector<1x128x128xbf16>
    %95 = vector.shape_cast %94 : vector<1x128x128xbf16> to vector<128x128xbf16>
    %cst_95 = arith.constant dense<0.000000e+00> : vector<256x128xf32>
    %96 = tpu.matmul %93, %95, %cst_95 {dimension_numbers = #tpu.dot_dimension_numbers<[1], [0], [0], [1], [0, 0, 1, 1], [], []>} : vector<256x128xbf16>, vector<128x128xbf16>, vector<256x128xf32> -> vector<256x128xf32>
    %97 = arith.addf %90, %96 : vector<256x128xf32>
    %c0_96 = arith.constant 0 : index
    %c9_97 = arith.constant 9 : index
    %c0_98 = arith.constant 0 : index
    %98 = vector.load %arg8[%c0_96, %c9_97, %c0_98] : memref<18x32x128xf32, #tpu.memory_space<vmem>>, vector<16x16x128xf32>
    %99 = arith.truncf %98 : vector<16x16x128xf32> to vector<16x16x128xbf16>
    %100 = vector.shape_cast %99 : vector<16x16x128xbf16> to vector<256x128xbf16>
    %c2_99 = arith.constant 2 : index
    %c0_100 = arith.constant 0 : index
    %c0_101 = arith.constant 0 : index
    %101 = vector.load %arg5[%c2_99, %c0_100, %c0_101] : memref<9x128x128xbf16, #tpu.memory_space<vmem>>, vector<1x128x128xbf16>
    %102 = vector.shape_cast %101 : vector<1x128x128xbf16> to vector<128x128xbf16>
    %cst_102 = arith.constant dense<0.000000e+00> : vector<256x128xf32>
    %103 = tpu.matmul %100, %102, %cst_102 {dimension_numbers = #tpu.dot_dimension_numbers<[1], [0], [0], [1], [0, 0, 1, 1], [], []>} : vector<256x128xbf16>, vector<128x128xbf16>, vector<256x128xf32> -> vector<256x128xf32>
    %104 = arith.addf %97, %103 : vector<256x128xf32>
    %c1_103 = arith.constant 1 : index
    %c7_104 = arith.constant 7 : index
    %c0_105 = arith.constant 0 : index
    %105 = vector.load %arg8[%c1_103, %c7_104, %c0_105] : memref<18x32x128xf32, #tpu.memory_space<vmem>>, vector<16x16x128xf32>
    %106 = arith.truncf %105 : vector<16x16x128xf32> to vector<16x16x128xbf16>
    %107 = vector.shape_cast %106 : vector<16x16x128xbf16> to vector<256x128xbf16>
    %c3_106 = arith.constant 3 : index
    %c0_107 = arith.constant 0 : index
    %c0_108 = arith.constant 0 : index
    %108 = vector.load %arg5[%c3_106, %c0_107, %c0_108] : memref<9x128x128xbf16, #tpu.memory_space<vmem>>, vector<1x128x128xbf16>
    %109 = vector.shape_cast %108 : vector<1x128x128xbf16> to vector<128x128xbf16>
    %cst_109 = arith.constant dense<0.000000e+00> : vector<256x128xf32>
    %110 = tpu.matmul %107, %109, %cst_109 {dimension_numbers = #tpu.dot_dimension_numbers<[1], [0], [0], [1], [0, 0, 1, 1], [], []>} : vector<256x128xbf16>, vector<128x128xbf16>, vector<256x128xf32> -> vector<256x128xf32>
    %111 = arith.addf %104, %110 : vector<256x128xf32>
    %c1_110 = arith.constant 1 : index
    %c8_111 = arith.constant 8 : index
    %c0_112 = arith.constant 0 : index
    %112 = vector.load %arg8[%c1_110, %c8_111, %c0_112] : memref<18x32x128xf32, #tpu.memory_space<vmem>>, vector<16x16x128xf32>
    %113 = arith.truncf %112 : vector<16x16x128xf32> to vector<16x16x128xbf16>
    %114 = vector.shape_cast %113 : vector<16x16x128xbf16> to vector<256x128xbf16>
    %c4_113 = arith.constant 4 : index
    %c0_114 = arith.constant 0 : index
    %c0_115 = arith.constant 0 : index
    %115 = vector.load %arg5[%c4_113, %c0_114, %c0_115] : memref<9x128x128xbf16, #tpu.memory_space<vmem>>, vector<1x128x128xbf16>
    %116 = vector.shape_cast %115 : vector<1x128x128xbf16> to vector<128x128xbf16>
    %cst_116 = arith.constant dense<0.000000e+00> : vector<256x128xf32>
    %117 = tpu.matmul %114, %116, %cst_116 {dimension_numbers = #tpu.dot_dimension_numbers<[1], [0], [0], [1], [0, 0, 1, 1], [], []>} : vector<256x128xbf16>, vector<128x128xbf16>, vector<256x128xf32> -> vector<256x128xf32>
    %118 = arith.addf %111, %117 : vector<256x128xf32>
    %c1_117 = arith.constant 1 : index
    %c9_118 = arith.constant 9 : index
    %c0_119 = arith.constant 0 : index
    %119 = vector.load %arg8[%c1_117, %c9_118, %c0_119] : memref<18x32x128xf32, #tpu.memory_space<vmem>>, vector<16x16x128xf32>
    %120 = arith.truncf %119 : vector<16x16x128xf32> to vector<16x16x128xbf16>
    %121 = vector.shape_cast %120 : vector<16x16x128xbf16> to vector<256x128xbf16>
    %c5_120 = arith.constant 5 : index
    %c0_121 = arith.constant 0 : index
    %c0_122 = arith.constant 0 : index
    %122 = vector.load %arg5[%c5_120, %c0_121, %c0_122] : memref<9x128x128xbf16, #tpu.memory_space<vmem>>, vector<1x128x128xbf16>
    %123 = vector.shape_cast %122 : vector<1x128x128xbf16> to vector<128x128xbf16>
    %cst_123 = arith.constant dense<0.000000e+00> : vector<256x128xf32>
    %124 = tpu.matmul %121, %123, %cst_123 {dimension_numbers = #tpu.dot_dimension_numbers<[1], [0], [0], [1], [0, 0, 1, 1], [], []>} : vector<256x128xbf16>, vector<128x128xbf16>, vector<256x128xf32> -> vector<256x128xf32>
    %125 = arith.addf %118, %124 : vector<256x128xf32>
    %c2_124 = arith.constant 2 : index
    %c7_125 = arith.constant 7 : index
    %c0_126 = arith.constant 0 : index
    %126 = vector.load %arg8[%c2_124, %c7_125, %c0_126] : memref<18x32x128xf32, #tpu.memory_space<vmem>>, vector<16x16x128xf32>
    %127 = arith.truncf %126 : vector<16x16x128xf32> to vector<16x16x128xbf16>
    %128 = vector.shape_cast %127 : vector<16x16x128xbf16> to vector<256x128xbf16>
    %c6_127 = arith.constant 6 : index
    %c0_128 = arith.constant 0 : index
    %c0_129 = arith.constant 0 : index
    %129 = vector.load %arg5[%c6_127, %c0_128, %c0_129] : memref<9x128x128xbf16, #tpu.memory_space<vmem>>, vector<1x128x128xbf16>
    %130 = vector.shape_cast %129 : vector<1x128x128xbf16> to vector<128x128xbf16>
    %cst_130 = arith.constant dense<0.000000e+00> : vector<256x128xf32>
    %131 = tpu.matmul %128, %130, %cst_130 {dimension_numbers = #tpu.dot_dimension_numbers<[1], [0], [0], [1], [0, 0, 1, 1], [], []>} : vector<256x128xbf16>, vector<128x128xbf16>, vector<256x128xf32> -> vector<256x128xf32>
    %132 = arith.addf %125, %131 : vector<256x128xf32>
    %c2_131 = arith.constant 2 : index
    %c8_132 = arith.constant 8 : index
    %c0_133 = arith.constant 0 : index
    %133 = vector.load %arg8[%c2_131, %c8_132, %c0_133] : memref<18x32x128xf32, #tpu.memory_space<vmem>>, vector<16x16x128xf32>
    %134 = arith.truncf %133 : vector<16x16x128xf32> to vector<16x16x128xbf16>
    %135 = vector.shape_cast %134 : vector<16x16x128xbf16> to vector<256x128xbf16>
    %c7_134 = arith.constant 7 : index
    %c0_135 = arith.constant 0 : index
    %c0_136 = arith.constant 0 : index
    %136 = vector.load %arg5[%c7_134, %c0_135, %c0_136] : memref<9x128x128xbf16, #tpu.memory_space<vmem>>, vector<1x128x128xbf16>
    %137 = vector.shape_cast %136 : vector<1x128x128xbf16> to vector<128x128xbf16>
    %cst_137 = arith.constant dense<0.000000e+00> : vector<256x128xf32>
    %138 = tpu.matmul %135, %137, %cst_137 {dimension_numbers = #tpu.dot_dimension_numbers<[1], [0], [0], [1], [0, 0, 1, 1], [], []>} : vector<256x128xbf16>, vector<128x128xbf16>, vector<256x128xf32> -> vector<256x128xf32>
    %139 = arith.addf %132, %138 : vector<256x128xf32>
    %c2_138 = arith.constant 2 : index
    %c9_139 = arith.constant 9 : index
    %c0_140 = arith.constant 0 : index
    %140 = vector.load %arg8[%c2_138, %c9_139, %c0_140] : memref<18x32x128xf32, #tpu.memory_space<vmem>>, vector<16x16x128xf32>
    %141 = arith.truncf %140 : vector<16x16x128xf32> to vector<16x16x128xbf16>
    %142 = vector.shape_cast %141 : vector<16x16x128xbf16> to vector<256x128xbf16>
    %c8_141 = arith.constant 8 : index
    %c0_142 = arith.constant 0 : index
    %c0_143 = arith.constant 0 : index
    %143 = vector.load %arg5[%c8_141, %c0_142, %c0_143] : memref<9x128x128xbf16, #tpu.memory_space<vmem>>, vector<1x128x128xbf16>
    %144 = vector.shape_cast %143 : vector<1x128x128xbf16> to vector<128x128xbf16>
    %cst_144 = arith.constant dense<0.000000e+00> : vector<256x128xf32>
    %145 = tpu.matmul %142, %144, %cst_144 {dimension_numbers = #tpu.dot_dimension_numbers<[1], [0], [0], [1], [0, 0, 1, 1], [], []>} : vector<256x128xbf16>, vector<128x128xbf16>, vector<256x128xf32> -> vector<256x128xf32>
    %146 = arith.addf %139, %145 : vector<256x128xf32>
    %c0_145 = arith.constant 0 : index
    %c0_146 = arith.constant 0 : index
    %147 = vector.load %arg6[%c0_145, %c0_146] : memref<1x128xf32, #tpu.memory_space<vmem>>, vector<1x128xf32>
    %148 = vector.broadcast %147 : vector<1x128xf32> to vector<256x128xf32>
    %149 = arith.addf %146, %148 : vector<256x128xf32>
    %150 = vector.shape_cast %149 : vector<256x128xf32> to vector<16x16x128xf32>
    %c0_147 = arith.constant 0 : index
    %c0_148 = arith.constant 0 : index
    %c0_149 = arith.constant 0 : index
    %c0_150 = arith.constant 0 : index
    %151 = vector.load %arg7[%c0_147, %c0_148, %c0_149, %c0_150] : memref<1x16x16x128xf32, #tpu.memory_space<vmem>>, vector<1x16x16x128xf32>
    %152 = vector.shape_cast %151 : vector<1x16x16x128xf32> to vector<16x16x128xf32>
    %153 = vector.shape_cast %150 : vector<16x16x128xf32> to vector<1x16x16x128xf32>
    tpu.vector_store %arg7[%c0_147, %c0_148, %c0_149, %c0_150], %153 {strides = array<i32>} : memref<1x16x16x128xf32, #tpu.memory_space<vmem>>, vector<1x16x16x128xf32>,
    return
  }
  func.func @transform_0(%arg0: i32) -> (i32, i32, i32) {
    %c0_i32 = arith.constant 0 : i32
    %c0_i32_0 = arith.constant 0 : i32
    %c0_i32_1 = arith.constant 0 : i32
    return %arg0, %c0_i32, %c0_i32_0 : i32, i32, i32
  }
  func.func @transform_1(%arg0: i32) -> (i32, i32) {
    %c0_i32 = arith.constant 0 : i32
    %c0_i32_0 = arith.constant 0 : i32
    %c0_i32_1 = arith.constant 0 : i32
    return %c0_i32, %c0_i32_0 : i32, i32
  }
  func.func @transform_2(%arg0: i32) -> (i32, i32, i32) {
    %c0_i32 = arith.constant 0 : i32
    %c0_i32_0 = arith.constant 0 : i32
    %c0_i32_1 = arith.constant 0 : i32
    %c0_i32_2 = arith.constant 0 : i32
    return %c0_i32, %c0_i32_0, %c0_i32_1 : i32, i32, i32
  }
  func.func @transform_3(%arg0: i32) -> (i32, i32) {
    %c0_i32 = arith.constant 0 : i32
    %c0_i32_0 = arith.constant 0 : i32
    %c0_i32_1 = arith.constant 0 : i32
    return %c0_i32, %c0_i32_0 : i32, i32
  }
  func.func @transform_4(%arg0: i32) -> (i32, i32, i32) {
    %c0_i32 = arith.constant 0 : i32
    %c0_i32_0 = arith.constant 0 : i32
    %c0_i32_1 = arith.constant 0 : i32
    %c0_i32_2 = arith.constant 0 : i32
    return %c0_i32, %c0_i32_0, %c0_i32_1 : i32, i32, i32
  }
  func.func @transform_5(%arg0: i32) -> (i32, i32) {
    %c0_i32 = arith.constant 0 : i32
    %c0_i32_0 = arith.constant 0 : i32
    %c0_i32_1 = arith.constant 0 : i32
    return %c0_i32, %c0_i32_0 : i32, i32
  }
  func.func @transform_6(%arg0: i32) -> (i32, i32, i32, i32) {
    %c0_i32 = arith.constant 0 : i32
    %c0_i32_0 = arith.constant 0 : i32
    %c0_i32_1 = arith.constant 0 : i32
    %c0_i32_2 = arith.constant 0 : i32
    return %arg0, %c0_i32, %c0_i32_0, %c0_i32_1 : i32, i32, i32, i32
  }
}

</mosaic_0001>

<llo_original>
// kernel: tpu_custom_call.1
$region0: #{tpu_custom_call.1}
  #allocation0 [shape = 'u32[]', space=smem, size = 0x4, offset = 0x4, fixed_abs, tag = 'smem constant byte address 0x4 - core index']
  #allocation1 [shape = 'u32[72,128]{1,0:T(1,128)}', space=vmem, size = 0x9000, scoped, tag = 'internal scratch']
  #allocation2 [shape = 'f32[18,32,128]{2,1,0:T(8,128)}', space=vmem, size = 0x48000, scoped, tag = 'scratch operand']
  %s0 = inlined_call_operand.hbm [shape: bf16[2,256,128], index: 0, kind: input, shape index: {}]
  %s1 = inlined_call_operand.hbm [shape: bf16[128,128], index: 1, kind: input, shape index: {}]
  %s2 = inlined_call_operand.hbm [shape: bf16[9,128,128], index: 2, kind: input, shape index: {}]
  %s3 = inlined_call_operand.vmem [shape: f32[1,128], index: 3, kind: input, shape index: {}]
  %s4 = inlined_call_operand.hbm [shape: bf16[9,128,128], index: 4, kind: input, shape index: {}]
  %s5 = inlined_call_operand.vmem [shape: f32[1,128], index: 5, kind: input, shape index: {}]
  %s6 = inlined_call_operand.hbm [shape: f32[2,16,16,128], index: 6, kind: output, shape index: {}]
  %s7 = sld [smem:[#allocation0]]
  $region73: #{tpu_custom_call.1} parent=0
    _
  %s9 = ssub.s32 1, %s7
  %s10 = scalar_select 0, %s9, %s7
  $region1: #{tpu_custom_call.1} parent=0
    #allocation3 [shape = 'u8[131072]{0}', space=vmem, size = 0x20000, scoped, tag = 'input window, operand 0']
    #allocation4 [shape = 's32[2]{0}', space=sflag, size = 0x8, scoped, tag = 'scoped memory for tpu_custom_call.1']
    #allocation5 [shape = 's32[2]{0}', space=sflag, size = 0x8, scoped, tag = 'scoped memory for tpu_custom_call.1']
    #allocation6 [shape = 'u8[32768]{0}', space=vmem, size = 0x8000, scoped, tag = 'input window, operand 1, single buffered']
    #allocation7 [shape = 's32[1]{0}', space=sflag, size = 0x4, scoped, tag = 'scoped memory for tpu_custom_call.1']
    #allocation8 [shape = 'u8[294912]{0}', space=vmem, size = 0x48000, scoped, tag = 'input window, operand 2, single buffered']
    #allocation9 [shape = 'u8[294912]{0}', space=vmem, size = 0x48000, scoped, tag = 'input window, operand 4, single buffered']
    #allocation10 [shape = 's32[1]{0}', space=sflag, size = 0x4, scoped, tag = 'scoped memory for tpu_custom_call.1']
    #allocation11 [shape = 'u8[262144]{0}', space=vmem, size = 0x40000, scoped, tag = 'output window, operand 0']
    %11 = vsyncpa [#allocation4], 0
    %s12 = scalar_lea.sflag [#allocation4], 1
    %13 = vsyncpa %s12, 0
    %14 = vsyncpa [#allocation7], 0
    %15 = vsyncpa [#allocation10], 0
    %16 = vsyncpa [#allocation5], 0
    %s17 = scalar_lea.sflag [#allocation5], 1
    %18 = vsyncpa %s17, 0
    loop: start=0, step=1, limit=4
    $region2: #{tpu_custom_call.1} parent=1 // loop_pre_header
      _
    $region3: #{tpu_custom_call.1} parent=1 // loop_header
      %s20 = sphi 0, %s24
      %p21 = scmp.ge.s32.totalorder %s20, 4
      %s30 = sphi 0, %s32
      %s33 = sphi 0, %s30
      %s34 = sphi 0, %s33
      %s50 = sphi 0, %s34
      %s54 = sphi 0, %s54
      %s56 = sphi 0, %s54
      %s57 = sphi 0, %s56
      %s71 = sphi 0, %s57
      %s75 = sphi 0, %s75
      %s77 = sphi 0, %s75
      %s78 = sphi 0, %s77
      %s92 = sphi 0, %s78
      %s96 = sphi 0, %s96
      %s98 = sphi 0, %s96
      %s99 = sphi 0, %s98
      %s113 = sphi 0, %s99
      %s117 = sphi 0, %s117
      %s119 = sphi 0, %s117
      %s120 = sphi 0, %s119
      %s134 = sphi 0, %s120
      %s138 = sphi 0, %s138
      %s140 = sphi 0, %s138
      %s141 = sphi 0, %s140
      %s155 = sphi 0, %s141
      %s161 = sphi 0, %s163
      %s164 = sphi 0, %s161
      %s165 = sphi 0, %s164
      %s181 = sphi 0, %s165
    $region4: #{tpu_custom_call.1} parent=1 // loop_header_branch
      %23 = sbr.rel (%p21) target = $region8
    $region5: #{tpu_custom_call.1} parent=1 // loop_body
      %s25 = ssub.s32 %s20, 1
      %s26 = ssub.s32 %s20, 2
      %s27 = sadd.s32 %s20, 1
      %s28 = ssub.s32 %s20, %s27
      %p29 = scmp.eq.s32.totalorder %s28, 0
      %s31 = sadd.s32 %s30, 1
      %s32 = scalar_select %p29, %s30, %s31
      %p35 = pneg %p29
      %p36 = scmp.eq.s32.totalorder %s20, 1
      %p37 = por %p35, %p36
      %p38 = scmp.ne.s32.totalorder %s30, %s33
      %p39 = scmp.eq.s32.totalorder %s20, 0
      %p40 = por %p38, %p39
      %p41 = scmp.ne.s32.totalorder %s30, %s33
      %p42 = scmp.eq.s32.totalorder %s25, 1
      %p43 = por %p41, %p42
      %p44 = scmp.ne.s32.totalorder %s33, %s34
      %p45 = scmp.eq.s32.totalorder %s25, 0
      %p46 = por %p44, %p45
      %p47 = scmp.ne.s32.totalorder %s33, %s34
      %p48 = scmp.eq.s32.totalorder %s26, 1
      %p49 = por %p47, %p48
      %p51 = scmp.ne.s32.totalorder %s34, %s50
      %p52 = scmp.eq.s32.totalorder %s26, 0
      %p53 = por %p51, %p52
      %s55 = sadd.s32 %s54, 1
      %p58 = scmp.eq.s32.totalorder %s20, 1
      %p59 = scmp.ne.s32.totalorder %s54, %s56
      %p60 = scmp.eq.s32.totalorder %s20, 0
      %p61 = por %p59, %p60
      %p62 = scmp.ne.s32.totalorder %s54, %s56
      %p63 = scmp.eq.s32.totalorder %s25, 1
      %p64 = por %p62, %p63
      %p65 = scmp.ne.s32.totalorder %s56, %s57
      %p66 = scmp.eq.s32.totalorder %s25, 0
      %p67 = por %p65, %p66
      %p68 = scmp.ne.s32.totalorder %s56, %s57
      %p69 = scmp.eq.s32.totalorder %s26, 1
      %p70 = por %p68, %p69
      %p72 = scmp.ne.s32.totalorder %s57, %s71
      %p73 = scmp.eq.s32.totalorder %s26, 0
      %p74 = por %p72, %p73
      %s76 = sadd.s32 %s75, 1
      %p79 = scmp.eq.s32.totalorder %s20, 1
      %p80 = scmp.ne.s32.totalorder %s75, %s77
      %p81 = scmp.eq.s32.totalorder %s20, 0
      %p82 = por %p80, %p81
      %p83 = scmp.ne.s32.totalorder %s75, %s77
      %p84 = scmp.eq.s32.totalorder %s25, 1
      %p85 = por %p83, %p84
      %p86 = scmp.ne.s32.totalorder %s77, %s78
      %p87 = scmp.eq.s32.totalorder %s25, 0
      %p88 = por %p86, %p87
      %p89 = scmp.ne.s32.totalorder %s77, %s78
      %p90 = scmp.eq.s32.totalorder %s26, 1
      %p91 = por %p89, %p90
      %p93 = scmp.ne.s32.totalorder %s78, %s92
      %p94 = scmp.eq.s32.totalorder %s26, 0
      %p95 = por %p93, %p94
      %s97 = sadd.s32 %s96, 1
      %p100 = scmp.eq.s32.totalorder %s20, 1
      %p101 = scmp.ne.s32.totalorder %s96, %s98
      %p102 = scmp.eq.s32.totalorder %s20, 0
      %p103 = por %p101, %p102
      %p104 = scmp.ne.s32.totalorder %s96, %s98
      %p105 = scmp.eq.s32.totalorder %s25, 1
      %p106 = por %p104, %p105
      %p107 = scmp.ne.s32.totalorder %s98, %s99
      %p108 = scmp.eq.s32.totalorder %s25, 0
      %p109 = por %p107, %p108
      %p110 = scmp.ne.s32.totalorder %s98, %s99
      %p111 = scmp.eq.s32.totalorder %s26, 1
      %p112 = por %p110, %p111
      %p114 = scmp.ne.s32.totalorder %s99, %s113
      %p115 = scmp.eq.s32.totalorder %s26, 0
      %p116 = por %p114, %p115
      %s118 = sadd.s32 %s117, 1
      %p121 = scmp.eq.s32.totalorder %s20, 1
      %p122 = scmp.ne.s32.totalorder %s117, %s119
      %p123 = scmp.eq.s32.totalorder %s20, 0
      %p124 = por %p122, %p123
      %p125 = scmp.ne.s32.totalorder %s117, %s119
      %p126 = scmp.eq.s32.totalorder %s25, 1
      %p127 = por %p125, %p126
      %p128 = scmp.ne.s32.totalorder %s119, %s120
      %p129 = scmp.eq.s32.totalorder %s25, 0
      %p130 = por %p128, %p129
      %p131 = scmp.ne.s32.totalorder %s119, %s120
      %p132 = scmp.eq.s32.totalorder %s26, 1
      %p133 = por %p131, %p132
      %p135 = scmp.ne.s32.totalorder %s120, %s134
      %p136 = scmp.eq.s32.totalorder %s26, 0
      %p137 = por %p135, %p136
      %s139 = sadd.s32 %s138, 1
      %p142 = scmp.eq.s32.totalorder %s20, 1
      %p143 = scmp.ne.s32.totalorder %s138, %s140
      %p144 = scmp.eq.s32.totalorder %s20, 0
      %p145 = por %p143, %p144
      %p146 = scmp.ne.s32.totalorder %s138, %s140
      %p147 = scmp.eq.s32.totalorder %s25, 1
      %p148 = por %p146, %p147
      %p149 = scmp.ne.s32.totalorder %s140, %s141
      %p150 = scmp.eq.s32.totalorder %s25, 0
      %p151 = por %p149, %p150
      %p152 = scmp.ne.s32.totalorder %s140, %s141
      %p153 = scmp.eq.s32.totalorder %s26, 1
      %p154 = por %p152, %p153
      %p156 = scmp.ne.s32.totalorder %s141, %s155
      %p157 = scmp.eq.s32.totalorder %s26, 0
      %p158 = por %p156, %p157
      %s159 = ssub.s32 %s20, %s27
      %p160 = scmp.eq.s32.totalorder %s159, 0
      %s162 = sadd.s32 %s161, 1
      %s163 = scalar_select %p160, %s161, %s162
      %p166 = pneg %p160
      %p167 = scmp.eq.s32.totalorder %s20, 1
      %p168 = por %p166, %p167
      %p169 = scmp.ne.s32.totalorder %s161, %s164
      %p170 = scmp.eq.s32.totalorder %s20, 0
      %p171 = por %p169, %p170
      %p172 = scmp.ne.s32.totalorder %s161, %s164
      %p173 = scmp.eq.s32.totalorder %s25, 1
      %p174 = por %p172, %p173
      %p175 = scmp.ne.s32.totalorder %s164, %s165
      %p176 = scmp.eq.s32.totalorder %s25, 0
      %p177 = por %p175, %p176
      %p178 = scmp.ne.s32.totalorder %s164, %s165
      %p179 = scmp.eq.s32.totalorder %s26, 1
      %p180 = por %p178, %p179
      %p182 = scmp.ne.s32.totalorder %s165, %s181
      %p183 = scmp.eq.s32.totalorder %s26, 0
      %p184 = por %p182, %p183
      %p185 = scmp.le.s32.totalorder 1, %s20
      %p186 = scmp.lt.s32.totalorder %s20, 3
      %p187 = pnand %p185, %p186
      %p188 = pneg %p187
      // Predicated region
      $region9: #{tpu_custom_call.1} parent=5 // pred_check
        _
      $region10: #{tpu_custom_call.1} parent=5 // pred_check_branch
        %190 = sbr.rel (%p187) target = $region12
      $region11: #{tpu_custom_call.1} parent=5 // pred_region
        %s191 = ssub.s32 %s20, 1
        // Predicated region
        $region13: #{tpu_custom_call.1} parent=11 // pred_check
          %p192 = pneg %p67
        $region14: #{tpu_custom_call.1} parent=11 // pred_check_branch
          %194 = sbr.rel (%p192) target = $region16
        $region15: #{tpu_custom_call.1} parent=11 // pred_region
          %196 = vsyncadd [#allocation7], 0
          %s197 = sshll.u32 %s1, 4
          %s198 = int_to_ptr.hbm [resolvable:$true] %s197
          %s199 = sshll.u32 [#allocation6], 4
          %s200 = int_to_ptr.vmem [resolvable:$true] %s199
          %205 = dma.hbm_to_vmem [thread:$0]  %s198, 1024, %s200, [#allocation7], 64, 64, 4
        $region16: #{tpu_custom_call.1} parent=11 // pred_fallthru
          _
        // Predicated region
        $region17: #{tpu_custom_call.1} parent=11 // pred_check
          %p206 = pneg %p88
        $region18: #{tpu_custom_call.1} parent=11 // pred_check_branch
          %208 = sbr.rel (%p206) target = $region20
        $region19: #{tpu_custom_call.1} parent=11 // pred_region
          %210 = vsyncadd [#allocation7], 0
          %s211 = sshll.u32 %s2, 4
          %s212 = int_to_ptr.hbm [resolvable:$true] %s211
          %s213 = sshll.u32 [#allocation8], 4
          %s214 = int_to_ptr.vmem [resolvable:$true] %s213
          %219 = dma.hbm_to_vmem [thread:$0]  %s212, 9216, %s214, [#allocation7], 64, 64, 4
        $region20: #{tpu_custom_call.1} parent=11 // pred_fallthru
          _
        // Predicated region
        $region21: #{tpu_custom_call.1} parent=11 // pred_check
          %p220 = pneg %p109
        $region22: #{tpu_custom_call.1} parent=11 // pred_check_branch
          %222 = sbr.rel (%p220) target = $region24
        $region23: #{tpu_custom_call.1} parent=11 // pred_region
          _
        $region24: #{tpu_custom_call.1} parent=11 // pred_fallthru
          _
        // Predicated region
        $region25: #{tpu_custom_call.1} parent=11 // pred_check
          %p223 = pneg %p130
        $region26: #{tpu_custom_call.1} parent=11 // pred_check_branch
          %225 = sbr.rel (%p223) target = $region28
        $region27: #{tpu_custom_call.1} parent=11 // pred_region
          %227 = vsyncadd [#allocation10], 0
          %s228 = sshll.u32 %s4, 4
          %s229 = int_to_ptr.hbm [resolvable:$true] %s228
          %s230 = sshll.u32 [#allocation9], 4
          %s231 = int_to_ptr.vmem [resolvable:$true] %s230
          %236 = dma.hbm_to_vmem [thread:$0]  %s229, 9216, %s231, [#allocation10], 64, 64, 4
        $region28: #{tpu_custom_call.1} parent=11 // pred_fallthru
          _
        // Predicated region
        $region29: #{tpu_custom_call.1} parent=11 // pred_check
          %p237 = pneg %p151
        $region30: #{tpu_custom_call.1} parent=11 // pred_check_branch
          %239 = sbr.rel (%p237) target = $region32
        $region31: #{tpu_custom_call.1} parent=11 // pred_region
          _
        $region32: #{tpu_custom_call.1} parent=11 // pred_fallthru
          _
      $region12: #{tpu_custom_call.1} parent=5 // pred_fallthru
        _
      %p240 = scmp.lt.s32.totalorder %s20, 2
      // Predicated region
      $region33: #{tpu_custom_call.1} parent=5 // pred_check
        %p241 = pneg %p240
      $region34: #{tpu_custom_call.1} parent=5 // pred_check_branch
        %243 = sbr.rel (%p241) target = $region36
      $region35: #{tpu_custom_call.1} parent=5 // pred_region
        // Predicated region
        $region37: #{tpu_custom_call.1} parent=35 // pred_check
          %p244 = pneg %p40
        $region38: #{tpu_custom_call.1} parent=35 // pred_check_branch
          %246 = sbr.rel (%p244) target = $region40
        $region39: #{tpu_custom_call.1} parent=35 // pred_region
          %s247 = sand.u32 %s30, 1
          %s248 = scalar_lea.sflag [#allocation4], %s247
          %s249 = sand.u32 %s30, 1
          %s250 = smul.addr %s249, 128
          %s251 = scalar_lea.vmem [#allocation3], %s250
          %253 = vsyncadd %s248, 0
          %s254 = smul.addr %s20, 32
          %s255 = smul.addr %s254, 4
          %s256 = scalar_lea.hbm %s0, %s255
          %s257 = sshll.u32 %s256, 4
          %s258 = int_to_ptr.hbm [resolvable:$true] %s257
          %s259 = sshll.u32 %s251, 4
          %s260 = int_to_ptr.vmem [resolvable:$true] %s259
          %265 = dma.hbm_to_vmem [thread:$0]  %s258, 2048, %s260, %s248, 64, 64, 4
        $region40: #{tpu_custom_call.1} parent=35 // pred_fallthru
          _
      $region36: #{tpu_custom_call.1} parent=5 // pred_fallthru
        _
      %p266 = scmp.le.s32.totalorder 1, %s20
      %p267 = scmp.lt.s32.totalorder %s20, 3
      %p268 = pnand %p266, %p267
      %p269 = pneg %p268
      // Predicated region
      $region41: #{tpu_custom_call.1} parent=5 // pred_check
        _
      $region42: #{tpu_custom_call.1} parent=5 // pred_check_branch
        %271 = sbr.rel (%p268) target = $region44
      $region43: #{tpu_custom_call.1} parent=5 // pred_region
        %s272 = ssub.s32 %s20, 1
        %s273 = sand.u32 %s33, 1
        %s274 = scalar_lea.sflag [#allocation4], %s273
        %s275 = sand.u32 %s33, 1
        %s276 = smul.addr %s275, 128
        %s277 = scalar_lea.vmem [#allocation3], %s276
        // Predicated region
        $region45: #{tpu_custom_call.1} parent=43 // pred_check
          %p278 = pneg %p46
        $region46: #{tpu_custom_call.1} parent=43 // pred_check_branch
          %280 = sbr.rel (%p278) target = $region48
        $region47: #{tpu_custom_call.1} parent=43 // pred_region
          %282 = dma.done %s274, 2048
        $region48: #{tpu_custom_call.1} parent=43 // pred_fallthru
          _
        // Predicated region
        $region49: #{tpu_custom_call.1} parent=43 // pred_check
          %p283 = pneg %p67
        $region50: #{tpu_custom_call.1} parent=43 // pred_check_branch
          %285 = sbr.rel (%p283) target = $region52
        $region51: #{tpu_custom_call.1} parent=43 // pred_region
          %287 = dma.done [#allocation7], 1024
        $region52: #{tpu_custom_call.1} parent=43 // pred_fallthru
          _
        // Predicated region
        $region53: #{tpu_custom_call.1} parent=43 // pred_check
          %p288 = pneg %p88
        $region54: #{tpu_custom_call.1} parent=43 // pred_check_branch
          %290 = sbr.rel (%p288) target = $region56
        $region55: #{tpu_custom_call.1} parent=43 // pred_region
          %292 = dma.done [#allocation7], 9216
        $region56: #{tpu_custom_call.1} parent=43 // pred_fallthru
          _
        // Predicated region
        $region57: #{tpu_custom_call.1} parent=43 // pred_check
          %p293 = pneg %p130
        $region58: #{tpu_custom_call.1} parent=43 // pred_check_branch
          %295 = sbr.rel (%p293) target = $region60
        $region59: #{tpu_custom_call.1} parent=43 // pred_region
          %297 = dma.done [#allocation10], 9216
        $region60: #{tpu_custom_call.1} parent=43 // pred_fallthru
          _
        %s298 = sand.u32 %s33, 1
        %s299 = scalar_lea.sflag [#allocation4], %s298
        %s300 = sand.u32 %s33, 1
        %s301 = smul.addr %s300, 128
        %s302 = scalar_lea.vmem [#allocation3], %s301
        %p303 = pneg %p46
        %p304 = pneg %p43
        %p305 = pneg %p67
        %p306 = pneg %p64
        %p307 = pneg %p88
        %p308 = pneg %p85
        %p309 = pneg %p109
        %p310 = pneg %p106
        %p311 = pneg %p130
        %p312 = pneg %p127
        %p313 = pneg %p151
        %p314 = pneg %p148
        %p315 = pneg %p177
        %p316 = pneg %p174
        %s317 = sand.u32 %s164, 1
        %s318 = scalar_lea.sflag [#allocation5], %s317
        %s319 = sand.u32 %s164, 1
        %s320 = smul.addr %s319, 256
        %s321 = scalar_lea.vmem [#allocation11], %s320
        %v322 = vld [vmem:[%s277] sm:$0xf]
        %v323 = vld [vmem:[%s277 + $0x4] sm:$0xf]
        %v324 = vld [vmem:[%s277 + $0x8] sm:$0xf]
        %v325 = vld [vmem:[%s277 + $0xc] sm:$0xf]
        %v326 = vld [vmem:[%s277 + $0x10] sm:$0xf]
        %v327 = vld [vmem:[%s277 + $0x14] sm:$0xf]
        %v328 = vld [vmem:[%s277 + $0x18] sm:$0xf]
        %v329 = vld [vmem:[%s277 + $0x1c] sm:$0xf]
        %v330 = vld [vmem:[%s277 + $0x20] sm:$0xf]
        %v331 = vld [vmem:[%s277 + $0x24] sm:$0xf]
        %v332 = vld [vmem:[%s277 + $0x28] sm:$0xf]
        %v333 = vld [vmem:[%s277 + $0x2c] sm:$0xf]
        %v334 = vld [vmem:[%s277 + $0x30] sm:$0xf]
        %v335 = vld [vmem:[%s277 + $0x34] sm:$0xf]
        %v336 = vld [vmem:[%s277 + $0x38] sm:$0xf]
        %v337 = vld [vmem:[%s277 + $0x3c] sm:$0xf]
        %v338 = vld [vmem:[%s277 + $0x40] sm:$0xf]
        %v339 = vld [vmem:[%s277 + $0x44] sm:$0xf]
        %v340 = vld [vmem:[%s277 + $0x48] sm:$0xf]
        %v341 = vld [vmem:[%s277 + $0x4c] sm:$0xf]
        %v342 = vld [vmem:[%s277 + $0x50] sm:$0xf]
        %v343 = vld [vmem:[%s277 + $0x54] sm:$0xf]
        %v344 = vld [vmem:[%s277 + $0x58] sm:$0xf]
        %v345 = vld [vmem:[%s277 + $0x5c] sm:$0xf]
        %v346 = vld [vmem:[%s277 + $0x60] sm:$0xf]
        %v347 = vld [vmem:[%s277 + $0x64] sm:$0xf]
        %v348 = vld [vmem:[%s277 + $0x68] sm:$0xf]
        %v349 = vld [vmem:[%s277 + $0x6c] sm:$0xf]
        %v350 = vld [vmem:[%s277 + $0x70] sm:$0xf]
        %v351 = vld [vmem:[%s277 + $0x74] sm:$0xf]
        %v352 = vld [vmem:[%s277 + $0x78] sm:$0xf]
        %v353 = vld [vmem:[%s277 + $0x7c] sm:$0xf]
        %v354 = vld [vmem:[#allocation6] sm:$0xf]
        %v355 = vld [vmem:[#allocation6 + $0x4] sm:$0xf]
        %v356 = vld [vmem:[#allocation6 + $0x8] sm:$0xf]
        %v357 = vld [vmem:[#allocation6 + $0xc] sm:$0xf]
        %v358 = vld [vmem:[#allocation6 + $0x10] sm:$0xf]
        %v359 = vld [vmem:[#allocation6 + $0x14] sm:$0xf]
        %v360 = vld [vmem:[#allocation6 + $0x18] sm:$0xf]
        %v361 = vld [vmem:[#allocation6 + $0x1c] sm:$0xf]
        %v362 = vld [vmem:[#allocation6 + $0x20] sm:$0xf]
        %v363 = vld [vmem:[#allocation6 + $0x24] sm:$0xf]
        %v364 = vld [vmem:[#allocation6 + $0x28] sm:$0xf]
        %v365 = vld [vmem:[#allocation6 + $0x2c] sm:$0xf]
        %v366 = vld [vmem:[#allocation6 + $0x30] sm:$0xf]
        %v367 = vld [vmem:[#allocation6 + $0x34] sm:$0xf]
        %v368 = vld [vmem:[#allocation6 + $0x38] sm:$0xf]
        %v369 = vld [vmem:[#allocation6 + $0x3c] sm:$0xf]
        %v402 = vunpack.c.l.b16 %v322
        %v403 = vunpack.c.l.b16 %v323
        %v404 = vunpack.c.l.b16 %v324
        %v405 = vunpack.c.l.b16 %v325
        %v406 = vunpack.c.l.b16 %v326
        %v407 = vunpack.c.l.b16 %v327
        %v408 = vunpack.c.l.b16 %v328
        %v409 = vunpack.c.l.b16 %v329
        %v410 = vunpack.c.l.b16 %v330
        %v411 = vunpack.c.l.b16 %v331
        %v412 = vunpack.c.l.b16 %v332
        %v413 = vunpack.c.l.b16 %v333
        %v414 = vunpack.c.l.b16 %v334
        %v415 = vunpack.c.l.b16 %v335
        %v416 = vunpack.c.l.b16 %v336
        %v417 = vunpack.c.l.b16 %v337
        %v418 = vunpack.c.l.b16 %v338
        %v419 = vunpack.c.l.b16 %v339
        %v420 = vunpack.c.l.b16 %v340
        %v421 = vunpack.c.l.b16 %v341
        %v422 = vunpack.c.l.b16 %v342
        %v423 = vunpack.c.l.b16 %v343
        %v424 = vunpack.c.l.b16 %v344
        %v425 = vunpack.c.l.b16 %v345
        %v426 = vunpack.c.l.b16 %v346
        %v427 = vunpack.c.l.b16 %v347
        %v428 = vunpack.c.l.b16 %v348
        %v429 = vunpack.c.l.b16 %v349
        %v430 = vunpack.c.l.b16 %v350
        %v431 = vunpack.c.l.b16 %v351
        %v432 = vunpack.c.l.b16 %v352
        %v433 = vunpack.c.l.b16 %v353
        %v434 = vpack.c.b16 %v403, %v402
        %v435 = vpack.c.b16 %v405, %v404
        %v436 = vpack.c.b16 %v407, %v406
        %v437 = vpack.c.b16 %v409, %v408
        %v438 = vpack.c.b16 %v411, %v410
        %v439 = vpack.c.b16 %v413, %v412
        %v440 = vpack.c.b16 %v415, %v414
        %v441 = vpack.c.b16 %v417, %v416
        %v442 = vpack.c.b16 %v419, %v418
        %v443 = vpack.c.b16 %v421, %v420
        %v444 = vpack.c.b16 %v423, %v422
        %v445 = vpack.c.b16 %v425, %v424
        %v446 = vpack.c.b16 %v427, %v426
        %v447 = vpack.c.b16 %v429, %v428
        %v448 = vpack.c.b16 %v431, %v430
        %v449 = vpack.c.b16 %v433, %v432
        %v482 = vunpack.c.l.b16 %v354
        %v483 = vunpack.c.l.b16 %v355
        %v484 = vunpack.c.l.b16 %v356
        %v485 = vunpack.c.l.b16 %v357
        %v486 = vunpack.c.l.b16 %v358
        %v487 = vunpack.c.l.b16 %v359
        %v488 = vunpack.c.l.b16 %v360
        %v489 = vunpack.c.l.b16 %v361
        %v490 = vunpack.c.l.b16 %v362
        %v491 = vunpack.c.l.b16 %v363
        %v492 = vunpack.c.l.b16 %v364
        %v493 = vunpack.c.l.b16 %v365
        %v494 = vunpack.c.l.b16 %v366
        %v495 = vunpack.c.l.b16 %v367
        %v496 = vunpack.c.l.b16 %v368
        %v497 = vunpack.c.l.b16 %v369
        %v498 = vpack.c.b16 %v483, %v482
        %v499 = vpack.c.b16 %v485, %v484
        %v500 = vpack.c.b16 %v487, %v486
        %v501 = vpack.c.b16 %v489, %v488
        %v502 = vpack.c.b16 %v491, %v490
        %v503 = vpack.c.b16 %v493, %v492
        %v504 = vpack.c.b16 %v495, %v494
        %v505 = vpack.c.b16 %v497, %v496
        %514 = vmatpush.bf16.msra.mxu0 %v505
        %515 = vmatpush.bf16.msra.mxu0 %v504
        %516 = vmatpush.bf16.msra.mxu0 %v503
        %517 = vmatpush.bf16.msra.mxu0 %v502
        %518 = vmatpush.bf16.msra.mxu0 %v501
        %519 = vmatpush.bf16.msra.mxu0 %v500
        %520 = vmatpush.bf16.msra.mxu0 %v499
        %521 = vmatpush.bf16.msra.mxu0 %v498
        %522 = vmatmul.bf16.gmra.mxu0 %v434
        %v523 = vpop.f32.mrf.mxu0
        %v524 = vadd.f32 0.0, %v523
        %v525 = vpop.f32.mrf.mxu0
        %v526 = vadd.f32 0.0, %v525
        %527 = vmatmul.bf16.gmra.mxu0 %v435
        %v528 = vpop.f32.mrf.mxu0
        %v529 = vadd.f32 0.0, %v528
        %v530 = vpop.f32.mrf.mxu0
        %v531 = vadd.f32 0.0, %v530
        %532 = vmatmul.bf16.gmra.mxu0 %v436
        %v533 = vpop.f32.mrf.mxu0
        %v534 = vadd.f32 0.0, %v533
        %v535 = vpop.f32.mrf.mxu0
        %v536 = vadd.f32 0.0, %v535
        %537 = vmatmul.bf16.gmra.mxu0 %v437
        %v538 = vpop.f32.mrf.mxu0
        %v539 = vadd.f32 0.0, %v538
        %v540 = vpop.f32.mrf.mxu0
        %v541 = vadd.f32 0.0, %v540
        %542 = vmatmul.bf16.gmra.mxu0 %v438
        %v543 = vpop.f32.mrf.mxu0
        %v544 = vadd.f32 0.0, %v543
        %v545 = vpop.f32.mrf.mxu0
        %v546 = vadd.f32 0.0, %v545
        %547 = vmatmul.bf16.gmra.mxu0 %v439
        %v548 = vpop.f32.mrf.mxu0
        %v549 = vadd.f32 0.0, %v548
        %v550 = vpop.f32.mrf.mxu0
        %v551 = vadd.f32 0.0, %v550
        %552 = vmatmul.bf16.gmra.mxu0 %v440
        %v553 = vpop.f32.mrf.mxu0
        %v554 = vadd.f32 0.0, %v553
        %v555 = vpop.f32.mrf.mxu0
        %v556 = vadd.f32 0.0, %v555
        %557 = vmatmul.bf16.gmra.mxu0 %v441
        %v558 = vpop.f32.mrf.mxu0
        %v559 = vadd.f32 0.0, %v558
        %v560 = vpop.f32.mrf.mxu0
        %v561 = vadd.f32 0.0, %v560
        %562 = vmatmul.bf16.gmra.mxu0 %v442
        %v563 = vpop.f32.mrf.mxu0
        %v564 = vadd.f32 0.0, %v563
        %v565 = vpop.f32.mrf.mxu0
        %v566 = vadd.f32 0.0, %v565
        %567 = vmatmul.bf16.gmra.mxu0 %v443
        %v568 = vpop.f32.mrf.mxu0
        %v569 = vadd.f32 0.0, %v568
        %v570 = vpop.f32.mrf.mxu0
        %v571 = vadd.f32 0.0, %v570
        %572 = vmatmul.bf16.gmra.mxu0 %v444
        %v573 = vpop.f32.mrf.mxu0
        %v574 = vadd.f32 0.0, %v573
        %v575 = vpop.f32.mrf.mxu0
        %v576 = vadd.f32 0.0, %v575
        %577 = vmatmul.bf16.gmra.mxu0 %v445
        %v578 = vpop.f32.mrf.mxu0
        %v579 = vadd.f32 0.0, %v578
        %v580 = vpop.f32.mrf.mxu0
        %v581 = vadd.f32 0.0, %v580
        %582 = vmatmul.bf16.gmra.mxu0 %v446
        %v583 = vpop.f32.mrf.mxu0
        %v584 = vadd.f32 0.0, %v583
        %v585 = vpop.f32.mrf.mxu0
        %v586 = vadd.f32 0.0, %v585
        %587 = vmatmul.bf16.gmra.mxu0 %v447
        %v588 = vpop.f32.mrf.mxu0
        %v589 = vadd.f32 0.0, %v588
        %v590 = vpop.f32.mrf.mxu0
        %v591 = vadd.f32 0.0, %v590
        %592 = vmatmul.bf16.gmra.mxu0 %v448
        %v593 = vpop.f32.mrf.mxu0
        %v594 = vadd.f32 0.0, %v593
        %v595 = vpop.f32.mrf.mxu0
        %v596 = vadd.f32 0.0, %v595
        %597 = vmatmul.bf16.gmra.mxu0 %v449
        %v598 = vpop.f32.mrf.mxu0
        %v599 = vadd.f32 0.0, %v598
        %v600 = vpop.f32.mrf.mxu0
        %v601 = vadd.f32 0.0, %v600
        %602 = vdwg.mxu0
        %603 = vst [vmem:[#allocation2] sm:$0xff] 0.0
        %604 = vst [vmem:[#allocation2 + $0x8] sm:$0xff] 0.0
        %605 = vst [vmem:[#allocation2 + $0x10] sm:$0xff] 0.0
        %606 = vst [vmem:[#allocation2 + $0x18] sm:$0xff] 0.0
        %s607 = scalar_lea.vmem [#allocation2], 544
        %608 = vst [vmem:[%s607] sm:$0xff] 0.0
        %609 = vst [vmem:[%s607 + $0x8] sm:$0xff] 0.0
        %610 = vst [vmem:[%s607 + $0x10] sm:$0xff] 0.0
        %611 = vst [vmem:[%s607 + $0x18] sm:$0xff] 0.0
        %s612 = scalar_lea.vmem [#allocation2], 32
        %613 = vst [vmem:[%s612] sm:$0xff] 0.0
        %614 = vst [vmem:[%s612 + $0x20] sm:$0xff] 0.0
        %615 = vst [vmem:[%s612 + $0x40] sm:$0xff] 0.0
        %616 = vst [vmem:[%s612 + $0x60] sm:$0xff] 0.0
        %617 = vst [vmem:[%s612 + $0x80] sm:$0xff] 0.0
        %618 = vst [vmem:[%s612 + $0xa0] sm:$0xff] 0.0
        %619 = vst [vmem:[%s612 + $0xc0] sm:$0xff] 0.0
        %620 = vst [vmem:[%s612 + $0xe0] sm:$0xff] 0.0
        %621 = vst [vmem:[%s612 + $0x100] sm:$0xff] 0.0
        %622 = vst [vmem:[%s612 + $0x120] sm:$0xff] 0.0
        %623 = vst [vmem:[%s612 + $0x140] sm:$0xff] 0.0
        %624 = vst [vmem:[%s612 + $0x160] sm:$0xff] 0.0
        %625 = vst [vmem:[%s612 + $0x180] sm:$0xff] 0.0
        %626 = vst [vmem:[%s612 + $0x1a0] sm:$0xff] 0.0
        %627 = vst [vmem:[%s612 + $0x1c0] sm:$0xff] 0.0
        %628 = vst [vmem:[%s612 + $0x1e0] sm:$0xff] 0.0
        %629 = vst [vmem:[%s612 + $0x18] sm:$0xff] 0.0
        %630 = vst [vmem:[%s612 + $0x38] sm:$0xff] 0.0
        %631 = vst [vmem:[%s612 + $0x58] sm:$0xff] 0.0
        %632 = vst [vmem:[%s612 + $0x78] sm:$0xff] 0.0
        %633 = vst [vmem:[%s612 + $0x98] sm:$0xff] 0.0
        %634 = vst [vmem:[%s612 + $0xb8] sm:$0xff] 0.0
        %635 = vst [vmem:[%s612 + $0xd8] sm:$0xff] 0.0
        %636 = vst [vmem:[%s612 + $0xf8] sm:$0xff] 0.0
        %637 = vst [vmem:[%s612 + $0x118] sm:$0xff] 0.0
        %638 = vst [vmem:[%s612 + $0x138] sm:$0xff] 0.0
        %639 = vst [vmem:[%s612 + $0x158] sm:$0xff] 0.0
        %640 = vst [vmem:[%s612 + $0x178] sm:$0xff] 0.0
        %641 = vst [vmem:[%s612 + $0x198] sm:$0xff] 0.0
        %642 = vst [vmem:[%s612 + $0x1b8] sm:$0xff] 0.0
        %643 = vst [vmem:[%s612 + $0x1d8] sm:$0xff] 0.0
        %644 = vst [vmem:[%s612 + $0x1f8] sm:$0xff] 0.0
        %645 = vst [vmem:[%s612 + $0x8] sm:$0xff] %v524
        %646 = vst [vmem:[%s612 + $0x10] sm:$0xff] %v526
        %647 = vst [vmem:[%s612 + $0x28] sm:$0xff] %v529
        %648 = vst [vmem:[%s612 + $0x30] sm:$0xff] %v531
        %649 = vst [vmem:[%s612 + $0x48] sm:$0xff] %v534
        %650 = vst [vmem:[%s612 + $0x50] sm:$0xff] %v536
        %651 = vst [vmem:[%s612 + $0x68] sm:$0xff] %v539
        %652 = vst [vmem:[%s612 + $0x70] sm:$0xff] %v541
        %653 = vst [vmem:[%s612 + $0x88] sm:$0xff] %v544
        %654 = vst [vmem:[%s612 + $0x90] sm:$0xff] %v546
        %655 = vst [vmem:[%s612 + $0xa8] sm:$0xff] %v549
        %656 = vst [vmem:[%s612 + $0xb0] sm:$0xff] %v551
        %657 = vst [vmem:[%s612 + $0xc8] sm:$0xff] %v554
        %658 = vst [vmem:[%s612 + $0xd0] sm:$0xff] %v556
        %659 = vst [vmem:[%s612 + $0xe8] sm:$0xff] %v559
        %660 = vst [vmem:[%s612 + $0xf0] sm:$0xff] %v561
        %661 = vst [vmem:[%s612 + $0x108] sm:$0xff] %v564
        %662 = vst [vmem:[%s612 + $0x110] sm:$0xff] %v566
        %663 = vst [vmem:[%s612 + $0x128] sm:$0xff] %v569
        %664 = vst [vmem:[%s612 + $0x130] sm:$0xff] %v571
        %665 = vst [vmem:[%s612 + $0x148] sm:$0xff] %v574
        %666 = vst [vmem:[%s612 + $0x150] sm:$0xff] %v576
        %667 = vst [vmem:[%s612 + $0x168] sm:$0xff] %v579
        %668 = vst [vmem:[%s612 + $0x170] sm:$0xff] %v581
        %669 = vst [vmem:[%s612 + $0x188] sm:$0xff] %v584
        %670 = vst [vmem:[%s612 + $0x190] sm:$0xff] %v586
        %671 = vst [vmem:[%s612 + $0x1a8] sm:$0xff] %v589
        %672 = vst [vmem:[%s612 + $0x1b0] sm:$0xff] %v591
        %673 = vst [vmem:[%s612 + $0x1c8] sm:$0xff] %v594
        %674 = vst [vmem:[%s612 + $0x1d0] sm:$0xff] %v596
        %675 = vst [vmem:[%s612 + $0x1e8] sm:$0xff] %v599
        %676 = vst [vmem:[%s612 + $0x1f0] sm:$0xff] %v601
        %v677 = vld [vmem:[#allocation2 + $0x7] sm:$0xff]
        %v678 = vld [vmem:[#allocation2 + $0xf] sm:$0xff]
        %v679 = vld [vmem:[#allocation2 + $0x27] sm:$0xff]
        %v680 = vld [vmem:[#allocation2 + $0x2f] sm:$0xff]
        %v681 = vld [vmem:[#allocation2 + $0x47] sm:$0xff]
        %v682 = vld [vmem:[#allocation2 + $0x4f] sm:$0xff]
        %v683 = vld [vmem:[#allocation2 + $0x67] sm:$0xff]
        %v684 = vld [vmem:[#allocation2 + $0x6f] sm:$0xff]
        %v685 = vld [vmem:[#allocation2 + $0x87] sm:$0xff]
        %v686 = vld [vmem:[#allocation2 + $0x8f] sm:$0xff]
        %v687 = vld [vmem:[#allocation2 + $0xa7] sm:$0xff]
        %v688 = vld [vmem:[#allocation2 + $0xaf] sm:$0xff]
        %v689 = vld [vmem:[#allocation2 + $0xc7] sm:$0xff]
        %v690 = vld [vmem:[#allocation2 + $0xcf] sm:$0xff]
        %v691 = vld [vmem:[#allocation2 + $0xe7] sm:$0xff]
        %v692 = vld [vmem:[#allocation2 + $0xef] sm:$0xff]
        %v693 = vld [vmem:[#allocation2 + $0x107] sm:$0xff]
        %v694 = vld [vmem:[#allocation2 + $0x10f] sm:$0xff]
        %v695 = vld [vmem:[#allocation2 + $0x127] sm:$0xff]
        %v696 = vld [vmem:[#allocation2 + $0x12f] sm:$0xff]
        %v697 = vld [vmem:[#allocation2 + $0x147] sm:$0xff]
        %v698 = vld [vmem:[#allocation2 + $0x14f] sm:$0xff]
        %v699 = vld [vmem:[#allocation2 + $0x167] sm:$0xff]
        %v700 = vld [vmem:[#allocation2 + $0x16f] sm:$0xff]
        %v701 = vld [vmem:[#allocation2 + $0x187] sm:$0xff]
        %v702 = vld [vmem:[#allocation2 + $0x18f] sm:$0xff]
        %v703 = vld [vmem:[#allocation2 + $0x1a7] sm:$0xff]
        %v704 = vld [vmem:[#allocation2 + $0x1af] sm:$0xff]
        %v705 = vld [vmem:[#allocation2 + $0x1c7] sm:$0xff]
        %v706 = vld [vmem:[#allocation2 + $0x1cf] sm:$0xff]
        %v707 = vld [vmem:[#allocation2 + $0x1e7] sm:$0xff]
        %v708 = vld [vmem:[#allocation2 + $0x1ef] sm:$0xff]
        %v709 = vpack.c.bf16 %v677, %v677
        %v710 = vpack.c.bf16 %v678, %v678
        %v711 = vpack.c.bf16 %v679, %v679
        %v712 = vpack.c.bf16 %v680, %v680
        %v713 = vpack.c.bf16 %v681, %v681
        %v714 = vpack.c.bf16 %v682, %v682
        %v715 = vpack.c.bf16 %v683, %v683
        %v716 = vpack.c.bf16 %v684, %v684
        %v717 = vpack.c.bf16 %v685, %v685
        %v718 = vpack.c.bf16 %v686, %v686
        %v719 = vpack.c.bf16 %v687, %v687
        %v720 = vpack.c.bf16 %v688, %v688
        %v721 = vpack.c.bf16 %v689, %v689
        %v722 = vpack.c.bf16 %v690, %v690
        %v723 = vpack.c.bf16 %v691, %v691
        %v724 = vpack.c.bf16 %v692, %v692
        %v725 = vpack.c.bf16 %v693, %v693
        %v726 = vpack.c.bf16 %v694, %v694
        %v727 = vpack.c.bf16 %v695, %v695
        %v728 = vpack.c.bf16 %v696, %v696
        %v729 = vpack.c.bf16 %v697, %v697
        %v730 = vpack.c.bf16 %v698, %v698
        %v731 = vpack.c.bf16 %v699, %v699
        %v732 = vpack.c.bf16 %v700, %v700
        %v733 = vpack.c.bf16 %v701, %v701
        %v734 = vpack.c.bf16 %v702, %v702
        %v735 = vpack.c.bf16 %v703, %v703
        %v736 = vpack.c.bf16 %v704, %v704
        %v737 = vpack.c.bf16 %v705, %v705
        %v738 = vpack.c.bf16 %v706, %v706
        %v739 = vpack.c.bf16 %v707, %v707
        %v740 = vpack.c.bf16 %v708, %v708
        %v741 = vld [vmem:[#allocation8] sm:$0xf]
        %v742 = vld [vmem:[#allocation8 + $0x4] sm:$0xf]
        %v743 = vld [vmem:[#allocation8 + $0x8] sm:$0xf]
        %v744 = vld [vmem:[#allocation8 + $0xc] sm:$0xf]
        %v745 = vld [vmem:[#allocation8 + $0x10] sm:$0xf]
        %v746 = vld [vmem:[#allocation8 + $0x14] sm:$0xf]
        %v747 = vld [vmem:[#allocation8 + $0x18] sm:$0xf]
        %v748 = vld [vmem:[#allocation8 + $0x1c] sm:$0xf]
        %v749 = vld [vmem:[#allocation8 + $0x20] sm:$0xf]
        %v750 = vld [vmem:[#allocation8 + $0x24] sm:$0xf]
        %v751 = vld [vmem:[#allocation8 + $0x28] sm:$0xf]
        %v752 = vld [vmem:[#allocation8 + $0x2c] sm:$0xf]
        %v753 = vld [vmem:[#allocation8 + $0x30] sm:$0xf]
        %v754 = vld [vmem:[#allocation8 + $0x34] sm:$0xf]
        %v755 = vld [vmem:[#allocation8 + $0x38] sm:$0xf]
        %v756 = vld [vmem:[#allocation8 + $0x3c] sm:$0xf]
        %v757 = vld [vmem:[#allocation2 + $0x8] sm:$0xff]
        %v758 = vld [vmem:[#allocation2 + $0x10] sm:$0xff]
        %v759 = vld [vmem:[#allocation2 + $0x28] sm:$0xff]
        %v760 = vld [vmem:[#allocation2 + $0x30] sm:$0xff]
        %v761 = vld [vmem:[#allocation2 + $0x48] sm:$0xff]
        %v762 = vld [vmem:[#allocation2 + $0x50] sm:$0xff]
        %v763 = vld [vmem:[#allocation2 + $0x68] sm:$0xff]
        %v764 = vld [vmem:[#allocation2 + $0x70] sm:$0xff]
        %v765 = vld [vmem:[#allocation2 + $0x88] sm:$0xff]
        %v766 = vld [vmem:[#allocation2 + $0x90] sm:$0xff]
        %v767 = vld [vmem:[#allocation2 + $0xa8] sm:$0xff]
        %v768 = vld [vmem:[#allocation2 + $0xb0] sm:$0xff]
        %v769 = vld [vmem:[#allocation2 + $0xc8] sm:$0xff]
        %v770 = vld [vmem:[#allocation2 + $0xd0] sm:$0xff]
        %v771 = vld [vmem:[#allocation2 + $0xe8] sm:$0xff]
        %v772 = vld [vmem:[#allocation2 + $0xf0] sm:$0xff]
        %v773 = vld [vmem:[#allocation2 + $0x108] sm:$0xff]
        %v774 = vld [vmem:[#allocation2 + $0x110] sm:$0xff]
        %v775 = vld [vmem:[#allocation2 + $0x128] sm:$0xff]
        %v776 = vld [vmem:[#allocation2 + $0x130] sm:$0xff]
        %v777 = vld [vmem:[#allocation2 + $0x148] sm:$0xff]
        %v778 = vld [vmem:[#allocation2 + $0x150] sm:$0xff]
        %v779 = vld [vmem:[#allocation2 + $0x168] sm:$0xff]
        %v780 = vld [vmem:[#allocation2 + $0x170] sm:$0xff]
        %v781 = vld [vmem:[#allocation2 + $0x188] sm:$0xff]
        %v782 = vld [vmem:[#allocation2 + $0x190] sm:$0xff]
        %v783 = vld [vmem:[#allocation2 + $0x1a8] sm:$0xff]
        %v784 = vld [vmem:[#allocation2 + $0x1b0] sm:$0xff]
        %v785 = vld [vmem:[#allocation2 + $0x1c8] sm:$0xff]
        %v786 = vld [vmem:[#allocation2 + $0x1d0] sm:$0xff]
        %v787 = vld [vmem:[#allocation2 + $0x1e8] sm:$0xff]
        %v788 = vld [vmem:[#allocation2 + $0x1f0] sm:$0xff]
        %v789 = vpack.c.bf16 %v757, %v757
        %v790 = vpack.c.bf16 %v758, %v758
        %v791 = vpack.c.bf16 %v759, %v759
        %v792 = vpack.c.bf16 %v760, %v760
        %v793 = vpack.c.bf16 %v761, %v761
        %v794 = vpack.c.bf16 %v762, %v762
        %v795 = vpack.c.bf16 %v763, %v763
        %v796 = vpack.c.bf16 %v764, %v764
        %v797 = vpack.c.bf16 %v765, %v765
        %v798 = vpack.c.bf16 %v766, %v766
        %v799 = vpack.c.bf16 %v767, %v767
        %v800 = vpack.c.bf16 %v768, %v768
        %v801 = vpack.c.bf16 %v769, %v769
        %v802 = vpack.c.bf16 %v770, %v770
        %v803 = vpack.c.bf16 %v771, %v771
        %v804 = vpack.c.bf16 %v772, %v772
        %v805 = vpack.c.bf16 %v773, %v773
        %v806 = vpack.c.bf16 %v774, %v774
        %v807 = vpack.c.bf16 %v775, %v775
        %v808 = vpack.c.bf16 %v776, %v776
        %v809 = vpack.c.bf16 %v777, %v777
        %v810 = vpack.c.bf16 %v778, %v778
        %v811 = vpack.c.bf16 %v779, %v779
        %v812 = vpack.c.bf16 %v780, %v780
        %v813 = vpack.c.bf16 %v781, %v781
        %v814 = vpack.c.bf16 %v782, %v782
        %v815 = vpack.c.bf16 %v783, %v783
        %v816 = vpack.c.bf16 %v784, %v784
        %v817 = vpack.c.bf16 %v785, %v785
        %v818 = vpack.c.bf16 %v786, %v786
        %v819 = vpack.c.bf16 %v787, %v787
        %v820 = vpack.c.bf16 %v788, %v788
        %s821 = scalar_lea.vmem [#allocation8], 64
        %v822 = vld [vmem:[%s821] sm:$0xf]
        %v823 = vld [vmem:[%s821 + $0x4] sm:$0xf]
        %v824 = vld [vmem:[%s821 + $0x8] sm:$0xf]
        %v825 = vld [vmem:[%s821 + $0xc] sm:$0xf]
        %v826 = vld [vmem:[%s821 + $0x10] sm:$0xf]
        %v827 = vld [vmem:[%s821 + $0x14] sm:$0xf]
        %v828 = vld [vmem:[%s821 + $0x18] sm:$0xf]
        %v829 = vld [vmem:[%s821 + $0x1c] sm:$0xf]
        %v830 = vld [vmem:[%s821 + $0x20] sm:$0xf]
        %v831 = vld [vmem:[%s821 + $0x24] sm:$0xf]
        %v832 = vld [vmem:[%s821 + $0x28] sm:$0xf]
        %v833 = vld [vmem:[%s821 + $0x2c] sm:$0xf]
        %v834 = vld [vmem:[%s821 + $0x30] sm:$0xf]
        %v835 = vld [vmem:[%s821 + $0x34] sm:$0xf]
        %v836 = vld [vmem:[%s821 + $0x38] sm:$0xf]
        %v837 = vld [vmem:[%s821 + $0x3c] sm:$0xf]
        %v870 = vunpack.c.l.b16 %v789
        %v871 = vunpack.c.l.b16 %v790
        %v872 = vunpack.c.l.b16 %v791
        %v873 = vunpack.c.l.b16 %v792
        %v874 = vunpack.c.l.b16 %v793
        %v875 = vunpack.c.l.b16 %v794
        %v876 = vunpack.c.l.b16 %v795
        %v877 = vunpack.c.l.b16 %v796
        %v878 = vunpack.c.l.b16 %v797
        %v879 = vunpack.c.l.b16 %v798
        %v880 = vunpack.c.l.b16 %v799
        %v881 = vunpack.c.l.b16 %v800
        %v882 = vunpack.c.l.b16 %v801
        %v883 = vunpack.c.l.b16 %v802
        %v884 = vunpack.c.l.b16 %v803
        %v885 = vunpack.c.l.b16 %v804
        %v886 = vunpack.c.l.b16 %v805
        %v887 = vunpack.c.l.b16 %v806
        %v888 = vunpack.c.l.b16 %v807
        %v889 = vunpack.c.l.b16 %v808
        %v890 = vunpack.c.l.b16 %v809
        %v891 = vunpack.c.l.b16 %v810
        %v892 = vunpack.c.l.b16 %v811
        %v893 = vunpack.c.l.b16 %v812
        %v894 = vunpack.c.l.b16 %v813
        %v895 = vunpack.c.l.b16 %v814
        %v896 = vunpack.c.l.b16 %v815
        %v897 = vunpack.c.l.b16 %v816
        %v898 = vunpack.c.l.b16 %v817
        %v899 = vunpack.c.l.b16 %v818
        %v900 = vunpack.c.l.b16 %v819
        %v901 = vunpack.c.l.b16 %v820
        %v902 = vpack.c.b16 %v871, %v870
        %v903 = vpack.c.b16 %v873, %v872
        %v904 = vpack.c.b16 %v875, %v874
        %v905 = vpack.c.b16 %v877, %v876
        %v906 = vpack.c.b16 %v879, %v878
        %v907 = vpack.c.b16 %v881, %v880
        %v908 = vpack.c.b16 %v883, %v882
        %v909 = vpack.c.b16 %v885, %v884
        %v910 = vpack.c.b16 %v887, %v886
        %v911 = vpack.c.b16 %v889, %v888
        %v912 = vpack.c.b16 %v891, %v890
        %v913 = vpack.c.b16 %v893, %v892
        %v914 = vpack.c.b16 %v895, %v894
        %v915 = vpack.c.b16 %v897, %v896
        %v916 = vpack.c.b16 %v899, %v898
        %v917 = vpack.c.b16 %v901, %v900
        %v950 = vunpack.c.l.b16 %v822
        %v951 = vunpack.c.l.b16 %v823
        %v952 = vunpack.c.l.b16 %v824
        %v953 = vunpack.c.l.b16 %v825
        %v954 = vunpack.c.l.b16 %v826
        %v955 = vunpack.c.l.b16 %v827
        %v956 = vunpack.c.l.b16 %v828
        %v957 = vunpack.c.l.b16 %v829
        %v958 = vunpack.c.l.b16 %v830
        %v959 = vunpack.c.l.b16 %v831
        %v960 = vunpack.c.l.b16 %v832
        %v961 = vunpack.c.l.b16 %v833
        %v962 = vunpack.c.l.b16 %v834
        %v963 = vunpack.c.l.b16 %v835
        %v964 = vunpack.c.l.b16 %v836
        %v965 = vunpack.c.l.b16 %v837
        %v966 = vpack.c.b16 %v951, %v950
        %v967 = vpack.c.b16 %v953, %v952
        %v968 = vpack.c.b16 %v955, %v954
        %v969 = vpack.c.b16 %v957, %v956
        %v970 = vpack.c.b16 %v959, %v958
        %v971 = vpack.c.b16 %v961, %v960
        %v972 = vpack.c.b16 %v963, %v962
        %v973 = vpack.c.b16 %v965, %v964
        %982 = vmatpush.bf16.msra.mxu0 %v973
        %983 = vmatpush.bf16.msra.mxu0 %v972
        %984 = vmatpush.bf16.msra.mxu0 %v971
        %985 = vmatpush.bf16.msra.mxu0 %v970
        %986 = vmatpush.bf16.msra.mxu0 %v969
        %987 = vmatpush.bf16.msra.mxu0 %v968
        %988 = vmatpush.bf16.msra.mxu0 %v967
        %989 = vmatpush.bf16.msra.mxu0 %v966
        %990 = vmatmul.bf16.gmra.mxu0 %v902
        %v991 = vpop.f32.mrf.mxu0
        %v992 = vadd.f32 0.0, %v991
        %v993 = vpop.f32.mrf.mxu0
        %v994 = vadd.f32 0.0, %v993
        %995 = vmatmul.bf16.gmra.mxu0 %v903
        %v996 = vpop.f32.mrf.mxu0
        %v997 = vadd.f32 0.0, %v996
        %v998 = vpop.f32.mrf.mxu0
        %v999 = vadd.f32 0.0, %v998
        %1000 = vmatmul.bf16.gmra.mxu0 %v904
        %v1001 = vpop.f32.mrf.mxu0
        %v1002 = vadd.f32 0.0, %v1001
        %v1003 = vpop.f32.mrf.mxu0
        %v1004 = vadd.f32 0.0, %v1003
        %1005 = vmatmul.bf16.gmra.mxu0 %v905
        %v1006 = vpop.f32.mrf.mxu0
        %v1007 = vadd.f32 0.0, %v1006
        %v1008 = vpop.f32.mrf.mxu0
        %v1009 = vadd.f32 0.0, %v1008
        %1010 = vmatmul.bf16.gmra.mxu0 %v906
        %v1011 = vpop.f32.mrf.mxu0
        %v1012 = vadd.f32 0.0, %v1011
        %v1013 = vpop.f32.mrf.mxu0
        %v1014 = vadd.f32 0.0, %v1013
        %1015 = vmatmul.bf16.gmra.mxu0 %v907
        %v1016 = vpop.f32.mrf.mxu0
        %v1017 = vadd.f32 0.0, %v1016
        %v1018 = vpop.f32.mrf.mxu0
        %v1019 = vadd.f32 0.0, %v1018
        %1020 = vmatmul.bf16.gmra.mxu0 %v908
        %v1021 = vpop.f32.mrf.mxu0
        %v1022 = vadd.f32 0.0, %v1021
        %v1023 = vpop.f32.mrf.mxu0
        %v1024 = vadd.f32 0.0, %v1023
        %1025 = vmatmul.bf16.gmra.mxu0 %v909
        %v1026 = vpop.f32.mrf.mxu0
        %v1027 = vadd.f32 0.0, %v1026
        %v1028 = vpop.f32.mrf.mxu0
        %v1029 = vadd.f32 0.0, %v1028
        %1030 = vmatmul.bf16.gmra.mxu0 %v910
        %v1031 = vpop.f32.mrf.mxu0
        %v1032 = vadd.f32 0.0, %v1031
        %v1033 = vpop.f32.mrf.mxu0
        %v1034 = vadd.f32 0.0, %v1033
        %1035 = vmatmul.bf16.gmra.mxu0 %v911
        %v1036 = vpop.f32.mrf.mxu0
        %v1037 = vadd.f32 0.0, %v1036
        %v1038 = vpop.f32.mrf.mxu0
        %v1039 = vadd.f32 0.0, %v1038
        %1040 = vmatmul.bf16.gmra.mxu0 %v912
        %v1041 = vpop.f32.mrf.mxu0
        %v1042 = vadd.f32 0.0, %v1041
        %v1043 = vpop.f32.mrf.mxu0
        %v1044 = vadd.f32 0.0, %v1043
        %1045 = vmatmul.bf16.gmra.mxu0 %v913
        %v1046 = vpop.f32.mrf.mxu0
        %v1047 = vadd.f32 0.0, %v1046
        %v1048 = vpop.f32.mrf.mxu0
        %v1049 = vadd.f32 0.0, %v1048
        %1050 = vmatmul.bf16.gmra.mxu0 %v914
        %v1051 = vpop.f32.mrf.mxu0
        %v1052 = vadd.f32 0.0, %v1051
        %v1053 = vpop.f32.mrf.mxu0
        %v1054 = vadd.f32 0.0, %v1053
        %1055 = vmatmul.bf16.gmra.mxu0 %v915
        %v1056 = vpop.f32.mrf.mxu0
        %v1057 = vadd.f32 0.0, %v1056
        %v1058 = vpop.f32.mrf.mxu0
        %v1059 = vadd.f32 0.0, %v1058
        %1060 = vmatmul.bf16.gmra.mxu0 %v916
        %v1061 = vpop.f32.mrf.mxu0
        %v1062 = vadd.f32 0.0, %v1061
        %v1063 = vpop.f32.mrf.mxu0
        %v1064 = vadd.f32 0.0, %v1063
        %1065 = vmatmul.bf16.gmra.mxu0 %v917
        %v1066 = vpop.f32.mrf.mxu0
        %v1067 = vadd.f32 0.0, %v1066
        %v1068 = vpop.f32.mrf.mxu0
        %v1069 = vadd.f32 0.0, %v1068
        %1070 = vdwg.mxu0
        %v1103 = vunpack.c.l.b16 %v709
        %v1104 = vunpack.c.l.b16 %v710
        %v1105 = vunpack.c.l.b16 %v711
        %v1106 = vunpack.c.l.b16 %v712
        %v1107 = vunpack.c.l.b16 %v713
        %v1108 = vunpack.c.l.b16 %v714
        %v1109 = vunpack.c.l.b16 %v715
        %v1110 = vunpack.c.l.b16 %v716
        %v1111 = vunpack.c.l.b16 %v717
        %v1112 = vunpack.c.l.b16 %v718
        %v1113 = vunpack.c.l.b16 %v719
        %v1114 = vunpack.c.l.b16 %v720
        %v1115 = vunpack.c.l.b16 %v721
        %v1116 = vunpack.c.l.b16 %v722
        %v1117 = vunpack.c.l.b16 %v723
        %v1118 = vunpack.c.l.b16 %v724
        %v1119 = vunpack.c.l.b16 %v725
        %v1120 = vunpack.c.l.b16 %v726
        %v1121 = vunpack.c.l.b16 %v727
        %v1122 = vunpack.c.l.b16 %v728
        %v1123 = vunpack.c.l.b16 %v729
        %v1124 = vunpack.c.l.b16 %v730
        %v1125 = vunpack.c.l.b16 %v731
        %v1126 = vunpack.c.l.b16 %v732
        %v1127 = vunpack.c.l.b16 %v733
        %v1128 = vunpack.c.l.b16 %v734
        %v1129 = vunpack.c.l.b16 %v735
        %v1130 = vunpack.c.l.b16 %v736
        %v1131 = vunpack.c.l.b16 %v737
        %v1132 = vunpack.c.l.b16 %v738
        %v1133 = vunpack.c.l.b16 %v739
        %v1134 = vunpack.c.l.b16 %v740
        %v1135 = vpack.c.b16 %v1104, %v1103
        %v1136 = vpack.c.b16 %v1106, %v1105
        %v1137 = vpack.c.b16 %v1108, %v1107
        %v1138 = vpack.c.b16 %v1110, %v1109
        %v1139 = vpack.c.b16 %v1112, %v1111
        %v1140 = vpack.c.b16 %v1114, %v1113
        %v1141 = vpack.c.b16 %v1116, %v1115
        %v1142 = vpack.c.b16 %v1118, %v1117
        %v1143 = vpack.c.b16 %v1120, %v1119
        %v1144 = vpack.c.b16 %v1122, %v1121
        %v1145 = vpack.c.b16 %v1124, %v1123
        %v1146 = vpack.c.b16 %v1126, %v1125
        %v1147 = vpack.c.b16 %v1128, %v1127
        %v1148 = vpack.c.b16 %v1130, %v1129
        %v1149 = vpack.c.b16 %v1132, %v1131
        %v1150 = vpack.c.b16 %v1134, %v1133
        %v1183 = vunpack.c.l.b16 %v741
        %v1184 = vunpack.c.l.b16 %v742
        %v1185 = vunpack.c.l.b16 %v743
        %v1186 = vunpack.c.l.b16 %v744
        %v1187 = vunpack.c.l.b16 %v745
        %v1188 = vunpack.c.l.b16 %v746
        %v1189 = vunpack.c.l.b16 %v747
        %v1190 = vunpack.c.l.b16 %v748
        %v1191 = vunpack.c.l.b16 %v749
        %v1192 = vunpack.c.l.b16 %v750
        %v1193 = vunpack.c.l.b16 %v751
        %v1194 = vunpack.c.l.b16 %v752
        %v1195 = vunpack.c.l.b16 %v753
        %v1196 = vunpack.c.l.b16 %v754
        %v1197 = vunpack.c.l.b16 %v755
        %v1198 = vunpack.c.l.b16 %v756
        %v1199 = vpack.c.b16 %v1184, %v1183
        %v1200 = vpack.c.b16 %v1186, %v1185
        %v1201 = vpack.c.b16 %v1188, %v1187
        %v1202 = vpack.c.b16 %v1190, %v1189
        %v1203 = vpack.c.b16 %v1192, %v1191
        %v1204 = vpack.c.b16 %v1194, %v1193
        %v1205 = vpack.c.b16 %v1196, %v1195
        %v1206 = vpack.c.b16 %v1198, %v1197
        %1215 = vmatpush.bf16.msra.mxu0 %v1206
        %1216 = vmatpush.bf16.msra.mxu0 %v1205
        %1217 = vmatpush.bf16.msra.mxu0 %v1204
        %1218 = vmatpush.bf16.msra.mxu0 %v1203
        %1219 = vmatpush.bf16.msra.mxu0 %v1202
        %1220 = vmatpush.bf16.msra.mxu0 %v1201
        %1221 = vmatpush.bf16.msra.mxu0 %v1200
        %1222 = vmatpush.bf16.msra.mxu0 %v1199
        %1223 = vmatmul.bf16.gmra.mxu0 %v1135
        %v1224 = vpop.f32.mrf.mxu0
        %v1225 = vadd.f32 %v992, %v1224
        %v1226 = vpop.f32.mrf.mxu0
        %v1227 = vadd.f32 %v994, %v1226
        %1228 = vmatmul.bf16.gmra.mxu0 %v1136
        %v1229 = vpop.f32.mrf.mxu0
        %v1230 = vadd.f32 %v997, %v1229
        %v1231 = vpop.f32.mrf.mxu0
        %v1232 = vadd.f32 %v999, %v1231
        %1233 = vmatmul.bf16.gmra.mxu0 %v1137
        %v1234 = vpop.f32.mrf.mxu0
        %v1235 = vadd.f32 %v1002, %v1234
        %v1236 = vpop.f32.mrf.mxu0
        %v1237 = vadd.f32 %v1004, %v1236
        %1238 = vmatmul.bf16.gmra.mxu0 %v1138
        %v1239 = vpop.f32.mrf.mxu0
        %v1240 = vadd.f32 %v1007, %v1239
        %v1241 = vpop.f32.mrf.mxu0
        %v1242 = vadd.f32 %v1009, %v1241
        %1243 = vmatmul.bf16.gmra.mxu0 %v1139
        %v1244 = vpop.f32.mrf.mxu0
        %v1245 = vadd.f32 %v1012, %v1244
        %v1246 = vpop.f32.mrf.mxu0
        %v1247 = vadd.f32 %v1014, %v1246
        %1248 = vmatmul.bf16.gmra.mxu0 %v1140
        %v1249 = vpop.f32.mrf.mxu0
        %v1250 = vadd.f32 %v1017, %v1249
        %v1251 = vpop.f32.mrf.mxu0
        %v1252 = vadd.f32 %v1019, %v1251
        %1253 = vmatmul.bf16.gmra.mxu0 %v1141
        %v1254 = vpop.f32.mrf.mxu0
        %v1255 = vadd.f32 %v1022, %v1254
        %v1256 = vpop.f32.mrf.mxu0
        %v1257 = vadd.f32 %v1024, %v1256
        %1258 = vmatmul.bf16.gmra.mxu0 %v1142
        %v1259 = vpop.f32.mrf.mxu0
        %v1260 = vadd.f32 %v1027, %v1259
        %v1261 = vpop.f32.mrf.mxu0
        %v1262 = vadd.f32 %v1029, %v1261
        %1263 = vmatmul.bf16.gmra.mxu0 %v1143
        %v1264 = vpop.f32.mrf.mxu0
        %v1265 = vadd.f32 %v1032, %v1264
        %v1266 = vpop.f32.mrf.mxu0
        %v1267 = vadd.f32 %v1034, %v1266
        %1268 = vmatmul.bf16.gmra.mxu0 %v1144
        %v1269 = vpop.f32.mrf.mxu0
        %v1270 = vadd.f32 %v1037, %v1269
        %v1271 = vpop.f32.mrf.mxu0
        %v1272 = vadd.f32 %v1039, %v1271
        %1273 = vmatmul.bf16.gmra.mxu0 %v1145
        %v1274 = vpop.f32.mrf.mxu0
        %v1275 = vadd.f32 %v1042, %v1274
        %v1276 = vpop.f32.mrf.mxu0
        %v1277 = vadd.f32 %v1044, %v1276
        %1278 = vmatmul.bf16.gmra.mxu0 %v1146
        %v1279 = vpop.f32.mrf.mxu0
        %v1280 = vadd.f32 %v1047, %v1279
        %v1281 = vpop.f32.mrf.mxu0
        %v1282 = vadd.f32 %v1049, %v1281
        %1283 = vmatmul.bf16.gmra.mxu0 %v1147
        %v1284 = vpop.f32.mrf.mxu0
        %v1285 = vadd.f32 %v1052, %v1284
        %v1286 = vpop.f32.mrf.mxu0
        %v1287 = vadd.f32 %v1054, %v1286
        %1288 = vmatmul.bf16.gmra.mxu0 %v1148
        %v1289 = vpop.f32.mrf.mxu0
        %v1290 = vadd.f32 %v1057, %v1289
        %v1291 = vpop.f32.mrf.mxu0
        %v1292 = vadd.f32 %v1059, %v1291
        %1293 = vmatmul.bf16.gmra.mxu0 %v1149
        %v1294 = vpop.f32.mrf.mxu0
        %v1295 = vadd.f32 %v1062, %v1294
        %v1296 = vpop.f32.mrf.mxu0
        %v1297 = vadd.f32 %v1064, %v1296
        %1298 = vmatmul.bf16.gmra.mxu0 %v1150
        %v1299 = vpop.f32.mrf.mxu0
        %v1300 = vadd.f32 %v1067, %v1299
        %v1301 = vpop.f32.mrf.mxu0
        %v1302 = vadd.f32 %v1069, %v1301
        %1303 = vdwg.mxu0
        %v1304 = vld [vmem:[#allocation2 + $0x9] sm:$0xff]
        %v1305 = vld [vmem:[#allocation2 + $0x11] sm:$0xff]
        %v1306 = vld [vmem:[#allocation2 + $0x29] sm:$0xff]
        %v1307 = vld [vmem:[#allocation2 + $0x31] sm:$0xff]
        %v1308 = vld [vmem:[#allocation2 + $0x49] sm:$0xff]
        %v1309 = vld [vmem:[#allocation2 + $0x51] sm:$0xff]
        %v1310 = vld [vmem:[#allocation2 + $0x69] sm:$0xff]
        %v1311 = vld [vmem:[#allocation2 + $0x71] sm:$0xff]
        %v1312 = vld [vmem:[#allocation2 + $0x89] sm:$0xff]
        %v1313 = vld [vmem:[#allocation2 + $0x91] sm:$0xff]
        %v1314 = vld [vmem:[#allocation2 + $0xa9] sm:$0xff]
        %v1315 = vld [vmem:[#allocation2 + $0xb1] sm:$0xff]
        %v1316 = vld [vmem:[#allocation2 + $0xc9] sm:$0xff]
        %v1317 = vld [vmem:[#allocation2 + $0xd1] sm:$0xff]
        %v1318 = vld [vmem:[#allocation2 + $0xe9] sm:$0xff]
        %v1319 = vld [vmem:[#allocation2 + $0xf1] sm:$0xff]
        %v1320 = vld [vmem:[#allocation2 + $0x109] sm:$0xff]
        %v1321 = vld [vmem:[#allocation2 + $0x111] sm:$0xff]
        %v1322 = vld [vmem:[#allocation2 + $0x129] sm:$0xff]
        %v1323 = vld [vmem:[#allocation2 + $0x131] sm:$0xff]
        %v1324 = vld [vmem:[#allocation2 + $0x149] sm:$0xff]
        %v1325 = vld [vmem:[#allocation2 + $0x151] sm:$0xff]
        %v1326 = vld [vmem:[#allocation2 + $0x169] sm:$0xff]
        %v1327 = vld [vmem:[#allocation2 + $0x171] sm:$0xff]
        %v1328 = vld [vmem:[#allocation2 + $0x189] sm:$0xff]
        %v1329 = vld [vmem:[#allocation2 + $0x191] sm:$0xff]
        %v1330 = vld [vmem:[#allocation2 + $0x1a9] sm:$0xff]
        %v1331 = vld [vmem:[#allocation2 + $0x1b1] sm:$0xff]
        %v1332 = vld [vmem:[#allocation2 + $0x1c9] sm:$0xff]
        %v1333 = vld [vmem:[#allocation2 + $0x1d1] sm:$0xff]
        %v1334 = vld [vmem:[#allocation2 + $0x1e9] sm:$0xff]
        %v1335 = vld [vmem:[#allocation2 + $0x1f1] sm:$0xff]
        %v1336 = vpack.c.bf16 %v1304, %v1304
        %v1337 = vpack.c.bf16 %v1305, %v1305
        %v1338 = vpack.c.bf16 %v1306, %v1306
        %v1339 = vpack.c.bf16 %v1307, %v1307
        %v1340 = vpack.c.bf16 %v1308, %v1308
        %v1341 = vpack.c.bf16 %v1309, %v1309
        %v1342 = vpack.c.bf16 %v1310, %v1310
        %v1343 = vpack.c.bf16 %v1311, %v1311
        %v1344 = vpack.c.bf16 %v1312, %v1312
        %v1345 = vpack.c.bf16 %v1313, %v1313
        %v1346 = vpack.c.bf16 %v1314, %v1314
        %v1347 = vpack.c.bf16 %v1315, %v1315
        %v1348 = vpack.c.bf16 %v1316, %v1316
        %v1349 = vpack.c.bf16 %v1317, %v1317
        %v1350 = vpack.c.bf16 %v1318, %v1318
        %v1351 = vpack.c.bf16 %v1319, %v1319
        %v1352 = vpack.c.bf16 %v1320, %v1320
        %v1353 = vpack.c.bf16 %v1321, %v1321
        %v1354 = vpack.c.bf16 %v1322, %v1322
        %v1355 = vpack.c.bf16 %v1323, %v1323
        %v1356 = vpack.c.bf16 %v1324, %v1324
        %v1357 = vpack.c.bf16 %v1325, %v1325
        %v1358 = vpack.c.bf16 %v1326, %v1326
        %v1359 = vpack.c.bf16 %v1327, %v1327
        %v1360 = vpack.c.bf16 %v1328, %v1328
        %v1361 = vpack.c.bf16 %v1329, %v1329
        %v1362 = vpack.c.bf16 %v1330, %v1330
        %v1363 = vpack.c.bf16 %v1331, %v1331
        %v1364 = vpack.c.bf16 %v1332, %v1332
        %v1365 = vpack.c.bf16 %v1333, %v1333
        %v1366 = vpack.c.bf16 %v1334, %v1334
        %v1367 = vpack.c.bf16 %v1335, %v1335
        %s1368 = scalar_lea.vmem [#allocation8], 128
        %v1369 = vld [vmem:[%s1368] sm:$0xf]
        %v1370 = vld [vmem:[%s1368 + $0x4] sm:$0xf]
        %v1371 = vld [vmem:[%s1368 + $0x8] sm:$0xf]
        %v1372 = vld [vmem:[%s1368 + $0xc] sm:$0xf]
        %v1373 = vld [vmem:[%s1368 + $0x10] sm:$0xf]
        %v1374 = vld [vmem:[%s1368 + $0x14] sm:$0xf]
        %v1375 = vld [vmem:[%s1368 + $0x18] sm:$0xf]
        %v1376 = vld [vmem:[%s1368 + $0x1c] sm:$0xf]
        %v1377 = vld [vmem:[%s1368 + $0x20] sm:$0xf]
        %v1378 = vld [vmem:[%s1368 + $0x24] sm:$0xf]
        %v1379 = vld [vmem:[%s1368 + $0x28] sm:$0xf]
        %v1380 = vld [vmem:[%s1368 + $0x2c] sm:$0xf]
        %v1381 = vld [vmem:[%s1368 + $0x30] sm:$0xf]
        %v1382 = vld [vmem:[%s1368 + $0x34] sm:$0xf]
        %v1383 = vld [vmem:[%s1368 + $0x38] sm:$0xf]
        %v1384 = vld [vmem:[%s1368 + $0x3c] sm:$0xf]
        %v1417 = vunpack.c.l.b16 %v1336
        %v1418 = vunpack.c.l.b16 %v1337
        %v1419 = vunpack.c.l.b16 %v1338
        %v1420 = vunpack.c.l.b16 %v1339
        %v1421 = vunpack.c.l.b16 %v1340
        %v1422 = vunpack.c.l.b16 %v1341
        %v1423 = vunpack.c.l.b16 %v1342
        %v1424 = vunpack.c.l.b16 %v1343
        %v1425 = vunpack.c.l.b16 %v1344
        %v1426 = vunpack.c.l.b16 %v1345
        %v1427 = vunpack.c.l.b16 %v1346
        %v1428 = vunpack.c.l.b16 %v1347
        %v1429 = vunpack.c.l.b16 %v1348
        %v1430 = vunpack.c.l.b16 %v1349
        %v1431 = vunpack.c.l.b16 %v1350
        %v1432 = vunpack.c.l.b16 %v1351
        %v1433 = vunpack.c.l.b16 %v1352
        %v1434 = vunpack.c.l.b16 %v1353
        %v1435 = vunpack.c.l.b16 %v1354
        %v1436 = vunpack.c.l.b16 %v1355
        %v1437 = vunpack.c.l.b16 %v1356
        %v1438 = vunpack.c.l.b16 %v1357
        %v1439 = vunpack.c.l.b16 %v1358
        %v1440 = vunpack.c.l.b16 %v1359
        %v1441 = vunpack.c.l.b16 %v1360
        %v1442 = vunpack.c.l.b16 %v1361
        %v1443 = vunpack.c.l.b16 %v1362
        %v1444 = vunpack.c.l.b16 %v1363
        %v1445 = vunpack.c.l.b16 %v1364
        %v1446 = vunpack.c.l.b16 %v1365
        %v1447 = vunpack.c.l.b16 %v1366
        %v1448 = vunpack.c.l.b16 %v1367
        %v1449 = vpack.c.b16 %v1418, %v1417
        %v1450 = vpack.c.b16 %v1420, %v1419
        %v1451 = vpack.c.b16 %v1422, %v1421
        %v1452 = vpack.c.b16 %v1424, %v1423
        %v1453 = vpack.c.b16 %v1426, %v1425
        %v1454 = vpack.c.b16 %v1428, %v1427
        %v1455 = vpack.c.b16 %v1430, %v1429
        %v1456 = vpack.c.b16 %v1432, %v1431
        %v1457 = vpack.c.b16 %v1434, %v1433
        %v1458 = vpack.c.b16 %v1436, %v1435
        %v1459 = vpack.c.b16 %v1438, %v1437
        %v1460 = vpack.c.b16 %v1440, %v1439
        %v1461 = vpack.c.b16 %v1442, %v1441
        %v1462 = vpack.c.b16 %v1444, %v1443
        %v1463 = vpack.c.b16 %v1446, %v1445
        %v1464 = vpack.c.b16 %v1448, %v1447
        %v1497 = vunpack.c.l.b16 %v1369
        %v1498 = vunpack.c.l.b16 %v1370
        %v1499 = vunpack.c.l.b16 %v1371
        %v1500 = vunpack.c.l.b16 %v1372
        %v1501 = vunpack.c.l.b16 %v1373
        %v1502 = vunpack.c.l.b16 %v1374
        %v1503 = vunpack.c.l.b16 %v1375
        %v1504 = vunpack.c.l.b16 %v1376
        %v1505 = vunpack.c.l.b16 %v1377
        %v1506 = vunpack.c.l.b16 %v1378
        %v1507 = vunpack.c.l.b16 %v1379
        %v1508 = vunpack.c.l.b16 %v1380
        %v1509 = vunpack.c.l.b16 %v1381
        %v1510 = vunpack.c.l.b16 %v1382
        %v1511 = vunpack.c.l.b16 %v1383
        %v1512 = vunpack.c.l.b16 %v1384
        %v1513 = vpack.c.b16 %v1498, %v1497
        %v1514 = vpack.c.b16 %v1500, %v1499
        %v1515 = vpack.c.b16 %v1502, %v1501
        %v1516 = vpack.c.b16 %v1504, %v1503
        %v1517 = vpack.c.b16 %v1506, %v1505
        %v1518 = vpack.c.b16 %v1508, %v1507
        %v1519 = vpack.c.b16 %v1510, %v1509
        %v1520 = vpack.c.b16 %v1512, %v1511
        %1529 = vmatpush.bf16.msra.mxu0 %v1520
        %1530 = vmatpush.bf16.msra.mxu0 %v1519
        %1531 = vmatpush.bf16.msra.mxu0 %v1518
        %1532 = vmatpush.bf16.msra.mxu0 %v1517
        %1533 = vmatpush.bf16.msra.mxu0 %v1516
        %1534 = vmatpush.bf16.msra.mxu0 %v1515
        %1535 = vmatpush.bf16.msra.mxu0 %v1514
        %1536 = vmatpush.bf16.msra.mxu0 %v1513
        %1537 = vmatmul.bf16.gmra.mxu0 %v1449
        %v1538 = vpop.f32.mrf.mxu0
        %v1539 = vadd.f32 0.0, %v1538
        %v1540 = vpop.f32.mrf.mxu0
        %v1541 = vadd.f32 0.0, %v1540
        %1542 = vmatmul.bf16.gmra.mxu0 %v1450
        %v1543 = vpop.f32.mrf.mxu0
        %v1544 = vadd.f32 0.0, %v1543
        %v1545 = vpop.f32.mrf.mxu0
        %v1546 = vadd.f32 0.0, %v1545
        %1547 = vmatmul.bf16.gmra.mxu0 %v1451
        %v1548 = vpop.f32.mrf.mxu0
        %v1549 = vadd.f32 0.0, %v1548
        %v1550 = vpop.f32.mrf.mxu0
        %v1551 = vadd.f32 0.0, %v1550
        %1552 = vmatmul.bf16.gmra.mxu0 %v1452
        %v1553 = vpop.f32.mrf.mxu0
        %v1554 = vadd.f32 0.0, %v1553
        %v1555 = vpop.f32.mrf.mxu0
        %v1556 = vadd.f32 0.0, %v1555
        %1557 = vmatmul.bf16.gmra.mxu0 %v1453
        %v1558 = vpop.f32.mrf.mxu0
        %v1559 = vadd.f32 0.0, %v1558
        %v1560 = vpop.f32.mrf.mxu0
        %v1561 = vadd.f32 0.0, %v1560
        %1562 = vmatmul.bf16.gmra.mxu0 %v1454
        %v1563 = vpop.f32.mrf.mxu0
        %v1564 = vadd.f32 0.0, %v1563
        %v1565 = vpop.f32.mrf.mxu0
        %v1566 = vadd.f32 0.0, %v1565
        %1567 = vmatmul.bf16.gmra.mxu0 %v1455
        %v1568 = vpop.f32.mrf.mxu0
        %v1569 = vadd.f32 0.0, %v1568
        %v1570 = vpop.f32.mrf.mxu0
        %v1571 = vadd.f32 0.0, %v1570
        %1572 = vmatmul.bf16.gmra.mxu0 %v1456
        %v1573 = vpop.f32.mrf.mxu0
        %v1574 = vadd.f32 0.0, %v1573
        %v1575 = vpop.f32.mrf.mxu0
        %v1576 = vadd.f32 0.0, %v1575
        %1577 = vmatmul.bf16.gmra.mxu0 %v1457
        %v1578 = vpop.f32.mrf.mxu0
        %v1579 = vadd.f32 0.0, %v1578
        %v1580 = vpop.f32.mrf.mxu0
        %v1581 = vadd.f32 0.0, %v1580
        %1582 = vmatmul.bf16.gmra.mxu0 %v1458
        %v1583 = vpop.f32.mrf.mxu0
        %v1584 = vadd.f32 0.0, %v1583
        %v1585 = vpop.f32.mrf.mxu0
        %v1586 = vadd.f32 0.0, %v1585
        %1587 = vmatmul.bf16.gmra.mxu0 %v1459
        %v1588 = vpop.f32.mrf.mxu0
        %v1589 = vadd.f32 0.0, %v1588
        %v1590 = vpop.f32.mrf.mxu0
        %v1591 = vadd.f32 0.0, %v1590
        %1592 = vmatmul.bf16.gmra.mxu0 %v1460
        %v1593 = vpop.f32.mrf.mxu0
        %v1594 = vadd.f32 0.0, %v1593
        %v1595 = vpop.f32.mrf.mxu0
        %v1596 = vadd.f32 0.0, %v1595
        %1597 = vmatmul.bf16.gmra.mxu0 %v1461
        %v1598 = vpop.f32.mrf.mxu0
        %v1599 = vadd.f32 0.0, %v1598
        %v1600 = vpop.f32.mrf.mxu0
        %v1601 = vadd.f32 0.0, %v1600
        %1602 = vmatmul.bf16.gmra.mxu0 %v1462
        %v1603 = vpop.f32.mrf.mxu0
        %v1604 = vadd.f32 0.0, %v1603
        %v1605 = vpop.f32.mrf.mxu0
        %v1606 = vadd.f32 0.0, %v1605
        %1607 = vmatmul.bf16.gmra.mxu0 %v1463
        %v1608 = vpop.f32.mrf.mxu0
        %v1609 = vadd.f32 0.0, %v1608
        %v1610 = vpop.f32.mrf.mxu0
        %v1611 = vadd.f32 0.0, %v1610
        %1612 = vmatmul.bf16.gmra.mxu0 %v1464
        %v1613 = vpop.f32.mrf.mxu0
        %v1614 = vadd.f32 0.0, %v1613
        %v1615 = vpop.f32.mrf.mxu0
        %v1616 = vadd.f32 0.0, %v1615
        %1617 = vdwg.mxu0
        %v1618 = vadd.f32 %v1225, %v1539
        %v1619 = vadd.f32 %v1227, %v1541
        %v1620 = vadd.f32 %v1230, %v1544
        %v1621 = vadd.f32 %v1232, %v1546
        %v1622 = vadd.f32 %v1235, %v1549
        %v1623 = vadd.f32 %v1237, %v1551
        %v1624 = vadd.f32 %v1240, %v1554
        %v1625 = vadd.f32 %v1242, %v1556
        %v1626 = vadd.f32 %v1245, %v1559
        %v1627 = vadd.f32 %v1247, %v1561
        %v1628 = vadd.f32 %v1250, %v1564
        %v1629 = vadd.f32 %v1252, %v1566
        %v1630 = vadd.f32 %v1255, %v1569
        %v1631 = vadd.f32 %v1257, %v1571
        %v1632 = vadd.f32 %v1260, %v1574
        %v1633 = vadd.f32 %v1262, %v1576
        %v1634 = vadd.f32 %v1265, %v1579
        %v1635 = vadd.f32 %v1267, %v1581
        %v1636 = vadd.f32 %v1270, %v1584
        %v1637 = vadd.f32 %v1272, %v1586
        %v1638 = vadd.f32 %v1275, %v1589
        %v1639 = vadd.f32 %v1277, %v1591
        %v1640 = vadd.f32 %v1280, %v1594
        %v1641 = vadd.f32 %v1282, %v1596
        %v1642 = vadd.f32 %v1285, %v1599
        %v1643 = vadd.f32 %v1287, %v1601
        %v1644 = vadd.f32 %v1290, %v1604
        %v1645 = vadd.f32 %v1292, %v1606
        %v1646 = vadd.f32 %v1295, %v1609
        %v1647 = vadd.f32 %v1297, %v1611
        %v1648 = vadd.f32 %v1300, %v1614
        %v1649 = vadd.f32 %v1302, %v1616
        %v1650 = vld [vmem:[%s612 + $0x7] sm:$0xff]
        %v1651 = vld [vmem:[%s612 + $0xf] sm:$0xff]
        %v1652 = vld [vmem:[%s612 + $0x27] sm:$0xff]
        %v1653 = vld [vmem:[%s612 + $0x2f] sm:$0xff]
        %v1654 = vld [vmem:[%s612 + $0x47] sm:$0xff]
        %v1655 = vld [vmem:[%s612 + $0x4f] sm:$0xff]
        %v1656 = vld [vmem:[%s612 + $0x67] sm:$0xff]
        %v1657 = vld [vmem:[%s612 + $0x6f] sm:$0xff]
        %v1658 = vld [vmem:[%s612 + $0x87] sm:$0xff]
        %v1659 = vld [vmem:[%s612 + $0x8f] sm:$0xff]
        %v1660 = vld [vmem:[%s612 + $0xa7] sm:$0xff]
        %v1661 = vld [vmem:[%s612 + $0xaf] sm:$0xff]
        %v1662 = vld [vmem:[%s612 + $0xc7] sm:$0xff]
        %v1663 = vld [vmem:[%s612 + $0xcf] sm:$0xff]
        %v1664 = vld [vmem:[%s612 + $0xe7] sm:$0xff]
        %v1665 = vld [vmem:[%s612 + $0xef] sm:$0xff]
        %v1666 = vld [vmem:[%s612 + $0x107] sm:$0xff]
        %v1667 = vld [vmem:[%s612 + $0x10f] sm:$0xff]
        %v1668 = vld [vmem:[%s612 + $0x127] sm:$0xff]
        %v1669 = vld [vmem:[%s612 + $0x12f] sm:$0xff]
        %v1670 = vld [vmem:[%s612 + $0x147] sm:$0xff]
        %v1671 = vld [vmem:[%s612 + $0x14f] sm:$0xff]
        %v1672 = vld [vmem:[%s612 + $0x167] sm:$0xff]
        %v1673 = vld [vmem:[%s612 + $0x16f] sm:$0xff]
        %v1674 = vld [vmem:[%s612 + $0x187] sm:$0xff]
        %v1675 = vld [vmem:[%s612 + $0x18f] sm:$0xff]
        %v1676 = vld [vmem:[%s612 + $0x1a7] sm:$0xff]
        %v1677 = vld [vmem:[%s612 + $0x1af] sm:$0xff]
        %v1678 = vld [vmem:[%s612 + $0x1c7] sm:$0xff]
        %v1679 = vld [vmem:[%s612 + $0x1cf] sm:$0xff]
        %v1680 = vld [vmem:[%s612 + $0x1e7] sm:$0xff]
        %v1681 = vld [vmem:[%s612 + $0x1ef] sm:$0xff]
        %v1682 = vpack.c.bf16 %v1650, %v1650
        %v1683 = vpack.c.bf16 %v1651, %v1651
        %v1684 = vpack.c.bf16 %v1652, %v1652
        %v1685 = vpack.c.bf16 %v1653, %v1653
        %v1686 = vpack.c.bf16 %v1654, %v1654
        %v1687 = vpack.c.bf16 %v1655, %v1655
        %v1688 = vpack.c.bf16 %v1656, %v1656
        %v1689 = vpack.c.bf16 %v1657, %v1657
        %v1690 = vpack.c.bf16 %v1658, %v1658
        %v1691 = vpack.c.bf16 %v1659, %v1659
        %v1692 = vpack.c.bf16 %v1660, %v1660
        %v1693 = vpack.c.bf16 %v1661, %v1661
        %v1694 = vpack.c.bf16 %v1662, %v1662
        %v1695 = vpack.c.bf16 %v1663, %v1663
        %v1696 = vpack.c.bf16 %v1664, %v1664
        %v1697 = vpack.c.bf16 %v1665, %v1665
        %v1698 = vpack.c.bf16 %v1666, %v1666
        %v1699 = vpack.c.bf16 %v1667, %v1667
        %v1700 = vpack.c.bf16 %v1668, %v1668
        %v1701 = vpack.c.bf16 %v1669, %v1669
        %v1702 = vpack.c.bf16 %v1670, %v1670
        %v1703 = vpack.c.bf16 %v1671, %v1671
        %v1704 = vpack.c.bf16 %v1672, %v1672
        %v1705 = vpack.c.bf16 %v1673, %v1673
        %v1706 = vpack.c.bf16 %v1674, %v1674
        %v1707 = vpack.c.bf16 %v1675, %v1675
        %v1708 = vpack.c.bf16 %v1676, %v1676
        %v1709 = vpack.c.bf16 %v1677, %v1677
        %v1710 = vpack.c.bf16 %v1678, %v1678
        %v1711 = vpack.c.bf16 %v1679, %v1679
        %v1712 = vpack.c.bf16 %v1680, %v1680
        %v1713 = vpack.c.bf16 %v1681, %v1681
        %s1714 = scalar_lea.vmem [#allocation8], 192
        %v1715 = vld [vmem:[%s1714] sm:$0xf]
        %v1716 = vld [vmem:[%s1714 + $0x4] sm:$0xf]
        %v1717 = vld [vmem:[%s1714 + $0x8] sm:$0xf]
        %v1718 = vld [vmem:[%s1714 + $0xc] sm:$0xf]
        %v1719 = vld [vmem:[%s1714 + $0x10] sm:$0xf]
        %v1720 = vld [vmem:[%s1714 + $0x14] sm:$0xf]
        %v1721 = vld [vmem:[%s1714 + $0x18] sm:$0xf]
        %v1722 = vld [vmem:[%s1714 + $0x1c] sm:$0xf]
        %v1723 = vld [vmem:[%s1714 + $0x20] sm:$0xf]
        %v1724 = vld [vmem:[%s1714 + $0x24] sm:$0xf]
        %v1725 = vld [vmem:[%s1714 + $0x28] sm:$0xf]
        %v1726 = vld [vmem:[%s1714 + $0x2c] sm:$0xf]
        %v1727 = vld [vmem:[%s1714 + $0x30] sm:$0xf]
        %v1728 = vld [vmem:[%s1714 + $0x34] sm:$0xf]
        %v1729 = vld [vmem:[%s1714 + $0x38] sm:$0xf]
        %v1730 = vld [vmem:[%s1714 + $0x3c] sm:$0xf]
        %v1763 = vunpack.c.l.b16 %v1682
        %v1764 = vunpack.c.l.b16 %v1683
        %v1765 = vunpack.c.l.b16 %v1684
        %v1766 = vunpack.c.l.b16 %v1685
        %v1767 = vunpack.c.l.b16 %v1686
        %v1768 = vunpack.c.l.b16 %v1687
        %v1769 = vunpack.c.l.b16 %v1688
        %v1770 = vunpack.c.l.b16 %v1689
        %v1771 = vunpack.c.l.b16 %v1690
        %v1772 = vunpack.c.l.b16 %v1691
        %v1773 = vunpack.c.l.b16 %v1692
        %v1774 = vunpack.c.l.b16 %v1693
        %v1775 = vunpack.c.l.b16 %v1694
        %v1776 = vunpack.c.l.b16 %v1695
        %v1777 = vunpack.c.l.b16 %v1696
        %v1778 = vunpack.c.l.b16 %v1697
        %v1779 = vunpack.c.l.b16 %v1698
        %v1780 = vunpack.c.l.b16 %v1699
        %v1781 = vunpack.c.l.b16 %v1700
        %v1782 = vunpack.c.l.b16 %v1701
        %v1783 = vunpack.c.l.b16 %v1702
        %v1784 = vunpack.c.l.b16 %v1703
        %v1785 = vunpack.c.l.b16 %v1704
        %v1786 = vunpack.c.l.b16 %v1705
        %v1787 = vunpack.c.l.b16 %v1706
        %v1788 = vunpack.c.l.b16 %v1707
        %v1789 = vunpack.c.l.b16 %v1708
        %v1790 = vunpack.c.l.b16 %v1709
        %v1791 = vunpack.c.l.b16 %v1710
        %v1792 = vunpack.c.l.b16 %v1711
        %v1793 = vunpack.c.l.b16 %v1712
        %v1794 = vunpack.c.l.b16 %v1713
        %v1795 = vpack.c.b16 %v1764, %v1763
        %v1796 = vpack.c.b16 %v1766, %v1765
        %v1797 = vpack.c.b16 %v1768, %v1767
        %v1798 = vpack.c.b16 %v1770, %v1769
        %v1799 = vpack.c.b16 %v1772, %v1771
        %v1800 = vpack.c.b16 %v1774, %v1773
        %v1801 = vpack.c.b16 %v1776, %v1775
        %v1802 = vpack.c.b16 %v1778, %v1777
        %v1803 = vpack.c.b16 %v1780, %v1779
        %v1804 = vpack.c.b16 %v1782, %v1781
        %v1805 = vpack.c.b16 %v1784, %v1783
        %v1806 = vpack.c.b16 %v1786, %v1785
        %v1807 = vpack.c.b16 %v1788, %v1787
        %v1808 = vpack.c.b16 %v1790, %v1789
        %v1809 = vpack.c.b16 %v1792, %v1791
        %v1810 = vpack.c.b16 %v1794, %v1793
        %v1843 = vunpack.c.l.b16 %v1715
        %v1844 = vunpack.c.l.b16 %v1716
        %v1845 = vunpack.c.l.b16 %v1717
        %v1846 = vunpack.c.l.b16 %v1718
        %v1847 = vunpack.c.l.b16 %v1719
        %v1848 = vunpack.c.l.b16 %v1720
        %v1849 = vunpack.c.l.b16 %v1721
        %v1850 = vunpack.c.l.b16 %v1722
        %v1851 = vunpack.c.l.b16 %v1723
        %v1852 = vunpack.c.l.b16 %v1724
        %v1853 = vunpack.c.l.b16 %v1725
        %v1854 = vunpack.c.l.b16 %v1726
        %v1855 = vunpack.c.l.b16 %v1727
        %v1856 = vunpack.c.l.b16 %v1728
        %v1857 = vunpack.c.l.b16 %v1729
        %v1858 = vunpack.c.l.b16 %v1730
        %v1859 = vpack.c.b16 %v1844, %v1843
        %v1860 = vpack.c.b16 %v1846, %v1845
        %v1861 = vpack.c.b16 %v1848, %v1847
        %v1862 = vpack.c.b16 %v1850, %v1849
        %v1863 = vpack.c.b16 %v1852, %v1851
        %v1864 = vpack.c.b16 %v1854, %v1853
        %v1865 = vpack.c.b16 %v1856, %v1855
        %v1866 = vpack.c.b16 %v1858, %v1857
        %1875 = vmatpush.bf16.msra.mxu0 %v1866
        %1876 = vmatpush.bf16.msra.mxu0 %v1865
        %1877 = vmatpush.bf16.msra.mxu0 %v1864
        %1878 = vmatpush.bf16.msra.mxu0 %v1863
        %1879 = vmatpush.bf16.msra.mxu0 %v1862
        %1880 = vmatpush.bf16.msra.mxu0 %v1861
        %1881 = vmatpush.bf16.msra.mxu0 %v1860
        %1882 = vmatpush.bf16.msra.mxu0 %v1859
        %1883 = vmatmul.bf16.gmra.mxu0 %v1795
        %v1884 = vpop.f32.mrf.mxu0
        %v1885 = vadd.f32 0.0, %v1884
        %v1886 = vpop.f32.mrf.mxu0
        %v1887 = vadd.f32 0.0, %v1886
        %1888 = vmatmul.bf16.gmra.mxu0 %v1796
        %v1889 = vpop.f32.mrf.mxu0
        %v1890 = vadd.f32 0.0, %v1889
        %v1891 = vpop.f32.mrf.mxu0
        %v1892 = vadd.f32 0.0, %v1891
        %1893 = vmatmul.bf16.gmra.mxu0 %v1797
        %v1894 = vpop.f32.mrf.mxu0
        %v1895 = vadd.f32 0.0, %v1894
        %v1896 = vpop.f32.mrf.mxu0
        %v1897 = vadd.f32 0.0, %v1896
        %1898 = vmatmul.bf16.gmra.mxu0 %v1798
        %v1899 = vpop.f32.mrf.mxu0
        %v1900 = vadd.f32 0.0, %v1899
        %v1901 = vpop.f32.mrf.mxu0
        %v1902 = vadd.f32 0.0, %v1901
        %1903 = vmatmul.bf16.gmra.mxu0 %v1799
        %v1904 = vpop.f32.mrf.mxu0
        %v1905 = vadd.f32 0.0, %v1904
        %v1906 = vpop.f32.mrf.mxu0
        %v1907 = vadd.f32 0.0, %v1906
        %1908 = vmatmul.bf16.gmra.mxu0 %v1800
        %v1909 = vpop.f32.mrf.mxu0
        %v1910 = vadd.f32 0.0, %v1909
        %v1911 = vpop.f32.mrf.mxu0
        %v1912 = vadd.f32 0.0, %v1911
        %1913 = vmatmul.bf16.gmra.mxu0 %v1801
        %v1914 = vpop.f32.mrf.mxu0
        %v1915 = vadd.f32 0.0, %v1914
        %v1916 = vpop.f32.mrf.mxu0
        %v1917 = vadd.f32 0.0, %v1916
        %1918 = vmatmul.bf16.gmra.mxu0 %v1802
        %v1919 = vpop.f32.mrf.mxu0
        %v1920 = vadd.f32 0.0, %v1919
        %v1921 = vpop.f32.mrf.mxu0
        %v1922 = vadd.f32 0.0, %v1921
        %1923 = vmatmul.bf16.gmra.mxu0 %v1803
        %v1924 = vpop.f32.mrf.mxu0
        %v1925 = vadd.f32 0.0, %v1924
        %v1926 = vpop.f32.mrf.mxu0
        %v1927 = vadd.f32 0.0, %v1926
        %1928 = vmatmul.bf16.gmra.mxu0 %v1804
        %v1929 = vpop.f32.mrf.mxu0
        %v1930 = vadd.f32 0.0, %v1929
        %v1931 = vpop.f32.mrf.mxu0
        %v1932 = vadd.f32 0.0, %v1931
        %1933 = vmatmul.bf16.gmra.mxu0 %v1805
        %v1934 = vpop.f32.mrf.mxu0
        %v1935 = vadd.f32 0.0, %v1934
        %v1936 = vpop.f32.mrf.mxu0
        %v1937 = vadd.f32 0.0, %v1936
        %1938 = vmatmul.bf16.gmra.mxu0 %v1806
        %v1939 = vpop.f32.mrf.mxu0
        %v1940 = vadd.f32 0.0, %v1939
        %v1941 = vpop.f32.mrf.mxu0
        %v1942 = vadd.f32 0.0, %v1941
        %1943 = vmatmul.bf16.gmra.mxu0 %v1807
        %v1944 = vpop.f32.mrf.mxu0
        %v1945 = vadd.f32 0.0, %v1944
        %v1946 = vpop.f32.mrf.mxu0
        %v1947 = vadd.f32 0.0, %v1946
        %1948 = vmatmul.bf16.gmra.mxu0 %v1808
        %v1949 = vpop.f32.mrf.mxu0
        %v1950 = vadd.f32 0.0, %v1949
        %v1951 = vpop.f32.mrf.mxu0
        %v1952 = vadd.f32 0.0, %v1951
        %1953 = vmatmul.bf16.gmra.mxu0 %v1809
        %v1954 = vpop.f32.mrf.mxu0
        %v1955 = vadd.f32 0.0, %v1954
        %v1956 = vpop.f32.mrf.mxu0
        %v1957 = vadd.f32 0.0, %v1956
        %1958 = vmatmul.bf16.gmra.mxu0 %v1810
        %v1959 = vpop.f32.mrf.mxu0
        %v1960 = vadd.f32 0.0, %v1959
        %v1961 = vpop.f32.mrf.mxu0
        %v1962 = vadd.f32 0.0, %v1961
        %1963 = vdwg.mxu0
        %v1964 = vadd.f32 %v1618, %v1885
        %v1965 = vadd.f32 %v1619, %v1887
        %v1966 = vadd.f32 %v1620, %v1890
        %v1967 = vadd.f32 %v1621, %v1892
        %v1968 = vadd.f32 %v1622, %v1895
        %v1969 = vadd.f32 %v1623, %v1897
        %v1970 = vadd.f32 %v1624, %v1900
        %v1971 = vadd.f32 %v1625, %v1902
        %v1972 = vadd.f32 %v1626, %v1905
        %v1973 = vadd.f32 %v1627, %v1907
        %v1974 = vadd.f32 %v1628, %v1910
        %v1975 = vadd.f32 %v1629, %v1912
        %v1976 = vadd.f32 %v1630, %v1915
        %v1977 = vadd.f32 %v1631, %v1917
        %v1978 = vadd.f32 %v1632, %v1920
        %v1979 = vadd.f32 %v1633, %v1922
        %v1980 = vadd.f32 %v1634, %v1925
        %v1981 = vadd.f32 %v1635, %v1927
        %v1982 = vadd.f32 %v1636, %v1930
        %v1983 = vadd.f32 %v1637, %v1932
        %v1984 = vadd.f32 %v1638, %v1935
        %v1985 = vadd.f32 %v1639, %v1937
        %v1986 = vadd.f32 %v1640, %v1940
        %v1987 = vadd.f32 %v1641, %v1942
        %v1988 = vadd.f32 %v1642, %v1945
        %v1989 = vadd.f32 %v1643, %v1947
        %v1990 = vadd.f32 %v1644, %v1950
        %v1991 = vadd.f32 %v1645, %v1952
        %v1992 = vadd.f32 %v1646, %v1955
        %v1993 = vadd.f32 %v1647, %v1957
        %v1994 = vadd.f32 %v1648, %v1960
        %v1995 = vadd.f32 %v1649, %v1962
        %v1996 = vld [vmem:[%s612 + $0x8] sm:$0xff]
        %v1997 = vld [vmem:[%s612 + $0x10] sm:$0xff]
        %v1998 = vld [vmem:[%s612 + $0x28] sm:$0xff]
        %v1999 = vld [vmem:[%s612 + $0x30] sm:$0xff]
        %v2000 = vld [vmem:[%s612 + $0x48] sm:$0xff]
        %v2001 = vld [vmem:[%s612 + $0x50] sm:$0xff]
        %v2002 = vld [vmem:[%s612 + $0x68] sm:$0xff]
        %v2003 = vld [vmem:[%s612 + $0x70] sm:$0xff]
        %v2004 = vld [vmem:[%s612 + $0x88] sm:$0xff]
        %v2005 = vld [vmem:[%s612 + $0x90] sm:$0xff]
        %v2006 = vld [vmem:[%s612 + $0xa8] sm:$0xff]
        %v2007 = vld [vmem:[%s612 + $0xb0] sm:$0xff]
        %v2008 = vld [vmem:[%s612 + $0xc8] sm:$0xff]
        %v2009 = vld [vmem:[%s612 + $0xd0] sm:$0xff]
        %v2010 = vld [vmem:[%s612 + $0xe8] sm:$0xff]
        %v2011 = vld [vmem:[%s612 + $0xf0] sm:$0xff]
        %v2012 = vld [vmem:[%s612 + $0x108] sm:$0xff]
        %v2013 = vld [vmem:[%s612 + $0x110] sm:$0xff]
        %v2014 = vld [vmem:[%s612 + $0x128] sm:$0xff]
        %v2015 = vld [vmem:[%s612 + $0x130] sm:$0xff]
        %v2016 = vld [vmem:[%s612 + $0x148] sm:$0xff]
        %v2017 = vld [vmem:[%s612 + $0x150] sm:$0xff]
        %v2018 = vld [vmem:[%s612 + $0x168] sm:$0xff]
        %v2019 = vld [vmem:[%s612 + $0x170] sm:$0xff]
        %v2020 = vld [vmem:[%s612 + $0x188] sm:$0xff]
        %v2021 = vld [vmem:[%s612 + $0x190] sm:$0xff]
        %v2022 = vld [vmem:[%s612 + $0x1a8] sm:$0xff]
        %v2023 = vld [vmem:[%s612 + $0x1b0] sm:$0xff]
        %v2024 = vld [vmem:[%s612 + $0x1c8] sm:$0xff]
        %v2025 = vld [vmem:[%s612 + $0x1d0] sm:$0xff]
        %v2026 = vld [vmem:[%s612 + $0x1e8] sm:$0xff]
        %v2027 = vld [vmem:[%s612 + $0x1f0] sm:$0xff]
        %v2028 = vpack.c.bf16 %v1996, %v1996
        %v2029 = vpack.c.bf16 %v1997, %v1997
        %v2030 = vpack.c.bf16 %v1998, %v1998
        %v2031 = vpack.c.bf16 %v1999, %v1999
        %v2032 = vpack.c.bf16 %v2000, %v2000
        %v2033 = vpack.c.bf16 %v2001, %v2001
        %v2034 = vpack.c.bf16 %v2002, %v2002
        %v2035 = vpack.c.bf16 %v2003, %v2003
        %v2036 = vpack.c.bf16 %v2004, %v2004
        %v2037 = vpack.c.bf16 %v2005, %v2005
        %v2038 = vpack.c.bf16 %v2006, %v2006
        %v2039 = vpack.c.bf16 %v2007, %v2007
        %v2040 = vpack.c.bf16 %v2008, %v2008
        %v2041 = vpack.c.bf16 %v2009, %v2009
        %v2042 = vpack.c.bf16 %v2010, %v2010
        %v2043 = vpack.c.bf16 %v2011, %v2011
        %v2044 = vpack.c.bf16 %v2012, %v2012
        %v2045 = vpack.c.bf16 %v2013, %v2013
        %v2046 = vpack.c.bf16 %v2014, %v2014
        %v2047 = vpack.c.bf16 %v2015, %v2015
        %v2048 = vpack.c.bf16 %v2016, %v2016
        %v2049 = vpack.c.bf16 %v2017, %v2017
        %v2050 = vpack.c.bf16 %v2018, %v2018
        %v2051 = vpack.c.bf16 %v2019, %v2019
        %v2052 = vpack.c.bf16 %v2020, %v2020
        %v2053 = vpack.c.bf16 %v2021, %v2021
        %v2054 = vpack.c.bf16 %v2022, %v2022
        %v2055 = vpack.c.bf16 %v2023, %v2023
        %v2056 = vpack.c.bf16 %v2024, %v2024
        %v2057 = vpack.c.bf16 %v2025, %v2025
        %v2058 = vpack.c.bf16 %v2026, %v2026
        %v2059 = vpack.c.bf16 %v2027, %v2027
        %s2060 = scalar_lea.vmem [#allocation8], 256
        %v2061 = vld [vmem:[%s2060] sm:$0xf]
        %v2062 = vld [vmem:[%s2060 + $0x4] sm:$0xf]
        %v2063 = vld [vmem:[%s2060 + $0x8] sm:$0xf]
        %v2064 = vld [vmem:[%s2060 + $0xc] sm:$0xf]
        %v2065 = vld [vmem:[%s2060 + $0x10] sm:$0xf]
        %v2066 = vld [vmem:[%s2060 + $0x14] sm:$0xf]
        %v2067 = vld [vmem:[%s2060 + $0x18] sm:$0xf]
        %v2068 = vld [vmem:[%s2060 + $0x1c] sm:$0xf]
        %v2069 = vld [vmem:[%s2060 + $0x20] sm:$0xf]
        %v2070 = vld [vmem:[%s2060 + $0x24] sm:$0xf]
        %v2071 = vld [vmem:[%s2060 + $0x28] sm:$0xf]
        %v2072 = vld [vmem:[%s2060 + $0x2c] sm:$0xf]
        %v2073 = vld [vmem:[%s2060 + $0x30] sm:$0xf]
        %v2074 = vld [vmem:[%s2060 + $0x34] sm:$0xf]
        %v2075 = vld [vmem:[%s2060 + $0x38] sm:$0xf]
        %v2076 = vld [vmem:[%s2060 + $0x3c] sm:$0xf]
        %v2109 = vunpack.c.l.b16 %v2028
        %v2110 = vunpack.c.l.b16 %v2029
        %v2111 = vunpack.c.l.b16 %v2030
        %v2112 = vunpack.c.l.b16 %v2031
        %v2113 = vunpack.c.l.b16 %v2032
        %v2114 = vunpack.c.l.b16 %v2033
        %v2115 = vunpack.c.l.b16 %v2034
        %v2116 = vunpack.c.l.b16 %v2035
        %v2117 = vunpack.c.l.b16 %v2036
        %v2118 = vunpack.c.l.b16 %v2037
        %v2119 = vunpack.c.l.b16 %v2038
        %v2120 = vunpack.c.l.b16 %v2039
        %v2121 = vunpack.c.l.b16 %v2040
        %v2122 = vunpack.c.l.b16 %v2041
        %v2123 = vunpack.c.l.b16 %v2042
        %v2124 = vunpack.c.l.b16 %v2043
        %v2125 = vunpack.c.l.b16 %v2044
        %v2126 = vunpack.c.l.b16 %v2045
        %v2127 = vunpack.c.l.b16 %v2046
        %v2128 = vunpack.c.l.b16 %v2047
        %v2129 = vunpack.c.l.b16 %v2048
        %v2130 = vunpack.c.l.b16 %v2049
        %v2131 = vunpack.c.l.b16 %v2050
        %v2132 = vunpack.c.l.b16 %v2051
        %v2133 = vunpack.c.l.b16 %v2052
        %v2134 = vunpack.c.l.b16 %v2053
        %v2135 = vunpack.c.l.b16 %v2054
        %v2136 = vunpack.c.l.b16 %v2055
        %v2137 = vunpack.c.l.b16 %v2056
        %v2138 = vunpack.c.l.b16 %v2057
        %v2139 = vunpack.c.l.b16 %v2058
        %v2140 = vunpack.c.l.b16 %v2059
        %v2141 = vpack.c.b16 %v2110, %v2109
        %v2142 = vpack.c.b16 %v2112, %v2111
        %v2143 = vpack.c.b16 %v2114, %v2113
        %v2144 = vpack.c.b16 %v2116, %v2115
        %v2145 = vpack.c.b16 %v2118, %v2117
        %v2146 = vpack.c.b16 %v2120, %v2119
        %v2147 = vpack.c.b16 %v2122, %v2121
        %v2148 = vpack.c.b16 %v2124, %v2123
        %v2149 = vpack.c.b16 %v2126, %v2125
        %v2150 = vpack.c.b16 %v2128, %v2127
        %v2151 = vpack.c.b16 %v2130, %v2129
        %v2152 = vpack.c.b16 %v2132, %v2131
        %v2153 = vpack.c.b16 %v2134, %v2133
        %v2154 = vpack.c.b16 %v2136, %v2135
        %v2155 = vpack.c.b16 %v2138, %v2137
        %v2156 = vpack.c.b16 %v2140, %v2139
        %v2189 = vunpack.c.l.b16 %v2061
        %v2190 = vunpack.c.l.b16 %v2062
        %v2191 = vunpack.c.l.b16 %v2063
        %v2192 = vunpack.c.l.b16 %v2064
        %v2193 = vunpack.c.l.b16 %v2065
        %v2194 = vunpack.c.l.b16 %v2066
        %v2195 = vunpack.c.l.b16 %v2067
        %v2196 = vunpack.c.l.b16 %v2068
        %v2197 = vunpack.c.l.b16 %v2069
        %v2198 = vunpack.c.l.b16 %v2070
        %v2199 = vunpack.c.l.b16 %v2071
        %v2200 = vunpack.c.l.b16 %v2072
        %v2201 = vunpack.c.l.b16 %v2073
        %v2202 = vunpack.c.l.b16 %v2074
        %v2203 = vunpack.c.l.b16 %v2075
        %v2204 = vunpack.c.l.b16 %v2076
        %v2205 = vpack.c.b16 %v2190, %v2189
        %v2206 = vpack.c.b16 %v2192, %v2191
        %v2207 = vpack.c.b16 %v2194, %v2193
        %v2208 = vpack.c.b16 %v2196, %v2195
        %v2209 = vpack.c.b16 %v2198, %v2197
        %v2210 = vpack.c.b16 %v2200, %v2199
        %v2211 = vpack.c.b16 %v2202, %v2201
        %v2212 = vpack.c.b16 %v2204, %v2203
        %2221 = vmatpush.bf16.msra.mxu0 %v2212
        %2222 = vmatpush.bf16.msra.mxu0 %v2211
        %2223 = vmatpush.bf16.msra.mxu0 %v2210
        %2224 = vmatpush.bf16.msra.mxu0 %v2209
        %2225 = vmatpush.bf16.msra.mxu0 %v2208
        %2226 = vmatpush.bf16.msra.mxu0 %v2207
        %2227 = vmatpush.bf16.msra.mxu0 %v2206
        %2228 = vmatpush.bf16.msra.mxu0 %v2205
        %2229 = vmatmul.bf16.gmra.mxu0 %v2141
        %v2230 = vpop.f32.mrf.mxu0
        %v2231 = vadd.f32 0.0, %v2230
        %v2232 = vpop.f32.mrf.mxu0
        %v2233 = vadd.f32 0.0, %v2232
        %2234 = vmatmul.bf16.gmra.mxu0 %v2142
        %v2235 = vpop.f32.mrf.mxu0
        %v2236 = vadd.f32 0.0, %v2235
        %v2237 = vpop.f32.mrf.mxu0
        %v2238 = vadd.f32 0.0, %v2237
        %2239 = vmatmul.bf16.gmra.mxu0 %v2143
        %v2240 = vpop.f32.mrf.mxu0
        %v2241 = vadd.f32 0.0, %v2240
        %v2242 = vpop.f32.mrf.mxu0
        %v2243 = vadd.f32 0.0, %v2242
        %2244 = vmatmul.bf16.gmra.mxu0 %v2144
        %v2245 = vpop.f32.mrf.mxu0
        %v2246 = vadd.f32 0.0, %v2245
        %v2247 = vpop.f32.mrf.mxu0
        %v2248 = vadd.f32 0.0, %v2247
        %2249 = vmatmul.bf16.gmra.mxu0 %v2145
        %v2250 = vpop.f32.mrf.mxu0
        %v2251 = vadd.f32 0.0, %v2250
        %v2252 = vpop.f32.mrf.mxu0
        %v2253 = vadd.f32 0.0, %v2252
        %2254 = vmatmul.bf16.gmra.mxu0 %v2146
        %v2255 = vpop.f32.mrf.mxu0
        %v2256 = vadd.f32 0.0, %v2255
        %v2257 = vpop.f32.mrf.mxu0
        %v2258 = vadd.f32 0.0, %v2257
        %2259 = vmatmul.bf16.gmra.mxu0 %v2147
        %v2260 = vpop.f32.mrf.mxu0
        %v2261 = vadd.f32 0.0, %v2260
        %v2262 = vpop.f32.mrf.mxu0
        %v2263 = vadd.f32 0.0, %v2262
        %2264 = vmatmul.bf16.gmra.mxu0 %v2148
        %v2265 = vpop.f32.mrf.mxu0
        %v2266 = vadd.f32 0.0, %v2265
        %v2267 = vpop.f32.mrf.mxu0
        %v2268 = vadd.f32 0.0, %v2267
        %2269 = vmatmul.bf16.gmra.mxu0 %v2149
        %v2270 = vpop.f32.mrf.mxu0
        %v2271 = vadd.f32 0.0, %v2270
        %v2272 = vpop.f32.mrf.mxu0
        %v2273 = vadd.f32 0.0, %v2272
        %2274 = vmatmul.bf16.gmra.mxu0 %v2150
        %v2275 = vpop.f32.mrf.mxu0
        %v2276 = vadd.f32 0.0, %v2275
        %v2277 = vpop.f32.mrf.mxu0
        %v2278 = vadd.f32 0.0, %v2277
        %2279 = vmatmul.bf16.gmra.mxu0 %v2151
        %v2280 = vpop.f32.mrf.mxu0
        %v2281 = vadd.f32 0.0, %v2280
        %v2282 = vpop.f32.mrf.mxu0
        %v2283 = vadd.f32 0.0, %v2282
        %2284 = vmatmul.bf16.gmra.mxu0 %v2152
        %v2285 = vpop.f32.mrf.mxu0
        %v2286 = vadd.f32 0.0, %v2285
        %v2287 = vpop.f32.mrf.mxu0
        %v2288 = vadd.f32 0.0, %v2287
        %2289 = vmatmul.bf16.gmra.mxu0 %v2153
        %v2290 = vpop.f32.mrf.mxu0
        %v2291 = vadd.f32 0.0, %v2290
        %v2292 = vpop.f32.mrf.mxu0
        %v2293 = vadd.f32 0.0, %v2292
        %2294 = vmatmul.bf16.gmra.mxu0 %v2154
        %v2295 = vpop.f32.mrf.mxu0
        %v2296 = vadd.f32 0.0, %v2295
        %v2297 = vpop.f32.mrf.mxu0
        %v2298 = vadd.f32 0.0, %v2297
        %2299 = vmatmul.bf16.gmra.mxu0 %v2155
        %v2300 = vpop.f32.mrf.mxu0
        %v2301 = vadd.f32 0.0, %v2300
        %v2302 = vpop.f32.mrf.mxu0
        %v2303 = vadd.f32 0.0, %v2302
        %2304 = vmatmul.bf16.gmra.mxu0 %v2156
        %v2305 = vpop.f32.mrf.mxu0
        %v2306 = vadd.f32 0.0, %v2305
        %v2307 = vpop.f32.mrf.mxu0
        %v2308 = vadd.f32 0.0, %v2307
        %2309 = vdwg.mxu0
        %v2310 = vadd.f32 %v1964, %v2231
        %v2311 = vadd.f32 %v1965, %v2233
        %v2312 = vadd.f32 %v1966, %v2236
        %v2313 = vadd.f32 %v1967, %v2238
        %v2314 = vadd.f32 %v1968, %v2241
        %v2315 = vadd.f32 %v1969, %v2243
        %v2316 = vadd.f32 %v1970, %v2246
        %v2317 = vadd.f32 %v1971, %v2248
        %v2318 = vadd.f32 %v1972, %v2251
        %v2319 = vadd.f32 %v1973, %v2253
        %v2320 = vadd.f32 %v1974, %v2256
        %v2321 = vadd.f32 %v1975, %v2258
        %v2322 = vadd.f32 %v1976, %v2261
        %v2323 = vadd.f32 %v1977, %v2263
        %v2324 = vadd.f32 %v1978, %v2266
        %v2325 = vadd.f32 %v1979, %v2268
        %v2326 = vadd.f32 %v1980, %v2271
        %v2327 = vadd.f32 %v1981, %v2273
        %v2328 = vadd.f32 %v1982, %v2276
        %v2329 = vadd.f32 %v1983, %v2278
        %v2330 = vadd.f32 %v1984, %v2281
        %v2331 = vadd.f32 %v1985, %v2283
        %v2332 = vadd.f32 %v1986, %v2286
        %v2333 = vadd.f32 %v1987, %v2288
        %v2334 = vadd.f32 %v1988, %v2291
        %v2335 = vadd.f32 %v1989, %v2293
        %v2336 = vadd.f32 %v1990, %v2296
        %v2337 = vadd.f32 %v1991, %v2298
        %v2338 = vadd.f32 %v1992, %v2301
        %v2339 = vadd.f32 %v1993, %v2303
        %v2340 = vadd.f32 %v1994, %v2306
        %v2341 = vadd.f32 %v1995, %v2308
        %v2342 = vld [vmem:[%s612 + $0x9] sm:$0xff]
        %v2343 = vld [vmem:[%s612 + $0x11] sm:$0xff]
        %v2344 = vld [vmem:[%s612 + $0x29] sm:$0xff]
        %v2345 = vld [vmem:[%s612 + $0x31] sm:$0xff]
        %v2346 = vld [vmem:[%s612 + $0x49] sm:$0xff]
        %v2347 = vld [vmem:[%s612 + $0x51] sm:$0xff]
        %v2348 = vld [vmem:[%s612 + $0x69] sm:$0xff]
        %v2349 = vld [vmem:[%s612 + $0x71] sm:$0xff]
        %v2350 = vld [vmem:[%s612 + $0x89] sm:$0xff]
        %v2351 = vld [vmem:[%s612 + $0x91] sm:$0xff]
        %v2352 = vld [vmem:[%s612 + $0xa9] sm:$0xff]
        %v2353 = vld [vmem:[%s612 + $0xb1] sm:$0xff]
        %v2354 = vld [vmem:[%s612 + $0xc9] sm:$0xff]
        %v2355 = vld [vmem:[%s612 + $0xd1] sm:$0xff]
        %v2356 = vld [vmem:[%s612 + $0xe9] sm:$0xff]
        %v2357 = vld [vmem:[%s612 + $0xf1] sm:$0xff]
        %v2358 = vld [vmem:[%s612 + $0x109] sm:$0xff]
        %v2359 = vld [vmem:[%s612 + $0x111] sm:$0xff]
        %v2360 = vld [vmem:[%s612 + $0x129] sm:$0xff]
        %v2361 = vld [vmem:[%s612 + $0x131] sm:$0xff]
        %v2362 = vld [vmem:[%s612 + $0x149] sm:$0xff]
        %v2363 = vld [vmem:[%s612 + $0x151] sm:$0xff]
        %v2364 = vld [vmem:[%s612 + $0x169] sm:$0xff]
        %v2365 = vld [vmem:[%s612 + $0x171] sm:$0xff]
        %v2366 = vld [vmem:[%s612 + $0x189] sm:$0xff]
        %v2367 = vld [vmem:[%s612 + $0x191] sm:$0xff]
        %v2368 = vld [vmem:[%s612 + $0x1a9] sm:$0xff]
        %v2369 = vld [vmem:[%s612 + $0x1b1] sm:$0xff]
        %v2370 = vld [vmem:[%s612 + $0x1c9] sm:$0xff]
        %v2371 = vld [vmem:[%s612 + $0x1d1] sm:$0xff]
        %v2372 = vld [vmem:[%s612 + $0x1e9] sm:$0xff]
        %v2373 = vld [vmem:[%s612 + $0x1f1] sm:$0xff]
        %v2374 = vpack.c.bf16 %v2342, %v2342
        %v2375 = vpack.c.bf16 %v2343, %v2343
        %v2376 = vpack.c.bf16 %v2344, %v2344
        %v2377 = vpack.c.bf16 %v2345, %v2345
        %v2378 = vpack.c.bf16 %v2346, %v2346
        %v2379 = vpack.c.bf16 %v2347, %v2347
        %v2380 = vpack.c.bf16 %v2348, %v2348
        %v2381 = vpack.c.bf16 %v2349, %v2349
        %v2382 = vpack.c.bf16 %v2350, %v2350
        %v2383 = vpack.c.bf16 %v2351, %v2351
        %v2384 = vpack.c.bf16 %v2352, %v2352
        %v2385 = vpack.c.bf16 %v2353, %v2353
        %v2386 = vpack.c.bf16 %v2354, %v2354
        %v2387 = vpack.c.bf16 %v2355, %v2355
        %v2388 = vpack.c.bf16 %v2356, %v2356
        %v2389 = vpack.c.bf16 %v2357, %v2357
        %v2390 = vpack.c.bf16 %v2358, %v2358
        %v2391 = vpack.c.bf16 %v2359, %v2359
        %v2392 = vpack.c.bf16 %v2360, %v2360
        %v2393 = vpack.c.bf16 %v2361, %v2361
        %v2394 = vpack.c.bf16 %v2362, %v2362
        %v2395 = vpack.c.bf16 %v2363, %v2363
        %v2396 = vpack.c.bf16 %v2364, %v2364
        %v2397 = vpack.c.bf16 %v2365, %v2365
        %v2398 = vpack.c.bf16 %v2366, %v2366
        %v2399 = vpack.c.bf16 %v2367, %v2367
        %v2400 = vpack.c.bf16 %v2368, %v2368
        %v2401 = vpack.c.bf16 %v2369, %v2369
        %v2402 = vpack.c.bf16 %v2370, %v2370
        %v2403 = vpack.c.bf16 %v2371, %v2371
        %v2404 = vpack.c.bf16 %v2372, %v2372
        %v2405 = vpack.c.bf16 %v2373, %v2373
        %s2406 = scalar_lea.vmem [#allocation8], 320
        %v2407 = vld [vmem:[%s2406] sm:$0xf]
        %v2408 = vld [vmem:[%s2406 + $0x4] sm:$0xf]
        %v2409 = vld [vmem:[%s2406 + $0x8] sm:$0xf]
        %v2410 = vld [vmem:[%s2406 + $0xc] sm:$0xf]
        %v2411 = vld [vmem:[%s2406 + $0x10] sm:$0xf]
        %v2412 = vld [vmem:[%s2406 + $0x14] sm:$0xf]
        %v2413 = vld [vmem:[%s2406 + $0x18] sm:$0xf]
        %v2414 = vld [vmem:[%s2406 + $0x1c] sm:$0xf]
        %v2415 = vld [vmem:[%s2406 + $0x20] sm:$0xf]
        %v2416 = vld [vmem:[%s2406 + $0x24] sm:$0xf]
        %v2417 = vld [vmem:[%s2406 + $0x28] sm:$0xf]
        %v2418 = vld [vmem:[%s2406 + $0x2c] sm:$0xf]
        %v2419 = vld [vmem:[%s2406 + $0x30] sm:$0xf]
        %v2420 = vld [vmem:[%s2406 + $0x34] sm:$0xf]
        %v2421 = vld [vmem:[%s2406 + $0x38] sm:$0xf]
        %v2422 = vld [vmem:[%s2406 + $0x3c] sm:$0xf]
        %v2455 = vunpack.c.l.b16 %v2374
        %v2456 = vunpack.c.l.b16 %v2375
        %v2457 = vunpack.c.l.b16 %v2376
        %v2458 = vunpack.c.l.b16 %v2377
        %v2459 = vunpack.c.l.b16 %v2378
        %v2460 = vunpack.c.l.b16 %v2379
        %v2461 = vunpack.c.l.b16 %v2380
        %v2462 = vunpack.c.l.b16 %v2381
        %v2463 = vunpack.c.l.b16 %v2382
        %v2464 = vunpack.c.l.b16 %v2383
        %v2465 = vunpack.c.l.b16 %v2384
        %v2466 = vunpack.c.l.b16 %v2385
        %v2467 = vunpack.c.l.b16 %v2386
        %v2468 = vunpack.c.l.b16 %v2387
        %v2469 = vunpack.c.l.b16 %v2388
        %v2470 = vunpack.c.l.b16 %v2389
        %v2471 = vunpack.c.l.b16 %v2390
        %v2472 = vunpack.c.l.b16 %v2391
        %v2473 = vunpack.c.l.b16 %v2392
        %v2474 = vunpack.c.l.b16 %v2393
        %v2475 = vunpack.c.l.b16 %v2394
        %v2476 = vunpack.c.l.b16 %v2395
        %v2477 = vunpack.c.l.b16 %v2396
        %v2478 = vunpack.c.l.b16 %v2397
        %v2479 = vunpack.c.l.b16 %v2398
        %v2480 = vunpack.c.l.b16 %v2399
        %v2481 = vunpack.c.l.b16 %v2400
        %v2482 = vunpack.c.l.b16 %v2401
        %v2483 = vunpack.c.l.b16 %v2402
        %v2484 = vunpack.c.l.b16 %v2403
        %v2485 = vunpack.c.l.b16 %v2404
        %v2486 = vunpack.c.l.b16 %v2405
        %v2487 = vpack.c.b16 %v2456, %v2455
        %v2488 = vpack.c.b16 %v2458, %v2457
        %v2489 = vpack.c.b16 %v2460, %v2459
        %v2490 = vpack.c.b16 %v2462, %v2461
        %v2491 = vpack.c.b16 %v2464, %v2463
        %v2492 = vpack.c.b16 %v2466, %v2465
        %v2493 = vpack.c.b16 %v2468, %v2467
        %v2494 = vpack.c.b16 %v2470, %v2469
        %v2495 = vpack.c.b16 %v2472, %v2471
        %v2496 = vpack.c.b16 %v2474, %v2473
        %v2497 = vpack.c.b16 %v2476, %v2475
        %v2498 = vpack.c.b16 %v2478, %v2477
        %v2499 = vpack.c.b16 %v2480, %v2479
        %v2500 = vpack.c.b16 %v2482, %v2481
        %v2501 = vpack.c.b16 %v2484, %v2483
        %v2502 = vpack.c.b16 %v2486, %v2485
        %v2535 = vunpack.c.l.b16 %v2407
        %v2536 = vunpack.c.l.b16 %v2408
        %v2537 = vunpack.c.l.b16 %v2409
        %v2538 = vunpack.c.l.b16 %v2410
        %v2539 = vunpack.c.l.b16 %v2411
        %v2540 = vunpack.c.l.b16 %v2412
        %v2541 = vunpack.c.l.b16 %v2413
        %v2542 = vunpack.c.l.b16 %v2414
        %v2543 = vunpack.c.l.b16 %v2415
        %v2544 = vunpack.c.l.b16 %v2416
        %v2545 = vunpack.c.l.b16 %v2417
        %v2546 = vunpack.c.l.b16 %v2418
        %v2547 = vunpack.c.l.b16 %v2419
        %v2548 = vunpack.c.l.b16 %v2420
        %v2549 = vunpack.c.l.b16 %v2421
        %v2550 = vunpack.c.l.b16 %v2422
        %v2551 = vpack.c.b16 %v2536, %v2535
        %v2552 = vpack.c.b16 %v2538, %v2537
        %v2553 = vpack.c.b16 %v2540, %v2539
        %v2554 = vpack.c.b16 %v2542, %v2541
        %v2555 = vpack.c.b16 %v2544, %v2543
        %v2556 = vpack.c.b16 %v2546, %v2545
        %v2557 = vpack.c.b16 %v2548, %v2547
        %v2558 = vpack.c.b16 %v2550, %v2549
        %2567 = vmatpush.bf16.msra.mxu0 %v2558
        %2568 = vmatpush.bf16.msra.mxu0 %v2557
        %2569 = vmatpush.bf16.msra.mxu0 %v2556
        %2570 = vmatpush.bf16.msra.mxu0 %v2555
        %2571 = vmatpush.bf16.msra.mxu0 %v2554
        %2572 = vmatpush.bf16.msra.mxu0 %v2553
        %2573 = vmatpush.bf16.msra.mxu0 %v2552
        %2574 = vmatpush.bf16.msra.mxu0 %v2551
        %2575 = vmatmul.bf16.gmra.mxu0 %v2487
        %v2576 = vpop.f32.mrf.mxu0
        %v2577 = vadd.f32 0.0, %v2576
        %v2578 = vpop.f32.mrf.mxu0
        %v2579 = vadd.f32 0.0, %v2578
        %2580 = vmatmul.bf16.gmra.mxu0 %v2488
        %v2581 = vpop.f32.mrf.mxu0
        %v2582 = vadd.f32 0.0, %v2581
        %v2583 = vpop.f32.mrf.mxu0
        %v2584 = vadd.f32 0.0, %v2583
        %2585 = vmatmul.bf16.gmra.mxu0 %v2489
        %v2586 = vpop.f32.mrf.mxu0
        %v2587 = vadd.f32 0.0, %v2586
        %v2588 = vpop.f32.mrf.mxu0
        %v2589 = vadd.f32 0.0, %v2588
        %2590 = vmatmul.bf16.gmra.mxu0 %v2490
        %v2591 = vpop.f32.mrf.mxu0
        %v2592 = vadd.f32 0.0, %v2591
        %v2593 = vpop.f32.mrf.mxu0
        %v2594 = vadd.f32 0.0, %v2593
        %2595 = vmatmul.bf16.gmra.mxu0 %v2491
        %v2596 = vpop.f32.mrf.mxu0
        %v2597 = vadd.f32 0.0, %v2596
        %v2598 = vpop.f32.mrf.mxu0
        %v2599 = vadd.f32 0.0, %v2598
        %2600 = vmatmul.bf16.gmra.mxu0 %v2492
        %v2601 = vpop.f32.mrf.mxu0
        %v2602 = vadd.f32 0.0, %v2601
        %v2603 = vpop.f32.mrf.mxu0
        %v2604 = vadd.f32 0.0, %v2603
        %2605 = vmatmul.bf16.gmra.mxu0 %v2493
        %v2606 = vpop.f32.mrf.mxu0
        %v2607 = vadd.f32 0.0, %v2606
        %v2608 = vpop.f32.mrf.mxu0
        %v2609 = vadd.f32 0.0, %v2608
        %2610 = vmatmul.bf16.gmra.mxu0 %v2494
        %v2611 = vpop.f32.mrf.mxu0
        %v2612 = vadd.f32 0.0, %v2611
        %v2613 = vpop.f32.mrf.mxu0
        %v2614 = vadd.f32 0.0, %v2613
        %2615 = vmatmul.bf16.gmra.mxu0 %v2495
        %v2616 = vpop.f32.mrf.mxu0
        %v2617 = vadd.f32 0.0, %v2616
        %v2618 = vpop.f32.mrf.mxu0
        %v2619 = vadd.f32 0.0, %v2618
        %2620 = vmatmul.bf16.gmra.mxu0 %v2496
        %v2621 = vpop.f32.mrf.mxu0
        %v2622 = vadd.f32 0.0, %v2621
        %v2623 = vpop.f32.mrf.mxu0
        %v2624 = vadd.f32 0.0, %v2623
        %2625 = vmatmul.bf16.gmra.mxu0 %v2497
        %v2626 = vpop.f32.mrf.mxu0
        %v2627 = vadd.f32 0.0, %v2626
        %v2628 = vpop.f32.mrf.mxu0
        %v2629 = vadd.f32 0.0, %v2628
        %2630 = vmatmul.bf16.gmra.mxu0 %v2498
        %v2631 = vpop.f32.mrf.mxu0
        %v2632 = vadd.f32 0.0, %v2631
        %v2633 = vpop.f32.mrf.mxu0
        %v2634 = vadd.f32 0.0, %v2633
        %2635 = vmatmul.bf16.gmra.mxu0 %v2499
        %v2636 = vpop.f32.mrf.mxu0
        %v2637 = vadd.f32 0.0, %v2636
        %v2638 = vpop.f32.mrf.mxu0
        %v2639 = vadd.f32 0.0, %v2638
        %2640 = vmatmul.bf16.gmra.mxu0 %v2500
        %v2641 = vpop.f32.mrf.mxu0
        %v2642 = vadd.f32 0.0, %v2641
        %v2643 = vpop.f32.mrf.mxu0
        %v2644 = vadd.f32 0.0, %v2643
        %2645 = vmatmul.bf16.gmra.mxu0 %v2501
        %v2646 = vpop.f32.mrf.mxu0
        %v2647 = vadd.f32 0.0, %v2646
        %v2648 = vpop.f32.mrf.mxu0
        %v2649 = vadd.f32 0.0, %v2648
        %2650 = vmatmul.bf16.gmra.mxu0 %v2502
        %v2651 = vpop.f32.mrf.mxu0
        %v2652 = vadd.f32 0.0, %v2651
        %v2653 = vpop.f32.mrf.mxu0
        %v2654 = vadd.f32 0.0, %v2653
        %2655 = vdwg.mxu0
        %v2656 = vadd.f32 %v2310, %v2577
        %v2657 = vadd.f32 %v2311, %v2579
        %v2658 = vadd.f32 %v2312, %v2582
        %v2659 = vadd.f32 %v2313, %v2584
        %v2660 = vadd.f32 %v2314, %v2587
        %v2661 = vadd.f32 %v2315, %v2589
        %v2662 = vadd.f32 %v2316, %v2592
        %v2663 = vadd.f32 %v2317, %v2594
        %v2664 = vadd.f32 %v2318, %v2597
        %v2665 = vadd.f32 %v2319, %v2599
        %v2666 = vadd.f32 %v2320, %v2602
        %v2667 = vadd.f32 %v2321, %v2604
        %v2668 = vadd.f32 %v2322, %v2607
        %v2669 = vadd.f32 %v2323, %v2609
        %v2670 = vadd.f32 %v2324, %v2612
        %v2671 = vadd.f32 %v2325, %v2614
        %v2672 = vadd.f32 %v2326, %v2617
        %v2673 = vadd.f32 %v2327, %v2619
        %v2674 = vadd.f32 %v2328, %v2622
        %v2675 = vadd.f32 %v2329, %v2624
        %v2676 = vadd.f32 %v2330, %v2627
        %v2677 = vadd.f32 %v2331, %v2629
        %v2678 = vadd.f32 %v2332, %v2632
        %v2679 = vadd.f32 %v2333, %v2634
        %v2680 = vadd.f32 %v2334, %v2637
        %v2681 = vadd.f32 %v2335, %v2639
        %v2682 = vadd.f32 %v2336, %v2642
        %v2683 = vadd.f32 %v2337, %v2644
        %v2684 = vadd.f32 %v2338, %v2647
        %v2685 = vadd.f32 %v2339, %v2649
        %v2686 = vadd.f32 %v2340, %v2652
        %v2687 = vadd.f32 %v2341, %v2654
        %s2688 = scalar_lea.vmem [#allocation2], 64
        %v2689 = vld [vmem:[%s2688 + $0x7] sm:$0xff]
        %v2690 = vld [vmem:[%s2688 + $0xf] sm:$0xff]
        %v2691 = vld [vmem:[%s2688 + $0x27] sm:$0xff]
        %v2692 = vld [vmem:[%s2688 + $0x2f] sm:$0xff]
        %v2693 = vld [vmem:[%s2688 + $0x47] sm:$0xff]
        %v2694 = vld [vmem:[%s2688 + $0x4f] sm:$0xff]
        %v2695 = vld [vmem:[%s2688 + $0x67] sm:$0xff]
        %v2696 = vld [vmem:[%s2688 + $0x6f] sm:$0xff]
        %v2697 = vld [vmem:[%s2688 + $0x87] sm:$0xff]
        %v2698 = vld [vmem:[%s2688 + $0x8f] sm:$0xff]
        %v2699 = vld [vmem:[%s2688 + $0xa7] sm:$0xff]
        %v2700 = vld [vmem:[%s2688 + $0xaf] sm:$0xff]
        %v2701 = vld [vmem:[%s2688 + $0xc7] sm:$0xff]
        %v2702 = vld [vmem:[%s2688 + $0xcf] sm:$0xff]
        %v2703 = vld [vmem:[%s2688 + $0xe7] sm:$0xff]
        %v2704 = vld [vmem:[%s2688 + $0xef] sm:$0xff]
        %v2705 = vld [vmem:[%s2688 + $0x107] sm:$0xff]
        %v2706 = vld [vmem:[%s2688 + $0x10f] sm:$0xff]
        %v2707 = vld [vmem:[%s2688 + $0x127] sm:$0xff]
        %v2708 = vld [vmem:[%s2688 + $0x12f] sm:$0xff]
        %v2709 = vld [vmem:[%s2688 + $0x147] sm:$0xff]
        %v2710 = vld [vmem:[%s2688 + $0x14f] sm:$0xff]
        %v2711 = vld [vmem:[%s2688 + $0x167] sm:$0xff]
        %v2712 = vld [vmem:[%s2688 + $0x16f] sm:$0xff]
        %v2713 = vld [vmem:[%s2688 + $0x187] sm:$0xff]
        %v2714 = vld [vmem:[%s2688 + $0x18f] sm:$0xff]
        %v2715 = vld [vmem:[%s2688 + $0x1a7] sm:$0xff]
        %v2716 = vld [vmem:[%s2688 + $0x1af] sm:$0xff]
        %v2717 = vld [vmem:[%s2688 + $0x1c7] sm:$0xff]
        %v2718 = vld [vmem:[%s2688 + $0x1cf] sm:$0xff]
        %v2719 = vld [vmem:[%s2688 + $0x1e7] sm:$0xff]
        %v2720 = vld [vmem:[%s2688 + $0x1ef] sm:$0xff]
        %v2721 = vpack.c.bf16 %v2689, %v2689
        %v2722 = vpack.c.bf16 %v2690, %v2690
        %v2723 = vpack.c.bf16 %v2691, %v2691
        %v2724 = vpack.c.bf16 %v2692, %v2692
        %v2725 = vpack.c.bf16 %v2693, %v2693
        %v2726 = vpack.c.bf16 %v2694, %v2694
        %v2727 = vpack.c.bf16 %v2695, %v2695
        %v2728 = vpack.c.bf16 %v2696, %v2696
        %v2729 = vpack.c.bf16 %v2697, %v2697
        %v2730 = vpack.c.bf16 %v2698, %v2698
        %v2731 = vpack.c.bf16 %v2699, %v2699
        %v2732 = vpack.c.bf16 %v2700, %v2700
        %v2733 = vpack.c.bf16 %v2701, %v2701
        %v2734 = vpack.c.bf16 %v2702, %v2702
        %v2735 = vpack.c.bf16 %v2703, %v2703
        %v2736 = vpack.c.bf16 %v2704, %v2704
        %v2737 = vpack.c.bf16 %v2705, %v2705
        %v2738 = vpack.c.bf16 %v2706, %v2706
        %v2739 = vpack.c.bf16 %v2707, %v2707
        %v2740 = vpack.c.bf16 %v2708, %v2708
        %v2741 = vpack.c.bf16 %v2709, %v2709
        %v2742 = vpack.c.bf16 %v2710, %v2710
        %v2743 = vpack.c.bf16 %v2711, %v2711
        %v2744 = vpack.c.bf16 %v2712, %v2712
        %v2745 = vpack.c.bf16 %v2713, %v2713
        %v2746 = vpack.c.bf16 %v2714, %v2714
        %v2747 = vpack.c.bf16 %v2715, %v2715
        %v2748 = vpack.c.bf16 %v2716, %v2716
        %v2749 = vpack.c.bf16 %v2717, %v2717
        %v2750 = vpack.c.bf16 %v2718, %v2718
        %v2751 = vpack.c.bf16 %v2719, %v2719
        %v2752 = vpack.c.bf16 %v2720, %v2720
        %s2753 = scalar_lea.vmem [#allocation8], 384
        %v2754 = vld [vmem:[%s2753] sm:$0xf]
        %v2755 = vld [vmem:[%s2753 + $0x4] sm:$0xf]
        %v2756 = vld [vmem:[%s2753 + $0x8] sm:$0xf]
        %v2757 = vld [vmem:[%s2753 + $0xc] sm:$0xf]
        %v2758 = vld [vmem:[%s2753 + $0x10] sm:$0xf]
        %v2759 = vld [vmem:[%s2753 + $0x14] sm:$0xf]
        %v2760 = vld [vmem:[%s2753 + $0x18] sm:$0xf]
        %v2761 = vld [vmem:[%s2753 + $0x1c] sm:$0xf]
        %v2762 = vld [vmem:[%s2753 + $0x20] sm:$0xf]
        %v2763 = vld [vmem:[%s2753 + $0x24] sm:$0xf]
        %v2764 = vld [vmem:[%s2753 + $0x28] sm:$0xf]
        %v2765 = vld [vmem:[%s2753 + $0x2c] sm:$0xf]
        %v2766 = vld [vmem:[%s2753 + $0x30] sm:$0xf]
        %v2767 = vld [vmem:[%s2753 + $0x34] sm:$0xf]
        %v2768 = vld [vmem:[%s2753 + $0x38] sm:$0xf]
        %v2769 = vld [vmem:[%s2753 + $0x3c] sm:$0xf]
        %v2802 = vunpack.c.l.b16 %v2721
        %v2803 = vunpack.c.l.b16 %v2722
        %v2804 = vunpack.c.l.b16 %v2723
        %v2805 = vunpack.c.l.b16 %v2724
        %v2806 = vunpack.c.l.b16 %v2725
        %v2807 = vunpack.c.l.b16 %v2726
        %v2808 = vunpack.c.l.b16 %v2727
        %v2809 = vunpack.c.l.b16 %v2728
        %v2810 = vunpack.c.l.b16 %v2729
        %v2811 = vunpack.c.l.b16 %v2730
        %v2812 = vunpack.c.l.b16 %v2731
        %v2813 = vunpack.c.l.b16 %v2732
        %v2814 = vunpack.c.l.b16 %v2733
        %v2815 = vunpack.c.l.b16 %v2734
        %v2816 = vunpack.c.l.b16 %v2735
        %v2817 = vunpack.c.l.b16 %v2736
        %v2818 = vunpack.c.l.b16 %v2737
        %v2819 = vunpack.c.l.b16 %v2738
        %v2820 = vunpack.c.l.b16 %v2739
        %v2821 = vunpack.c.l.b16 %v2740
        %v2822 = vunpack.c.l.b16 %v2741
        %v2823 = vunpack.c.l.b16 %v2742
        %v2824 = vunpack.c.l.b16 %v2743
        %v2825 = vunpack.c.l.b16 %v2744
        %v2826 = vunpack.c.l.b16 %v2745
        %v2827 = vunpack.c.l.b16 %v2746
        %v2828 = vunpack.c.l.b16 %v2747
        %v2829 = vunpack.c.l.b16 %v2748
        %v2830 = vunpack.c.l.b16 %v2749
        %v2831 = vunpack.c.l.b16 %v2750
        %v2832 = vunpack.c.l.b16 %v2751
        %v2833 = vunpack.c.l.b16 %v2752
        %v2834 = vpack.c.b16 %v2803, %v2802
        %v2835 = vpack.c.b16 %v2805, %v2804
        %v2836 = vpack.c.b16 %v2807, %v2806
        %v2837 = vpack.c.b16 %v2809, %v2808
        %v2838 = vpack.c.b16 %v2811, %v2810
        %v2839 = vpack.c.b16 %v2813, %v2812
        %v2840 = vpack.c.b16 %v2815, %v2814
        %v2841 = vpack.c.b16 %v2817, %v2816
        %v2842 = vpack.c.b16 %v2819, %v2818
        %v2843 = vpack.c.b16 %v2821, %v2820
        %v2844 = vpack.c.b16 %v2823, %v2822
        %v2845 = vpack.c.b16 %v2825, %v2824
        %v2846 = vpack.c.b16 %v2827, %v2826
        %v2847 = vpack.c.b16 %v2829, %v2828
        %v2848 = vpack.c.b16 %v2831, %v2830
        %v2849 = vpack.c.b16 %v2833, %v2832
        %v2882 = vunpack.c.l.b16 %v2754
        %v2883 = vunpack.c.l.b16 %v2755
        %v2884 = vunpack.c.l.b16 %v2756
        %v2885 = vunpack.c.l.b16 %v2757
        %v2886 = vunpack.c.l.b16 %v2758
        %v2887 = vunpack.c.l.b16 %v2759
        %v2888 = vunpack.c.l.b16 %v2760
        %v2889 = vunpack.c.l.b16 %v2761
        %v2890 = vunpack.c.l.b16 %v2762
        %v2891 = vunpack.c.l.b16 %v2763
        %v2892 = vunpack.c.l.b16 %v2764
        %v2893 = vunpack.c.l.b16 %v2765
        %v2894 = vunpack.c.l.b16 %v2766
        %v2895 = vunpack.c.l.b16 %v2767
        %v2896 = vunpack.c.l.b16 %v2768
        %v2897 = vunpack.c.l.b16 %v2769
        %v2898 = vpack.c.b16 %v2883, %v2882
        %v2899 = vpack.c.b16 %v2885, %v2884
        %v2900 = vpack.c.b16 %v2887, %v2886
        %v2901 = vpack.c.b16 %v2889, %v2888
        %v2902 = vpack.c.b16 %v2891, %v2890
        %v2903 = vpack.c.b16 %v2893, %v2892
        %v2904 = vpack.c.b16 %v2895, %v2894
        %v2905 = vpack.c.b16 %v2897, %v2896
        %2914 = vmatpush.bf16.msra.mxu0 %v2905
        %2915 = vmatpush.bf16.msra.mxu0 %v2904
        %2916 = vmatpush.bf16.msra.mxu0 %v2903
        %2917 = vmatpush.bf16.msra.mxu0 %v2902
        %2918 = vmatpush.bf16.msra.mxu0 %v2901
        %2919 = vmatpush.bf16.msra.mxu0 %v2900
        %2920 = vmatpush.bf16.msra.mxu0 %v2899
        %2921 = vmatpush.bf16.msra.mxu0 %v2898
        %2922 = vmatmul.bf16.gmra.mxu0 %v2834
        %v2923 = vpop.f32.mrf.mxu0
        %v2924 = vadd.f32 0.0, %v2923
        %v2925 = vpop.f32.mrf.mxu0
        %v2926 = vadd.f32 0.0, %v2925
        %2927 = vmatmul.bf16.gmra.mxu0 %v2835
        %v2928 = vpop.f32.mrf.mxu0
        %v2929 = vadd.f32 0.0, %v2928
        %v2930 = vpop.f32.mrf.mxu0
        %v2931 = vadd.f32 0.0, %v2930
        %2932 = vmatmul.bf16.gmra.mxu0 %v2836
        %v2933 = vpop.f32.mrf.mxu0
        %v2934 = vadd.f32 0.0, %v2933
        %v2935 = vpop.f32.mrf.mxu0
        %v2936 = vadd.f32 0.0, %v2935
        %2937 = vmatmul.bf16.gmra.mxu0 %v2837
        %v2938 = vpop.f32.mrf.mxu0
        %v2939 = vadd.f32 0.0, %v2938
        %v2940 = vpop.f32.mrf.mxu0
        %v2941 = vadd.f32 0.0, %v2940
        %2942 = vmatmul.bf16.gmra.mxu0 %v2838
        %v2943 = vpop.f32.mrf.mxu0
        %v2944 = vadd.f32 0.0, %v2943
        %v2945 = vpop.f32.mrf.mxu0
        %v2946 = vadd.f32 0.0, %v2945
        %2947 = vmatmul.bf16.gmra.mxu0 %v2839
        %v2948 = vpop.f32.mrf.mxu0
        %v2949 = vadd.f32 0.0, %v2948
        %v2950 = vpop.f32.mrf.mxu0
        %v2951 = vadd.f32 0.0, %v2950
        %2952 = vmatmul.bf16.gmra.mxu0 %v2840
        %v2953 = vpop.f32.mrf.mxu0
        %v2954 = vadd.f32 0.0, %v2953
        %v2955 = vpop.f32.mrf.mxu0
        %v2956 = vadd.f32 0.0, %v2955
        %2957 = vmatmul.bf16.gmra.mxu0 %v2841
        %v2958 = vpop.f32.mrf.mxu0
        %v2959 = vadd.f32 0.0, %v2958
        %v2960 = vpop.f32.mrf.mxu0
        %v2961 = vadd.f32 0.0, %v2960
        %2962 = vmatmul.bf16.gmra.mxu0 %v2842
        %v2963 = vpop.f32.mrf.mxu0
        %v2964 = vadd.f32 0.0, %v2963
        %v2965 = vpop.f32.mrf.mxu0
        %v2966 = vadd.f32 0.0, %v2965
        %2967 = vmatmul.bf16.gmra.mxu0 %v2843
        %v2968 = vpop.f32.mrf.mxu0
        %v2969 = vadd.f32 0.0, %v2968
        %v2970 = vpop.f32.mrf.mxu0
        %v2971 = vadd.f32 0.0, %v2970
        %2972 = vmatmul.bf16.gmra.mxu0 %v2844
        %v2973 = vpop.f32.mrf.mxu0
        %v2974 = vadd.f32 0.0, %v2973
        %v2975 = vpop.f32.mrf.mxu0
        %v2976 = vadd.f32 0.0, %v2975
        %2977 = vmatmul.bf16.gmra.mxu0 %v2845
        %v2978 = vpop.f32.mrf.mxu0
        %v2979 = vadd.f32 0.0, %v2978
        %v2980 = vpop.f32.mrf.mxu0
        %v2981 = vadd.f32 0.0, %v2980
        %2982 = vmatmul.bf16.gmra.mxu0 %v2846
        %v2983 = vpop.f32.mrf.mxu0
        %v2984 = vadd.f32 0.0, %v2983
        %v2985 = vpop.f32.mrf.mxu0
        %v2986 = vadd.f32 0.0, %v2985
        %2987 = vmatmul.bf16.gmra.mxu0 %v2847
        %v2988 = vpop.f32.mrf.mxu0
        %v2989 = vadd.f32 0.0, %v2988
        %v2990 = vpop.f32.mrf.mxu0
        %v2991 = vadd.f32 0.0, %v2990
        %2992 = vmatmul.bf16.gmra.mxu0 %v2848
        %v2993 = vpop.f32.mrf.mxu0
        %v2994 = vadd.f32 0.0, %v2993
        %v2995 = vpop.f32.mrf.mxu0
        %v2996 = vadd.f32 0.0, %v2995
        %2997 = vmatmul.bf16.gmra.mxu0 %v2849
        %v2998 = vpop.f32.mrf.mxu0
        %v2999 = vadd.f32 0.0, %v2998
        %v3000 = vpop.f32.mrf.mxu0
        %v3001 = vadd.f32 0.0, %v3000
        %3002 = vdwg.mxu0
        %v3003 = vadd.f32 %v2656, %v2924
        %v3004 = vadd.f32 %v2657, %v2926
        %v3005 = vadd.f32 %v2658, %v2929
        %v3006 = vadd.f32 %v2659, %v2931
        %v3007 = vadd.f32 %v2660, %v2934
        %v3008 = vadd.f32 %v2661, %v2936
        %v3009 = vadd.f32 %v2662, %v2939
        %v3010 = vadd.f32 %v2663, %v2941
        %v3011 = vadd.f32 %v2664, %v2944
        %v3012 = vadd.f32 %v2665, %v2946
        %v3013 = vadd.f32 %v2666, %v2949
        %v3014 = vadd.f32 %v2667, %v2951
        %v3015 = vadd.f32 %v2668, %v2954
        %v3016 = vadd.f32 %v2669, %v2956
        %v3017 = vadd.f32 %v2670, %v2959
        %v3018 = vadd.f32 %v2671, %v2961
        %v3019 = vadd.f32 %v2672, %v2964
        %v3020 = vadd.f32 %v2673, %v2966
        %v3021 = vadd.f32 %v2674, %v2969
        %v3022 = vadd.f32 %v2675, %v2971
        %v3023 = vadd.f32 %v2676, %v2974
        %v3024 = vadd.f32 %v2677, %v2976
        %v3025 = vadd.f32 %v2678, %v2979
        %v3026 = vadd.f32 %v2679, %v2981
        %v3027 = vadd.f32 %v2680, %v2984
        %v3028 = vadd.f32 %v2681, %v2986
        %v3029 = vadd.f32 %v2682, %v2989
        %v3030 = vadd.f32 %v2683, %v2991
        %v3031 = vadd.f32 %v2684, %v2994
        %v3032 = vadd.f32 %v2685, %v2996
        %v3033 = vadd.f32 %v2686, %v2999
        %v3034 = vadd.f32 %v2687, %v3001
        %v3035 = vld [vmem:[%s2688 + $0x8] sm:$0xff]
        %v3036 = vld [vmem:[%s2688 + $0x10] sm:$0xff]
        %v3037 = vld [vmem:[%s2688 + $0x28] sm:$0xff]
        %v3038 = vld [vmem:[%s2688 + $0x30] sm:$0xff]
        %v3039 = vld [vmem:[%s2688 + $0x48] sm:$0xff]
        %v3040 = vld [vmem:[%s2688 + $0x50] sm:$0xff]
        %v3041 = vld [vmem:[%s2688 + $0x68] sm:$0xff]
        %v3042 = vld [vmem:[%s2688 + $0x70] sm:$0xff]
        %v3043 = vld [vmem:[%s2688 + $0x88] sm:$0xff]
        %v3044 = vld [vmem:[%s2688 + $0x90] sm:$0xff]
        %v3045 = vld [vmem:[%s2688 + $0xa8] sm:$0xff]
        %v3046 = vld [vmem:[%s2688 + $0xb0] sm:$0xff]
        %v3047 = vld [vmem:[%s2688 + $0xc8] sm:$0xff]
        %v3048 = vld [vmem:[%s2688 + $0xd0] sm:$0xff]
        %v3049 = vld [vmem:[%s2688 + $0xe8] sm:$0xff]
        %v3050 = vld [vmem:[%s2688 + $0xf0] sm:$0xff]
        %v3051 = vld [vmem:[%s2688 + $0x108] sm:$0xff]
        %v3052 = vld [vmem:[%s2688 + $0x110] sm:$0xff]
        %v3053 = vld [vmem:[%s2688 + $0x128] sm:$0xff]
        %v3054 = vld [vmem:[%s2688 + $0x130] sm:$0xff]
        %v3055 = vld [vmem:[%s2688 + $0x148] sm:$0xff]
        %v3056 = vld [vmem:[%s2688 + $0x150] sm:$0xff]
        %v3057 = vld [vmem:[%s2688 + $0x168] sm:$0xff]
        %v3058 = vld [vmem:[%s2688 + $0x170] sm:$0xff]
        %v3059 = vld [vmem:[%s2688 + $0x188] sm:$0xff]
        %v3060 = vld [vmem:[%s2688 + $0x190] sm:$0xff]
        %v3061 = vld [vmem:[%s2688 + $0x1a8] sm:$0xff]
        %v3062 = vld [vmem:[%s2688 + $0x1b0] sm:$0xff]
        %v3063 = vld [vmem:[%s2688 + $0x1c8] sm:$0xff]
        %v3064 = vld [vmem:[%s2688 + $0x1d0] sm:$0xff]
        %v3065 = vld [vmem:[%s2688 + $0x1e8] sm:$0xff]
        %v3066 = vld [vmem:[%s2688 + $0x1f0] sm:$0xff]
        %v3067 = vpack.c.bf16 %v3035, %v3035
        %v3068 = vpack.c.bf16 %v3036, %v3036
        %v3069 = vpack.c.bf16 %v3037, %v3037
        %v3070 = vpack.c.bf16 %v3038, %v3038
        %v3071 = vpack.c.bf16 %v3039, %v3039
        %v3072 = vpack.c.bf16 %v3040, %v3040
        %v3073 = vpack.c.bf16 %v3041, %v3041
        %v3074 = vpack.c.bf16 %v3042, %v3042
        %v3075 = vpack.c.bf16 %v3043, %v3043
        %v3076 = vpack.c.bf16 %v3044, %v3044
        %v3077 = vpack.c.bf16 %v3045, %v3045
        %v3078 = vpack.c.bf16 %v3046, %v3046
        %v3079 = vpack.c.bf16 %v3047, %v3047
        %v3080 = vpack.c.bf16 %v3048, %v3048
        %v3081 = vpack.c.bf16 %v3049, %v3049
        %v3082 = vpack.c.bf16 %v3050, %v3050
        %v3083 = vpack.c.bf16 %v3051, %v3051
        %v3084 = vpack.c.bf16 %v3052, %v3052
        %v3085 = vpack.c.bf16 %v3053, %v3053
        %v3086 = vpack.c.bf16 %v3054, %v3054
        %v3087 = vpack.c.bf16 %v3055, %v3055
        %v3088 = vpack.c.bf16 %v3056, %v3056
        %v3089 = vpack.c.bf16 %v3057, %v3057
        %v3090 = vpack.c.bf16 %v3058, %v3058
        %v3091 = vpack.c.bf16 %v3059, %v3059
        %v3092 = vpack.c.bf16 %v3060, %v3060
        %v3093 = vpack.c.bf16 %v3061, %v3061
        %v3094 = vpack.c.bf16 %v3062, %v3062
        %v3095 = vpack.c.bf16 %v3063, %v3063
        %v3096 = vpack.c.bf16 %v3064, %v3064
        %v3097 = vpack.c.bf16 %v3065, %v3065
        %v3098 = vpack.c.bf16 %v3066, %v3066
        %s3099 = scalar_lea.vmem [#allocation8], 448
        %v3100 = vld [vmem:[%s3099] sm:$0xf]
        %v3101 = vld [vmem:[%s3099 + $0x4] sm:$0xf]
        %v3102 = vld [vmem:[%s3099 + $0x8] sm:$0xf]
        %v3103 = vld [vmem:[%s3099 + $0xc] sm:$0xf]
        %v3104 = vld [vmem:[%s3099 + $0x10] sm:$0xf]
        %v3105 = vld [vmem:[%s3099 + $0x14] sm:$0xf]
        %v3106 = vld [vmem:[%s3099 + $0x18] sm:$0xf]
        %v3107 = vld [vmem:[%s3099 + $0x1c] sm:$0xf]
        %v3108 = vld [vmem:[%s3099 + $0x20] sm:$0xf]
        %v3109 = vld [vmem:[%s3099 + $0x24] sm:$0xf]
        %v3110 = vld [vmem:[%s3099 + $0x28] sm:$0xf]
        %v3111 = vld [vmem:[%s3099 + $0x2c] sm:$0xf]
        %v3112 = vld [vmem:[%s3099 + $0x30] sm:$0xf]
        %v3113 = vld [vmem:[%s3099 + $0x34] sm:$0xf]
        %v3114 = vld [vmem:[%s3099 + $0x38] sm:$0xf]
        %v3115 = vld [vmem:[%s3099 + $0x3c] sm:$0xf]
        %v3148 = vunpack.c.l.b16 %v3067
        %v3149 = vunpack.c.l.b16 %v3068
        %v3150 = vunpack.c.l.b16 %v3069
        %v3151 = vunpack.c.l.b16 %v3070
        %v3152 = vunpack.c.l.b16 %v3071
        %v3153 = vunpack.c.l.b16 %v3072
        %v3154 = vunpack.c.l.b16 %v3073
        %v3155 = vunpack.c.l.b16 %v3074
        %v3156 = vunpack.c.l.b16 %v3075
        %v3157 = vunpack.c.l.b16 %v3076
        %v3158 = vunpack.c.l.b16 %v3077
        %v3159 = vunpack.c.l.b16 %v3078
        %v3160 = vunpack.c.l.b16 %v3079
        %v3161 = vunpack.c.l.b16 %v3080
        %v3162 = vunpack.c.l.b16 %v3081
        %v3163 = vunpack.c.l.b16 %v3082
        %v3164 = vunpack.c.l.b16 %v3083
        %v3165 = vunpack.c.l.b16 %v3084
        %v3166 = vunpack.c.l.b16 %v3085
        %v3167 = vunpack.c.l.b16 %v3086
        %v3168 = vunpack.c.l.b16 %v3087
        %v3169 = vunpack.c.l.b16 %v3088
        %v3170 = vunpack.c.l.b16 %v3089
        %v3171 = vunpack.c.l.b16 %v3090
        %v3172 = vunpack.c.l.b16 %v3091
        %v3173 = vunpack.c.l.b16 %v3092
        %v3174 = vunpack.c.l.b16 %v3093
        %v3175 = vunpack.c.l.b16 %v3094
        %v3176 = vunpack.c.l.b16 %v3095
        %v3177 = vunpack.c.l.b16 %v3096
        %v3178 = vunpack.c.l.b16 %v3097
        %v3179 = vunpack.c.l.b16 %v3098
        %v3180 = vpack.c.b16 %v3149, %v3148
        %v3181 = vpack.c.b16 %v3151, %v3150
        %v3182 = vpack.c.b16 %v3153, %v3152
        %v3183 = vpack.c.b16 %v3155, %v3154
        %v3184 = vpack.c.b16 %v3157, %v3156
        %v3185 = vpack.c.b16 %v3159, %v3158
        %v3186 = vpack.c.b16 %v3161, %v3160
        %v3187 = vpack.c.b16 %v3163, %v3162
        %v3188 = vpack.c.b16 %v3165, %v3164
        %v3189 = vpack.c.b16 %v3167, %v3166
        %v3190 = vpack.c.b16 %v3169, %v3168
        %v3191 = vpack.c.b16 %v3171, %v3170
        %v3192 = vpack.c.b16 %v3173, %v3172
        %v3193 = vpack.c.b16 %v3175, %v3174
        %v3194 = vpack.c.b16 %v3177, %v3176
        %v3195 = vpack.c.b16 %v3179, %v3178
        %v3228 = vunpack.c.l.b16 %v3100
        %v3229 = vunpack.c.l.b16 %v3101
        %v3230 = vunpack.c.l.b16 %v3102
        %v3231 = vunpack.c.l.b16 %v3103
        %v3232 = vunpack.c.l.b16 %v3104
        %v3233 = vunpack.c.l.b16 %v3105
        %v3234 = vunpack.c.l.b16 %v3106
        %v3235 = vunpack.c.l.b16 %v3107
        %v3236 = vunpack.c.l.b16 %v3108
        %v3237 = vunpack.c.l.b16 %v3109
        %v3238 = vunpack.c.l.b16 %v3110
        %v3239 = vunpack.c.l.b16 %v3111
        %v3240 = vunpack.c.l.b16 %v3112
        %v3241 = vunpack.c.l.b16 %v3113
        %v3242 = vunpack.c.l.b16 %v3114
        %v3243 = vunpack.c.l.b16 %v3115
        %v3244 = vpack.c.b16 %v3229, %v3228
        %v3245 = vpack.c.b16 %v3231, %v3230
        %v3246 = vpack.c.b16 %v3233, %v3232
        %v3247 = vpack.c.b16 %v3235, %v3234
        %v3248 = vpack.c.b16 %v3237, %v3236
        %v3249 = vpack.c.b16 %v3239, %v3238
        %v3250 = vpack.c.b16 %v3241, %v3240
        %v3251 = vpack.c.b16 %v3243, %v3242
        %3260 = vmatpush.bf16.msra.mxu0 %v3251
        %3261 = vmatpush.bf16.msra.mxu0 %v3250
        %3262 = vmatpush.bf16.msra.mxu0 %v3249
        %3263 = vmatpush.bf16.msra.mxu0 %v3248
        %3264 = vmatpush.bf16.msra.mxu0 %v3247
        %3265 = vmatpush.bf16.msra.mxu0 %v3246
        %3266 = vmatpush.bf16.msra.mxu0 %v3245
        %3267 = vmatpush.bf16.msra.mxu0 %v3244
        %3268 = vmatmul.bf16.gmra.mxu0 %v3180
        %v3269 = vpop.f32.mrf.mxu0
        %v3270 = vadd.f32 0.0, %v3269
        %v3271 = vpop.f32.mrf.mxu0
        %v3272 = vadd.f32 0.0, %v3271
        %3273 = vmatmul.bf16.gmra.mxu0 %v3181
        %v3274 = vpop.f32.mrf.mxu0
        %v3275 = vadd.f32 0.0, %v3274
        %v3276 = vpop.f32.mrf.mxu0
        %v3277 = vadd.f32 0.0, %v3276
        %3278 = vmatmul.bf16.gmra.mxu0 %v3182
        %v3279 = vpop.f32.mrf.mxu0
        %v3280 = vadd.f32 0.0, %v3279
        %v3281 = vpop.f32.mrf.mxu0
        %v3282 = vadd.f32 0.0, %v3281
        %3283 = vmatmul.bf16.gmra.mxu0 %v3183
        %v3284 = vpop.f32.mrf.mxu0
        %v3285 = vadd.f32 0.0, %v3284
        %v3286 = vpop.f32.mrf.mxu0
        %v3287 = vadd.f32 0.0, %v3286
        %3288 = vmatmul.bf16.gmra.mxu0 %v3184
        %v3289 = vpop.f32.mrf.mxu0
        %v3290 = vadd.f32 0.0, %v3289
        %v3291 = vpop.f32.mrf.mxu0
        %v3292 = vadd.f32 0.0, %v3291
        %3293 = vmatmul.bf16.gmra.mxu0 %v3185
        %v3294 = vpop.f32.mrf.mxu0
        %v3295 = vadd.f32 0.0, %v3294
        %v3296 = vpop.f32.mrf.mxu0
        %v3297 = vadd.f32 0.0, %v3296
        %3298 = vmatmul.bf16.gmra.mxu0 %v3186
        %v3299 = vpop.f32.mrf.mxu0
        %v3300 = vadd.f32 0.0, %v3299
        %v3301 = vpop.f32.mrf.mxu0
        %v3302 = vadd.f32 0.0, %v3301
        %3303 = vmatmul.bf16.gmra.mxu0 %v3187
        %v3304 = vpop.f32.mrf.mxu0
        %v3305 = vadd.f32 0.0, %v3304
        %v3306 = vpop.f32.mrf.mxu0
        %v3307 = vadd.f32 0.0, %v3306
        %3308 = vmatmul.bf16.gmra.mxu0 %v3188
        %v3309 = vpop.f32.mrf.mxu0
        %v3310 = vadd.f32 0.0, %v3309
        %v3311 = vpop.f32.mrf.mxu0
        %v3312 = vadd.f32 0.0, %v3311
        %3313 = vmatmul.bf16.gmra.mxu0 %v3189
        %v3314 = vpop.f32.mrf.mxu0
        %v3315 = vadd.f32 0.0, %v3314
        %v3316 = vpop.f32.mrf.mxu0
        %v3317 = vadd.f32 0.0, %v3316
        %3318 = vmatmul.bf16.gmra.mxu0 %v3190
        %v3319 = vpop.f32.mrf.mxu0
        %v3320 = vadd.f32 0.0, %v3319
        %v3321 = vpop.f32.mrf.mxu0
        %v3322 = vadd.f32 0.0, %v3321
        %3323 = vmatmul.bf16.gmra.mxu0 %v3191
        %v3324 = vpop.f32.mrf.mxu0
        %v3325 = vadd.f32 0.0, %v3324
        %v3326 = vpop.f32.mrf.mxu0
        %v3327 = vadd.f32 0.0, %v3326
        %3328 = vmatmul.bf16.gmra.mxu0 %v3192
        %v3329 = vpop.f32.mrf.mxu0
        %v3330 = vadd.f32 0.0, %v3329
        %v3331 = vpop.f32.mrf.mxu0
        %v3332 = vadd.f32 0.0, %v3331
        %3333 = vmatmul.bf16.gmra.mxu0 %v3193
        %v3334 = vpop.f32.mrf.mxu0
        %v3335 = vadd.f32 0.0, %v3334
        %v3336 = vpop.f32.mrf.mxu0
        %v3337 = vadd.f32 0.0, %v3336
        %3338 = vmatmul.bf16.gmra.mxu0 %v3194
        %v3339 = vpop.f32.mrf.mxu0
        %v3340 = vadd.f32 0.0, %v3339
        %v3341 = vpop.f32.mrf.mxu0
        %v3342 = vadd.f32 0.0, %v3341
        %3343 = vmatmul.bf16.gmra.mxu0 %v3195
        %v3344 = vpop.f32.mrf.mxu0
        %v3345 = vadd.f32 0.0, %v3344
        %v3346 = vpop.f32.mrf.mxu0
        %v3347 = vadd.f32 0.0, %v3346
        %3348 = vdwg.mxu0
        %v3349 = vadd.f32 %v3003, %v3270
        %v3350 = vadd.f32 %v3004, %v3272
        %v3351 = vadd.f32 %v3005, %v3275
        %v3352 = vadd.f32 %v3006, %v3277
        %v3353 = vadd.f32 %v3007, %v3280
        %v3354 = vadd.f32 %v3008, %v3282
        %v3355 = vadd.f32 %v3009, %v3285
        %v3356 = vadd.f32 %v3010, %v3287
        %v3357 = vadd.f32 %v3011, %v3290
        %v3358 = vadd.f32 %v3012, %v3292
        %v3359 = vadd.f32 %v3013, %v3295
        %v3360 = vadd.f32 %v3014, %v3297
        %v3361 = vadd.f32 %v3015, %v3300
        %v3362 = vadd.f32 %v3016, %v3302
        %v3363 = vadd.f32 %v3017, %v3305
        %v3364 = vadd.f32 %v3018, %v3307
        %v3365 = vadd.f32 %v3019, %v3310
        %v3366 = vadd.f32 %v3020, %v3312
        %v3367 = vadd.f32 %v3021, %v3315
        %v3368 = vadd.f32 %v3022, %v3317
        %v3369 = vadd.f32 %v3023, %v3320
        %v3370 = vadd.f32 %v3024, %v3322
        %v3371 = vadd.f32 %v3025, %v3325
        %v3372 = vadd.f32 %v3026, %v3327
        %v3373 = vadd.f32 %v3027, %v3330
        %v3374 = vadd.f32 %v3028, %v3332
        %v3375 = vadd.f32 %v3029, %v3335
        %v3376 = vadd.f32 %v3030, %v3337
        %v3377 = vadd.f32 %v3031, %v3340
        %v3378 = vadd.f32 %v3032, %v3342
        %v3379 = vadd.f32 %v3033, %v3345
        %v3380 = vadd.f32 %v3034, %v3347
        %v3381 = vld [vmem:[%s2688 + $0x9] sm:$0xff]
        %v3382 = vld [vmem:[%s2688 + $0x11] sm:$0xff]
        %v3383 = vld [vmem:[%s2688 + $0x29] sm:$0xff]
        %v3384 = vld [vmem:[%s2688 + $0x31] sm:$0xff]
        %v3385 = vld [vmem:[%s2688 + $0x49] sm:$0xff]
        %v3386 = vld [vmem:[%s2688 + $0x51] sm:$0xff]
        %v3387 = vld [vmem:[%s2688 + $0x69] sm:$0xff]
        %v3388 = vld [vmem:[%s2688 + $0x71] sm:$0xff]
        %v3389 = vld [vmem:[%s2688 + $0x89] sm:$0xff]
        %v3390 = vld [vmem:[%s2688 + $0x91] sm:$0xff]
        %v3391 = vld [vmem:[%s2688 + $0xa9] sm:$0xff]
        %v3392 = vld [vmem:[%s2688 + $0xb1] sm:$0xff]
        %v3393 = vld [vmem:[%s2688 + $0xc9] sm:$0xff]
        %v3394 = vld [vmem:[%s2688 + $0xd1] sm:$0xff]
        %v3395 = vld [vmem:[%s2688 + $0xe9] sm:$0xff]
        %v3396 = vld [vmem:[%s2688 + $0xf1] sm:$0xff]
        %v3397 = vld [vmem:[%s2688 + $0x109] sm:$0xff]
        %v3398 = vld [vmem:[%s2688 + $0x111] sm:$0xff]
        %v3399 = vld [vmem:[%s2688 + $0x129] sm:$0xff]
        %v3400 = vld [vmem:[%s2688 + $0x131] sm:$0xff]
        %v3401 = vld [vmem:[%s2688 + $0x149] sm:$0xff]
        %v3402 = vld [vmem:[%s2688 + $0x151] sm:$0xff]
        %v3403 = vld [vmem:[%s2688 + $0x169] sm:$0xff]
        %v3404 = vld [vmem:[%s2688 + $0x171] sm:$0xff]
        %v3405 = vld [vmem:[%s2688 + $0x189] sm:$0xff]
        %v3406 = vld [vmem:[%s2688 + $0x191] sm:$0xff]
        %v3407 = vld [vmem:[%s2688 + $0x1a9] sm:$0xff]
        %v3408 = vld [vmem:[%s2688 + $0x1b1] sm:$0xff]
        %v3409 = vld [vmem:[%s2688 + $0x1c9] sm:$0xff]
        %v3410 = vld [vmem:[%s2688 + $0x1d1] sm:$0xff]
        %v3411 = vld [vmem:[%s2688 + $0x1e9] sm:$0xff]
        %v3412 = vld [vmem:[%s2688 + $0x1f1] sm:$0xff]
        %v3413 = vpack.c.bf16 %v3381, %v3381
        %v3414 = vpack.c.bf16 %v3382, %v3382
        %v3415 = vpack.c.bf16 %v3383, %v3383
        %v3416 = vpack.c.bf16 %v3384, %v3384
        %v3417 = vpack.c.bf16 %v3385, %v3385
        %v3418 = vpack.c.bf16 %v3386, %v3386
        %v3419 = vpack.c.bf16 %v3387, %v3387
        %v3420 = vpack.c.bf16 %v3388, %v3388
        %v3421 = vpack.c.bf16 %v3389, %v3389
        %v3422 = vpack.c.bf16 %v3390, %v3390
        %v3423 = vpack.c.bf16 %v3391, %v3391
        %v3424 = vpack.c.bf16 %v3392, %v3392
        %v3425 = vpack.c.bf16 %v3393, %v3393
        %v3426 = vpack.c.bf16 %v3394, %v3394
        %v3427 = vpack.c.bf16 %v3395, %v3395
        %v3428 = vpack.c.bf16 %v3396, %v3396
        %v3429 = vpack.c.bf16 %v3397, %v3397
        %v3430 = vpack.c.bf16 %v3398, %v3398
        %v3431 = vpack.c.bf16 %v3399, %v3399
        %v3432 = vpack.c.bf16 %v3400, %v3400
        %v3433 = vpack.c.bf16 %v3401, %v3401
        %v3434 = vpack.c.bf16 %v3402, %v3402
        %v3435 = vpack.c.bf16 %v3403, %v3403
        %v3436 = vpack.c.bf16 %v3404, %v3404
        %v3437 = vpack.c.bf16 %v3405, %v3405
        %v3438 = vpack.c.bf16 %v3406, %v3406
        %v3439 = vpack.c.bf16 %v3407, %v3407
        %v3440 = vpack.c.bf16 %v3408, %v3408
        %v3441 = vpack.c.bf16 %v3409, %v3409
        %v3442 = vpack.c.bf16 %v3410, %v3410
        %v3443 = vpack.c.bf16 %v3411, %v3411
        %v3444 = vpack.c.bf16 %v3412, %v3412
        %s3445 = scalar_lea.vmem [#allocation8], 512
        %v3446 = vld [vmem:[%s3445] sm:$0xf]
        %v3447 = vld [vmem:[%s3445 + $0x4] sm:$0xf]
        %v3448 = vld [vmem:[%s3445 + $0x8] sm:$0xf]
        %v3449 = vld [vmem:[%s3445 + $0xc] sm:$0xf]
        %v3450 = vld [vmem:[%s3445 + $0x10] sm:$0xf]
        %v3451 = vld [vmem:[%s3445 + $0x14] sm:$0xf]
        %v3452 = vld [vmem:[%s3445 + $0x18] sm:$0xf]
        %v3453 = vld [vmem:[%s3445 + $0x1c] sm:$0xf]
        %v3454 = vld [vmem:[%s3445 + $0x20] sm:$0xf]
        %v3455 = vld [vmem:[%s3445 + $0x24] sm:$0xf]
        %v3456 = vld [vmem:[%s3445 + $0x28] sm:$0xf]
        %v3457 = vld [vmem:[%s3445 + $0x2c] sm:$0xf]
        %v3458 = vld [vmem:[%s3445 + $0x30] sm:$0xf]
        %v3459 = vld [vmem:[%s3445 + $0x34] sm:$0xf]
        %v3460 = vld [vmem:[%s3445 + $0x38] sm:$0xf]
        %v3461 = vld [vmem:[%s3445 + $0x3c] sm:$0xf]
        %v3494 = vunpack.c.l.b16 %v3413
        %v3495 = vunpack.c.l.b16 %v3414
        %v3496 = vunpack.c.l.b16 %v3415
        %v3497 = vunpack.c.l.b16 %v3416
        %v3498 = vunpack.c.l.b16 %v3417
        %v3499 = vunpack.c.l.b16 %v3418
        %v3500 = vunpack.c.l.b16 %v3419
        %v3501 = vunpack.c.l.b16 %v3420
        %v3502 = vunpack.c.l.b16 %v3421
        %v3503 = vunpack.c.l.b16 %v3422
        %v3504 = vunpack.c.l.b16 %v3423
        %v3505 = vunpack.c.l.b16 %v3424
        %v3506 = vunpack.c.l.b16 %v3425
        %v3507 = vunpack.c.l.b16 %v3426
        %v3508 = vunpack.c.l.b16 %v3427
        %v3509 = vunpack.c.l.b16 %v3428
        %v3510 = vunpack.c.l.b16 %v3429
        %v3511 = vunpack.c.l.b16 %v3430
        %v3512 = vunpack.c.l.b16 %v3431
        %v3513 = vunpack.c.l.b16 %v3432
        %v3514 = vunpack.c.l.b16 %v3433
        %v3515 = vunpack.c.l.b16 %v3434
        %v3516 = vunpack.c.l.b16 %v3435
        %v3517 = vunpack.c.l.b16 %v3436
        %v3518 = vunpack.c.l.b16 %v3437
        %v3519 = vunpack.c.l.b16 %v3438
        %v3520 = vunpack.c.l.b16 %v3439
        %v3521 = vunpack.c.l.b16 %v3440
        %v3522 = vunpack.c.l.b16 %v3441
        %v3523 = vunpack.c.l.b16 %v3442
        %v3524 = vunpack.c.l.b16 %v3443
        %v3525 = vunpack.c.l.b16 %v3444
        %v3526 = vpack.c.b16 %v3495, %v3494
        %v3527 = vpack.c.b16 %v3497, %v3496
        %v3528 = vpack.c.b16 %v3499, %v3498
        %v3529 = vpack.c.b16 %v3501, %v3500
        %v3530 = vpack.c.b16 %v3503, %v3502
        %v3531 = vpack.c.b16 %v3505, %v3504
        %v3532 = vpack.c.b16 %v3507, %v3506
        %v3533 = vpack.c.b16 %v3509, %v3508
        %v3534 = vpack.c.b16 %v3511, %v3510
        %v3535 = vpack.c.b16 %v3513, %v3512
        %v3536 = vpack.c.b16 %v3515, %v3514
        %v3537 = vpack.c.b16 %v3517, %v3516
        %v3538 = vpack.c.b16 %v3519, %v3518
        %v3539 = vpack.c.b16 %v3521, %v3520
        %v3540 = vpack.c.b16 %v3523, %v3522
        %v3541 = vpack.c.b16 %v3525, %v3524
        %v3574 = vunpack.c.l.b16 %v3446
        %v3575 = vunpack.c.l.b16 %v3447
        %v3576 = vunpack.c.l.b16 %v3448
        %v3577 = vunpack.c.l.b16 %v3449
        %v3578 = vunpack.c.l.b16 %v3450
        %v3579 = vunpack.c.l.b16 %v3451
        %v3580 = vunpack.c.l.b16 %v3452
        %v3581 = vunpack.c.l.b16 %v3453
        %v3582 = vunpack.c.l.b16 %v3454
        %v3583 = vunpack.c.l.b16 %v3455
        %v3584 = vunpack.c.l.b16 %v3456
        %v3585 = vunpack.c.l.b16 %v3457
        %v3586 = vunpack.c.l.b16 %v3458
        %v3587 = vunpack.c.l.b16 %v3459
        %v3588 = vunpack.c.l.b16 %v3460
        %v3589 = vunpack.c.l.b16 %v3461
        %v3590 = vpack.c.b16 %v3575, %v3574
        %v3591 = vpack.c.b16 %v3577, %v3576
        %v3592 = vpack.c.b16 %v3579, %v3578
        %v3593 = vpack.c.b16 %v3581, %v3580
        %v3594 = vpack.c.b16 %v3583, %v3582
        %v3595 = vpack.c.b16 %v3585, %v3584
        %v3596 = vpack.c.b16 %v3587, %v3586
        %v3597 = vpack.c.b16 %v3589, %v3588
        %3606 = vmatpush.bf16.msra.mxu0 %v3597
        %3607 = vmatpush.bf16.msra.mxu0 %v3596
        %3608 = vmatpush.bf16.msra.mxu0 %v3595
        %3609 = vmatpush.bf16.msra.mxu0 %v3594
        %3610 = vmatpush.bf16.msra.mxu0 %v3593
        %3611 = vmatpush.bf16.msra.mxu0 %v3592
        %3612 = vmatpush.bf16.msra.mxu0 %v3591
        %3613 = vmatpush.bf16.msra.mxu0 %v3590
        %3614 = vmatmul.bf16.gmra.mxu0 %v3526
        %v3615 = vpop.f32.mrf.mxu0
        %v3616 = vadd.f32 0.0, %v3615
        %v3617 = vpop.f32.mrf.mxu0
        %v3618 = vadd.f32 0.0, %v3617
        %3619 = vmatmul.bf16.gmra.mxu0 %v3527
        %v3620 = vpop.f32.mrf.mxu0
        %v3621 = vadd.f32 0.0, %v3620
        %v3622 = vpop.f32.mrf.mxu0
        %v3623 = vadd.f32 0.0, %v3622
        %3624 = vmatmul.bf16.gmra.mxu0 %v3528
        %v3625 = vpop.f32.mrf.mxu0
        %v3626 = vadd.f32 0.0, %v3625
        %v3627 = vpop.f32.mrf.mxu0
        %v3628 = vadd.f32 0.0, %v3627
        %3629 = vmatmul.bf16.gmra.mxu0 %v3529
        %v3630 = vpop.f32.mrf.mxu0
        %v3631 = vadd.f32 0.0, %v3630
        %v3632 = vpop.f32.mrf.mxu0
        %v3633 = vadd.f32 0.0, %v3632
        %3634 = vmatmul.bf16.gmra.mxu0 %v3530
        %v3635 = vpop.f32.mrf.mxu0
        %v3636 = vadd.f32 0.0, %v3635
        %v3637 = vpop.f32.mrf.mxu0
        %v3638 = vadd.f32 0.0, %v3637
        %3639 = vmatmul.bf16.gmra.mxu0 %v3531
        %v3640 = vpop.f32.mrf.mxu0
        %v3641 = vadd.f32 0.0, %v3640
        %v3642 = vpop.f32.mrf.mxu0
        %v3643 = vadd.f32 0.0, %v3642
        %3644 = vmatmul.bf16.gmra.mxu0 %v3532
        %v3645 = vpop.f32.mrf.mxu0
        %v3646 = vadd.f32 0.0, %v3645
        %v3647 = vpop.f32.mrf.mxu0
        %v3648 = vadd.f32 0.0, %v3647
        %3649 = vmatmul.bf16.gmra.mxu0 %v3533
        %v3650 = vpop.f32.mrf.mxu0
        %v3651 = vadd.f32 0.0, %v3650
        %v3652 = vpop.f32.mrf.mxu0
        %v3653 = vadd.f32 0.0, %v3652
        %3654 = vmatmul.bf16.gmra.mxu0 %v3534
        %v3655 = vpop.f32.mrf.mxu0
        %v3656 = vadd.f32 0.0, %v3655
        %v3657 = vpop.f32.mrf.mxu0
        %v3658 = vadd.f32 0.0, %v3657
        %3659 = vmatmul.bf16.gmra.mxu0 %v3535
        %v3660 = vpop.f32.mrf.mxu0
        %v3661 = vadd.f32 0.0, %v3660
        %v3662 = vpop.f32.mrf.mxu0
        %v3663 = vadd.f32 0.0, %v3662
        %3664 = vmatmul.bf16.gmra.mxu0 %v3536
        %v3665 = vpop.f32.mrf.mxu0
        %v3666 = vadd.f32 0.0, %v3665
        %v3667 = vpop.f32.mrf.mxu0
        %v3668 = vadd.f32 0.0, %v3667
        %3669 = vmatmul.bf16.gmra.mxu0 %v3537
        %v3670 = vpop.f32.mrf.mxu0
        %v3671 = vadd.f32 0.0, %v3670
        %v3672 = vpop.f32.mrf.mxu0
        %v3673 = vadd.f32 0.0, %v3672
        %3674 = vmatmul.bf16.gmra.mxu0 %v3538
        %v3675 = vpop.f32.mrf.mxu0
        %v3676 = vadd.f32 0.0, %v3675
        %v3677 = vpop.f32.mrf.mxu0
        %v3678 = vadd.f32 0.0, %v3677
        %3679 = vmatmul.bf16.gmra.mxu0 %v3539
        %v3680 = vpop.f32.mrf.mxu0
        %v3681 = vadd.f32 0.0, %v3680
        %v3682 = vpop.f32.mrf.mxu0
        %v3683 = vadd.f32 0.0, %v3682
        %3684 = vmatmul.bf16.gmra.mxu0 %v3540
        %v3685 = vpop.f32.mrf.mxu0
        %v3686 = vadd.f32 0.0, %v3685
        %v3687 = vpop.f32.mrf.mxu0
        %v3688 = vadd.f32 0.0, %v3687
        %3689 = vmatmul.bf16.gmra.mxu0 %v3541
        %v3690 = vpop.f32.mrf.mxu0
        %v3691 = vadd.f32 0.0, %v3690
        %v3692 = vpop.f32.mrf.mxu0
        %v3693 = vadd.f32 0.0, %v3692
        %3694 = vdwg.mxu0
        %v3695 = vadd.f32 %v3349, %v3616
        %v3696 = vadd.f32 %v3350, %v3618
        %v3697 = vadd.f32 %v3351, %v3621
        %v3698 = vadd.f32 %v3352, %v3623
        %v3699 = vadd.f32 %v3353, %v3626
        %v3700 = vadd.f32 %v3354, %v3628
        %v3701 = vadd.f32 %v3355, %v3631
        %v3702 = vadd.f32 %v3356, %v3633
        %v3703 = vadd.f32 %v3357, %v3636
        %v3704 = vadd.f32 %v3358, %v3638
        %v3705 = vadd.f32 %v3359, %v3641
        %v3706 = vadd.f32 %v3360, %v3643
        %v3707 = vadd.f32 %v3361, %v3646
        %v3708 = vadd.f32 %v3362, %v3648
        %v3709 = vadd.f32 %v3363, %v3651
        %v3710 = vadd.f32 %v3364, %v3653
        %v3711 = vadd.f32 %v3365, %v3656
        %v3712 = vadd.f32 %v3366, %v3658
        %v3713 = vadd.f32 %v3367, %v3661
        %v3714 = vadd.f32 %v3368, %v3663
        %v3715 = vadd.f32 %v3369, %v3666
        %v3716 = vadd.f32 %v3370, %v3668
        %v3717 = vadd.f32 %v3371, %v3671
        %v3718 = vadd.f32 %v3372, %v3673
        %v3719 = vadd.f32 %v3373, %v3676
        %v3720 = vadd.f32 %v3374, %v3678
        %v3721 = vadd.f32 %v3375, %v3681
        %v3722 = vadd.f32 %v3376, %v3683
        %v3723 = vadd.f32 %v3377, %v3686
        %v3724 = vadd.f32 %v3378, %v3688
        %v3725 = vadd.f32 %v3379, %v3691
        %v3726 = vadd.f32 %v3380, %v3693
        %v3727 = vld [vmem:[%s3] sm:$0x1]
        %v3729 = vperm.slane %v3727, 0
        %v3731 = vadd.f32 %v3695, %v3729
        %v3732 = vadd.f32 %v3696, %v3729
        %v3733 = vadd.f32 %v3697, %v3729
        %v3734 = vadd.f32 %v3698, %v3729
        %v3735 = vadd.f32 %v3699, %v3729
        %v3736 = vadd.f32 %v3700, %v3729
        %v3737 = vadd.f32 %v3701, %v3729
        %v3738 = vadd.f32 %v3702, %v3729
        %v3739 = vadd.f32 %v3703, %v3729
        %v3740 = vadd.f32 %v3704, %v3729
        %v3741 = vadd.f32 %v3705, %v3729
        %v3742 = vadd.f32 %v3706, %v3729
        %v3743 = vadd.f32 %v3707, %v3729
        %v3744 = vadd.f32 %v3708, %v3729
        %v3745 = vadd.f32 %v3709, %v3729
        %v3746 = vadd.f32 %v3710, %v3729
        %v3747 = vadd.f32 %v3711, %v3729
        %v3748 = vadd.f32 %v3712, %v3729
        %v3749 = vadd.f32 %v3713, %v3729
        %v3750 = vadd.f32 %v3714, %v3729
        %v3751 = vadd.f32 %v3715, %v3729
        %v3752 = vadd.f32 %v3716, %v3729
        %v3753 = vadd.f32 %v3717, %v3729
        %v3754 = vadd.f32 %v3718, %v3729
        %v3755 = vadd.f32 %v3719, %v3729
        %v3756 = vadd.f32 %v3720, %v3729
        %v3757 = vadd.f32 %v3721, %v3729
        %v3758 = vadd.f32 %v3722, %v3729
        %v3759 = vadd.f32 %v3723, %v3729
        %v3760 = vadd.f32 %v3724, %v3729
        %v3761 = vadd.f32 %v3725, %v3729
        %v3762 = vadd.f32 %v3726, %v3729
        %v3763 = vmax.f32 %v3731, 0.0
        %v3764 = vmax.f32 %v3732, 0.0
        %v3765 = vmax.f32 %v3733, 0.0
        %v3766 = vmax.f32 %v3734, 0.0
        %v3767 = vmax.f32 %v3735, 0.0
        %v3768 = vmax.f32 %v3736, 0.0
        %v3769 = vmax.f32 %v3737, 0.0
        %v3770 = vmax.f32 %v3738, 0.0
        %v3771 = vmax.f32 %v3739, 0.0
        %v3772 = vmax.f32 %v3740, 0.0
        %v3773 = vmax.f32 %v3741, 0.0
        %v3774 = vmax.f32 %v3742, 0.0
        %v3775 = vmax.f32 %v3743, 0.0
        %v3776 = vmax.f32 %v3744, 0.0
        %v3777 = vmax.f32 %v3745, 0.0
        %v3778 = vmax.f32 %v3746, 0.0
        %v3779 = vmax.f32 %v3747, 0.0
        %v3780 = vmax.f32 %v3748, 0.0
        %v3781 = vmax.f32 %v3749, 0.0
        %v3782 = vmax.f32 %v3750, 0.0
        %v3783 = vmax.f32 %v3751, 0.0
        %v3784 = vmax.f32 %v3752, 0.0
        %v3785 = vmax.f32 %v3753, 0.0
        %v3786 = vmax.f32 %v3754, 0.0
        %v3787 = vmax.f32 %v3755, 0.0
        %v3788 = vmax.f32 %v3756, 0.0
        %v3789 = vmax.f32 %v3757, 0.0
        %v3790 = vmax.f32 %v3758, 0.0
        %v3791 = vmax.f32 %v3759, 0.0
        %v3792 = vmax.f32 %v3760, 0.0
        %v3793 = vmax.f32 %v3761, 0.0
        %v3794 = vmax.f32 %v3762, 0.0
        %v3795 = vmin.f32 %v3763, 6.0
        %v3796 = vmin.f32 %v3764, 6.0
        %v3797 = vmin.f32 %v3765, 6.0
        %v3798 = vmin.f32 %v3766, 6.0
        %v3799 = vmin.f32 %v3767, 6.0
        %v3800 = vmin.f32 %v3768, 6.0
        %v3801 = vmin.f32 %v3769, 6.0
        %v3802 = vmin.f32 %v3770, 6.0
        %v3803 = vmin.f32 %v3771, 6.0
        %v3804 = vmin.f32 %v3772, 6.0
        %v3805 = vmin.f32 %v3773, 6.0
        %v3806 = vmin.f32 %v3774, 6.0
        %v3807 = vmin.f32 %v3775, 6.0
        %v3808 = vmin.f32 %v3776, 6.0
        %v3809 = vmin.f32 %v3777, 6.0
        %v3810 = vmin.f32 %v3778, 6.0
        %v3811 = vmin.f32 %v3779, 6.0
        %v3812 = vmin.f32 %v3780, 6.0
        %v3813 = vmin.f32 %v3781, 6.0
        %v3814 = vmin.f32 %v3782, 6.0
        %v3815 = vmin.f32 %v3783, 6.0
        %v3816 = vmin.f32 %v3784, 6.0
        %v3817 = vmin.f32 %v3785, 6.0
        %v3818 = vmin.f32 %v3786, 6.0
        %v3819 = vmin.f32 %v3787, 6.0
        %v3820 = vmin.f32 %v3788, 6.0
        %v3821 = vmin.f32 %v3789, 6.0
        %v3822 = vmin.f32 %v3790, 6.0
        %v3823 = vmin.f32 %v3791, 6.0
        %v3824 = vmin.f32 %v3792, 6.0
        %v3825 = vmin.f32 %v3793, 6.0
        %v3826 = vmin.f32 %v3794, 6.0
        %3827 = vst [vmem:[%s612 + $0x8] sm:$0xff] %v3795
        %3828 = vst [vmem:[%s612 + $0x10] sm:$0xff] %v3796
        %3829 = vst [vmem:[%s612 + $0x28] sm:$0xff] %v3797
        %3830 = vst [vmem:[%s612 + $0x30] sm:$0xff] %v3798
        %3831 = vst [vmem:[%s612 + $0x48] sm:$0xff] %v3799
        %3832 = vst [vmem:[%s612 + $0x50] sm:$0xff] %v3800
        %3833 = vst [vmem:[%s612 + $0x68] sm:$0xff] %v3801
        %3834 = vst [vmem:[%s612 + $0x70] sm:$0xff] %v3802
        %3835 = vst [vmem:[%s612 + $0x88] sm:$0xff] %v3803
        %3836 = vst [vmem:[%s612 + $0x90] sm:$0xff] %v3804
        %3837 = vst [vmem:[%s612 + $0xa8] sm:$0xff] %v3805
        %3838 = vst [vmem:[%s612 + $0xb0] sm:$0xff] %v3806
        %3839 = vst [vmem:[%s612 + $0xc8] sm:$0xff] %v3807
        %3840 = vst [vmem:[%s612 + $0xd0] sm:$0xff] %v3808
        %3841 = vst [vmem:[%s612 + $0xe8] sm:$0xff] %v3809
        %3842 = vst [vmem:[%s612 + $0xf0] sm:$0xff] %v3810
        %3843 = vst [vmem:[%s612 + $0x108] sm:$0xff] %v3811
        %3844 = vst [vmem:[%s612 + $0x110] sm:$0xff] %v3812
        %3845 = vst [vmem:[%s612 + $0x128] sm:$0xff] %v3813
        %3846 = vst [vmem:[%s612 + $0x130] sm:$0xff] %v3814
        %3847 = vst [vmem:[%s612 + $0x148] sm:$0xff] %v3815
        %3848 = vst [vmem:[%s612 + $0x150] sm:$0xff] %v3816
        %3849 = vst [vmem:[%s612 + $0x168] sm:$0xff] %v3817
        %3850 = vst [vmem:[%s612 + $0x170] sm:$0xff] %v3818
        %3851 = vst [vmem:[%s612 + $0x188] sm:$0xff] %v3819
        %3852 = vst [vmem:[%s612 + $0x190] sm:$0xff] %v3820
        %3853 = vst [vmem:[%s612 + $0x1a8] sm:$0xff] %v3821
        %3854 = vst [vmem:[%s612 + $0x1b0] sm:$0xff] %v3822
        %3855 = vst [vmem:[%s612 + $0x1c8] sm:$0xff] %v3823
        %3856 = vst [vmem:[%s612 + $0x1d0] sm:$0xff] %v3824
        %3857 = vst [vmem:[%s612 + $0x1e8] sm:$0xff] %v3825
        %3858 = vst [vmem:[%s612 + $0x1f0] sm:$0xff] %v3826
        %v3859 = vld [vmem:[#allocation2 + $0x7] sm:$0xff]
        %v3860 = vld [vmem:[#allocation2 + $0xf] sm:$0xff]
        %v3861 = vld [vmem:[#allocation2 + $0x27] sm:$0xff]
        %v3862 = vld [vmem:[#allocation2 + $0x2f] sm:$0xff]
        %v3863 = vld [vmem:[#allocation2 + $0x47] sm:$0xff]
        %v3864 = vld [vmem:[#allocation2 + $0x4f] sm:$0xff]
        %v3865 = vld [vmem:[#allocation2 + $0x67] sm:$0xff]
        %v3866 = vld [vmem:[#allocation2 + $0x6f] sm:$0xff]
        %v3867 = vld [vmem:[#allocation2 + $0x87] sm:$0xff]
        %v3868 = vld [vmem:[#allocation2 + $0x8f] sm:$0xff]
        %v3869 = vld [vmem:[#allocation2 + $0xa7] sm:$0xff]
        %v3870 = vld [vmem:[#allocation2 + $0xaf] sm:$0xff]
        %v3871 = vld [vmem:[#allocation2 + $0xc7] sm:$0xff]
        %v3872 = vld [vmem:[#allocation2 + $0xcf] sm:$0xff]
        %v3873 = vld [vmem:[#allocation2 + $0xe7] sm:$0xff]
        %v3874 = vld [vmem:[#allocation2 + $0xef] sm:$0xff]
        %v3875 = vld [vmem:[#allocation2 + $0x107] sm:$0xff]
        %v3876 = vld [vmem:[#allocation2 + $0x10f] sm:$0xff]
        %v3877 = vld [vmem:[#allocation2 + $0x127] sm:$0xff]
        %v3878 = vld [vmem:[#allocation2 + $0x12f] sm:$0xff]
        %v3879 = vld [vmem:[#allocation2 + $0x147] sm:$0xff]
        %v3880 = vld [vmem:[#allocation2 + $0x14f] sm:$0xff]
        %v3881 = vld [vmem:[#allocation2 + $0x167] sm:$0xff]
        %v3882 = vld [vmem:[#allocation2 + $0x16f] sm:$0xff]
        %v3883 = vld [vmem:[#allocation2 + $0x187] sm:$0xff]
        %v3884 = vld [vmem:[#allocation2 + $0x18f] sm:$0xff]
        %v3885 = vld [vmem:[#allocation2 + $0x1a7] sm:$0xff]
        %v3886 = vld [vmem:[#allocation2 + $0x1af] sm:$0xff]
        %v3887 = vld [vmem:[#allocation2 + $0x1c7] sm:$0xff]
        %v3888 = vld [vmem:[#allocation2 + $0x1cf] sm:$0xff]
        %v3889 = vld [vmem:[#allocation2 + $0x1e7] sm:$0xff]
        %v3890 = vld [vmem:[#allocation2 + $0x1ef] sm:$0xff]
        %v3891 = vpack.c.bf16 %v3859, %v3859
        %v3892 = vpack.c.bf16 %v3860, %v3860
        %v3893 = vpack.c.bf16 %v3861, %v3861
        %v3894 = vpack.c.bf16 %v3862, %v3862
        %v3895 = vpack.c.bf16 %v3863, %v3863
        %v3896 = vpack.c.bf16 %v3864, %v3864
        %v3897 = vpack.c.bf16 %v3865, %v3865
        %v3898 = vpack.c.bf16 %v3866, %v3866
        %v3899 = vpack.c.bf16 %v3867, %v3867
        %v3900 = vpack.c.bf16 %v3868, %v3868
        %v3901 = vpack.c.bf16 %v3869, %v3869
        %v3902 = vpack.c.bf16 %v3870, %v3870
        %v3903 = vpack.c.bf16 %v3871, %v3871
        %v3904 = vpack.c.bf16 %v3872, %v3872
        %v3905 = vpack.c.bf16 %v3873, %v3873
        %v3906 = vpack.c.bf16 %v3874, %v3874
        %v3907 = vpack.c.bf16 %v3875, %v3875
        %v3908 = vpack.c.bf16 %v3876, %v3876
        %v3909 = vpack.c.bf16 %v3877, %v3877
        %v3910 = vpack.c.bf16 %v3878, %v3878
        %v3911 = vpack.c.bf16 %v3879, %v3879
        %v3912 = vpack.c.bf16 %v3880, %v3880
        %v3913 = vpack.c.bf16 %v3881, %v3881
        %v3914 = vpack.c.bf16 %v3882, %v3882
        %v3915 = vpack.c.bf16 %v3883, %v3883
        %v3916 = vpack.c.bf16 %v3884, %v3884
        %v3917 = vpack.c.bf16 %v3885, %v3885
        %v3918 = vpack.c.bf16 %v3886, %v3886
        %v3919 = vpack.c.bf16 %v3887, %v3887
        %v3920 = vpack.c.bf16 %v3888, %v3888
        %v3921 = vpack.c.bf16 %v3889, %v3889
        %v3922 = vpack.c.bf16 %v3890, %v3890
        %v3923 = vld [vmem:[#allocation9] sm:$0xf]
        %v3924 = vld [vmem:[#allocation9 + $0x4] sm:$0xf]
        %v3925 = vld [vmem:[#allocation9 + $0x8] sm:$0xf]
        %v3926 = vld [vmem:[#allocation9 + $0xc] sm:$0xf]
        %v3927 = vld [vmem:[#allocation9 + $0x10] sm:$0xf]
        %v3928 = vld [vmem:[#allocation9 + $0x14] sm:$0xf]
        %v3929 = vld [vmem:[#allocation9 + $0x18] sm:$0xf]
        %v3930 = vld [vmem:[#allocation9 + $0x1c] sm:$0xf]
        %v3931 = vld [vmem:[#allocation9 + $0x20] sm:$0xf]
        %v3932 = vld [vmem:[#allocation9 + $0x24] sm:$0xf]
        %v3933 = vld [vmem:[#allocation9 + $0x28] sm:$0xf]
        %v3934 = vld [vmem:[#allocation9 + $0x2c] sm:$0xf]
        %v3935 = vld [vmem:[#allocation9 + $0x30] sm:$0xf]
        %v3936 = vld [vmem:[#allocation9 + $0x34] sm:$0xf]
        %v3937 = vld [vmem:[#allocation9 + $0x38] sm:$0xf]
        %v3938 = vld [vmem:[#allocation9 + $0x3c] sm:$0xf]
        %v3939 = vld [vmem:[#allocation2 + $0x8] sm:$0xff]
        %v3940 = vld [vmem:[#allocation2 + $0x10] sm:$0xff]
        %v3941 = vld [vmem:[#allocation2 + $0x28] sm:$0xff]
        %v3942 = vld [vmem:[#allocation2 + $0x30] sm:$0xff]
        %v3943 = vld [vmem:[#allocation2 + $0x48] sm:$0xff]
        %v3944 = vld [vmem:[#allocation2 + $0x50] sm:$0xff]
        %v3945 = vld [vmem:[#allocation2 + $0x68] sm:$0xff]
        %v3946 = vld [vmem:[#allocation2 + $0x70] sm:$0xff]
        %v3947 = vld [vmem:[#allocation2 + $0x88] sm:$0xff]
        %v3948 = vld [vmem:[#allocation2 + $0x90] sm:$0xff]
        %v3949 = vld [vmem:[#allocation2 + $0xa8] sm:$0xff]
        %v3950 = vld [vmem:[#allocation2 + $0xb0] sm:$0xff]
        %v3951 = vld [vmem:[#allocation2 + $0xc8] sm:$0xff]
        %v3952 = vld [vmem:[#allocation2 + $0xd0] sm:$0xff]
        %v3953 = vld [vmem:[#allocation2 + $0xe8] sm:$0xff]
        %v3954 = vld [vmem:[#allocation2 + $0xf0] sm:$0xff]
        %v3955 = vld [vmem:[#allocation2 + $0x108] sm:$0xff]
        %v3956 = vld [vmem:[#allocation2 + $0x110] sm:$0xff]
        %v3957 = vld [vmem:[#allocation2 + $0x128] sm:$0xff]
        %v3958 = vld [vmem:[#allocation2 + $0x130] sm:$0xff]
        %v3959 = vld [vmem:[#allocation2 + $0x148] sm:$0xff]
        %v3960 = vld [vmem:[#allocation2 + $0x150] sm:$0xff]
        %v3961 = vld [vmem:[#allocation2 + $0x168] sm:$0xff]
        %v3962 = vld [vmem:[#allocation2 + $0x170] sm:$0xff]
        %v3963 = vld [vmem:[#allocation2 + $0x188] sm:$0xff]
        %v3964 = vld [vmem:[#allocation2 + $0x190] sm:$0xff]
        %v3965 = vld [vmem:[#allocation2 + $0x1a8] sm:$0xff]
        %v3966 = vld [vmem:[#allocation2 + $0x1b0] sm:$0xff]
        %v3967 = vld [vmem:[#allocation2 + $0x1c8] sm:$0xff]
        %v3968 = vld [vmem:[#allocation2 + $0x1d0] sm:$0xff]
        %v3969 = vld [vmem:[#allocation2 + $0x1e8] sm:$0xff]
        %v3970 = vld [vmem:[#allocation2 + $0x1f0] sm:$0xff]
        %v3971 = vpack.c.bf16 %v3939, %v3939
        %v3972 = vpack.c.bf16 %v3940, %v3940
        %v3973 = vpack.c.bf16 %v3941, %v3941
        %v3974 = vpack.c.bf16 %v3942, %v3942
        %v3975 = vpack.c.bf16 %v3943, %v3943
        %v3976 = vpack.c.bf16 %v3944, %v3944
        %v3977 = vpack.c.bf16 %v3945, %v3945
        %v3978 = vpack.c.bf16 %v3946, %v3946
        %v3979 = vpack.c.bf16 %v3947, %v3947
        %v3980 = vpack.c.bf16 %v3948, %v3948
        %v3981 = vpack.c.bf16 %v3949, %v3949
        %v3982 = vpack.c.bf16 %v3950, %v3950
        %v3983 = vpack.c.bf16 %v3951, %v3951
        %v3984 = vpack.c.bf16 %v3952, %v3952
        %v3985 = vpack.c.bf16 %v3953, %v3953
        %v3986 = vpack.c.bf16 %v3954, %v3954
        %v3987 = vpack.c.bf16 %v3955, %v3955
        %v3988 = vpack.c.bf16 %v3956, %v3956
        %v3989 = vpack.c.bf16 %v3957, %v3957
        %v3990 = vpack.c.bf16 %v3958, %v3958
        %v3991 = vpack.c.bf16 %v3959, %v3959
        %v3992 = vpack.c.bf16 %v3960, %v3960
        %v3993 = vpack.c.bf16 %v3961, %v3961
        %v3994 = vpack.c.bf16 %v3962, %v3962
        %v3995 = vpack.c.bf16 %v3963, %v3963
        %v3996 = vpack.c.bf16 %v3964, %v3964
        %v3997 = vpack.c.bf16 %v3965, %v3965
        %v3998 = vpack.c.bf16 %v3966, %v3966
        %v3999 = vpack.c.bf16 %v3967, %v3967
        %v4000 = vpack.c.bf16 %v3968, %v3968
        %v4001 = vpack.c.bf16 %v3969, %v3969
        %v4002 = vpack.c.bf16 %v3970, %v3970
        %s4003 = scalar_lea.vmem [#allocation9], 64
        %v4004 = vld [vmem:[%s4003] sm:$0xf]
        %v4005 = vld [vmem:[%s4003 + $0x4] sm:$0xf]
        %v4006 = vld [vmem:[%s4003 + $0x8] sm:$0xf]
        %v4007 = vld [vmem:[%s4003 + $0xc] sm:$0xf]
        %v4008 = vld [vmem:[%s4003 + $0x10] sm:$0xf]
        %v4009 = vld [vmem:[%s4003 + $0x14] sm:$0xf]
        %v4010 = vld [vmem:[%s4003 + $0x18] sm:$0xf]
        %v4011 = vld [vmem:[%s4003 + $0x1c] sm:$0xf]
        %v4012 = vld [vmem:[%s4003 + $0x20] sm:$0xf]
        %v4013 = vld [vmem:[%s4003 + $0x24] sm:$0xf]
        %v4014 = vld [vmem:[%s4003 + $0x28] sm:$0xf]
        %v4015 = vld [vmem:[%s4003 + $0x2c] sm:$0xf]
        %v4016 = vld [vmem:[%s4003 + $0x30] sm:$0xf]
        %v4017 = vld [vmem:[%s4003 + $0x34] sm:$0xf]
        %v4018 = vld [vmem:[%s4003 + $0x38] sm:$0xf]
        %v4019 = vld [vmem:[%s4003 + $0x3c] sm:$0xf]
        %v4052 = vunpack.c.l.b16 %v3971
        %v4053 = vunpack.c.l.b16 %v3972
        %v4054 = vunpack.c.l.b16 %v3973
        %v4055 = vunpack.c.l.b16 %v3974
        %v4056 = vunpack.c.l.b16 %v3975
        %v4057 = vunpack.c.l.b16 %v3976
        %v4058 = vunpack.c.l.b16 %v3977
        %v4059 = vunpack.c.l.b16 %v3978
        %v4060 = vunpack.c.l.b16 %v3979
        %v4061 = vunpack.c.l.b16 %v3980
        %v4062 = vunpack.c.l.b16 %v3981
        %v4063 = vunpack.c.l.b16 %v3982
        %v4064 = vunpack.c.l.b16 %v3983
        %v4065 = vunpack.c.l.b16 %v3984
        %v4066 = vunpack.c.l.b16 %v3985
        %v4067 = vunpack.c.l.b16 %v3986
        %v4068 = vunpack.c.l.b16 %v3987
        %v4069 = vunpack.c.l.b16 %v3988
        %v4070 = vunpack.c.l.b16 %v3989
        %v4071 = vunpack.c.l.b16 %v3990
        %v4072 = vunpack.c.l.b16 %v3991
        %v4073 = vunpack.c.l.b16 %v3992
        %v4074 = vunpack.c.l.b16 %v3993
        %v4075 = vunpack.c.l.b16 %v3994
        %v4076 = vunpack.c.l.b16 %v3995
        %v4077 = vunpack.c.l.b16 %v3996
        %v4078 = vunpack.c.l.b16 %v3997
        %v4079 = vunpack.c.l.b16 %v3998
        %v4080 = vunpack.c.l.b16 %v3999
        %v4081 = vunpack.c.l.b16 %v4000
        %v4082 = vunpack.c.l.b16 %v4001
        %v4083 = vunpack.c.l.b16 %v4002
        %v4084 = vpack.c.b16 %v4053, %v4052
        %v4085 = vpack.c.b16 %v4055, %v4054
        %v4086 = vpack.c.b16 %v4057, %v4056
        %v4087 = vpack.c.b16 %v4059, %v4058
        %v4088 = vpack.c.b16 %v4061, %v4060
        %v4089 = vpack.c.b16 %v4063, %v4062
        %v4090 = vpack.c.b16 %v4065, %v4064
        %v4091 = vpack.c.b16 %v4067, %v4066
        %v4092 = vpack.c.b16 %v4069, %v4068
        %v4093 = vpack.c.b16 %v4071, %v4070
        %v4094 = vpack.c.b16 %v4073, %v4072
        %v4095 = vpack.c.b16 %v4075, %v4074
        %v4096 = vpack.c.b16 %v4077, %v4076
        %v4097 = vpack.c.b16 %v4079, %v4078
        %v4098 = vpack.c.b16 %v4081, %v4080
        %v4099 = vpack.c.b16 %v4083, %v4082
        %v4132 = vunpack.c.l.b16 %v4004
        %v4133 = vunpack.c.l.b16 %v4005
        %v4134 = vunpack.c.l.b16 %v4006
        %v4135 = vunpack.c.l.b16 %v4007
        %v4136 = vunpack.c.l.b16 %v4008
        %v4137 = vunpack.c.l.b16 %v4009
        %v4138 = vunpack.c.l.b16 %v4010
        %v4139 = vunpack.c.l.b16 %v4011
        %v4140 = vunpack.c.l.b16 %v4012
        %v4141 = vunpack.c.l.b16 %v4013
        %v4142 = vunpack.c.l.b16 %v4014
        %v4143 = vunpack.c.l.b16 %v4015
        %v4144 = vunpack.c.l.b16 %v4016
        %v4145 = vunpack.c.l.b16 %v4017
        %v4146 = vunpack.c.l.b16 %v4018
        %v4147 = vunpack.c.l.b16 %v4019
        %v4148 = vpack.c.b16 %v4133, %v4132
        %v4149 = vpack.c.b16 %v4135, %v4134
        %v4150 = vpack.c.b16 %v4137, %v4136
        %v4151 = vpack.c.b16 %v4139, %v4138
        %v4152 = vpack.c.b16 %v4141, %v4140
        %v4153 = vpack.c.b16 %v4143, %v4142
        %v4154 = vpack.c.b16 %v4145, %v4144
        %v4155 = vpack.c.b16 %v4147, %v4146
        %4164 = vmatpush.bf16.msra.mxu0 %v4155
        %4165 = vmatpush.bf16.msra.mxu0 %v4154
        %4166 = vmatpush.bf16.msra.mxu0 %v4153
        %4167 = vmatpush.bf16.msra.mxu0 %v4152
        %4168 = vmatpush.bf16.msra.mxu0 %v4151
        %4169 = vmatpush.bf16.msra.mxu0 %v4150
        %4170 = vmatpush.bf16.msra.mxu0 %v4149
        %4171 = vmatpush.bf16.msra.mxu0 %v4148
        %4172 = vmatmul.bf16.gmra.mxu0 %v4084
        %v4173 = vpop.f32.mrf.mxu0
        %v4174 = vadd.f32 0.0, %v4173
        %v4175 = vpop.f32.mrf.mxu0
        %v4176 = vadd.f32 0.0, %v4175
        %4177 = vmatmul.bf16.gmra.mxu0 %v4085
        %v4178 = vpop.f32.mrf.mxu0
        %v4179 = vadd.f32 0.0, %v4178
        %v4180 = vpop.f32.mrf.mxu0
        %v4181 = vadd.f32 0.0, %v4180
        %4182 = vmatmul.bf16.gmra.mxu0 %v4086
        %v4183 = vpop.f32.mrf.mxu0
        %v4184 = vadd.f32 0.0, %v4183
        %v4185 = vpop.f32.mrf.mxu0
        %v4186 = vadd.f32 0.0, %v4185
        %4187 = vmatmul.bf16.gmra.mxu0 %v4087
        %v4188 = vpop.f32.mrf.mxu0
        %v4189 = vadd.f32 0.0, %v4188
        %v4190 = vpop.f32.mrf.mxu0
        %v4191 = vadd.f32 0.0, %v4190
        %4192 = vmatmul.bf16.gmra.mxu0 %v4088
        %v4193 = vpop.f32.mrf.mxu0
        %v4194 = vadd.f32 0.0, %v4193
        %v4195 = vpop.f32.mrf.mxu0
        %v4196 = vadd.f32 0.0, %v4195
        %4197 = vmatmul.bf16.gmra.mxu0 %v4089
        %v4198 = vpop.f32.mrf.mxu0
        %v4199 = vadd.f32 0.0, %v4198
        %v4200 = vpop.f32.mrf.mxu0
        %v4201 = vadd.f32 0.0, %v4200
        %4202 = vmatmul.bf16.gmra.mxu0 %v4090
        %v4203 = vpop.f32.mrf.mxu0
        %v4204 = vadd.f32 0.0, %v4203
        %v4205 = vpop.f32.mrf.mxu0
        %v4206 = vadd.f32 0.0, %v4205
        %4207 = vmatmul.bf16.gmra.mxu0 %v4091
        %v4208 = vpop.f32.mrf.mxu0
        %v4209 = vadd.f32 0.0, %v4208
        %v4210 = vpop.f32.mrf.mxu0
        %v4211 = vadd.f32 0.0, %v4210
        %4212 = vmatmul.bf16.gmra.mxu0 %v4092
        %v4213 = vpop.f32.mrf.mxu0
        %v4214 = vadd.f32 0.0, %v4213
        %v4215 = vpop.f32.mrf.mxu0
        %v4216 = vadd.f32 0.0, %v4215
        %4217 = vmatmul.bf16.gmra.mxu0 %v4093
        %v4218 = vpop.f32.mrf.mxu0
        %v4219 = vadd.f32 0.0, %v4218
        %v4220 = vpop.f32.mrf.mxu0
        %v4221 = vadd.f32 0.0, %v4220
        %4222 = vmatmul.bf16.gmra.mxu0 %v4094
        %v4223 = vpop.f32.mrf.mxu0
        %v4224 = vadd.f32 0.0, %v4223
        %v4225 = vpop.f32.mrf.mxu0
        %v4226 = vadd.f32 0.0, %v4225
        %4227 = vmatmul.bf16.gmra.mxu0 %v4095
        %v4228 = vpop.f32.mrf.mxu0
        %v4229 = vadd.f32 0.0, %v4228
        %v4230 = vpop.f32.mrf.mxu0
        %v4231 = vadd.f32 0.0, %v4230
        %4232 = vmatmul.bf16.gmra.mxu0 %v4096
        %v4233 = vpop.f32.mrf.mxu0
        %v4234 = vadd.f32 0.0, %v4233
        %v4235 = vpop.f32.mrf.mxu0
        %v4236 = vadd.f32 0.0, %v4235
        %4237 = vmatmul.bf16.gmra.mxu0 %v4097
        %v4238 = vpop.f32.mrf.mxu0
        %v4239 = vadd.f32 0.0, %v4238
        %v4240 = vpop.f32.mrf.mxu0
        %v4241 = vadd.f32 0.0, %v4240
        %4242 = vmatmul.bf16.gmra.mxu0 %v4098
        %v4243 = vpop.f32.mrf.mxu0
        %v4244 = vadd.f32 0.0, %v4243
        %v4245 = vpop.f32.mrf.mxu0
        %v4246 = vadd.f32 0.0, %v4245
        %4247 = vmatmul.bf16.gmra.mxu0 %v4099
        %v4248 = vpop.f32.mrf.mxu0
        %v4249 = vadd.f32 0.0, %v4248
        %v4250 = vpop.f32.mrf.mxu0
        %v4251 = vadd.f32 0.0, %v4250
        %4252 = vdwg.mxu0
        %v4285 = vunpack.c.l.b16 %v3891
        %v4286 = vunpack.c.l.b16 %v3892
        %v4287 = vunpack.c.l.b16 %v3893
        %v4288 = vunpack.c.l.b16 %v3894
        %v4289 = vunpack.c.l.b16 %v3895
        %v4290 = vunpack.c.l.b16 %v3896
        %v4291 = vunpack.c.l.b16 %v3897
        %v4292 = vunpack.c.l.b16 %v3898
        %v4293 = vunpack.c.l.b16 %v3899
        %v4294 = vunpack.c.l.b16 %v3900
        %v4295 = vunpack.c.l.b16 %v3901
        %v4296 = vunpack.c.l.b16 %v3902
        %v4297 = vunpack.c.l.b16 %v3903
        %v4298 = vunpack.c.l.b16 %v3904
        %v4299 = vunpack.c.l.b16 %v3905
        %v4300 = vunpack.c.l.b16 %v3906
        %v4301 = vunpack.c.l.b16 %v3907
        %v4302 = vunpack.c.l.b16 %v3908
        %v4303 = vunpack.c.l.b16 %v3909
        %v4304 = vunpack.c.l.b16 %v3910
        %v4305 = vunpack.c.l.b16 %v3911
        %v4306 = vunpack.c.l.b16 %v3912
        %v4307 = vunpack.c.l.b16 %v3913
        %v4308 = vunpack.c.l.b16 %v3914
        %v4309 = vunpack.c.l.b16 %v3915
        %v4310 = vunpack.c.l.b16 %v3916
        %v4311 = vunpack.c.l.b16 %v3917
        %v4312 = vunpack.c.l.b16 %v3918
        %v4313 = vunpack.c.l.b16 %v3919
        %v4314 = vunpack.c.l.b16 %v3920
        %v4315 = vunpack.c.l.b16 %v3921
        %v4316 = vunpack.c.l.b16 %v3922
        %v4317 = vpack.c.b16 %v4286, %v4285
        %v4318 = vpack.c.b16 %v4288, %v4287
        %v4319 = vpack.c.b16 %v4290, %v4289
        %v4320 = vpack.c.b16 %v4292, %v4291
        %v4321 = vpack.c.b16 %v4294, %v4293
        %v4322 = vpack.c.b16 %v4296, %v4295
        %v4323 = vpack.c.b16 %v4298, %v4297
        %v4324 = vpack.c.b16 %v4300, %v4299
        %v4325 = vpack.c.b16 %v4302, %v4301
        %v4326 = vpack.c.b16 %v4304, %v4303
        %v4327 = vpack.c.b16 %v4306, %v4305
        %v4328 = vpack.c.b16 %v4308, %v4307
        %v4329 = vpack.c.b16 %v4310, %v4309
        %v4330 = vpack.c.b16 %v4312, %v4311
        %v4331 = vpack.c.b16 %v4314, %v4313
        %v4332 = vpack.c.b16 %v4316, %v4315
        %v4365 = vunpack.c.l.b16 %v3923
        %v4366 = vunpack.c.l.b16 %v3924
        %v4367 = vunpack.c.l.b16 %v3925
        %v4368 = vunpack.c.l.b16 %v3926
        %v4369 = vunpack.c.l.b16 %v3927
        %v4370 = vunpack.c.l.b16 %v3928
        %v4371 = vunpack.c.l.b16 %v3929
        %v4372 = vunpack.c.l.b16 %v3930
        %v4373 = vunpack.c.l.b16 %v3931
        %v4374 = vunpack.c.l.b16 %v3932
        %v4375 = vunpack.c.l.b16 %v3933
        %v4376 = vunpack.c.l.b16 %v3934
        %v4377 = vunpack.c.l.b16 %v3935
        %v4378 = vunpack.c.l.b16 %v3936
        %v4379 = vunpack.c.l.b16 %v3937
        %v4380 = vunpack.c.l.b16 %v3938
        %v4381 = vpack.c.b16 %v4366, %v4365
        %v4382 = vpack.c.b16 %v4368, %v4367
        %v4383 = vpack.c.b16 %v4370, %v4369
        %v4384 = vpack.c.b16 %v4372, %v4371
        %v4385 = vpack.c.b16 %v4374, %v4373
        %v4386 = vpack.c.b16 %v4376, %v4375
        %v4387 = vpack.c.b16 %v4378, %v4377
        %v4388 = vpack.c.b16 %v4380, %v4379
        %4397 = vmatpush.bf16.msra.mxu0 %v4388
        %4398 = vmatpush.bf16.msra.mxu0 %v4387
        %4399 = vmatpush.bf16.msra.mxu0 %v4386
        %4400 = vmatpush.bf16.msra.mxu0 %v4385
        %4401 = vmatpush.bf16.msra.mxu0 %v4384
        %4402 = vmatpush.bf16.msra.mxu0 %v4383
        %4403 = vmatpush.bf16.msra.mxu0 %v4382
        %4404 = vmatpush.bf16.msra.mxu0 %v4381
        %4405 = vmatmul.bf16.gmra.mxu0 %v4317
        %v4406 = vpop.f32.mrf.mxu0
        %v4407 = vadd.f32 %v4174, %v4406
        %v4408 = vpop.f32.mrf.mxu0
        %v4409 = vadd.f32 %v4176, %v4408
        %4410 = vmatmul.bf16.gmra.mxu0 %v4318
        %v4411 = vpop.f32.mrf.mxu0
        %v4412 = vadd.f32 %v4179, %v4411
        %v4413 = vpop.f32.mrf.mxu0
        %v4414 = vadd.f32 %v4181, %v4413
        %4415 = vmatmul.bf16.gmra.mxu0 %v4319
        %v4416 = vpop.f32.mrf.mxu0
        %v4417 = vadd.f32 %v4184, %v4416
        %v4418 = vpop.f32.mrf.mxu0
        %v4419 = vadd.f32 %v4186, %v4418
        %4420 = vmatmul.bf16.gmra.mxu0 %v4320
        %v4421 = vpop.f32.mrf.mxu0
        %v4422 = vadd.f32 %v4189, %v4421
        %v4423 = vpop.f32.mrf.mxu0
        %v4424 = vadd.f32 %v4191, %v4423
        %4425 = vmatmul.bf16.gmra.mxu0 %v4321
        %v4426 = vpop.f32.mrf.mxu0
        %v4427 = vadd.f32 %v4194, %v4426
        %v4428 = vpop.f32.mrf.mxu0
        %v4429 = vadd.f32 %v4196, %v4428
        %4430 = vmatmul.bf16.gmra.mxu0 %v4322
        %v4431 = vpop.f32.mrf.mxu0
        %v4432 = vadd.f32 %v4199, %v4431
        %v4433 = vpop.f32.mrf.mxu0
        %v4434 = vadd.f32 %v4201, %v4433
        %4435 = vmatmul.bf16.gmra.mxu0 %v4323
        %v4436 = vpop.f32.mrf.mxu0
        %v4437 = vadd.f32 %v4204, %v4436
        %v4438 = vpop.f32.mrf.mxu0
        %v4439 = vadd.f32 %v4206, %v4438
        %4440 = vmatmul.bf16.gmra.mxu0 %v4324
        %v4441 = vpop.f32.mrf.mxu0
        %v4442 = vadd.f32 %v4209, %v4441
        %v4443 = vpop.f32.mrf.mxu0
        %v4444 = vadd.f32 %v4211, %v4443
        %4445 = vmatmul.bf16.gmra.mxu0 %v4325
        %v4446 = vpop.f32.mrf.mxu0
        %v4447 = vadd.f32 %v4214, %v4446
        %v4448 = vpop.f32.mrf.mxu0
        %v4449 = vadd.f32 %v4216, %v4448
        %4450 = vmatmul.bf16.gmra.mxu0 %v4326
        %v4451 = vpop.f32.mrf.mxu0
        %v4452 = vadd.f32 %v4219, %v4451
        %v4453 = vpop.f32.mrf.mxu0
        %v4454 = vadd.f32 %v4221, %v4453
        %4455 = vmatmul.bf16.gmra.mxu0 %v4327
        %v4456 = vpop.f32.mrf.mxu0
        %v4457 = vadd.f32 %v4224, %v4456
        %v4458 = vpop.f32.mrf.mxu0
        %v4459 = vadd.f32 %v4226, %v4458
        %4460 = vmatmul.bf16.gmra.mxu0 %v4328
        %v4461 = vpop.f32.mrf.mxu0
        %v4462 = vadd.f32 %v4229, %v4461
        %v4463 = vpop.f32.mrf.mxu0
        %v4464 = vadd.f32 %v4231, %v4463
        %4465 = vmatmul.bf16.gmra.mxu0 %v4329
        %v4466 = vpop.f32.mrf.mxu0
        %v4467 = vadd.f32 %v4234, %v4466
        %v4468 = vpop.f32.mrf.mxu0
        %v4469 = vadd.f32 %v4236, %v4468
        %4470 = vmatmul.bf16.gmra.mxu0 %v4330
        %v4471 = vpop.f32.mrf.mxu0
        %v4472 = vadd.f32 %v4239, %v4471
        %v4473 = vpop.f32.mrf.mxu0
        %v4474 = vadd.f32 %v4241, %v4473
        %4475 = vmatmul.bf16.gmra.mxu0 %v4331
        %v4476 = vpop.f32.mrf.mxu0
        %v4477 = vadd.f32 %v4244, %v4476
        %v4478 = vpop.f32.mrf.mxu0
        %v4479 = vadd.f32 %v4246, %v4478
        %4480 = vmatmul.bf16.gmra.mxu0 %v4332
        %v4481 = vpop.f32.mrf.mxu0
        %v4482 = vadd.f32 %v4249, %v4481
        %v4483 = vpop.f32.mrf.mxu0
        %v4484 = vadd.f32 %v4251, %v4483
        %4485 = vdwg.mxu0
        %v4486 = vld [vmem:[#allocation2 + $0x9] sm:$0xff]
        %v4487 = vld [vmem:[#allocation2 + $0x11] sm:$0xff]
        %v4488 = vld [vmem:[#allocation2 + $0x29] sm:$0xff]
        %v4489 = vld [vmem:[#allocation2 + $0x31] sm:$0xff]
        %v4490 = vld [vmem:[#allocation2 + $0x49] sm:$0xff]
        %v4491 = vld [vmem:[#allocation2 + $0x51] sm:$0xff]
        %v4492 = vld [vmem:[#allocation2 + $0x69] sm:$0xff]
        %v4493 = vld [vmem:[#allocation2 + $0x71] sm:$0xff]
        %v4494 = vld [vmem:[#allocation2 + $0x89] sm:$0xff]
        %v4495 = vld [vmem:[#allocation2 + $0x91] sm:$0xff]
        %v4496 = vld [vmem:[#allocation2 + $0xa9] sm:$0xff]
        %v4497 = vld [vmem:[#allocation2 + $0xb1] sm:$0xff]
        %v4498 = vld [vmem:[#allocation2 + $0xc9] sm:$0xff]
        %v4499 = vld [vmem:[#allocation2 + $0xd1] sm:$0xff]
        %v4500 = vld [vmem:[#allocation2 + $0xe9] sm:$0xff]
        %v4501 = vld [vmem:[#allocation2 + $0xf1] sm:$0xff]
        %v4502 = vld [vmem:[#allocation2 + $0x109] sm:$0xff]
        %v4503 = vld [vmem:[#allocation2 + $0x111] sm:$0xff]
        %v4504 = vld [vmem:[#allocation2 + $0x129] sm:$0xff]
        %v4505 = vld [vmem:[#allocation2 + $0x131] sm:$0xff]
        %v4506 = vld [vmem:[#allocation2 + $0x149] sm:$0xff]
        %v4507 = vld [vmem:[#allocation2 + $0x151] sm:$0xff]
        %v4508 = vld [vmem:[#allocation2 + $0x169] sm:$0xff]
        %v4509 = vld [vmem:[#allocation2 + $0x171] sm:$0xff]
        %v4510 = vld [vmem:[#allocation2 + $0x189] sm:$0xff]
        %v4511 = vld [vmem:[#allocation2 + $0x191] sm:$0xff]
        %v4512 = vld [vmem:[#allocation2 + $0x1a9] sm:$0xff]
        %v4513 = vld [vmem:[#allocation2 + $0x1b1] sm:$0xff]
        %v4514 = vld [vmem:[#allocation2 + $0x1c9] sm:$0xff]
        %v4515 = vld [vmem:[#allocation2 + $0x1d1] sm:$0xff]
        %v4516 = vld [vmem:[#allocation2 + $0x1e9] sm:$0xff]
        %v4517 = vld [vmem:[#allocation2 + $0x1f1] sm:$0xff]
        %v4518 = vpack.c.bf16 %v4486, %v4486
        %v4519 = vpack.c.bf16 %v4487, %v4487
        %v4520 = vpack.c.bf16 %v4488, %v4488
        %v4521 = vpack.c.bf16 %v4489, %v4489
        %v4522 = vpack.c.bf16 %v4490, %v4490
        %v4523 = vpack.c.bf16 %v4491, %v4491
        %v4524 = vpack.c.bf16 %v4492, %v4492
        %v4525 = vpack.c.bf16 %v4493, %v4493
        %v4526 = vpack.c.bf16 %v4494, %v4494
        %v4527 = vpack.c.bf16 %v4495, %v4495
        %v4528 = vpack.c.bf16 %v4496, %v4496
        %v4529 = vpack.c.bf16 %v4497, %v4497
        %v4530 = vpack.c.bf16 %v4498, %v4498
        %v4531 = vpack.c.bf16 %v4499, %v4499
        %v4532 = vpack.c.bf16 %v4500, %v4500
        %v4533 = vpack.c.bf16 %v4501, %v4501
        %v4534 = vpack.c.bf16 %v4502, %v4502
        %v4535 = vpack.c.bf16 %v4503, %v4503
        %v4536 = vpack.c.bf16 %v4504, %v4504
        %v4537 = vpack.c.bf16 %v4505, %v4505
        %v4538 = vpack.c.bf16 %v4506, %v4506
        %v4539 = vpack.c.bf16 %v4507, %v4507
        %v4540 = vpack.c.bf16 %v4508, %v4508
        %v4541 = vpack.c.bf16 %v4509, %v4509
        %v4542 = vpack.c.bf16 %v4510, %v4510
        %v4543 = vpack.c.bf16 %v4511, %v4511
        %v4544 = vpack.c.bf16 %v4512, %v4512
        %v4545 = vpack.c.bf16 %v4513, %v4513
        %v4546 = vpack.c.bf16 %v4514, %v4514
        %v4547 = vpack.c.bf16 %v4515, %v4515
        %v4548 = vpack.c.bf16 %v4516, %v4516
        %v4549 = vpack.c.bf16 %v4517, %v4517
        %s4550 = scalar_lea.vmem [#allocation9], 128
        %v4551 = vld [vmem:[%s4550] sm:$0xf]
        %v4552 = vld [vmem:[%s4550 + $0x4] sm:$0xf]
        %v4553 = vld [vmem:[%s4550 + $0x8] sm:$0xf]
        %v4554 = vld [vmem:[%s4550 + $0xc] sm:$0xf]
        %v4555 = vld [vmem:[%s4550 + $0x10] sm:$0xf]
        %v4556 = vld [vmem:[%s4550 + $0x14] sm:$0xf]
        %v4557 = vld [vmem:[%s4550 + $0x18] sm:$0xf]
        %v4558 = vld [vmem:[%s4550 + $0x1c] sm:$0xf]
        %v4559 = vld [vmem:[%s4550 + $0x20] sm:$0xf]
        %v4560 = vld [vmem:[%s4550 + $0x24] sm:$0xf]
        %v4561 = vld [vmem:[%s4550 + $0x28] sm:$0xf]
        %v4562 = vld [vmem:[%s4550 + $0x2c] sm:$0xf]
        %v4563 = vld [vmem:[%s4550 + $0x30] sm:$0xf]
        %v4564 = vld [vmem:[%s4550 + $0x34] sm:$0xf]
        %v4565 = vld [vmem:[%s4550 + $0x38] sm:$0xf]
        %v4566 = vld [vmem:[%s4550 + $0x3c] sm:$0xf]
        %v4599 = vunpack.c.l.b16 %v4518
        %v4600 = vunpack.c.l.b16 %v4519
        %v4601 = vunpack.c.l.b16 %v4520
        %v4602 = vunpack.c.l.b16 %v4521
        %v4603 = vunpack.c.l.b16 %v4522
        %v4604 = vunpack.c.l.b16 %v4523
        %v4605 = vunpack.c.l.b16 %v4524
        %v4606 = vunpack.c.l.b16 %v4525
        %v4607 = vunpack.c.l.b16 %v4526
        %v4608 = vunpack.c.l.b16 %v4527
        %v4609 = vunpack.c.l.b16 %v4528
        %v4610 = vunpack.c.l.b16 %v4529
        %v4611 = vunpack.c.l.b16 %v4530
        %v4612 = vunpack.c.l.b16 %v4531
        %v4613 = vunpack.c.l.b16 %v4532
        %v4614 = vunpack.c.l.b16 %v4533
        %v4615 = vunpack.c.l.b16 %v4534
        %v4616 = vunpack.c.l.b16 %v4535
        %v4617 = vunpack.c.l.b16 %v4536
        %v4618 = vunpack.c.l.b16 %v4537
        %v4619 = vunpack.c.l.b16 %v4538
        %v4620 = vunpack.c.l.b16 %v4539
        %v4621 = vunpack.c.l.b16 %v4540
        %v4622 = vunpack.c.l.b16 %v4541
        %v4623 = vunpack.c.l.b16 %v4542
        %v4624 = vunpack.c.l.b16 %v4543
        %v4625 = vunpack.c.l.b16 %v4544
        %v4626 = vunpack.c.l.b16 %v4545
        %v4627 = vunpack.c.l.b16 %v4546
        %v4628 = vunpack.c.l.b16 %v4547
        %v4629 = vunpack.c.l.b16 %v4548
        %v4630 = vunpack.c.l.b16 %v4549
        %v4631 = vpack.c.b16 %v4600, %v4599
        %v4632 = vpack.c.b16 %v4602, %v4601
        %v4633 = vpack.c.b16 %v4604, %v4603
        %v4634 = vpack.c.b16 %v4606, %v4605
        %v4635 = vpack.c.b16 %v4608, %v4607
        %v4636 = vpack.c.b16 %v4610, %v4609
        %v4637 = vpack.c.b16 %v4612, %v4611
        %v4638 = vpack.c.b16 %v4614, %v4613
        %v4639 = vpack.c.b16 %v4616, %v4615
        %v4640 = vpack.c.b16 %v4618, %v4617
        %v4641 = vpack.c.b16 %v4620, %v4619
        %v4642 = vpack.c.b16 %v4622, %v4621
        %v4643 = vpack.c.b16 %v4624, %v4623
        %v4644 = vpack.c.b16 %v4626, %v4625
        %v4645 = vpack.c.b16 %v4628, %v4627
        %v4646 = vpack.c.b16 %v4630, %v4629
        %v4679 = vunpack.c.l.b16 %v4551
        %v4680 = vunpack.c.l.b16 %v4552
        %v4681 = vunpack.c.l.b16 %v4553
        %v4682 = vunpack.c.l.b16 %v4554
        %v4683 = vunpack.c.l.b16 %v4555
        %v4684 = vunpack.c.l.b16 %v4556
        %v4685 = vunpack.c.l.b16 %v4557
        %v4686 = vunpack.c.l.b16 %v4558
        %v4687 = vunpack.c.l.b16 %v4559
        %v4688 = vunpack.c.l.b16 %v4560
        %v4689 = vunpack.c.l.b16 %v4561
        %v4690 = vunpack.c.l.b16 %v4562
        %v4691 = vunpack.c.l.b16 %v4563
        %v4692 = vunpack.c.l.b16 %v4564
        %v4693 = vunpack.c.l.b16 %v4565
        %v4694 = vunpack.c.l.b16 %v4566
        %v4695 = vpack.c.b16 %v4680, %v4679
        %v4696 = vpack.c.b16 %v4682, %v4681
        %v4697 = vpack.c.b16 %v4684, %v4683
        %v4698 = vpack.c.b16 %v4686, %v4685
        %v4699 = vpack.c.b16 %v4688, %v4687
        %v4700 = vpack.c.b16 %v4690, %v4689
        %v4701 = vpack.c.b16 %v4692, %v4691
        %v4702 = vpack.c.b16 %v4694, %v4693
        %4711 = vmatpush.bf16.msra.mxu0 %v4702
        %4712 = vmatpush.bf16.msra.mxu0 %v4701
        %4713 = vmatpush.bf16.msra.mxu0 %v4700
        %4714 = vmatpush.bf16.msra.mxu0 %v4699
        %4715 = vmatpush.bf16.msra.mxu0 %v4698
        %4716 = vmatpush.bf16.msra.mxu0 %v4697
        %4717 = vmatpush.bf16.msra.mxu0 %v4696
        %4718 = vmatpush.bf16.msra.mxu0 %v4695
        %4719 = vmatmul.bf16.gmra.mxu0 %v4631
        %v4720 = vpop.f32.mrf.mxu0
        %v4721 = vadd.f32 0.0, %v4720
        %v4722 = vpop.f32.mrf.mxu0
        %v4723 = vadd.f32 0.0, %v4722
        %4724 = vmatmul.bf16.gmra.mxu0 %v4632
        %v4725 = vpop.f32.mrf.mxu0
        %v4726 = vadd.f32 0.0, %v4725
        %v4727 = vpop.f32.mrf.mxu0
        %v4728 = vadd.f32 0.0, %v4727
        %4729 = vmatmul.bf16.gmra.mxu0 %v4633
        %v4730 = vpop.f32.mrf.mxu0
        %v4731 = vadd.f32 0.0, %v4730
        %v4732 = vpop.f32.mrf.mxu0
        %v4733 = vadd.f32 0.0, %v4732
        %4734 = vmatmul.bf16.gmra.mxu0 %v4634
        %v4735 = vpop.f32.mrf.mxu0
        %v4736 = vadd.f32 0.0, %v4735
        %v4737 = vpop.f32.mrf.mxu0
        %v4738 = vadd.f32 0.0, %v4737
        %4739 = vmatmul.bf16.gmra.mxu0 %v4635
        %v4740 = vpop.f32.mrf.mxu0
        %v4741 = vadd.f32 0.0, %v4740
        %v4742 = vpop.f32.mrf.mxu0
        %v4743 = vadd.f32 0.0, %v4742
        %4744 = vmatmul.bf16.gmra.mxu0 %v4636
        %v4745 = vpop.f32.mrf.mxu0
        %v4746 = vadd.f32 0.0, %v4745
        %v4747 = vpop.f32.mrf.mxu0
        %v4748 = vadd.f32 0.0, %v4747
        %4749 = vmatmul.bf16.gmra.mxu0 %v4637
        %v4750 = vpop.f32.mrf.mxu0
        %v4751 = vadd.f32 0.0, %v4750
        %v4752 = vpop.f32.mrf.mxu0
        %v4753 = vadd.f32 0.0, %v4752
        %4754 = vmatmul.bf16.gmra.mxu0 %v4638
        %v4755 = vpop.f32.mrf.mxu0
        %v4756 = vadd.f32 0.0, %v4755
        %v4757 = vpop.f32.mrf.mxu0
        %v4758 = vadd.f32 0.0, %v4757
        %4759 = vmatmul.bf16.gmra.mxu0 %v4639
        %v4760 = vpop.f32.mrf.mxu0
        %v4761 = vadd.f32 0.0, %v4760
        %v4762 = vpop.f32.mrf.mxu0
        %v4763 = vadd.f32 0.0, %v4762
        %4764 = vmatmul.bf16.gmra.mxu0 %v4640
        %v4765 = vpop.f32.mrf.mxu0
        %v4766 = vadd.f32 0.0, %v4765
        %v4767 = vpop.f32.mrf.mxu0
        %v4768 = vadd.f32 0.0, %v4767
        %4769 = vmatmul.bf16.gmra.mxu0 %v4641
        %v4770 = vpop.f32.mrf.mxu0
        %v4771 = vadd.f32 0.0, %v4770
        %v4772 = vpop.f32.mrf.mxu0
        %v4773 = vadd.f32 0.0, %v4772
        %4774 = vmatmul.bf16.gmra.mxu0 %v4642
        %v4775 = vpop.f32.mrf.mxu0
        %v4776 = vadd.f32 0.0, %v4775
        %v4777 = vpop.f32.mrf.mxu0
        %v4778 = vadd.f32 0.0, %v4777
        %4779 = vmatmul.bf16.gmra.mxu0 %v4643
        %v4780 = vpop.f32.mrf.mxu0
        %v4781 = vadd.f32 0.0, %v4780
        %v4782 = vpop.f32.mrf.mxu0
        %v4783 = vadd.f32 0.0, %v4782
        %4784 = vmatmul.bf16.gmra.mxu0 %v4644
        %v4785 = vpop.f32.mrf.mxu0
        %v4786 = vadd.f32 0.0, %v4785
        %v4787 = vpop.f32.mrf.mxu0
        %v4788 = vadd.f32 0.0, %v4787
        %4789 = vmatmul.bf16.gmra.mxu0 %v4645
        %v4790 = vpop.f32.mrf.mxu0
        %v4791 = vadd.f32 0.0, %v4790
        %v4792 = vpop.f32.mrf.mxu0
        %v4793 = vadd.f32 0.0, %v4792
        %4794 = vmatmul.bf16.gmra.mxu0 %v4646
        %v4795 = vpop.f32.mrf.mxu0
        %v4796 = vadd.f32 0.0, %v4795
        %v4797 = vpop.f32.mrf.mxu0
        %v4798 = vadd.f32 0.0, %v4797
        %4799 = vdwg.mxu0
        %v4800 = vadd.f32 %v4407, %v4721
        %v4801 = vadd.f32 %v4409, %v4723
        %v4802 = vadd.f32 %v4412, %v4726
        %v4803 = vadd.f32 %v4414, %v4728
        %v4804 = vadd.f32 %v4417, %v4731
        %v4805 = vadd.f32 %v4419, %v4733
        %v4806 = vadd.f32 %v4422, %v4736
        %v4807 = vadd.f32 %v4424, %v4738
        %v4808 = vadd.f32 %v4427, %v4741
        %v4809 = vadd.f32 %v4429, %v4743
        %v4810 = vadd.f32 %v4432, %v4746
        %v4811 = vadd.f32 %v4434, %v4748
        %v4812 = vadd.f32 %v4437, %v4751
        %v4813 = vadd.f32 %v4439, %v4753
        %v4814 = vadd.f32 %v4442, %v4756
        %v4815 = vadd.f32 %v4444, %v4758
        %v4816 = vadd.f32 %v4447, %v4761
        %v4817 = vadd.f32 %v4449, %v4763
        %v4818 = vadd.f32 %v4452, %v4766
        %v4819 = vadd.f32 %v4454, %v4768
        %v4820 = vadd.f32 %v4457, %v4771
        %v4821 = vadd.f32 %v4459, %v4773
        %v4822 = vadd.f32 %v4462, %v4776
        %v4823 = vadd.f32 %v4464, %v4778
        %v4824 = vadd.f32 %v4467, %v4781
        %v4825 = vadd.f32 %v4469, %v4783
        %v4826 = vadd.f32 %v4472, %v4786
        %v4827 = vadd.f32 %v4474, %v4788
        %v4828 = vadd.f32 %v4477, %v4791
        %v4829 = vadd.f32 %v4479, %v4793
        %v4830 = vadd.f32 %v4482, %v4796
        %v4831 = vadd.f32 %v4484, %v4798
        %v4832 = vld [vmem:[%s612 + $0x7] sm:$0xff]
        %v4833 = vld [vmem:[%s612 + $0xf] sm:$0xff]
        %v4834 = vld [vmem:[%s612 + $0x27] sm:$0xff]
        %v4835 = vld [vmem:[%s612 + $0x2f] sm:$0xff]
        %v4836 = vld [vmem:[%s612 + $0x47] sm:$0xff]
        %v4837 = vld [vmem:[%s612 + $0x4f] sm:$0xff]
        %v4838 = vld [vmem:[%s612 + $0x67] sm:$0xff]
        %v4839 = vld [vmem:[%s612 + $0x6f] sm:$0xff]
        %v4840 = vld [vmem:[%s612 + $0x87] sm:$0xff]
        %v4841 = vld [vmem:[%s612 + $0x8f] sm:$0xff]
        %v4842 = vld [vmem:[%s612 + $0xa7] sm:$0xff]
        %v4843 = vld [vmem:[%s612 + $0xaf] sm:$0xff]
        %v4844 = vld [vmem:[%s612 + $0xc7] sm:$0xff]
        %v4845 = vld [vmem:[%s612 + $0xcf] sm:$0xff]
        %v4846 = vld [vmem:[%s612 + $0xe7] sm:$0xff]
        %v4847 = vld [vmem:[%s612 + $0xef] sm:$0xff]
        %v4848 = vld [vmem:[%s612 + $0x107] sm:$0xff]
        %v4849 = vld [vmem:[%s612 + $0x10f] sm:$0xff]
        %v4850 = vld [vmem:[%s612 + $0x127] sm:$0xff]
        %v4851 = vld [vmem:[%s612 + $0x12f] sm:$0xff]
        %v4852 = vld [vmem:[%s612 + $0x147] sm:$0xff]
        %v4853 = vld [vmem:[%s612 + $0x14f] sm:$0xff]
        %v4854 = vld [vmem:[%s612 + $0x167] sm:$0xff]
        %v4855 = vld [vmem:[%s612 + $0x16f] sm:$0xff]
        %v4856 = vld [vmem:[%s612 + $0x187] sm:$0xff]
        %v4857 = vld [vmem:[%s612 + $0x18f] sm:$0xff]
        %v4858 = vld [vmem:[%s612 + $0x1a7] sm:$0xff]
        %v4859 = vld [vmem:[%s612 + $0x1af] sm:$0xff]
        %v4860 = vld [vmem:[%s612 + $0x1c7] sm:$0xff]
        %v4861 = vld [vmem:[%s612 + $0x1cf] sm:$0xff]
        %v4862 = vld [vmem:[%s612 + $0x1e7] sm:$0xff]
        %v4863 = vld [vmem:[%s612 + $0x1ef] sm:$0xff]
        %v4864 = vpack.c.bf16 %v4832, %v4832
        %v4865 = vpack.c.bf16 %v4833, %v4833
        %v4866 = vpack.c.bf16 %v4834, %v4834
        %v4867 = vpack.c.bf16 %v4835, %v4835
        %v4868 = vpack.c.bf16 %v4836, %v4836
        %v4869 = vpack.c.bf16 %v4837, %v4837
        %v4870 = vpack.c.bf16 %v4838, %v4838
        %v4871 = vpack.c.bf16 %v4839, %v4839
        %v4872 = vpack.c.bf16 %v4840, %v4840
        %v4873 = vpack.c.bf16 %v4841, %v4841
        %v4874 = vpack.c.bf16 %v4842, %v4842
        %v4875 = vpack.c.bf16 %v4843, %v4843
        %v4876 = vpack.c.bf16 %v4844, %v4844
        %v4877 = vpack.c.bf16 %v4845, %v4845
        %v4878 = vpack.c.bf16 %v4846, %v4846
        %v4879 = vpack.c.bf16 %v4847, %v4847
        %v4880 = vpack.c.bf16 %v4848, %v4848
        %v4881 = vpack.c.bf16 %v4849, %v4849
        %v4882 = vpack.c.bf16 %v4850, %v4850
        %v4883 = vpack.c.bf16 %v4851, %v4851
        %v4884 = vpack.c.bf16 %v4852, %v4852
        %v4885 = vpack.c.bf16 %v4853, %v4853
        %v4886 = vpack.c.bf16 %v4854, %v4854
        %v4887 = vpack.c.bf16 %v4855, %v4855
        %v4888 = vpack.c.bf16 %v4856, %v4856
        %v4889 = vpack.c.bf16 %v4857, %v4857
        %v4890 = vpack.c.bf16 %v4858, %v4858
        %v4891 = vpack.c.bf16 %v4859, %v4859
        %v4892 = vpack.c.bf16 %v4860, %v4860
        %v4893 = vpack.c.bf16 %v4861, %v4861
        %v4894 = vpack.c.bf16 %v4862, %v4862
        %v4895 = vpack.c.bf16 %v4863, %v4863
        %s4896 = scalar_lea.vmem [#allocation9], 192
        %v4897 = vld [vmem:[%s4896] sm:$0xf]
        %v4898 = vld [vmem:[%s4896 + $0x4] sm:$0xf]
        %v4899 = vld [vmem:[%s4896 + $0x8] sm:$0xf]
        %v4900 = vld [vmem:[%s4896 + $0xc] sm:$0xf]
        %v4901 = vld [vmem:[%s4896 + $0x10] sm:$0xf]
        %v4902 = vld [vmem:[%s4896 + $0x14] sm:$0xf]
        %v4903 = vld [vmem:[%s4896 + $0x18] sm:$0xf]
        %v4904 = vld [vmem:[%s4896 + $0x1c] sm:$0xf]
        %v4905 = vld [vmem:[%s4896 + $0x20] sm:$0xf]
        %v4906 = vld [vmem:[%s4896 + $0x24] sm:$0xf]
        %v4907 = vld [vmem:[%s4896 + $0x28] sm:$0xf]
        %v4908 = vld [vmem:[%s4896 + $0x2c] sm:$0xf]
        %v4909 = vld [vmem:[%s4896 + $0x30] sm:$0xf]
        %v4910 = vld [vmem:[%s4896 + $0x34] sm:$0xf]
        %v4911 = vld [vmem:[%s4896 + $0x38] sm:$0xf]
        %v4912 = vld [vmem:[%s4896 + $0x3c] sm:$0xf]
        %v4945 = vunpack.c.l.b16 %v4864
        %v4946 = vunpack.c.l.b16 %v4865
        %v4947 = vunpack.c.l.b16 %v4866
        %v4948 = vunpack.c.l.b16 %v4867
        %v4949 = vunpack.c.l.b16 %v4868
        %v4950 = vunpack.c.l.b16 %v4869
        %v4951 = vunpack.c.l.b16 %v4870
        %v4952 = vunpack.c.l.b16 %v4871
        %v4953 = vunpack.c.l.b16 %v4872
        %v4954 = vunpack.c.l.b16 %v4873
        %v4955 = vunpack.c.l.b16 %v4874
        %v4956 = vunpack.c.l.b16 %v4875
        %v4957 = vunpack.c.l.b16 %v4876
        %v4958 = vunpack.c.l.b16 %v4877
        %v4959 = vunpack.c.l.b16 %v4878
        %v4960 = vunpack.c.l.b16 %v4879
        %v4961 = vunpack.c.l.b16 %v4880
        %v4962 = vunpack.c.l.b16 %v4881
        %v4963 = vunpack.c.l.b16 %v4882
        %v4964 = vunpack.c.l.b16 %v4883
        %v4965 = vunpack.c.l.b16 %v4884
        %v4966 = vunpack.c.l.b16 %v4885
        %v4967 = vunpack.c.l.b16 %v4886
        %v4968 = vunpack.c.l.b16 %v4887
        %v4969 = vunpack.c.l.b16 %v4888
        %v4970 = vunpack.c.l.b16 %v4889
        %v4971 = vunpack.c.l.b16 %v4890
        %v4972 = vunpack.c.l.b16 %v4891
        %v4973 = vunpack.c.l.b16 %v4892
        %v4974 = vunpack.c.l.b16 %v4893
        %v4975 = vunpack.c.l.b16 %v4894
        %v4976 = vunpack.c.l.b16 %v4895
        %v4977 = vpack.c.b16 %v4946, %v4945
        %v4978 = vpack.c.b16 %v4948, %v4947
        %v4979 = vpack.c.b16 %v4950, %v4949
        %v4980 = vpack.c.b16 %v4952, %v4951
        %v4981 = vpack.c.b16 %v4954, %v4953
        %v4982 = vpack.c.b16 %v4956, %v4955
        %v4983 = vpack.c.b16 %v4958, %v4957
        %v4984 = vpack.c.b16 %v4960, %v4959
        %v4985 = vpack.c.b16 %v4962, %v4961
        %v4986 = vpack.c.b16 %v4964, %v4963
        %v4987 = vpack.c.b16 %v4966, %v4965
        %v4988 = vpack.c.b16 %v4968, %v4967
        %v4989 = vpack.c.b16 %v4970, %v4969
        %v4990 = vpack.c.b16 %v4972, %v4971
        %v4991 = vpack.c.b16 %v4974, %v4973
        %v4992 = vpack.c.b16 %v4976, %v4975
        %v5025 = vunpack.c.l.b16 %v4897
        %v5026 = vunpack.c.l.b16 %v4898
        %v5027 = vunpack.c.l.b16 %v4899
        %v5028 = vunpack.c.l.b16 %v4900
        %v5029 = vunpack.c.l.b16 %v4901
        %v5030 = vunpack.c.l.b16 %v4902
        %v5031 = vunpack.c.l.b16 %v4903
        %v5032 = vunpack.c.l.b16 %v4904
        %v5033 = vunpack.c.l.b16 %v4905
        %v5034 = vunpack.c.l.b16 %v4906
        %v5035 = vunpack.c.l.b16 %v4907
        %v5036 = vunpack.c.l.b16 %v4908
        %v5037 = vunpack.c.l.b16 %v4909
        %v5038 = vunpack.c.l.b16 %v4910
        %v5039 = vunpack.c.l.b16 %v4911
        %v5040 = vunpack.c.l.b16 %v4912
        %v5041 = vpack.c.b16 %v5026, %v5025
        %v5042 = vpack.c.b16 %v5028, %v5027
        %v5043 = vpack.c.b16 %v5030, %v5029
        %v5044 = vpack.c.b16 %v5032, %v5031
        %v5045 = vpack.c.b16 %v5034, %v5033
        %v5046 = vpack.c.b16 %v5036, %v5035
        %v5047 = vpack.c.b16 %v5038, %v5037
        %v5048 = vpack.c.b16 %v5040, %v5039
        %5057 = vmatpush.bf16.msra.mxu0 %v5048
        %5058 = vmatpush.bf16.msra.mxu0 %v5047
        %5059 = vmatpush.bf16.msra.mxu0 %v5046
        %5060 = vmatpush.bf16.msra.mxu0 %v5045
        %5061 = vmatpush.bf16.msra.mxu0 %v5044
        %5062 = vmatpush.bf16.msra.mxu0 %v5043
        %5063 = vmatpush.bf16.msra.mxu0 %v5042
        %5064 = vmatpush.bf16.msra.mxu0 %v5041
        %5065 = vmatmul.bf16.gmra.mxu0 %v4977
        %v5066 = vpop.f32.mrf.mxu0
        %v5067 = vadd.f32 0.0, %v5066
        %v5068 = vpop.f32.mrf.mxu0
        %v5069 = vadd.f32 0.0, %v5068
        %5070 = vmatmul.bf16.gmra.mxu0 %v4978
        %v5071 = vpop.f32.mrf.mxu0
        %v5072 = vadd.f32 0.0, %v5071
        %v5073 = vpop.f32.mrf.mxu0
        %v5074 = vadd.f32 0.0, %v5073
        %5075 = vmatmul.bf16.gmra.mxu0 %v4979
        %v5076 = vpop.f32.mrf.mxu0
        %v5077 = vadd.f32 0.0, %v5076
        %v5078 = vpop.f32.mrf.mxu0
        %v5079 = vadd.f32 0.0, %v5078
        %5080 = vmatmul.bf16.gmra.mxu0 %v4980
        %v5081 = vpop.f32.mrf.mxu0
        %v5082 = vadd.f32 0.0, %v5081
        %v5083 = vpop.f32.mrf.mxu0
        %v5084 = vadd.f32 0.0, %v5083
        %5085 = vmatmul.bf16.gmra.mxu0 %v4981
        %v5086 = vpop.f32.mrf.mxu0
        %v5087 = vadd.f32 0.0, %v5086
        %v5088 = vpop.f32.mrf.mxu0
        %v5089 = vadd.f32 0.0, %v5088
        %5090 = vmatmul.bf16.gmra.mxu0 %v4982
        %v5091 = vpop.f32.mrf.mxu0
        %v5092 = vadd.f32 0.0, %v5091
        %v5093 = vpop.f32.mrf.mxu0
        %v5094 = vadd.f32 0.0, %v5093
        %5095 = vmatmul.bf16.gmra.mxu0 %v4983
        %v5096 = vpop.f32.mrf.mxu0
        %v5097 = vadd.f32 0.0, %v5096
        %v5098 = vpop.f32.mrf.mxu0
        %v5099 = vadd.f32 0.0, %v5098
        %5100 = vmatmul.bf16.gmra.mxu0 %v4984
        %v5101 = vpop.f32.mrf.mxu0
        %v5102 = vadd.f32 0.0, %v5101
        %v5103 = vpop.f32.mrf.mxu0
        %v5104 = vadd.f32 0.0, %v5103
        %5105 = vmatmul.bf16.gmra.mxu0 %v4985
        %v5106 = vpop.f32.mrf.mxu0
        %v5107 = vadd.f32 0.0, %v5106
        %v5108 = vpop.f32.mrf.mxu0
        %v5109 = vadd.f32 0.0, %v5108
        %5110 = vmatmul.bf16.gmra.mxu0 %v4986
        %v5111 = vpop.f32.mrf.mxu0
        %v5112 = vadd.f32 0.0, %v5111
        %v5113 = vpop.f32.mrf.mxu0
        %v5114 = vadd.f32 0.0, %v5113
        %5115 = vmatmul.bf16.gmra.mxu0 %v4987
        %v5116 = vpop.f32.mrf.mxu0
        %v5117 = vadd.f32 0.0, %v5116
        %v5118 = vpop.f32.mrf.mxu0
        %v5119 = vadd.f32 0.0, %v5118
        %5120 = vmatmul.bf16.gmra.mxu0 %v4988
        %v5121 = vpop.f32.mrf.mxu0
        %v5122 = vadd.f32 0.0, %v5121
        %v5123 = vpop.f32.mrf.mxu0
        %v5124 = vadd.f32 0.0, %v5123
        %5125 = vmatmul.bf16.gmra.mxu0 %v4989
        %v5126 = vpop.f32.mrf.mxu0
        %v5127 = vadd.f32 0.0, %v5126
        %v5128 = vpop.f32.mrf.mxu0
        %v5129 = vadd.f32 0.0, %v5128
        %5130 = vmatmul.bf16.gmra.mxu0 %v4990
        %v5131 = vpop.f32.mrf.mxu0
        %v5132 = vadd.f32 0.0, %v5131
        %v5133 = vpop.f32.mrf.mxu0
        %v5134 = vadd.f32 0.0, %v5133
        %5135 = vmatmul.bf16.gmra.mxu0 %v4991
        %v5136 = vpop.f32.mrf.mxu0
        %v5137 = vadd.f32 0.0, %v5136
        %v5138 = vpop.f32.mrf.mxu0
        %v5139 = vadd.f32 0.0, %v5138
        %5140 = vmatmul.bf16.gmra.mxu0 %v4992
        %v5141 = vpop.f32.mrf.mxu0
        %v5142 = vadd.f32 0.0, %v5141
        %v5143 = vpop.f32.mrf.mxu0
        %v5144 = vadd.f32 0.0, %v5143
        %5145 = vdwg.mxu0
        %v5146 = vadd.f32 %v4800, %v5067
        %v5147 = vadd.f32 %v4801, %v5069
        %v5148 = vadd.f32 %v4802, %v5072
        %v5149 = vadd.f32 %v4803, %v5074
        %v5150 = vadd.f32 %v4804, %v5077
        %v5151 = vadd.f32 %v4805, %v5079
        %v5152 = vadd.f32 %v4806, %v5082
        %v5153 = vadd.f32 %v4807, %v5084
        %v5154 = vadd.f32 %v4808, %v5087
        %v5155 = vadd.f32 %v4809, %v5089
        %v5156 = vadd.f32 %v4810, %v5092
        %v5157 = vadd.f32 %v4811, %v5094
        %v5158 = vadd.f32 %v4812, %v5097
        %v5159 = vadd.f32 %v4813, %v5099
        %v5160 = vadd.f32 %v4814, %v5102
        %v5161 = vadd.f32 %v4815, %v5104
        %v5162 = vadd.f32 %v4816, %v5107
        %v5163 = vadd.f32 %v4817, %v5109
        %v5164 = vadd.f32 %v4818, %v5112
        %v5165 = vadd.f32 %v4819, %v5114
        %v5166 = vadd.f32 %v4820, %v5117
        %v5167 = vadd.f32 %v4821, %v5119
        %v5168 = vadd.f32 %v4822, %v5122
        %v5169 = vadd.f32 %v4823, %v5124
        %v5170 = vadd.f32 %v4824, %v5127
        %v5171 = vadd.f32 %v4825, %v5129
        %v5172 = vadd.f32 %v4826, %v5132
        %v5173 = vadd.f32 %v4827, %v5134
        %v5174 = vadd.f32 %v4828, %v5137
        %v5175 = vadd.f32 %v4829, %v5139
        %v5176 = vadd.f32 %v4830, %v5142
        %v5177 = vadd.f32 %v4831, %v5144
        %v5178 = vld [vmem:[%s612 + $0x8] sm:$0xff]
        %v5179 = vld [vmem:[%s612 + $0x10] sm:$0xff]
        %v5180 = vld [vmem:[%s612 + $0x28] sm:$0xff]
        %v5181 = vld [vmem:[%s612 + $0x30] sm:$0xff]
        %v5182 = vld [vmem:[%s612 + $0x48] sm:$0xff]
        %v5183 = vld [vmem:[%s612 + $0x50] sm:$0xff]
        %v5184 = vld [vmem:[%s612 + $0x68] sm:$0xff]
        %v5185 = vld [vmem:[%s612 + $0x70] sm:$0xff]
        %v5186 = vld [vmem:[%s612 + $0x88] sm:$0xff]
        %v5187 = vld [vmem:[%s612 + $0x90] sm:$0xff]
        %v5188 = vld [vmem:[%s612 + $0xa8] sm:$0xff]
        %v5189 = vld [vmem:[%s612 + $0xb0] sm:$0xff]
        %v5190 = vld [vmem:[%s612 + $0xc8] sm:$0xff]
        %v5191 = vld [vmem:[%s612 + $0xd0] sm:$0xff]
        %v5192 = vld [vmem:[%s612 + $0xe8] sm:$0xff]
        %v5193 = vld [vmem:[%s612 + $0xf0] sm:$0xff]
        %v5194 = vld [vmem:[%s612 + $0x108] sm:$0xff]
        %v5195 = vld [vmem:[%s612 + $0x110] sm:$0xff]
        %v5196 = vld [vmem:[%s612 + $0x128] sm:$0xff]
        %v5197 = vld [vmem:[%s612 + $0x130] sm:$0xff]
        %v5198 = vld [vmem:[%s612 + $0x148] sm:$0xff]
        %v5199 = vld [vmem:[%s612 + $0x150] sm:$0xff]
        %v5200 = vld [vmem:[%s612 + $0x168] sm:$0xff]
        %v5201 = vld [vmem:[%s612 + $0x170] sm:$0xff]
        %v5202 = vld [vmem:[%s612 + $0x188] sm:$0xff]
        %v5203 = vld [vmem:[%s612 + $0x190] sm:$0xff]
        %v5204 = vld [vmem:[%s612 + $0x1a8] sm:$0xff]
        %v5205 = vld [vmem:[%s612 + $0x1b0] sm:$0xff]
        %v5206 = vld [vmem:[%s612 + $0x1c8] sm:$0xff]
        %v5207 = vld [vmem:[%s612 + $0x1d0] sm:$0xff]
        %v5208 = vld [vmem:[%s612 + $0x1e8] sm:$0xff]
        %v5209 = vld [vmem:[%s612 + $0x1f0] sm:$0xff]
        %v5210 = vpack.c.bf16 %v5178, %v5178
        %v5211 = vpack.c.bf16 %v5179, %v5179
        %v5212 = vpack.c.bf16 %v5180, %v5180
        %v5213 = vpack.c.bf16 %v5181, %v5181
        %v5214 = vpack.c.bf16 %v5182, %v5182
        %v5215 = vpack.c.bf16 %v5183, %v5183
        %v5216 = vpack.c.bf16 %v5184, %v5184
        %v5217 = vpack.c.bf16 %v5185, %v5185
        %v5218 = vpack.c.bf16 %v5186, %v5186
        %v5219 = vpack.c.bf16 %v5187, %v5187
        %v5220 = vpack.c.bf16 %v5188, %v5188
        %v5221 = vpack.c.bf16 %v5189, %v5189
        %v5222 = vpack.c.bf16 %v5190, %v5190
        %v5223 = vpack.c.bf16 %v5191, %v5191
        %v5224 = vpack.c.bf16 %v5192, %v5192
        %v5225 = vpack.c.bf16 %v5193, %v5193
        %v5226 = vpack.c.bf16 %v5194, %v5194
        %v5227 = vpack.c.bf16 %v5195, %v5195
        %v5228 = vpack.c.bf16 %v5196, %v5196
        %v5229 = vpack.c.bf16 %v5197, %v5197
        %v5230 = vpack.c.bf16 %v5198, %v5198
        %v5231 = vpack.c.bf16 %v5199, %v5199
        %v5232 = vpack.c.bf16 %v5200, %v5200
        %v5233 = vpack.c.bf16 %v5201, %v5201
        %v5234 = vpack.c.bf16 %v5202, %v5202
        %v5235 = vpack.c.bf16 %v5203, %v5203
        %v5236 = vpack.c.bf16 %v5204, %v5204
        %v5237 = vpack.c.bf16 %v5205, %v5205
        %v5238 = vpack.c.bf16 %v5206, %v5206
        %v5239 = vpack.c.bf16 %v5207, %v5207
        %v5240 = vpack.c.bf16 %v5208, %v5208
        %v5241 = vpack.c.bf16 %v5209, %v5209
        %s5242 = scalar_lea.vmem [#allocation9], 256
        %v5243 = vld [vmem:[%s5242] sm:$0xf]
        %v5244 = vld [vmem:[%s5242 + $0x4] sm:$0xf]
        %v5245 = vld [vmem:[%s5242 + $0x8] sm:$0xf]
        %v5246 = vld [vmem:[%s5242 + $0xc] sm:$0xf]
        %v5247 = vld [vmem:[%s5242 + $0x10] sm:$0xf]
        %v5248 = vld [vmem:[%s5242 + $0x14] sm:$0xf]
        %v5249 = vld [vmem:[%s5242 + $0x18] sm:$0xf]
        %v5250 = vld [vmem:[%s5242 + $0x1c] sm:$0xf]
        %v5251 = vld [vmem:[%s5242 + $0x20] sm:$0xf]
        %v5252 = vld [vmem:[%s5242 + $0x24] sm:$0xf]
        %v5253 = vld [vmem:[%s5242 + $0x28] sm:$0xf]
        %v5254 = vld [vmem:[%s5242 + $0x2c] sm:$0xf]
        %v5255 = vld [vmem:[%s5242 + $0x30] sm:$0xf]
        %v5256 = vld [vmem:[%s5242 + $0x34] sm:$0xf]
        %v5257 = vld [vmem:[%s5242 + $0x38] sm:$0xf]
        %v5258 = vld [vmem:[%s5242 + $0x3c] sm:$0xf]
        %v5291 = vunpack.c.l.b16 %v5210
        %v5292 = vunpack.c.l.b16 %v5211
        %v5293 = vunpack.c.l.b16 %v5212
        %v5294 = vunpack.c.l.b16 %v5213
        %v5295 = vunpack.c.l.b16 %v5214
        %v5296 = vunpack.c.l.b16 %v5215
        %v5297 = vunpack.c.l.b16 %v5216
        %v5298 = vunpack.c.l.b16 %v5217
        %v5299 = vunpack.c.l.b16 %v5218
        %v5300 = vunpack.c.l.b16 %v5219
        %v5301 = vunpack.c.l.b16 %v5220
        %v5302 = vunpack.c.l.b16 %v5221
        %v5303 = vunpack.c.l.b16 %v5222
        %v5304 = vunpack.c.l.b16 %v5223
        %v5305 = vunpack.c.l.b16 %v5224
        %v5306 = vunpack.c.l.b16 %v5225
        %v5307 = vunpack.c.l.b16 %v5226
        %v5308 = vunpack.c.l.b16 %v5227
        %v5309 = vunpack.c.l.b16 %v5228
        %v5310 = vunpack.c.l.b16 %v5229
        %v5311 = vunpack.c.l.b16 %v5230
        %v5312 = vunpack.c.l.b16 %v5231
        %v5313 = vunpack.c.l.b16 %v5232
        %v5314 = vunpack.c.l.b16 %v5233
        %v5315 = vunpack.c.l.b16 %v5234
        %v5316 = vunpack.c.l.b16 %v5235
        %v5317 = vunpack.c.l.b16 %v5236
        %v5318 = vunpack.c.l.b16 %v5237
        %v5319 = vunpack.c.l.b16 %v5238
        %v5320 = vunpack.c.l.b16 %v5239
        %v5321 = vunpack.c.l.b16 %v5240
        %v5322 = vunpack.c.l.b16 %v5241
        %v5323 = vpack.c.b16 %v5292, %v5291
        %v5324 = vpack.c.b16 %v5294, %v5293
        %v5325 = vpack.c.b16 %v5296, %v5295
        %v5326 = vpack.c.b16 %v5298, %v5297
        %v5327 = vpack.c.b16 %v5300, %v5299
        %v5328 = vpack.c.b16 %v5302, %v5301
        %v5329 = vpack.c.b16 %v5304, %v5303
        %v5330 = vpack.c.b16 %v5306, %v5305
        %v5331 = vpack.c.b16 %v5308, %v5307
        %v5332 = vpack.c.b16 %v5310, %v5309
        %v5333 = vpack.c.b16 %v5312, %v5311
        %v5334 = vpack.c.b16 %v5314, %v5313
        %v5335 = vpack.c.b16 %v5316, %v5315
        %v5336 = vpack.c.b16 %v5318, %v5317
        %v5337 = vpack.c.b16 %v5320, %v5319
        %v5338 = vpack.c.b16 %v5322, %v5321
        %v5371 = vunpack.c.l.b16 %v5243
        %v5372 = vunpack.c.l.b16 %v5244
        %v5373 = vunpack.c.l.b16 %v5245
        %v5374 = vunpack.c.l.b16 %v5246
        %v5375 = vunpack.c.l.b16 %v5247
        %v5376 = vunpack.c.l.b16 %v5248
        %v5377 = vunpack.c.l.b16 %v5249
        %v5378 = vunpack.c.l.b16 %v5250
        %v5379 = vunpack.c.l.b16 %v5251
        %v5380 = vunpack.c.l.b16 %v5252
        %v5381 = vunpack.c.l.b16 %v5253
        %v5382 = vunpack.c.l.b16 %v5254
        %v5383 = vunpack.c.l.b16 %v5255
        %v5384 = vunpack.c.l.b16 %v5256
        %v5385 = vunpack.c.l.b16 %v5257
        %v5386 = vunpack.c.l.b16 %v5258
        %v5387 = vpack.c.b16 %v5372, %v5371
        %v5388 = vpack.c.b16 %v5374, %v5373
        %v5389 = vpack.c.b16 %v5376, %v5375
        %v5390 = vpack.c.b16 %v5378, %v5377
        %v5391 = vpack.c.b16 %v5380, %v5379
        %v5392 = vpack.c.b16 %v5382, %v5381
        %v5393 = vpack.c.b16 %v5384, %v5383
        %v5394 = vpack.c.b16 %v5386, %v5385
        %5403 = vmatpush.bf16.msra.mxu0 %v5394
        %5404 = vmatpush.bf16.msra.mxu0 %v5393
        %5405 = vmatpush.bf16.msra.mxu0 %v5392
        %5406 = vmatpush.bf16.msra.mxu0 %v5391
        %5407 = vmatpush.bf16.msra.mxu0 %v5390
        %5408 = vmatpush.bf16.msra.mxu0 %v5389
        %5409 = vmatpush.bf16.msra.mxu0 %v5388
        %5410 = vmatpush.bf16.msra.mxu0 %v5387
        %5411 = vmatmul.bf16.gmra.mxu0 %v5323
        %v5412 = vpop.f32.mrf.mxu0
        %v5413 = vadd.f32 0.0, %v5412
        %v5414 = vpop.f32.mrf.mxu0
        %v5415 = vadd.f32 0.0, %v5414
        %5416 = vmatmul.bf16.gmra.mxu0 %v5324
        %v5417 = vpop.f32.mrf.mxu0
        %v5418 = vadd.f32 0.0, %v5417
        %v5419 = vpop.f32.mrf.mxu0
        %v5420 = vadd.f32 0.0, %v5419
        %5421 = vmatmul.bf16.gmra.mxu0 %v5325
        %v5422 = vpop.f32.mrf.mxu0
        %v5423 = vadd.f32 0.0, %v5422
        %v5424 = vpop.f32.mrf.mxu0
        %v5425 = vadd.f32 0.0, %v5424
        %5426 = vmatmul.bf16.gmra.mxu0 %v5326
        %v5427 = vpop.f32.mrf.mxu0
        %v5428 = vadd.f32 0.0, %v5427
        %v5429 = vpop.f32.mrf.mxu0
        %v5430 = vadd.f32 0.0, %v5429
        %5431 = vmatmul.bf16.gmra.mxu0 %v5327
        %v5432 = vpop.f32.mrf.mxu0
        %v5433 = vadd.f32 0.0, %v5432
        %v5434 = vpop.f32.mrf.mxu0
        %v5435 = vadd.f32 0.0, %v5434
        %5436 = vmatmul.bf16.gmra.mxu0 %v5328
        %v5437 = vpop.f32.mrf.mxu0
        %v5438 = vadd.f32 0.0, %v5437
        %v5439 = vpop.f32.mrf.mxu0
        %v5440 = vadd.f32 0.0, %v5439
        %5441 = vmatmul.bf16.gmra.mxu0 %v5329
        %v5442 = vpop.f32.mrf.mxu0
        %v5443 = vadd.f32 0.0, %v5442
        %v5444 = vpop.f32.mrf.mxu0
        %v5445 = vadd.f32 0.0, %v5444
        %5446 = vmatmul.bf16.gmra.mxu0 %v5330
        %v5447 = vpop.f32.mrf.mxu0
        %v5448 = vadd.f32 0.0, %v5447
        %v5449 = vpop.f32.mrf.mxu0
        %v5450 = vadd.f32 0.0, %v5449
        %5451 = vmatmul.bf16.gmra.mxu0 %v5331
        %v5452 = vpop.f32.mrf.mxu0
        %v5453 = vadd.f32 0.0, %v5452
        %v5454 = vpop.f32.mrf.mxu0
        %v5455 = vadd.f32 0.0, %v5454
        %5456 = vmatmul.bf16.gmra.mxu0 %v5332
        %v5457 = vpop.f32.mrf.mxu0
        %v5458 = vadd.f32 0.0, %v5457
        %v5459 = vpop.f32.mrf.mxu0
        %v5460 = vadd.f32 0.0, %v5459
        %5461 = vmatmul.bf16.gmra.mxu0 %v5333
        %v5462 = vpop.f32.mrf.mxu0
        %v5463 = vadd.f32 0.0, %v5462
        %v5464 = vpop.f32.mrf.mxu0
        %v5465 = vadd.f32 0.0, %v5464
        %5466 = vmatmul.bf16.gmra.mxu0 %v5334
        %v5467 = vpop.f32.mrf.mxu0
        %v5468 = vadd.f32 0.0, %v5467
        %v5469 = vpop.f32.mrf.mxu0
        %v5470 = vadd.f32 0.0, %v5469
        %5471 = vmatmul.bf16.gmra.mxu0 %v5335
        %v5472 = vpop.f32.mrf.mxu0
        %v5473 = vadd.f32 0.0, %v5472
        %v5474 = vpop.f32.mrf.mxu0
        %v5475 = vadd.f32 0.0, %v5474
        %5476 = vmatmul.bf16.gmra.mxu0 %v5336
        %v5477 = vpop.f32.mrf.mxu0
        %v5478 = vadd.f32 0.0, %v5477
        %v5479 = vpop.f32.mrf.mxu0
        %v5480 = vadd.f32 0.0, %v5479
        %5481 = vmatmul.bf16.gmra.mxu0 %v5337
        %v5482 = vpop.f32.mrf.mxu0
        %v5483 = vadd.f32 0.0, %v5482
        %v5484 = vpop.f32.mrf.mxu0
        %v5485 = vadd.f32 0.0, %v5484
        %5486 = vmatmul.bf16.gmra.mxu0 %v5338
        %v5487 = vpop.f32.mrf.mxu0
        %v5488 = vadd.f32 0.0, %v5487
        %v5489 = vpop.f32.mrf.mxu0
        %v5490 = vadd.f32 0.0, %v5489
        %5491 = vdwg.mxu0
        %v5492 = vadd.f32 %v5146, %v5413
        %v5493 = vadd.f32 %v5147, %v5415
        %v5494 = vadd.f32 %v5148, %v5418
        %v5495 = vadd.f32 %v5149, %v5420
        %v5496 = vadd.f32 %v5150, %v5423
        %v5497 = vadd.f32 %v5151, %v5425
        %v5498 = vadd.f32 %v5152, %v5428
        %v5499 = vadd.f32 %v5153, %v5430
        %v5500 = vadd.f32 %v5154, %v5433
        %v5501 = vadd.f32 %v5155, %v5435
        %v5502 = vadd.f32 %v5156, %v5438
        %v5503 = vadd.f32 %v5157, %v5440
        %v5504 = vadd.f32 %v5158, %v5443
        %v5505 = vadd.f32 %v5159, %v5445
        %v5506 = vadd.f32 %v5160, %v5448
        %v5507 = vadd.f32 %v5161, %v5450
        %v5508 = vadd.f32 %v5162, %v5453
        %v5509 = vadd.f32 %v5163, %v5455
        %v5510 = vadd.f32 %v5164, %v5458
        %v5511 = vadd.f32 %v5165, %v5460
        %v5512 = vadd.f32 %v5166, %v5463
        %v5513 = vadd.f32 %v5167, %v5465
        %v5514 = vadd.f32 %v5168, %v5468
        %v5515 = vadd.f32 %v5169, %v5470
        %v5516 = vadd.f32 %v5170, %v5473
        %v5517 = vadd.f32 %v5171, %v5475
        %v5518 = vadd.f32 %v5172, %v5478
        %v5519 = vadd.f32 %v5173, %v5480
        %v5520 = vadd.f32 %v5174, %v5483
        %v5521 = vadd.f32 %v5175, %v5485
        %v5522 = vadd.f32 %v5176, %v5488
        %v5523 = vadd.f32 %v5177, %v5490
        %v5524 = vld [vmem:[%s612 + $0x9] sm:$0xff]
        %v5525 = vld [vmem:[%s612 + $0x11] sm:$0xff]
        %v5526 = vld [vmem:[%s612 + $0x29] sm:$0xff]
        %v5527 = vld [vmem:[%s612 + $0x31] sm:$0xff]
        %v5528 = vld [vmem:[%s612 + $0x49] sm:$0xff]
        %v5529 = vld [vmem:[%s612 + $0x51] sm:$0xff]
        %v5530 = vld [vmem:[%s612 + $0x69] sm:$0xff]
        %v5531 = vld [vmem:[%s612 + $0x71] sm:$0xff]
        %v5532 = vld [vmem:[%s612 + $0x89] sm:$0xff]
        %v5533 = vld [vmem:[%s612 + $0x91] sm:$0xff]
        %v5534 = vld [vmem:[%s612 + $0xa9] sm:$0xff]
        %v5535 = vld [vmem:[%s612 + $0xb1] sm:$0xff]
        %v5536 = vld [vmem:[%s612 + $0xc9] sm:$0xff]
        %v5537 = vld [vmem:[%s612 + $0xd1] sm:$0xff]
        %v5538 = vld [vmem:[%s612 + $0xe9] sm:$0xff]
        %v5539 = vld [vmem:[%s612 + $0xf1] sm:$0xff]
        %v5540 = vld [vmem:[%s612 + $0x109] sm:$0xff]
        %v5541 = vld [vmem:[%s612 + $0x111] sm:$0xff]
        %v5542 = vld [vmem:[%s612 + $0x129] sm:$0xff]
        %v5543 = vld [vmem:[%s612 + $0x131] sm:$0xff]
        %v5544 = vld [vmem:[%s612 + $0x149] sm:$0xff]
        %v5545 = vld [vmem:[%s612 + $0x151] sm:$0xff]
        %v5546 = vld [vmem:[%s612 + $0x169] sm:$0xff]
        %v5547 = vld [vmem:[%s612 + $0x171] sm:$0xff]
        %v5548 = vld [vmem:[%s612 + $0x189] sm:$0xff]
        %v5549 = vld [vmem:[%s612 + $0x191] sm:$0xff]
        %v5550 = vld [vmem:[%s612 + $0x1a9] sm:$0xff]
        %v5551 = vld [vmem:[%s612 + $0x1b1] sm:$0xff]
        %v5552 = vld [vmem:[%s612 + $0x1c9] sm:$0xff]
        %v5553 = vld [vmem:[%s612 + $0x1d1] sm:$0xff]
        %v5554 = vld [vmem:[%s612 + $0x1e9] sm:$0xff]
        %v5555 = vld [vmem:[%s612 + $0x1f1] sm:$0xff]
        %v5556 = vpack.c.bf16 %v5524, %v5524
        %v5557 = vpack.c.bf16 %v5525, %v5525
        %v5558 = vpack.c.bf16 %v5526, %v5526
        %v5559 = vpack.c.bf16 %v5527, %v5527
        %v5560 = vpack.c.bf16 %v5528, %v5528
        %v5561 = vpack.c.bf16 %v5529, %v5529
        %v5562 = vpack.c.bf16 %v5530, %v5530
        %v5563 = vpack.c.bf16 %v5531, %v5531
        %v5564 = vpack.c.bf16 %v5532, %v5532
        %v5565 = vpack.c.bf16 %v5533, %v5533
        %v5566 = vpack.c.bf16 %v5534, %v5534
        %v5567 = vpack.c.bf16 %v5535, %v5535
        %v5568 = vpack.c.bf16 %v5536, %v5536
        %v5569 = vpack.c.bf16 %v5537, %v5537
        %v5570 = vpack.c.bf16 %v5538, %v5538
        %v5571 = vpack.c.bf16 %v5539, %v5539
        %v5572 = vpack.c.bf16 %v5540, %v5540
        %v5573 = vpack.c.bf16 %v5541, %v5541
        %v5574 = vpack.c.bf16 %v5542, %v5542
        %v5575 = vpack.c.bf16 %v5543, %v5543
        %v5576 = vpack.c.bf16 %v5544, %v5544
        %v5577 = vpack.c.bf16 %v5545, %v5545
        %v5578 = vpack.c.bf16 %v5546, %v5546
        %v5579 = vpack.c.bf16 %v5547, %v5547
        %v5580 = vpack.c.bf16 %v5548, %v5548
        %v5581 = vpack.c.bf16 %v5549, %v5549
        %v5582 = vpack.c.bf16 %v5550, %v5550
        %v5583 = vpack.c.bf16 %v5551, %v5551
        %v5584 = vpack.c.bf16 %v5552, %v5552
        %v5585 = vpack.c.bf16 %v5553, %v5553
        %v5586 = vpack.c.bf16 %v5554, %v5554
        %v5587 = vpack.c.bf16 %v5555, %v5555
        %s5588 = scalar_lea.vmem [#allocation9], 320
        %v5589 = vld [vmem:[%s5588] sm:$0xf]
        %v5590 = vld [vmem:[%s5588 + $0x4] sm:$0xf]
        %v5591 = vld [vmem:[%s5588 + $0x8] sm:$0xf]
        %v5592 = vld [vmem:[%s5588 + $0xc] sm:$0xf]
        %v5593 = vld [vmem:[%s5588 + $0x10] sm:$0xf]
        %v5594 = vld [vmem:[%s5588 + $0x14] sm:$0xf]
        %v5595 = vld [vmem:[%s5588 + $0x18] sm:$0xf]
        %v5596 = vld [vmem:[%s5588 + $0x1c] sm:$0xf]
        %v5597 = vld [vmem:[%s5588 + $0x20] sm:$0xf]
        %v5598 = vld [vmem:[%s5588 + $0x24] sm:$0xf]
        %v5599 = vld [vmem:[%s5588 + $0x28] sm:$0xf]
        %v5600 = vld [vmem:[%s5588 + $0x2c] sm:$0xf]
        %v5601 = vld [vmem:[%s5588 + $0x30] sm:$0xf]
        %v5602 = vld [vmem:[%s5588 + $0x34] sm:$0xf]
        %v5603 = vld [vmem:[%s5588 + $0x38] sm:$0xf]
        %v5604 = vld [vmem:[%s5588 + $0x3c] sm:$0xf]
        %v5637 = vunpack.c.l.b16 %v5556
        %v5638 = vunpack.c.l.b16 %v5557
        %v5639 = vunpack.c.l.b16 %v5558
        %v5640 = vunpack.c.l.b16 %v5559
        %v5641 = vunpack.c.l.b16 %v5560
        %v5642 = vunpack.c.l.b16 %v5561
        %v5643 = vunpack.c.l.b16 %v5562
        %v5644 = vunpack.c.l.b16 %v5563
        %v5645 = vunpack.c.l.b16 %v5564
        %v5646 = vunpack.c.l.b16 %v5565
        %v5647 = vunpack.c.l.b16 %v5566
        %v5648 = vunpack.c.l.b16 %v5567
        %v5649 = vunpack.c.l.b16 %v5568
        %v5650 = vunpack.c.l.b16 %v5569
        %v5651 = vunpack.c.l.b16 %v5570
        %v5652 = vunpack.c.l.b16 %v5571
        %v5653 = vunpack.c.l.b16 %v5572
        %v5654 = vunpack.c.l.b16 %v5573
        %v5655 = vunpack.c.l.b16 %v5574
        %v5656 = vunpack.c.l.b16 %v5575
        %v5657 = vunpack.c.l.b16 %v5576
        %v5658 = vunpack.c.l.b16 %v5577
        %v5659 = vunpack.c.l.b16 %v5578
        %v5660 = vunpack.c.l.b16 %v5579
        %v5661 = vunpack.c.l.b16 %v5580
        %v5662 = vunpack.c.l.b16 %v5581
        %v5663 = vunpack.c.l.b16 %v5582
        %v5664 = vunpack.c.l.b16 %v5583
        %v5665 = vunpack.c.l.b16 %v5584
        %v5666 = vunpack.c.l.b16 %v5585
        %v5667 = vunpack.c.l.b16 %v5586
        %v5668 = vunpack.c.l.b16 %v5587
        %v5669 = vpack.c.b16 %v5638, %v5637
        %v5670 = vpack.c.b16 %v5640, %v5639
        %v5671 = vpack.c.b16 %v5642, %v5641
        %v5672 = vpack.c.b16 %v5644, %v5643
        %v5673 = vpack.c.b16 %v5646, %v5645
        %v5674 = vpack.c.b16 %v5648, %v5647
        %v5675 = vpack.c.b16 %v5650, %v5649
        %v5676 = vpack.c.b16 %v5652, %v5651
        %v5677 = vpack.c.b16 %v5654, %v5653
        %v5678 = vpack.c.b16 %v5656, %v5655
        %v5679 = vpack.c.b16 %v5658, %v5657
        %v5680 = vpack.c.b16 %v5660, %v5659
        %v5681 = vpack.c.b16 %v5662, %v5661
        %v5682 = vpack.c.b16 %v5664, %v5663
        %v5683 = vpack.c.b16 %v5666, %v5665
        %v5684 = vpack.c.b16 %v5668, %v5667
        %v5717 = vunpack.c.l.b16 %v5589
        %v5718 = vunpack.c.l.b16 %v5590
        %v5719 = vunpack.c.l.b16 %v5591
        %v5720 = vunpack.c.l.b16 %v5592
        %v5721 = vunpack.c.l.b16 %v5593
        %v5722 = vunpack.c.l.b16 %v5594
        %v5723 = vunpack.c.l.b16 %v5595
        %v5724 = vunpack.c.l.b16 %v5596
        %v5725 = vunpack.c.l.b16 %v5597
        %v5726 = vunpack.c.l.b16 %v5598
        %v5727 = vunpack.c.l.b16 %v5599
        %v5728 = vunpack.c.l.b16 %v5600
        %v5729 = vunpack.c.l.b16 %v5601
        %v5730 = vunpack.c.l.b16 %v5602
        %v5731 = vunpack.c.l.b16 %v5603
        %v5732 = vunpack.c.l.b16 %v5604
        %v5733 = vpack.c.b16 %v5718, %v5717
        %v5734 = vpack.c.b16 %v5720, %v5719
        %v5735 = vpack.c.b16 %v5722, %v5721
        %v5736 = vpack.c.b16 %v5724, %v5723
        %v5737 = vpack.c.b16 %v5726, %v5725
        %v5738 = vpack.c.b16 %v5728, %v5727
        %v5739 = vpack.c.b16 %v5730, %v5729
        %v5740 = vpack.c.b16 %v5732, %v5731
        %5749 = vmatpush.bf16.msra.mxu0 %v5740
        %5750 = vmatpush.bf16.msra.mxu0 %v5739
        %5751 = vmatpush.bf16.msra.mxu0 %v5738
        %5752 = vmatpush.bf16.msra.mxu0 %v5737
        %5753 = vmatpush.bf16.msra.mxu0 %v5736
        %5754 = vmatpush.bf16.msra.mxu0 %v5735
        %5755 = vmatpush.bf16.msra.mxu0 %v5734
        %5756 = vmatpush.bf16.msra.mxu0 %v5733
        %5757 = vmatmul.bf16.gmra.mxu0 %v5669
        %v5758 = vpop.f32.mrf.mxu0
        %v5759 = vadd.f32 0.0, %v5758
        %v5760 = vpop.f32.mrf.mxu0
        %v5761 = vadd.f32 0.0, %v5760
        %5762 = vmatmul.bf16.gmra.mxu0 %v5670
        %v5763 = vpop.f32.mrf.mxu0
        %v5764 = vadd.f32 0.0, %v5763
        %v5765 = vpop.f32.mrf.mxu0
        %v5766 = vadd.f32 0.0, %v5765
        %5767 = vmatmul.bf16.gmra.mxu0 %v5671
        %v5768 = vpop.f32.mrf.mxu0
        %v5769 = vadd.f32 0.0, %v5768
        %v5770 = vpop.f32.mrf.mxu0
        %v5771 = vadd.f32 0.0, %v5770
        %5772 = vmatmul.bf16.gmra.mxu0 %v5672
        %v5773 = vpop.f32.mrf.mxu0
        %v5774 = vadd.f32 0.0, %v5773
        %v5775 = vpop.f32.mrf.mxu0
        %v5776 = vadd.f32 0.0, %v5775
        %5777 = vmatmul.bf16.gmra.mxu0 %v5673
        %v5778 = vpop.f32.mrf.mxu0
        %v5779 = vadd.f32 0.0, %v5778
        %v5780 = vpop.f32.mrf.mxu0
        %v5781 = vadd.f32 0.0, %v5780
        %5782 = vmatmul.bf16.gmra.mxu0 %v5674
        %v5783 = vpop.f32.mrf.mxu0
        %v5784 = vadd.f32 0.0, %v5783
        %v5785 = vpop.f32.mrf.mxu0
        %v5786 = vadd.f32 0.0, %v5785
        %5787 = vmatmul.bf16.gmra.mxu0 %v5675
        %v5788 = vpop.f32.mrf.mxu0
        %v5789 = vadd.f32 0.0, %v5788
        %v5790 = vpop.f32.mrf.mxu0
        %v5791 = vadd.f32 0.0, %v5790
        %5792 = vmatmul.bf16.gmra.mxu0 %v5676
        %v5793 = vpop.f32.mrf.mxu0
        %v5794 = vadd.f32 0.0, %v5793
        %v5795 = vpop.f32.mrf.mxu0
        %v5796 = vadd.f32 0.0, %v5795
        %5797 = vmatmul.bf16.gmra.mxu0 %v5677
        %v5798 = vpop.f32.mrf.mxu0
        %v5799 = vadd.f32 0.0, %v5798
        %v5800 = vpop.f32.mrf.mxu0
        %v5801 = vadd.f32 0.0, %v5800
        %5802 = vmatmul.bf16.gmra.mxu0 %v5678
        %v5803 = vpop.f32.mrf.mxu0
        %v5804 = vadd.f32 0.0, %v5803
        %v5805 = vpop.f32.mrf.mxu0
        %v5806 = vadd.f32 0.0, %v5805
        %5807 = vmatmul.bf16.gmra.mxu0 %v5679
        %v5808 = vpop.f32.mrf.mxu0
        %v5809 = vadd.f32 0.0, %v5808
        %v5810 = vpop.f32.mrf.mxu0
        %v5811 = vadd.f32 0.0, %v5810
        %5812 = vmatmul.bf16.gmra.mxu0 %v5680
        %v5813 = vpop.f32.mrf.mxu0
        %v5814 = vadd.f32 0.0, %v5813
        %v5815 = vpop.f32.mrf.mxu0
        %v5816 = vadd.f32 0.0, %v5815
        %5817 = vmatmul.bf16.gmra.mxu0 %v5681
        %v5818 = vpop.f32.mrf.mxu0
        %v5819 = vadd.f32 0.0, %v5818
        %v5820 = vpop.f32.mrf.mxu0
        %v5821 = vadd.f32 0.0, %v5820
        %5822 = vmatmul.bf16.gmra.mxu0 %v5682
        %v5823 = vpop.f32.mrf.mxu0
        %v5824 = vadd.f32 0.0, %v5823
        %v5825 = vpop.f32.mrf.mxu0
        %v5826 = vadd.f32 0.0, %v5825
        %5827 = vmatmul.bf16.gmra.mxu0 %v5683
        %v5828 = vpop.f32.mrf.mxu0
        %v5829 = vadd.f32 0.0, %v5828
        %v5830 = vpop.f32.mrf.mxu0
        %v5831 = vadd.f32 0.0, %v5830
        %5832 = vmatmul.bf16.gmra.mxu0 %v5684
        %v5833 = vpop.f32.mrf.mxu0
        %v5834 = vadd.f32 0.0, %v5833
        %v5835 = vpop.f32.mrf.mxu0
        %v5836 = vadd.f32 0.0, %v5835
        %5837 = vdwg.mxu0
        %v5838 = vadd.f32 %v5492, %v5759
        %v5839 = vadd.f32 %v5493, %v5761
        %v5840 = vadd.f32 %v5494, %v5764
        %v5841 = vadd.f32 %v5495, %v5766
        %v5842 = vadd.f32 %v5496, %v5769
        %v5843 = vadd.f32 %v5497, %v5771
        %v5844 = vadd.f32 %v5498, %v5774
        %v5845 = vadd.f32 %v5499, %v5776
        %v5846 = vadd.f32 %v5500, %v5779
        %v5847 = vadd.f32 %v5501, %v5781
        %v5848 = vadd.f32 %v5502, %v5784
        %v5849 = vadd.f32 %v5503, %v5786
        %v5850 = vadd.f32 %v5504, %v5789
        %v5851 = vadd.f32 %v5505, %v5791
        %v5852 = vadd.f32 %v5506, %v5794
        %v5853 = vadd.f32 %v5507, %v5796
        %v5854 = vadd.f32 %v5508, %v5799
        %v5855 = vadd.f32 %v5509, %v5801
        %v5856 = vadd.f32 %v5510, %v5804
        %v5857 = vadd.f32 %v5511, %v5806
        %v5858 = vadd.f32 %v5512, %v5809
        %v5859 = vadd.f32 %v5513, %v5811
        %v5860 = vadd.f32 %v5514, %v5814
        %v5861 = vadd.f32 %v5515, %v5816
        %v5862 = vadd.f32 %v5516, %v5819
        %v5863 = vadd.f32 %v5517, %v5821
        %v5864 = vadd.f32 %v5518, %v5824
        %v5865 = vadd.f32 %v5519, %v5826
        %v5866 = vadd.f32 %v5520, %v5829
        %v5867 = vadd.f32 %v5521, %v5831
        %v5868 = vadd.f32 %v5522, %v5834
        %v5869 = vadd.f32 %v5523, %v5836
        %v5870 = vld [vmem:[%s2688 + $0x7] sm:$0xff]
        %v5871 = vld [vmem:[%s2688 + $0xf] sm:$0xff]
        %v5872 = vld [vmem:[%s2688 + $0x27] sm:$0xff]
        %v5873 = vld [vmem:[%s2688 + $0x2f] sm:$0xff]
        %v5874 = vld [vmem:[%s2688 + $0x47] sm:$0xff]
        %v5875 = vld [vmem:[%s2688 + $0x4f] sm:$0xff]
        %v5876 = vld [vmem:[%s2688 + $0x67] sm:$0xff]
        %v5877 = vld [vmem:[%s2688 + $0x6f] sm:$0xff]
        %v5878 = vld [vmem:[%s2688 + $0x87] sm:$0xff]
        %v5879 = vld [vmem:[%s2688 + $0x8f] sm:$0xff]
        %v5880 = vld [vmem:[%s2688 + $0xa7] sm:$0xff]
        %v5881 = vld [vmem:[%s2688 + $0xaf] sm:$0xff]
        %v5882 = vld [vmem:[%s2688 + $0xc7] sm:$0xff]
        %v5883 = vld [vmem:[%s2688 + $0xcf] sm:$0xff]
        %v5884 = vld [vmem:[%s2688 + $0xe7] sm:$0xff]
        %v5885 = vld [vmem:[%s2688 + $0xef] sm:$0xff]
        %v5886 = vld [vmem:[%s2688 + $0x107] sm:$0xff]
        %v5887 = vld [vmem:[%s2688 + $0x10f] sm:$0xff]
        %v5888 = vld [vmem:[%s2688 + $0x127] sm:$0xff]
        %v5889 = vld [vmem:[%s2688 + $0x12f] sm:$0xff]
        %v5890 = vld [vmem:[%s2688 + $0x147] sm:$0xff]
        %v5891 = vld [vmem:[%s2688 + $0x14f] sm:$0xff]
        %v5892 = vld [vmem:[%s2688 + $0x167] sm:$0xff]
        %v5893 = vld [vmem:[%s2688 + $0x16f] sm:$0xff]
        %v5894 = vld [vmem:[%s2688 + $0x187] sm:$0xff]
        %v5895 = vld [vmem:[%s2688 + $0x18f] sm:$0xff]
        %v5896 = vld [vmem:[%s2688 + $0x1a7] sm:$0xff]
        %v5897 = vld [vmem:[%s2688 + $0x1af] sm:$0xff]
        %v5898 = vld [vmem:[%s2688 + $0x1c7] sm:$0xff]
        %v5899 = vld [vmem:[%s2688 + $0x1cf] sm:$0xff]
        %v5900 = vld [vmem:[%s2688 + $0x1e7] sm:$0xff]
        %v5901 = vld [vmem:[%s2688 + $0x1ef] sm:$0xff]
        %v5902 = vpack.c.bf16 %v5870, %v5870
        %v5903 = vpack.c.bf16 %v5871, %v5871
        %v5904 = vpack.c.bf16 %v5872, %v5872
        %v5905 = vpack.c.bf16 %v5873, %v5873
        %v5906 = vpack.c.bf16 %v5874, %v5874
        %v5907 = vpack.c.bf16 %v5875, %v5875
        %v5908 = vpack.c.bf16 %v5876, %v5876
        %v5909 = vpack.c.bf16 %v5877, %v5877
        %v5910 = vpack.c.bf16 %v5878, %v5878
        %v5911 = vpack.c.bf16 %v5879, %v5879
        %v5912 = vpack.c.bf16 %v5880, %v5880
        %v5913 = vpack.c.bf16 %v5881, %v5881
        %v5914 = vpack.c.bf16 %v5882, %v5882
        %v5915 = vpack.c.bf16 %v5883, %v5883
        %v5916 = vpack.c.bf16 %v5884, %v5884
        %v5917 = vpack.c.bf16 %v5885, %v5885
        %v5918 = vpack.c.bf16 %v5886, %v5886
        %v5919 = vpack.c.bf16 %v5887, %v5887
        %v5920 = vpack.c.bf16 %v5888, %v5888
        %v5921 = vpack.c.bf16 %v5889, %v5889
        %v5922 = vpack.c.bf16 %v5890, %v5890
        %v5923 = vpack.c.bf16 %v5891, %v5891
        %v5924 = vpack.c.bf16 %v5892, %v5892
        %v5925 = vpack.c.bf16 %v5893, %v5893
        %v5926 = vpack.c.bf16 %v5894, %v5894
        %v5927 = vpack.c.bf16 %v5895, %v5895
        %v5928 = vpack.c.bf16 %v5896, %v5896
        %v5929 = vpack.c.bf16 %v5897, %v5897
        %v5930 = vpack.c.bf16 %v5898, %v5898
        %v5931 = vpack.c.bf16 %v5899, %v5899
        %v5932 = vpack.c.bf16 %v5900, %v5900
        %v5933 = vpack.c.bf16 %v5901, %v5901
        %s5934 = scalar_lea.vmem [#allocation9], 384
        %v5935 = vld [vmem:[%s5934] sm:$0xf]
        %v5936 = vld [vmem:[%s5934 + $0x4] sm:$0xf]
        %v5937 = vld [vmem:[%s5934 + $0x8] sm:$0xf]
        %v5938 = vld [vmem:[%s5934 + $0xc] sm:$0xf]
        %v5939 = vld [vmem:[%s5934 + $0x10] sm:$0xf]
        %v5940 = vld [vmem:[%s5934 + $0x14] sm:$0xf]
        %v5941 = vld [vmem:[%s5934 + $0x18] sm:$0xf]
        %v5942 = vld [vmem:[%s5934 + $0x1c] sm:$0xf]
        %v5943 = vld [vmem:[%s5934 + $0x20] sm:$0xf]
        %v5944 = vld [vmem:[%s5934 + $0x24] sm:$0xf]
        %v5945 = vld [vmem:[%s5934 + $0x28] sm:$0xf]
        %v5946 = vld [vmem:[%s5934 + $0x2c] sm:$0xf]
        %v5947 = vld [vmem:[%s5934 + $0x30] sm:$0xf]
        %v5948 = vld [vmem:[%s5934 + $0x34] sm:$0xf]
        %v5949 = vld [vmem:[%s5934 + $0x38] sm:$0xf]
        %v5950 = vld [vmem:[%s5934 + $0x3c] sm:$0xf]
        %v5983 = vunpack.c.l.b16 %v5902
        %v5984 = vunpack.c.l.b16 %v5903
        %v5985 = vunpack.c.l.b16 %v5904
        %v5986 = vunpack.c.l.b16 %v5905
        %v5987 = vunpack.c.l.b16 %v5906
        %v5988 = vunpack.c.l.b16 %v5907
        %v5989 = vunpack.c.l.b16 %v5908
        %v5990 = vunpack.c.l.b16 %v5909
        %v5991 = vunpack.c.l.b16 %v5910
        %v5992 = vunpack.c.l.b16 %v5911
        %v5993 = vunpack.c.l.b16 %v5912
        %v5994 = vunpack.c.l.b16 %v5913
        %v5995 = vunpack.c.l.b16 %v5914
        %v5996 = vunpack.c.l.b16 %v5915
        %v5997 = vunpack.c.l.b16 %v5916
        %v5998 = vunpack.c.l.b16 %v5917
        %v5999 = vunpack.c.l.b16 %v5918
        %v6000 = vunpack.c.l.b16 %v5919
        %v6001 = vunpack.c.l.b16 %v5920
        %v6002 = vunpack.c.l.b16 %v5921
        %v6003 = vunpack.c.l.b16 %v5922
        %v6004 = vunpack.c.l.b16 %v5923
        %v6005 = vunpack.c.l.b16 %v5924
        %v6006 = vunpack.c.l.b16 %v5925
        %v6007 = vunpack.c.l.b16 %v5926
        %v6008 = vunpack.c.l.b16 %v5927
        %v6009 = vunpack.c.l.b16 %v5928
        %v6010 = vunpack.c.l.b16 %v5929
        %v6011 = vunpack.c.l.b16 %v5930
        %v6012 = vunpack.c.l.b16 %v5931
        %v6013 = vunpack.c.l.b16 %v5932
        %v6014 = vunpack.c.l.b16 %v5933
        %v6015 = vpack.c.b16 %v5984, %v5983
        %v6016 = vpack.c.b16 %v5986, %v5985
        %v6017 = vpack.c.b16 %v5988, %v5987
        %v6018 = vpack.c.b16 %v5990, %v5989
        %v6019 = vpack.c.b16 %v5992, %v5991
        %v6020 = vpack.c.b16 %v5994, %v5993
        %v6021 = vpack.c.b16 %v5996, %v5995
        %v6022 = vpack.c.b16 %v5998, %v5997
        %v6023 = vpack.c.b16 %v6000, %v5999
        %v6024 = vpack.c.b16 %v6002, %v6001
        %v6025 = vpack.c.b16 %v6004, %v6003
        %v6026 = vpack.c.b16 %v6006, %v6005
        %v6027 = vpack.c.b16 %v6008, %v6007
        %v6028 = vpack.c.b16 %v6010, %v6009
        %v6029 = vpack.c.b16 %v6012, %v6011
        %v6030 = vpack.c.b16 %v6014, %v6013
        %v6063 = vunpack.c.l.b16 %v5935
        %v6064 = vunpack.c.l.b16 %v5936
        %v6065 = vunpack.c.l.b16 %v5937
        %v6066 = vunpack.c.l.b16 %v5938
        %v6067 = vunpack.c.l.b16 %v5939
        %v6068 = vunpack.c.l.b16 %v5940
        %v6069 = vunpack.c.l.b16 %v5941
        %v6070 = vunpack.c.l.b16 %v5942
        %v6071 = vunpack.c.l.b16 %v5943
        %v6072 = vunpack.c.l.b16 %v5944
        %v6073 = vunpack.c.l.b16 %v5945
        %v6074 = vunpack.c.l.b16 %v5946
        %v6075 = vunpack.c.l.b16 %v5947
        %v6076 = vunpack.c.l.b16 %v5948
        %v6077 = vunpack.c.l.b16 %v5949
        %v6078 = vunpack.c.l.b16 %v5950
        %v6079 = vpack.c.b16 %v6064, %v6063
        %v6080 = vpack.c.b16 %v6066, %v6065
        %v6081 = vpack.c.b16 %v6068, %v6067
        %v6082 = vpack.c.b16 %v6070, %v6069
        %v6083 = vpack.c.b16 %v6072, %v6071
        %v6084 = vpack.c.b16 %v6074, %v6073
        %v6085 = vpack.c.b16 %v6076, %v6075
        %v6086 = vpack.c.b16 %v6078, %v6077
        %6095 = vmatpush.bf16.msra.mxu0 %v6086
        %6096 = vmatpush.bf16.msra.mxu0 %v6085
        %6097 = vmatpush.bf16.msra.mxu0 %v6084
        %6098 = vmatpush.bf16.msra.mxu0 %v6083
        %6099 = vmatpush.bf16.msra.mxu0 %v6082
        %6100 = vmatpush.bf16.msra.mxu0 %v6081
        %6101 = vmatpush.bf16.msra.mxu0 %v6080
        %6102 = vmatpush.bf16.msra.mxu0 %v6079
        %6103 = vmatmul.bf16.gmra.mxu0 %v6015
        %v6104 = vpop.f32.mrf.mxu0
        %v6105 = vadd.f32 0.0, %v6104
        %v6106 = vpop.f32.mrf.mxu0
        %v6107 = vadd.f32 0.0, %v6106
        %6108 = vmatmul.bf16.gmra.mxu0 %v6016
        %v6109 = vpop.f32.mrf.mxu0
        %v6110 = vadd.f32 0.0, %v6109
        %v6111 = vpop.f32.mrf.mxu0
        %v6112 = vadd.f32 0.0, %v6111
        %6113 = vmatmul.bf16.gmra.mxu0 %v6017
        %v6114 = vpop.f32.mrf.mxu0
        %v6115 = vadd.f32 0.0, %v6114
        %v6116 = vpop.f32.mrf.mxu0
        %v6117 = vadd.f32 0.0, %v6116
        %6118 = vmatmul.bf16.gmra.mxu0 %v6018
        %v6119 = vpop.f32.mrf.mxu0
        %v6120 = vadd.f32 0.0, %v6119
        %v6121 = vpop.f32.mrf.mxu0
        %v6122 = vadd.f32 0.0, %v6121
        %6123 = vmatmul.bf16.gmra.mxu0 %v6019
        %v6124 = vpop.f32.mrf.mxu0
        %v6125 = vadd.f32 0.0, %v6124
        %v6126 = vpop.f32.mrf.mxu0
        %v6127 = vadd.f32 0.0, %v6126
        %6128 = vmatmul.bf16.gmra.mxu0 %v6020
        %v6129 = vpop.f32.mrf.mxu0
        %v6130 = vadd.f32 0.0, %v6129
        %v6131 = vpop.f32.mrf.mxu0
        %v6132 = vadd.f32 0.0, %v6131
        %6133 = vmatmul.bf16.gmra.mxu0 %v6021
        %v6134 = vpop.f32.mrf.mxu0
        %v6135 = vadd.f32 0.0, %v6134
        %v6136 = vpop.f32.mrf.mxu0
        %v6137 = vadd.f32 0.0, %v6136
        %6138 = vmatmul.bf16.gmra.mxu0 %v6022
        %v6139 = vpop.f32.mrf.mxu0
        %v6140 = vadd.f32 0.0, %v6139
        %v6141 = vpop.f32.mrf.mxu0
        %v6142 = vadd.f32 0.0, %v6141
        %6143 = vmatmul.bf16.gmra.mxu0 %v6023
        %v6144 = vpop.f32.mrf.mxu0
        %v6145 = vadd.f32 0.0, %v6144
        %v6146 = vpop.f32.mrf.mxu0
        %v6147 = vadd.f32 0.0, %v6146
        %6148 = vmatmul.bf16.gmra.mxu0 %v6024
        %v6149 = vpop.f32.mrf.mxu0
        %v6150 = vadd.f32 0.0, %v6149
        %v6151 = vpop.f32.mrf.mxu0
        %v6152 = vadd.f32 0.0, %v6151
        %6153 = vmatmul.bf16.gmra.mxu0 %v6025
        %v6154 = vpop.f32.mrf.mxu0
        %v6155 = vadd.f32 0.0, %v6154
        %v6156 = vpop.f32.mrf.mxu0
        %v6157 = vadd.f32 0.0, %v6156
        %6158 = vmatmul.bf16.gmra.mxu0 %v6026
        %v6159 = vpop.f32.mrf.mxu0
        %v6160 = vadd.f32 0.0, %v6159
        %v6161 = vpop.f32.mrf.mxu0
        %v6162 = vadd.f32 0.0, %v6161
        %6163 = vmatmul.bf16.gmra.mxu0 %v6027
        %v6164 = vpop.f32.mrf.mxu0
        %v6165 = vadd.f32 0.0, %v6164
        %v6166 = vpop.f32.mrf.mxu0
        %v6167 = vadd.f32 0.0, %v6166
        %6168 = vmatmul.bf16.gmra.mxu0 %v6028
        %v6169 = vpop.f32.mrf.mxu0
        %v6170 = vadd.f32 0.0, %v6169
        %v6171 = vpop.f32.mrf.mxu0
        %v6172 = vadd.f32 0.0, %v6171
        %6173 = vmatmul.bf16.gmra.mxu0 %v6029
        %v6174 = vpop.f32.mrf.mxu0
        %v6175 = vadd.f32 0.0, %v6174
        %v6176 = vpop.f32.mrf.mxu0
        %v6177 = vadd.f32 0.0, %v6176
        %6178 = vmatmul.bf16.gmra.mxu0 %v6030
        %v6179 = vpop.f32.mrf.mxu0
        %v6180 = vadd.f32 0.0, %v6179
        %v6181 = vpop.f32.mrf.mxu0
        %v6182 = vadd.f32 0.0, %v6181
        %6183 = vdwg.mxu0
        %v6184 = vadd.f32 %v5838, %v6105
        %v6185 = vadd.f32 %v5839, %v6107
        %v6186 = vadd.f32 %v5840, %v6110
        %v6187 = vadd.f32 %v5841, %v6112
        %v6188 = vadd.f32 %v5842, %v6115
        %v6189 = vadd.f32 %v5843, %v6117
        %v6190 = vadd.f32 %v5844, %v6120
        %v6191 = vadd.f32 %v5845, %v6122
        %v6192 = vadd.f32 %v5846, %v6125
        %v6193 = vadd.f32 %v5847, %v6127
        %v6194 = vadd.f32 %v5848, %v6130
        %v6195 = vadd.f32 %v5849, %v6132
        %v6196 = vadd.f32 %v5850, %v6135
        %v6197 = vadd.f32 %v5851, %v6137
        %v6198 = vadd.f32 %v5852, %v6140
        %v6199 = vadd.f32 %v5853, %v6142
        %v6200 = vadd.f32 %v5854, %v6145
        %v6201 = vadd.f32 %v5855, %v6147
        %v6202 = vadd.f32 %v5856, %v6150
        %v6203 = vadd.f32 %v5857, %v6152
        %v6204 = vadd.f32 %v5858, %v6155
        %v6205 = vadd.f32 %v5859, %v6157
        %v6206 = vadd.f32 %v5860, %v6160
        %v6207 = vadd.f32 %v5861, %v6162
        %v6208 = vadd.f32 %v5862, %v6165
        %v6209 = vadd.f32 %v5863, %v6167
        %v6210 = vadd.f32 %v5864, %v6170
        %v6211 = vadd.f32 %v5865, %v6172
        %v6212 = vadd.f32 %v5866, %v6175
        %v6213 = vadd.f32 %v5867, %v6177
        %v6214 = vadd.f32 %v5868, %v6180
        %v6215 = vadd.f32 %v5869, %v6182
        %v6216 = vld [vmem:[%s2688 + $0x8] sm:$0xff]
        %v6217 = vld [vmem:[%s2688 + $0x10] sm:$0xff]
        %v6218 = vld [vmem:[%s2688 + $0x28] sm:$0xff]
        %v6219 = vld [vmem:[%s2688 + $0x30] sm:$0xff]
        %v6220 = vld [vmem:[%s2688 + $0x48] sm:$0xff]
        %v6221 = vld [vmem:[%s2688 + $0x50] sm:$0xff]
        %v6222 = vld [vmem:[%s2688 + $0x68] sm:$0xff]
        %v6223 = vld [vmem:[%s2688 + $0x70] sm:$0xff]
        %v6224 = vld [vmem:[%s2688 + $0x88] sm:$0xff]
        %v6225 = vld [vmem:[%s2688 + $0x90] sm:$0xff]
        %v6226 = vld [vmem:[%s2688 + $0xa8] sm:$0xff]
        %v6227 = vld [vmem:[%s2688 + $0xb0] sm:$0xff]
        %v6228 = vld [vmem:[%s2688 + $0xc8] sm:$0xff]
        %v6229 = vld [vmem:[%s2688 + $0xd0] sm:$0xff]
        %v6230 = vld [vmem:[%s2688 + $0xe8] sm:$0xff]
        %v6231 = vld [vmem:[%s2688 + $0xf0] sm:$0xff]
        %v6232 = vld [vmem:[%s2688 + $0x108] sm:$0xff]
        %v6233 = vld [vmem:[%s2688 + $0x110] sm:$0xff]
        %v6234 = vld [vmem:[%s2688 + $0x128] sm:$0xff]
        %v6235 = vld [vmem:[%s2688 + $0x130] sm:$0xff]
        %v6236 = vld [vmem:[%s2688 + $0x148] sm:$0xff]
        %v6237 = vld [vmem:[%s2688 + $0x150] sm:$0xff]
        %v6238 = vld [vmem:[%s2688 + $0x168] sm:$0xff]
        %v6239 = vld [vmem:[%s2688 + $0x170] sm:$0xff]
        %v6240 = vld [vmem:[%s2688 + $0x188] sm:$0xff]
        %v6241 = vld [vmem:[%s2688 + $0x190] sm:$0xff]
        %v6242 = vld [vmem:[%s2688 + $0x1a8] sm:$0xff]
        %v6243 = vld [vmem:[%s2688 + $0x1b0] sm:$0xff]
        %v6244 = vld [vmem:[%s2688 + $0x1c8] sm:$0xff]
        %v6245 = vld [vmem:[%s2688 + $0x1d0] sm:$0xff]
        %v6246 = vld [vmem:[%s2688 + $0x1e8] sm:$0xff]
        %v6247 = vld [vmem:[%s2688 + $0x1f0] sm:$0xff]
        %v6248 = vpack.c.bf16 %v6216, %v6216
        %v6249 = vpack.c.bf16 %v6217, %v6217
        %v6250 = vpack.c.bf16 %v6218, %v6218
        %v6251 = vpack.c.bf16 %v6219, %v6219
        %v6252 = vpack.c.bf16 %v6220, %v6220
        %v6253 = vpack.c.bf16 %v6221, %v6221
        %v6254 = vpack.c.bf16 %v6222, %v6222
        %v6255 = vpack.c.bf16 %v6223, %v6223
        %v6256 = vpack.c.bf16 %v6224, %v6224
        %v6257 = vpack.c.bf16 %v6225, %v6225
        %v6258 = vpack.c.bf16 %v6226, %v6226
        %v6259 = vpack.c.bf16 %v6227, %v6227
        %v6260 = vpack.c.bf16 %v6228, %v6228
        %v6261 = vpack.c.bf16 %v6229, %v6229
        %v6262 = vpack.c.bf16 %v6230, %v6230
        %v6263 = vpack.c.bf16 %v6231, %v6231
        %v6264 = vpack.c.bf16 %v6232, %v6232
        %v6265 = vpack.c.bf16 %v6233, %v6233
        %v6266 = vpack.c.bf16 %v6234, %v6234
        %v6267 = vpack.c.bf16 %v6235, %v6235
        %v6268 = vpack.c.bf16 %v6236, %v6236
        %v6269 = vpack.c.bf16 %v6237, %v6237
        %v6270 = vpack.c.bf16 %v6238, %v6238
        %v6271 = vpack.c.bf16 %v6239, %v6239
        %v6272 = vpack.c.bf16 %v6240, %v6240
        %v6273 = vpack.c.bf16 %v6241, %v6241
        %v6274 = vpack.c.bf16 %v6242, %v6242
        %v6275 = vpack.c.bf16 %v6243, %v6243
        %v6276 = vpack.c.bf16 %v6244, %v6244
        %v6277 = vpack.c.bf16 %v6245, %v6245
        %v6278 = vpack.c.bf16 %v6246, %v6246
        %v6279 = vpack.c.bf16 %v6247, %v6247
        %s6280 = scalar_lea.vmem [#allocation9], 448
        %v6281 = vld [vmem:[%s6280] sm:$0xf]
        %v6282 = vld [vmem:[%s6280 + $0x4] sm:$0xf]
        %v6283 = vld [vmem:[%s6280 + $0x8] sm:$0xf]
        %v6284 = vld [vmem:[%s6280 + $0xc] sm:$0xf]
        %v6285 = vld [vmem:[%s6280 + $0x10] sm:$0xf]
        %v6286 = vld [vmem:[%s6280 + $0x14] sm:$0xf]
        %v6287 = vld [vmem:[%s6280 + $0x18] sm:$0xf]
        %v6288 = vld [vmem:[%s6280 + $0x1c] sm:$0xf]
        %v6289 = vld [vmem:[%s6280 + $0x20] sm:$0xf]
        %v6290 = vld [vmem:[%s6280 + $0x24] sm:$0xf]
        %v6291 = vld [vmem:[%s6280 + $0x28] sm:$0xf]
        %v6292 = vld [vmem:[%s6280 + $0x2c] sm:$0xf]
        %v6293 = vld [vmem:[%s6280 + $0x30] sm:$0xf]
        %v6294 = vld [vmem:[%s6280 + $0x34] sm:$0xf]
        %v6295 = vld [vmem:[%s6280 + $0x38] sm:$0xf]
        %v6296 = vld [vmem:[%s6280 + $0x3c] sm:$0xf]
        %v6329 = vunpack.c.l.b16 %v6248
        %v6330 = vunpack.c.l.b16 %v6249
        %v6331 = vunpack.c.l.b16 %v6250
        %v6332 = vunpack.c.l.b16 %v6251
        %v6333 = vunpack.c.l.b16 %v6252
        %v6334 = vunpack.c.l.b16 %v6253
        %v6335 = vunpack.c.l.b16 %v6254
        %v6336 = vunpack.c.l.b16 %v6255
        %v6337 = vunpack.c.l.b16 %v6256
        %v6338 = vunpack.c.l.b16 %v6257
        %v6339 = vunpack.c.l.b16 %v6258
        %v6340 = vunpack.c.l.b16 %v6259
        %v6341 = vunpack.c.l.b16 %v6260
        %v6342 = vunpack.c.l.b16 %v6261
        %v6343 = vunpack.c.l.b16 %v6262
        %v6344 = vunpack.c.l.b16 %v6263
        %v6345 = vunpack.c.l.b16 %v6264
        %v6346 = vunpack.c.l.b16 %v6265
        %v6347 = vunpack.c.l.b16 %v6266
        %v6348 = vunpack.c.l.b16 %v6267
        %v6349 = vunpack.c.l.b16 %v6268
        %v6350 = vunpack.c.l.b16 %v6269
        %v6351 = vunpack.c.l.b16 %v6270
        %v6352 = vunpack.c.l.b16 %v6271
        %v6353 = vunpack.c.l.b16 %v6272
        %v6354 = vunpack.c.l.b16 %v6273
        %v6355 = vunpack.c.l.b16 %v6274
        %v6356 = vunpack.c.l.b16 %v6275
        %v6357 = vunpack.c.l.b16 %v6276
        %v6358 = vunpack.c.l.b16 %v6277
        %v6359 = vunpack.c.l.b16 %v6278
        %v6360 = vunpack.c.l.b16 %v6279
        %v6361 = vpack.c.b16 %v6330, %v6329
        %v6362 = vpack.c.b16 %v6332, %v6331
        %v6363 = vpack.c.b16 %v6334, %v6333
        %v6364 = vpack.c.b16 %v6336, %v6335
        %v6365 = vpack.c.b16 %v6338, %v6337
        %v6366 = vpack.c.b16 %v6340, %v6339
        %v6367 = vpack.c.b16 %v6342, %v6341
        %v6368 = vpack.c.b16 %v6344, %v6343
        %v6369 = vpack.c.b16 %v6346, %v6345
        %v6370 = vpack.c.b16 %v6348, %v6347
        %v6371 = vpack.c.b16 %v6350, %v6349
        %v6372 = vpack.c.b16 %v6352, %v6351
        %v6373 = vpack.c.b16 %v6354, %v6353
        %v6374 = vpack.c.b16 %v6356, %v6355
        %v6375 = vpack.c.b16 %v6358, %v6357
        %v6376 = vpack.c.b16 %v6360, %v6359
        %v6409 = vunpack.c.l.b16 %v6281
        %v6410 = vunpack.c.l.b16 %v6282
        %v6411 = vunpack.c.l.b16 %v6283
        %v6412 = vunpack.c.l.b16 %v6284
        %v6413 = vunpack.c.l.b16 %v6285
        %v6414 = vunpack.c.l.b16 %v6286
        %v6415 = vunpack.c.l.b16 %v6287
        %v6416 = vunpack.c.l.b16 %v6288
        %v6417 = vunpack.c.l.b16 %v6289
        %v6418 = vunpack.c.l.b16 %v6290
        %v6419 = vunpack.c.l.b16 %v6291
        %v6420 = vunpack.c.l.b16 %v6292
        %v6421 = vunpack.c.l.b16 %v6293
        %v6422 = vunpack.c.l.b16 %v6294
        %v6423 = vunpack.c.l.b16 %v6295
        %v6424 = vunpack.c.l.b16 %v6296
        %v6425 = vpack.c.b16 %v6410, %v6409
        %v6426 = vpack.c.b16 %v6412, %v6411
        %v6427 = vpack.c.b16 %v6414, %v6413
        %v6428 = vpack.c.b16 %v6416, %v6415
        %v6429 = vpack.c.b16 %v6418, %v6417
        %v6430 = vpack.c.b16 %v6420, %v6419
        %v6431 = vpack.c.b16 %v6422, %v6421
        %v6432 = vpack.c.b16 %v6424, %v6423
        %6441 = vmatpush.bf16.msra.mxu0 %v6432
        %6442 = vmatpush.bf16.msra.mxu0 %v6431
        %6443 = vmatpush.bf16.msra.mxu0 %v6430
        %6444 = vmatpush.bf16.msra.mxu0 %v6429
        %6445 = vmatpush.bf16.msra.mxu0 %v6428
        %6446 = vmatpush.bf16.msra.mxu0 %v6427
        %6447 = vmatpush.bf16.msra.mxu0 %v6426
        %6448 = vmatpush.bf16.msra.mxu0 %v6425
        %6449 = vmatmul.bf16.gmra.mxu0 %v6361
        %v6450 = vpop.f32.mrf.mxu0
        %v6451 = vadd.f32 0.0, %v6450
        %v6452 = vpop.f32.mrf.mxu0
        %v6453 = vadd.f32 0.0, %v6452
        %6454 = vmatmul.bf16.gmra.mxu0 %v6362
        %v6455 = vpop.f32.mrf.mxu0
        %v6456 = vadd.f32 0.0, %v6455
        %v6457 = vpop.f32.mrf.mxu0
        %v6458 = vadd.f32 0.0, %v6457
        %6459 = vmatmul.bf16.gmra.mxu0 %v6363
        %v6460 = vpop.f32.mrf.mxu0
        %v6461 = vadd.f32 0.0, %v6460
        %v6462 = vpop.f32.mrf.mxu0
        %v6463 = vadd.f32 0.0, %v6462
        %6464 = vmatmul.bf16.gmra.mxu0 %v6364
        %v6465 = vpop.f32.mrf.mxu0
        %v6466 = vadd.f32 0.0, %v6465
        %v6467 = vpop.f32.mrf.mxu0
        %v6468 = vadd.f32 0.0, %v6467
        %6469 = vmatmul.bf16.gmra.mxu0 %v6365
        %v6470 = vpop.f32.mrf.mxu0
        %v6471 = vadd.f32 0.0, %v6470
        %v6472 = vpop.f32.mrf.mxu0
        %v6473 = vadd.f32 0.0, %v6472
        %6474 = vmatmul.bf16.gmra.mxu0 %v6366
        %v6475 = vpop.f32.mrf.mxu0
        %v6476 = vadd.f32 0.0, %v6475
        %v6477 = vpop.f32.mrf.mxu0
        %v6478 = vadd.f32 0.0, %v6477
        %6479 = vmatmul.bf16.gmra.mxu0 %v6367
        %v6480 = vpop.f32.mrf.mxu0
        %v6481 = vadd.f32 0.0, %v6480
        %v6482 = vpop.f32.mrf.mxu0
        %v6483 = vadd.f32 0.0, %v6482
        %6484 = vmatmul.bf16.gmra.mxu0 %v6368
        %v6485 = vpop.f32.mrf.mxu0
        %v6486 = vadd.f32 0.0, %v6485
        %v6487 = vpop.f32.mrf.mxu0
        %v6488 = vadd.f32 0.0, %v6487
        %6489 = vmatmul.bf16.gmra.mxu0 %v6369
        %v6490 = vpop.f32.mrf.mxu0
        %v6491 = vadd.f32 0.0, %v6490
        %v6492 = vpop.f32.mrf.mxu0
        %v6493 = vadd.f32 0.0, %v6492
        %6494 = vmatmul.bf16.gmra.mxu0 %v6370
        %v6495 = vpop.f32.mrf.mxu0
        %v6496 = vadd.f32 0.0, %v6495
        %v6497 = vpop.f32.mrf.mxu0
        %v6498 = vadd.f32 0.0, %v6497
        %6499 = vmatmul.bf16.gmra.mxu0 %v6371
        %v6500 = vpop.f32.mrf.mxu0
        %v6501 = vadd.f32 0.0, %v6500
        %v6502 = vpop.f32.mrf.mxu0
        %v6503 = vadd.f32 0.0, %v6502
        %6504 = vmatmul.bf16.gmra.mxu0 %v6372
        %v6505 = vpop.f32.mrf.mxu0
        %v6506 = vadd.f32 0.0, %v6505
        %v6507 = vpop.f32.mrf.mxu0
        %v6508 = vadd.f32 0.0, %v6507
        %6509 = vmatmul.bf16.gmra.mxu0 %v6373
        %v6510 = vpop.f32.mrf.mxu0
        %v6511 = vadd.f32 0.0, %v6510
        %v6512 = vpop.f32.mrf.mxu0
        %v6513 = vadd.f32 0.0, %v6512
        %6514 = vmatmul.bf16.gmra.mxu0 %v6374
        %v6515 = vpop.f32.mrf.mxu0
        %v6516 = vadd.f32 0.0, %v6515
        %v6517 = vpop.f32.mrf.mxu0
        %v6518 = vadd.f32 0.0, %v6517
        %6519 = vmatmul.bf16.gmra.mxu0 %v6375
        %v6520 = vpop.f32.mrf.mxu0
        %v6521 = vadd.f32 0.0, %v6520
        %v6522 = vpop.f32.mrf.mxu0
        %v6523 = vadd.f32 0.0, %v6522
        %6524 = vmatmul.bf16.gmra.mxu0 %v6376
        %v6525 = vpop.f32.mrf.mxu0
        %v6526 = vadd.f32 0.0, %v6525
        %v6527 = vpop.f32.mrf.mxu0
        %v6528 = vadd.f32 0.0, %v6527
        %6529 = vdwg.mxu0
        %v6530 = vadd.f32 %v6184, %v6451
        %v6531 = vadd.f32 %v6185, %v6453
        %v6532 = vadd.f32 %v6186, %v6456
        %v6533 = vadd.f32 %v6187, %v6458
        %v6534 = vadd.f32 %v6188, %v6461
        %v6535 = vadd.f32 %v6189, %v6463
        %v6536 = vadd.f32 %v6190, %v6466
        %v6537 = vadd.f32 %v6191, %v6468
        %v6538 = vadd.f32 %v6192, %v6471
        %v6539 = vadd.f32 %v6193, %v6473
        %v6540 = vadd.f32 %v6194, %v6476
        %v6541 = vadd.f32 %v6195, %v6478
        %v6542 = vadd.f32 %v6196, %v6481
        %v6543 = vadd.f32 %v6197, %v6483
        %v6544 = vadd.f32 %v6198, %v6486
        %v6545 = vadd.f32 %v6199, %v6488
        %v6546 = vadd.f32 %v6200, %v6491
        %v6547 = vadd.f32 %v6201, %v6493
        %v6548 = vadd.f32 %v6202, %v6496
        %v6549 = vadd.f32 %v6203, %v6498
        %v6550 = vadd.f32 %v6204, %v6501
        %v6551 = vadd.f32 %v6205, %v6503
        %v6552 = vadd.f32 %v6206, %v6506
        %v6553 = vadd.f32 %v6207, %v6508
        %v6554 = vadd.f32 %v6208, %v6511
        %v6555 = vadd.f32 %v6209, %v6513
        %v6556 = vadd.f32 %v6210, %v6516
        %v6557 = vadd.f32 %v6211, %v6518
        %v6558 = vadd.f32 %v6212, %v6521
        %v6559 = vadd.f32 %v6213, %v6523
        %v6560 = vadd.f32 %v6214, %v6526
        %v6561 = vadd.f32 %v6215, %v6528
        %v6562 = vld [vmem:[%s2688 + $0x9] sm:$0xff]
        %v6563 = vld [vmem:[%s2688 + $0x11] sm:$0xff]
        %v6564 = vld [vmem:[%s2688 + $0x29] sm:$0xff]
        %v6565 = vld [vmem:[%s2688 + $0x31] sm:$0xff]
        %v6566 = vld [vmem:[%s2688 + $0x49] sm:$0xff]
        %v6567 = vld [vmem:[%s2688 + $0x51] sm:$0xff]
        %v6568 = vld [vmem:[%s2688 + $0x69] sm:$0xff]
        %v6569 = vld [vmem:[%s2688 + $0x71] sm:$0xff]
        %v6570 = vld [vmem:[%s2688 + $0x89] sm:$0xff]
        %v6571 = vld [vmem:[%s2688 + $0x91] sm:$0xff]
        %v6572 = vld [vmem:[%s2688 + $0xa9] sm:$0xff]
        %v6573 = vld [vmem:[%s2688 + $0xb1] sm:$0xff]
        %v6574 = vld [vmem:[%s2688 + $0xc9] sm:$0xff]
        %v6575 = vld [vmem:[%s2688 + $0xd1] sm:$0xff]
        %v6576 = vld [vmem:[%s2688 + $0xe9] sm:$0xff]
        %v6577 = vld [vmem:[%s2688 + $0xf1] sm:$0xff]
        %v6578 = vld [vmem:[%s2688 + $0x109] sm:$0xff]
        %v6579 = vld [vmem:[%s2688 + $0x111] sm:$0xff]
        %v6580 = vld [vmem:[%s2688 + $0x129] sm:$0xff]
        %v6581 = vld [vmem:[%s2688 + $0x131] sm:$0xff]
        %v6582 = vld [vmem:[%s2688 + $0x149] sm:$0xff]
        %v6583 = vld [vmem:[%s2688 + $0x151] sm:$0xff]
        %v6584 = vld [vmem:[%s2688 + $0x169] sm:$0xff]
        %v6585 = vld [vmem:[%s2688 + $0x171] sm:$0xff]
        %v6586 = vld [vmem:[%s2688 + $0x189] sm:$0xff]
        %v6587 = vld [vmem:[%s2688 + $0x191] sm:$0xff]
        %v6588 = vld [vmem:[%s2688 + $0x1a9] sm:$0xff]
        %v6589 = vld [vmem:[%s2688 + $0x1b1] sm:$0xff]
        %v6590 = vld [vmem:[%s2688 + $0x1c9] sm:$0xff]
        %v6591 = vld [vmem:[%s2688 + $0x1d1] sm:$0xff]
        %v6592 = vld [vmem:[%s2688 + $0x1e9] sm:$0xff]
        %v6593 = vld [vmem:[%s2688 + $0x1f1] sm:$0xff]
        %v6594 = vpack.c.bf16 %v6562, %v6562
        %v6595 = vpack.c.bf16 %v6563, %v6563
        %v6596 = vpack.c.bf16 %v6564, %v6564
        %v6597 = vpack.c.bf16 %v6565, %v6565
        %v6598 = vpack.c.bf16 %v6566, %v6566
        %v6599 = vpack.c.bf16 %v6567, %v6567
        %v6600 = vpack.c.bf16 %v6568, %v6568
        %v6601 = vpack.c.bf16 %v6569, %v6569
        %v6602 = vpack.c.bf16 %v6570, %v6570
        %v6603 = vpack.c.bf16 %v6571, %v6571
        %v6604 = vpack.c.bf16 %v6572, %v6572
        %v6605 = vpack.c.bf16 %v6573, %v6573
        %v6606 = vpack.c.bf16 %v6574, %v6574
        %v6607 = vpack.c.bf16 %v6575, %v6575
        %v6608 = vpack.c.bf16 %v6576, %v6576
        %v6609 = vpack.c.bf16 %v6577, %v6577
        %v6610 = vpack.c.bf16 %v6578, %v6578
        %v6611 = vpack.c.bf16 %v6579, %v6579
        %v6612 = vpack.c.bf16 %v6580, %v6580
        %v6613 = vpack.c.bf16 %v6581, %v6581
        %v6614 = vpack.c.bf16 %v6582, %v6582
        %v6615 = vpack.c.bf16 %v6583, %v6583
        %v6616 = vpack.c.bf16 %v6584, %v6584
        %v6617 = vpack.c.bf16 %v6585, %v6585
        %v6618 = vpack.c.bf16 %v6586, %v6586
        %v6619 = vpack.c.bf16 %v6587, %v6587
        %v6620 = vpack.c.bf16 %v6588, %v6588
        %v6621 = vpack.c.bf16 %v6589, %v6589
        %v6622 = vpack.c.bf16 %v6590, %v6590
        %v6623 = vpack.c.bf16 %v6591, %v6591
        %v6624 = vpack.c.bf16 %v6592, %v6592
        %v6625 = vpack.c.bf16 %v6593, %v6593
        %s6626 = scalar_lea.vmem [#allocation9], 512
        %v6627 = vld [vmem:[%s6626] sm:$0xf]
        %v6628 = vld [vmem:[%s6626 + $0x4] sm:$0xf]
        %v6629 = vld [vmem:[%s6626 + $0x8] sm:$0xf]
        %v6630 = vld [vmem:[%s6626 + $0xc] sm:$0xf]
        %v6631 = vld [vmem:[%s6626 + $0x10] sm:$0xf]
        %v6632 = vld [vmem:[%s6626 + $0x14] sm:$0xf]
        %v6633 = vld [vmem:[%s6626 + $0x18] sm:$0xf]
        %v6634 = vld [vmem:[%s6626 + $0x1c] sm:$0xf]
        %v6635 = vld [vmem:[%s6626 + $0x20] sm:$0xf]
        %v6636 = vld [vmem:[%s6626 + $0x24] sm:$0xf]
        %v6637 = vld [vmem:[%s6626 + $0x28] sm:$0xf]
        %v6638 = vld [vmem:[%s6626 + $0x2c] sm:$0xf]
        %v6639 = vld [vmem:[%s6626 + $0x30] sm:$0xf]
        %v6640 = vld [vmem:[%s6626 + $0x34] sm:$0xf]
        %v6641 = vld [vmem:[%s6626 + $0x38] sm:$0xf]
        %v6642 = vld [vmem:[%s6626 + $0x3c] sm:$0xf]
        %v6675 = vunpack.c.l.b16 %v6594
        %v6676 = vunpack.c.l.b16 %v6595
        %v6677 = vunpack.c.l.b16 %v6596
        %v6678 = vunpack.c.l.b16 %v6597
        %v6679 = vunpack.c.l.b16 %v6598
        %v6680 = vunpack.c.l.b16 %v6599
        %v6681 = vunpack.c.l.b16 %v6600
        %v6682 = vunpack.c.l.b16 %v6601
        %v6683 = vunpack.c.l.b16 %v6602
        %v6684 = vunpack.c.l.b16 %v6603
        %v6685 = vunpack.c.l.b16 %v6604
        %v6686 = vunpack.c.l.b16 %v6605
        %v6687 = vunpack.c.l.b16 %v6606
        %v6688 = vunpack.c.l.b16 %v6607
        %v6689 = vunpack.c.l.b16 %v6608
        %v6690 = vunpack.c.l.b16 %v6609
        %v6691 = vunpack.c.l.b16 %v6610
        %v6692 = vunpack.c.l.b16 %v6611
        %v6693 = vunpack.c.l.b16 %v6612
        %v6694 = vunpack.c.l.b16 %v6613
        %v6695 = vunpack.c.l.b16 %v6614
        %v6696 = vunpack.c.l.b16 %v6615
        %v6697 = vunpack.c.l.b16 %v6616
        %v6698 = vunpack.c.l.b16 %v6617
        %v6699 = vunpack.c.l.b16 %v6618
        %v6700 = vunpack.c.l.b16 %v6619
        %v6701 = vunpack.c.l.b16 %v6620
        %v6702 = vunpack.c.l.b16 %v6621
        %v6703 = vunpack.c.l.b16 %v6622
        %v6704 = vunpack.c.l.b16 %v6623
        %v6705 = vunpack.c.l.b16 %v6624
        %v6706 = vunpack.c.l.b16 %v6625
        %v6707 = vpack.c.b16 %v6676, %v6675
        %v6708 = vpack.c.b16 %v6678, %v6677
        %v6709 = vpack.c.b16 %v6680, %v6679
        %v6710 = vpack.c.b16 %v6682, %v6681
        %v6711 = vpack.c.b16 %v6684, %v6683
        %v6712 = vpack.c.b16 %v6686, %v6685
        %v6713 = vpack.c.b16 %v6688, %v6687
        %v6714 = vpack.c.b16 %v6690, %v6689
        %v6715 = vpack.c.b16 %v6692, %v6691
        %v6716 = vpack.c.b16 %v6694, %v6693
        %v6717 = vpack.c.b16 %v6696, %v6695
        %v6718 = vpack.c.b16 %v6698, %v6697
        %v6719 = vpack.c.b16 %v6700, %v6699
        %v6720 = vpack.c.b16 %v6702, %v6701
        %v6721 = vpack.c.b16 %v6704, %v6703
        %v6722 = vpack.c.b16 %v6706, %v6705
        %v6755 = vunpack.c.l.b16 %v6627
        %v6756 = vunpack.c.l.b16 %v6628
        %v6757 = vunpack.c.l.b16 %v6629
        %v6758 = vunpack.c.l.b16 %v6630
        %v6759 = vunpack.c.l.b16 %v6631
        %v6760 = vunpack.c.l.b16 %v6632
        %v6761 = vunpack.c.l.b16 %v6633
        %v6762 = vunpack.c.l.b16 %v6634
        %v6763 = vunpack.c.l.b16 %v6635
        %v6764 = vunpack.c.l.b16 %v6636
        %v6765 = vunpack.c.l.b16 %v6637
        %v6766 = vunpack.c.l.b16 %v6638
        %v6767 = vunpack.c.l.b16 %v6639
        %v6768 = vunpack.c.l.b16 %v6640
        %v6769 = vunpack.c.l.b16 %v6641
        %v6770 = vunpack.c.l.b16 %v6642
        %v6771 = vpack.c.b16 %v6756, %v6755
        %v6772 = vpack.c.b16 %v6758, %v6757
        %v6773 = vpack.c.b16 %v6760, %v6759
        %v6774 = vpack.c.b16 %v6762, %v6761
        %v6775 = vpack.c.b16 %v6764, %v6763
        %v6776 = vpack.c.b16 %v6766, %v6765
        %v6777 = vpack.c.b16 %v6768, %v6767
        %v6778 = vpack.c.b16 %v6770, %v6769
        %6787 = vmatpush.bf16.msra.mxu0 %v6778
        %6788 = vmatpush.bf16.msra.mxu0 %v6777
        %6789 = vmatpush.bf16.msra.mxu0 %v6776
        %6790 = vmatpush.bf16.msra.mxu0 %v6775
        %6791 = vmatpush.bf16.msra.mxu0 %v6774
        %6792 = vmatpush.bf16.msra.mxu0 %v6773
        %6793 = vmatpush.bf16.msra.mxu0 %v6772
        %6794 = vmatpush.bf16.msra.mxu0 %v6771
        %6795 = vmatmul.bf16.gmra.mxu0 %v6707
        %v6796 = vpop.f32.mrf.mxu0
        %v6797 = vadd.f32 0.0, %v6796
        %v6798 = vpop.f32.mrf.mxu0
        %v6799 = vadd.f32 0.0, %v6798
        %6800 = vmatmul.bf16.gmra.mxu0 %v6708
        %v6801 = vpop.f32.mrf.mxu0
        %v6802 = vadd.f32 0.0, %v6801
        %v6803 = vpop.f32.mrf.mxu0
        %v6804 = vadd.f32 0.0, %v6803
        %6805 = vmatmul.bf16.gmra.mxu0 %v6709
        %v6806 = vpop.f32.mrf.mxu0
        %v6807 = vadd.f32 0.0, %v6806
        %v6808 = vpop.f32.mrf.mxu0
        %v6809 = vadd.f32 0.0, %v6808
        %6810 = vmatmul.bf16.gmra.mxu0 %v6710
        %v6811 = vpop.f32.mrf.mxu0
        %v6812 = vadd.f32 0.0, %v6811
        %v6813 = vpop.f32.mrf.mxu0
        %v6814 = vadd.f32 0.0, %v6813
        %6815 = vmatmul.bf16.gmra.mxu0 %v6711
        %v6816 = vpop.f32.mrf.mxu0
        %v6817 = vadd.f32 0.0, %v6816
        %v6818 = vpop.f32.mrf.mxu0
        %v6819 = vadd.f32 0.0, %v6818
        %6820 = vmatmul.bf16.gmra.mxu0 %v6712
        %v6821 = vpop.f32.mrf.mxu0
        %v6822 = vadd.f32 0.0, %v6821
        %v6823 = vpop.f32.mrf.mxu0
        %v6824 = vadd.f32 0.0, %v6823
        %6825 = vmatmul.bf16.gmra.mxu0 %v6713
        %v6826 = vpop.f32.mrf.mxu0
        %v6827 = vadd.f32 0.0, %v6826
        %v6828 = vpop.f32.mrf.mxu0
        %v6829 = vadd.f32 0.0, %v6828
        %6830 = vmatmul.bf16.gmra.mxu0 %v6714
        %v6831 = vpop.f32.mrf.mxu0
        %v6832 = vadd.f32 0.0, %v6831
        %v6833 = vpop.f32.mrf.mxu0
        %v6834 = vadd.f32 0.0, %v6833
        %6835 = vmatmul.bf16.gmra.mxu0 %v6715
        %v6836 = vpop.f32.mrf.mxu0
        %v6837 = vadd.f32 0.0, %v6836
        %v6838 = vpop.f32.mrf.mxu0
        %v6839 = vadd.f32 0.0, %v6838
        %6840 = vmatmul.bf16.gmra.mxu0 %v6716
        %v6841 = vpop.f32.mrf.mxu0
        %v6842 = vadd.f32 0.0, %v6841
        %v6843 = vpop.f32.mrf.mxu0
        %v6844 = vadd.f32 0.0, %v6843
        %6845 = vmatmul.bf16.gmra.mxu0 %v6717
        %v6846 = vpop.f32.mrf.mxu0
        %v6847 = vadd.f32 0.0, %v6846
        %v6848 = vpop.f32.mrf.mxu0
        %v6849 = vadd.f32 0.0, %v6848
        %6850 = vmatmul.bf16.gmra.mxu0 %v6718
        %v6851 = vpop.f32.mrf.mxu0
        %v6852 = vadd.f32 0.0, %v6851
        %v6853 = vpop.f32.mrf.mxu0
        %v6854 = vadd.f32 0.0, %v6853
        %6855 = vmatmul.bf16.gmra.mxu0 %v6719
        %v6856 = vpop.f32.mrf.mxu0
        %v6857 = vadd.f32 0.0, %v6856
        %v6858 = vpop.f32.mrf.mxu0
        %v6859 = vadd.f32 0.0, %v6858
        %6860 = vmatmul.bf16.gmra.mxu0 %v6720
        %v6861 = vpop.f32.mrf.mxu0
        %v6862 = vadd.f32 0.0, %v6861
        %v6863 = vpop.f32.mrf.mxu0
        %v6864 = vadd.f32 0.0, %v6863
        %6865 = vmatmul.bf16.gmra.mxu0 %v6721
        %v6866 = vpop.f32.mrf.mxu0
        %v6867 = vadd.f32 0.0, %v6866
        %v6868 = vpop.f32.mrf.mxu0
        %v6869 = vadd.f32 0.0, %v6868
        %6870 = vmatmul.bf16.gmra.mxu0 %v6722
        %v6871 = vpop.f32.mrf.mxu0
        %v6872 = vadd.f32 0.0, %v6871
        %v6873 = vpop.f32.mrf.mxu0
        %v6874 = vadd.f32 0.0, %v6873
        %6875 = vdwg.mxu0
        %v6876 = vadd.f32 %v6530, %v6797
        %v6877 = vadd.f32 %v6531, %v6799
        %v6878 = vadd.f32 %v6532, %v6802
        %v6879 = vadd.f32 %v6533, %v6804
        %v6880 = vadd.f32 %v6534, %v6807
        %v6881 = vadd.f32 %v6535, %v6809
        %v6882 = vadd.f32 %v6536, %v6812
        %v6883 = vadd.f32 %v6537, %v6814
        %v6884 = vadd.f32 %v6538, %v6817
        %v6885 = vadd.f32 %v6539, %v6819
        %v6886 = vadd.f32 %v6540, %v6822
        %v6887 = vadd.f32 %v6541, %v6824
        %v6888 = vadd.f32 %v6542, %v6827
        %v6889 = vadd.f32 %v6543, %v6829
        %v6890 = vadd.f32 %v6544, %v6832
        %v6891 = vadd.f32 %v6545, %v6834
        %v6892 = vadd.f32 %v6546, %v6837
        %v6893 = vadd.f32 %v6547, %v6839
        %v6894 = vadd.f32 %v6548, %v6842
        %v6895 = vadd.f32 %v6549, %v6844
        %v6896 = vadd.f32 %v6550, %v6847
        %v6897 = vadd.f32 %v6551, %v6849
        %v6898 = vadd.f32 %v6552, %v6852
        %v6899 = vadd.f32 %v6553, %v6854
        %v6900 = vadd.f32 %v6554, %v6857
        %v6901 = vadd.f32 %v6555, %v6859
        %v6902 = vadd.f32 %v6556, %v6862
        %v6903 = vadd.f32 %v6557, %v6864
        %v6904 = vadd.f32 %v6558, %v6867
        %v6905 = vadd.f32 %v6559, %v6869
        %v6906 = vadd.f32 %v6560, %v6872
        %v6907 = vadd.f32 %v6561, %v6874
        %v6908 = vld [vmem:[%s5] sm:$0x1]
        %v6910 = vperm.slane %v6908, 0
        %v6912 = vadd.f32 %v6876, %v6910
        %v6913 = vadd.f32 %v6877, %v6910
        %v6914 = vadd.f32 %v6878, %v6910
        %v6915 = vadd.f32 %v6879, %v6910
        %v6916 = vadd.f32 %v6880, %v6910
        %v6917 = vadd.f32 %v6881, %v6910
        %v6918 = vadd.f32 %v6882, %v6910
        %v6919 = vadd.f32 %v6883, %v6910
        %v6920 = vadd.f32 %v6884, %v6910
        %v6921 = vadd.f32 %v6885, %v6910
        %v6922 = vadd.f32 %v6886, %v6910
        %v6923 = vadd.f32 %v6887, %v6910
        %v6924 = vadd.f32 %v6888, %v6910
        %v6925 = vadd.f32 %v6889, %v6910
        %v6926 = vadd.f32 %v6890, %v6910
        %v6927 = vadd.f32 %v6891, %v6910
        %v6928 = vadd.f32 %v6892, %v6910
        %v6929 = vadd.f32 %v6893, %v6910
        %v6930 = vadd.f32 %v6894, %v6910
        %v6931 = vadd.f32 %v6895, %v6910
        %v6932 = vadd.f32 %v6896, %v6910
        %v6933 = vadd.f32 %v6897, %v6910
        %v6934 = vadd.f32 %v6898, %v6910
        %v6935 = vadd.f32 %v6899, %v6910
        %v6936 = vadd.f32 %v6900, %v6910
        %v6937 = vadd.f32 %v6901, %v6910
        %v6938 = vadd.f32 %v6902, %v6910
        %v6939 = vadd.f32 %v6903, %v6910
        %v6940 = vadd.f32 %v6904, %v6910
        %v6941 = vadd.f32 %v6905, %v6910
        %v6942 = vadd.f32 %v6906, %v6910
        %v6943 = vadd.f32 %v6907, %v6910
        %6944 = vst [vmem:[%s321] sm:$0xff] %v6912
        %6945 = vst [vmem:[%s321 + $0x8] sm:$0xff] %v6913
        %6946 = vst [vmem:[%s321 + $0x10] sm:$0xff] %v6914
        %6947 = vst [vmem:[%s321 + $0x18] sm:$0xff] %v6915
        %6948 = vst [vmem:[%s321 + $0x20] sm:$0xff] %v6916
        %6949 = vst [vmem:[%s321 + $0x28] sm:$0xff] %v6917
        %6950 = vst [vmem:[%s321 + $0x30] sm:$0xff] %v6918
        %6951 = vst [vmem:[%s321 + $0x38] sm:$0xff] %v6919
        %6952 = vst [vmem:[%s321 + $0x40] sm:$0xff] %v6920
        %6953 = vst [vmem:[%s321 + $0x48] sm:$0xff] %v6921
        %6954 = vst [vmem:[%s321 + $0x50] sm:$0xff] %v6922
        %6955 = vst [vmem:[%s321 + $0x58] sm:$0xff] %v6923
        %6956 = vst [vmem:[%s321 + $0x60] sm:$0xff] %v6924
        %6957 = vst [vmem:[%s321 + $0x68] sm:$0xff] %v6925
        %6958 = vst [vmem:[%s321 + $0x70] sm:$0xff] %v6926
        %6959 = vst [vmem:[%s321 + $0x78] sm:$0xff] %v6927
        %6960 = vst [vmem:[%s321 + $0x80] sm:$0xff] %v6928
        %6961 = vst [vmem:[%s321 + $0x88] sm:$0xff] %v6929
        %6962 = vst [vmem:[%s321 + $0x90] sm:$0xff] %v6930
        %6963 = vst [vmem:[%s321 + $0x98] sm:$0xff] %v6931
        %6964 = vst [vmem:[%s321 + $0xa0] sm:$0xff] %v6932
        %6965 = vst [vmem:[%s321 + $0xa8] sm:$0xff] %v6933
        %6966 = vst [vmem:[%s321 + $0xb0] sm:$0xff] %v6934
        %6967 = vst [vmem:[%s321 + $0xb8] sm:$0xff] %v6935
        %6968 = vst [vmem:[%s321 + $0xc0] sm:$0xff] %v6936
        %6969 = vst [vmem:[%s321 + $0xc8] sm:$0xff] %v6937
        %6970 = vst [vmem:[%s321 + $0xd0] sm:$0xff] %v6938
        %6971 = vst [vmem:[%s321 + $0xd8] sm:$0xff] %v6939
        %6972 = vst [vmem:[%s321 + $0xe0] sm:$0xff] %v6940
        %6973 = vst [vmem:[%s321 + $0xe8] sm:$0xff] %v6941
        %6974 = vst [vmem:[%s321 + $0xf0] sm:$0xff] %v6942
        %6975 = vst [vmem:[%s321 + $0xf8] sm:$0xff] %v6943
        %s6976 = sand.u32 %s164, 1
        %s6977 = scalar_lea.sflag [#allocation5], %s6976
        %s6978 = sand.u32 %s164, 1
        %s6979 = smul.addr %s6978, 256
        %s6980 = scalar_lea.vmem [#allocation11], %s6979
        // Predicated region
        $region61: #{tpu_custom_call.1} parent=43 // pred_check
          %p6981 = pneg %p174
        $region62: #{tpu_custom_call.1} parent=43 // pred_check_branch
          %6983 = sbr.rel (%p6981) target = $region64
        $region63: #{tpu_custom_call.1} parent=43 // pred_region
          %6985 = vsyncadd %s6977, 0
          %s6986 = smul.addr %s25, 32
          %s6987 = smul.addr %s6986, 8
          %s6988 = scalar_lea.hbm %s6, %s6987
          %s6989 = sshll.u32 %s6980, 4
          %s6990 = int_to_ptr.vmem [resolvable:$true] %s6989
          %s6991 = sshll.u32 %s6988, 4
          %s6992 = int_to_ptr.hbm [resolvable:$true] %s6991
          %6997 = dma.vmem_to_hbm [thread:$0]  %s6990, 4096, %s6992, %s6977, 128, 128, 8
        $region64: #{tpu_custom_call.1} parent=43 // pred_fallthru
          _
      $region44: #{tpu_custom_call.1} parent=5 // pred_fallthru
        _
      %p6998 = scmp.le.s32.totalorder 2, %s20
      // Predicated region
      $region65: #{tpu_custom_call.1} parent=5 // pred_check
        %p6999 = pneg %p6998
      $region66: #{tpu_custom_call.1} parent=5 // pred_check_branch
        %7001 = sbr.rel (%p6999) target = $region68
      $region67: #{tpu_custom_call.1} parent=5 // pred_region
        %s7002 = ssub.s32 %s20, 2
        // Predicated region
        $region69: #{tpu_custom_call.1} parent=67 // pred_check
          %p7003 = pneg %p180
        $region70: #{tpu_custom_call.1} parent=67 // pred_check_branch
          %7005 = sbr.rel (%p7003) target = $region72
        $region71: #{tpu_custom_call.1} parent=67 // pred_region
          %s7006 = sand.u32 %s165, 1
          %s7007 = scalar_lea.sflag [#allocation5], %s7006
          %s7008 = sand.u32 %s165, 1
          %s7009 = smul.addr %s7008, 256
          %s7010 = scalar_lea.vmem [#allocation11], %s7009
          %7012 = dma.done %s7007, 4096
        $region72: #{tpu_custom_call.1} parent=67 // pred_fallthru
          _
      $region68: #{tpu_custom_call.1} parent=5 // pred_fallthru
        _
    $region6: #{tpu_custom_call.1} parent=1 // loop_footer
      %s24 = sadd.s32 1, %s20
    $region7: #{tpu_custom_call.1} parent=1 // loop_footer_branch
      %19 = sbr.rel target = $region3
    $region8: #{tpu_custom_call.1} parent=1 // loop_exit
      _
    %7013 = vsyncpa [#allocation4], 1
    %s7014 = scalar_lea.sflag [#allocation4], 1
    %7015 = vsyncpa %s7014, 1
    %7016 = vsyncpa [#allocation7], 1
    %7017 = vsyncpa [#allocation10], 1
    %7018 = vsyncpa [#allocation5], 1
    %s7019 = scalar_lea.sflag [#allocation5], 1
    %7020 = vsyncpa %s7019, 1

</llo_original>
